<compile_context>
chip_gen: v6e
topology: v6e:2x2x1
jax: 0.10.0
libtpu: 0.0.40
codegen_flags: <defaults>
</compile_context>

<pallas_src>
import functools
import math

import jax
import jax.numpy as jnp
from jax.experimental import pallas as pl
from jax.experimental.pallas import tpu as pltpu

NEG_INF = -1e30

_VMEM = pl.BlockSpec(memory_space=pltpu.MemorySpace.VMEM)


# ----------------------------------------------------------------------------
# Fused kernel
# ----------------------------------------------------------------------------
def _hgt_conv_layer(x, onehot, emask, wkqv_ref, watt_ref, wmsg_ref, wa_ref,
                    skip_ref, *, cfg):
    """One dgl.nn.HGTConv layer on the full (small) graph, in-kernel."""
    H, D, HD = cfg['H'], cfg['D'], cfg['HD']
    Tn, Te = cfg['Tn'], cfg['Te']
    N = x.shape[0]

    # Typed K/Q/V: one lane-dense matmul (Fin x Tn*3*HD) + one-hot selection.
    kqv_all = jnp.dot(x, wkqv_ref[...], preferred_element_type=jnp.float32)
    kqv = onehot[:, 0:1] * kqv_all[:, 0:3 * HD]
    for t in range(1, Tn):
        kqv = kqv + onehot[:, t:t + 1] * kqv_all[:, t * 3 * HD:(t + 1) * 3 * HD]
    k = kqv[:, 0:HD]
    q = kqv[:, HD:2 * HD]
    v = kqv[:, 2 * HD:3 * HD]

    # Per-etype transformed keys / messages for ALL heads at once
    # (block-diagonal weights; relation_pri / sqrt(d) already folded into watt).
    watt = watt_ref[...]
    wmsg = wmsg_ref[...]
    ktil_t = []   # (HD, N): transposed once per etype, not per head
    mtil = []     # (N, HD)
    for t in range(Te):
        ktil_t.append(jnp.dot(k, watt[t], preferred_element_type=jnp.float32).T)
        mtil.append(jnp.dot(v, wmsg[t], preferred_element_type=jnp.float32))

    # Edge-existence mask, hoisted out of the head loop.
    em = [emask[t] for t in range(Te)]
    mask_any = em[0]
    for t in range(1, Te):
        mask_any = mask_any + em[t]
    has_edge = mask_any > 0.0

    # Per-head edge softmax + aggregation; the typed output projection is
    # accumulated as sum_h oh_h @ wa[h*D:(h+1)*D, :]  (== concat(heads) @ wa).
    wa = wa_ref[...]                               # (HD, Tn*HD)
    a_all = jnp.zeros((N, Tn * HD), jnp.float32)
    for h in range(H):
        qh = q[:, h * D:(h + 1) * D]
        att = em[0] * jnp.dot(qh, ktil_t[0][h * D:(h + 1) * D, :],
                              preferred_element_type=jnp.float32)
        for t in range(1, Te):
            att = att + em[t] * jnp.dot(qh, ktil_t[t][h * D:(h + 1) * D, :],
                                        preferred_element_type=jnp.float32)

        # edge softmax over incoming edges of each destination node
        att = jnp.where(has_edge, att, NEG_INF)
        m = jnp.max(att, axis=1, keepdims=True)
        p = jnp.where(has_edge, jnp.exp(att - m), 0.0)
        denom = jnp.sum(p, axis=1, keepdims=True)
        denom = jnp.where(denom == 0.0, 1.0, denom)   # isolated dst -> 0 message
        p = p * pl.reciprocal(denom, approx=True)

        # message aggregation (per-etype masked matmuls)
        oh = jnp.dot(p * em[0], mtil[0][:, h * D:(h + 1) * D],
                     preferred_element_type=jnp.float32)
        for t in range(1, Te):
            oh = oh + jnp.dot(p * em[t], mtil[t][:, h * D:(h + 1) * D],
                              preferred_element_type=jnp.float32)

        a_all = a_all + jnp.dot(oh, wa[h * D:(h + 1) * D, :],
                                preferred_element_type=jnp.float32)

    # One-hot node-type selection of the typed output projection.
    a_out = onehot[:, 0:1] * a_all[:, 0:HD]
    for t in range(1, Tn):
        a_out = a_out + onehot[:, t:t + 1] * a_all[:, t * HD:(t + 1) * HD]

    # Skip gate: alpha = sigmoid(skip[ntype]) (exact one-hot -> matmul + EUP exp).
    z = jnp.dot(onehot, skip_ref[...], preferred_element_type=jnp.float32)  # (N,1)
    alpha = 1.0 / (1.0 + jnp.exp(-z))
    h_out = a_out * alpha
    if cfg['has_res']:
        # dgl.nn.HGTConv applies the residual mix only when x.shape == h.shape.
        h_out = h_out + x * (1.0 - alpha)
    return h_out


def hgt_aug_p_kernel(*refs, cfgs1, cfgs2, n_target, feat_t, arg_num):
    """Whole HGT_AUG_P forward (model1 -> glue -> model2) in one kernel."""
    (aug_feat_ref, aug_oh_ref, aug_em_ref,
     ori_tfeat_ref, ori_ofeat_ref, ori_oh_ref, ori_em_ref,
     lut_w_ref, lut_b_ref) = refs[:9]
    n_layers = len(cfgs1) + len(cfgs2)
    w_refs = refs[9:9 + 5 * n_layers]
    out_ref = refs[9 + 5 * n_layers]
    x2_ref = refs[9 + 5 * n_layers + 1]          # VMEM scratch for model2 input

    # ---- model1 on the augmented graph (all layers fused) ----
    h = aug_feat_ref[...]
    onehot = aug_oh_ref[...]
    emask = aug_em_ref[...]
    idx = 0
    for cfg in cfgs1:
        h = _hgt_conv_layer(h, onehot, emask, *w_refs[idx:idx + 5], cfg=cfg)
        idx += 5
    logits1 = h[:n_target, :]                    # (n_target, arg_num)

    # ---- glue: feat[target] = concat(h_target, logits1); feat[other] = LUT ----
    x2_ref[0:n_target, 0:feat_t] = ori_tfeat_ref[...]
    x2_ref[0:n_target, feat_t:feat_t + arg_num] = logits1
    x2_ref[n_target:, :] = (
        jnp.dot(ori_ofeat_ref[...], lut_w_ref[...],
                preferred_element_type=jnp.float32) + lut_b_ref[...])

    # ---- model2 on the original graph ----
    h2 = x2_ref[...]
    onehot = ori_oh_ref[...]
    emask = ori_em_ref[...]
    for cfg in cfgs2:
        h2 = _hgt_conv_layer(h2, onehot, emask, *w_refs[idx:idx + 5], cfg=cfg)
        idx += 5

    out_ref[...] = h2[:n_target, :]


# ----------------------------------------------------------------------------
# Parameter packing (done once at init, outside the hot path)
# ----------------------------------------------------------------------------
def pack_hgt_layer(p):
    H, D = p['num_heads'], p['head_size']
    HD = H * D
    Tn, Fin = p['wk'].shape[0], p['wk'].shape[1]
    Te = p['watt'].shape[1]
    inv_sqrt_d = 1.0 / math.sqrt(D)

    # (Fin, Tn*3*HD): per node type, [K | Q | V] stacked along lanes.
    wkqv = jnp.concatenate(
        [jnp.concatenate([p['wk'][t], p['wq'][t], p['wv'][t]], axis=1)
         for t in range(Tn)], axis=1)

    # Block-diagonal per-etype weights (heads along the diagonal).
    def blockdiag(w, scale=None):                 # (H, Te, D, D) -> (Te, HD, HD)
        out = jnp.zeros((Te, HD, HD), jnp.float32)
        for h in range(H):
            blk = w[h]
            if scale is not None:
                blk = blk * scale[h][:, None, None]
            out = out.at[:, h * D:(h + 1) * D, h * D:(h + 1) * D].set(blk)
        return out

    watt_bd = blockdiag(p['watt'], scale=p['pri'] * inv_sqrt_d)  # pri/sqrt(d) folded
    wmsg_bd = blockdiag(p['wmsg'])

    wa_st = jnp.concatenate([p['wa'][t] for t in range(Tn)], axis=1)  # (HD, Tn*HD)
    skip = p['skip'].reshape(Tn, 1).astype(jnp.float32)

    cfg = dict(H=H, D=D, HD=HD, Tn=Tn, Te=Te, Fin=Fin, has_res=(Fin == HD))
    return [wkqv, watt_bd, wmsg_bd, wa_st, skip], cfg


def pack_model(layer_params):
    weights, cfgs = [], []
    for p in layer_params:
        w, c = pack_hgt_layer(p)
        weights.extend(w)
        cfgs.append(c)
    return weights, tuple(cfgs)


def _cost_numbers(N, cfgs):
    flops, transc = 0, 0
    for c in cfgs:
        H, D, HD, Tn, Te, Fin = c['H'], c['D'], c['HD'], c['Tn'], c['Te'], c['Fin']
        flops += 2 * N * Fin * (Tn * 3 * HD)       # fused typed K/Q/V
        flops += 2 * Te * N * HD * HD * 2          # k-tilde + messages
        flops += 2 * H * Te * N * N * D * 2        # scores + aggregation
        flops += 2 * H * N * D * (Tn * HD)         # output projection
        transc += H * N * N + N                    # exp (softmax) + sigmoid
    return flops, transc


# ----------------------------------------------------------------------------
# Wrapper: ONE pallas_call for the whole forward
# ----------------------------------------------------------------------------
def hgt_aug_p_forward(packed, g_aug, g_ori):
    w1, cfgs1 = packed['model1']
    w2, cfgs2 = packed['model2']
    n_target, feat_t = g_ori['target_feat'].shape
    arg_num = cfgs1[-1]['HD']
    label_num = cfgs2[-1]['HD']
    N = g_ori['onehot'].shape[0]

    inputs = [g_aug['feat'], g_aug['onehot'], g_aug['emask'],
              g_ori['target_feat'], g_ori['other_feat'],
              g_ori['onehot'], g_ori['emask'],
              packed['lut_w'], packed['lut_b']] + list(w1) + list(w2)

    kernel = functools.partial(hgt_aug_p_kernel, cfgs1=cfgs1, cfgs2=cfgs2,
                               n_target=n_target, feat_t=feat_t, arg_num=arg_num)

    f1, t1 = _cost_numbers(N, cfgs1)
    f2, t2 = _cost_numbers(N, cfgs2)
    bytes_accessed = sum(int(a.size) * a.dtype.itemsize for a in inputs)
    bytes_accessed += n_target * label_num * 4

    return pl.pallas_call(
        kernel,
        out_shape=jax.ShapeDtypeStruct((n_target, label_num), jnp.float32),
        in_specs=[_VMEM] * len(inputs),
        out_specs=_VMEM,
        scratch_shapes=[pltpu.VMEM((N, feat_t + arg_num), jnp.float32)],
        cost_estimate=pl.CostEstimate(flops=f1 + f2, transcendentals=t1 + t2,
                                      bytes_accessed=bytes_accessed),
    )(*inputs)
    # TODO(synk): bf16 MXU inputs (v6e/v7x) and a dst-tiled grid for v7x's 2nd
    # TensorCore are only worthwhile at much larger N; kept f32 / gridless here.


# ----------------------------------------------------------------------------
# Deterministic parameter / graph construction
# ----------------------------------------------------------------------------
def init_hgtconv(key, in_size, head_size, num_heads, num_ntypes, num_etypes):
    HD = head_size * num_heads
    k = jax.random.split(key, 6)

    def tl(kk, fi, fo):
        return jax.random.normal(kk, (num_ntypes, fi, fo), jnp.float32) / math.sqrt(fi)

    return {
        'wk': tl(k[0], in_size, HD),
        'wq': tl(k[1], in_size, HD),
        'wv': tl(k[2], in_size, HD),
        'wa': tl(k[3], HD, HD),
        'watt': jax.random.normal(k[4], (num_heads, num_etypes, head_size, head_size),
                                  jnp.float32) / math.sqrt(head_size),
        'wmsg': jax.random.normal(k[5], (num_heads, num_etypes, head_size, head_size),
                                  jnp.float32) / math.sqrt(head_size),
        'pri': jnp.ones((num_heads, num_etypes), jnp.float32),
        'skip': jnp.ones((num_ntypes,), jnp.float32),
        'num_heads': num_heads,
        'head_size': head_size,
    }


def init_hgt(key, in_dim, hidden_dim, out_dim, num_heads, num_etypes,
             num_ntypes, num_layers):
    keys = jax.random.split(key, num_layers)
    layers = [init_hgtconv(keys[0], in_dim, hidden_dim, num_heads,
                           num_ntypes, num_etypes)]
    for i in range(1, num_layers - 1):
        layers.append(init_hgtconv(keys[i], hidden_dim * num_heads, hidden_dim,
                                   num_heads, num_ntypes, num_etypes))
    layers.append(init_hgtconv(keys[-1], hidden_dim * num_heads, out_dim, 1,
                               num_ntypes, num_etypes))
    return layers


def make_graph(key, n_paper, n_author):
    N = n_paper + n_author
    k1, k2 = jax.random.split(key)
    # etype 0: author -> paper ; etype 1: paper -> author  (dense dst x src)
    m_ap = (jax.random.uniform(k1, (n_paper, n_author)) < 0.35).astype(jnp.float32)
    m_pa = (jax.random.uniform(k2, (n_author, n_paper)) < 0.35).astype(jnp.float32)
    emask = jnp.zeros((2, N, N), jnp.float32)
    emask = emask.at[0, :n_paper, n_paper:].set(m_ap)
    emask = emask.at[1, n_paper:, :n_paper].set(m_pa)
    onehot = jnp.concatenate(
        [jnp.tile(jnp.array([[1.0, 0.0]], jnp.float32), (n_paper, 1)),
         jnp.tile(jnp.array([[0.0, 1.0]], jnp.float32), (n_author, 1))], axis=0)
    return emask, onehot


# ----------------------------------------------------------------------------
if __name__ == "__main__":
    key = jax.random.PRNGKey(0)
    (k_g1, k_g2, k_f1, k_f2, k_f3,
     k_m1, k_m2, k_lut_w, k_lut_b, k_map) = jax.random.split(key, 10)

    # config (small shapes consistent with the module)
    n_paper, n_author = 16, 16          # target ntype = 'paper'
    N = n_paper + n_author
    feat_paper, feat_author = 32, 24    # feature_sizes = [32, 24]
    hidden_dim, num_heads, num_layers = 8, 4, 2
    label_num, arg_num = 8, 16
    num_ntypes, num_etypes = 2, 2

    # graphs (dense representation)
    emask_aug, onehot_aug = make_graph(k_g1, n_paper, n_author)
    emask_ori, onehot_ori = make_graph(k_g2, n_paper, n_author)

    g_aug = {
        'feat': jax.random.normal(k_f1, (N, feat_paper), jnp.float32),
        'onehot': onehot_aug, 'emask': emask_aug,
    }
    g_ori = {
        'target_feat': jax.random.normal(k_f2, (n_paper, feat_paper), jnp.float32),
        'other_feat': jax.random.normal(k_f3, (n_author, feat_author), jnp.float32),
        'onehot': onehot_ori, 'emask': emask_ori,
    }

    # parameters (is_augmentation=True path), packed once for the fused kernel
    model1 = init_hgt(k_m1, feat_paper, hidden_dim, arg_num, 4,
                      num_etypes, num_ntypes, 2)
    model2 = init_hgt(k_m2, feat_paper + arg_num, hidden_dim, label_num,
                      num_heads, num_etypes, num_ntypes, num_layers)
    packed = {
        'model1': pack_model(model1),
        'model2': pack_model(model2),
        # look_up_table for the non-target ntype: Linear(24 -> 32 + 16)
        'lut_w': jax.random.normal(k_lut_w, (feat_author, feat_paper + arg_num),
                                   jnp.float32) / math.sqrt(feat_author),
        'lut_b': (jax.random.normal(k_lut_b, (feat_paper + arg_num,),
                                    jnp.float32) * 0.01).reshape(1, -1),
    }
    # self.mapping = nn.Linear(2*label_num, label_num) is never used in forward;
    # initialized here only for completeness.
    _mapping_w = jax.random.normal(k_map, (2 * label_num, label_num), jnp.float32)
    # TODO(synk): nn.Dropout is identity in inference mode; stochastic training
    # dropout is not implemented in the kernel.

    logits = hgt_aug_p_forward(packed, g_aug, g_ori)
    logits = jax.block_until_ready(logits)

    assert logits.shape == (n_paper, label_num), logits.shape
    assert bool(jnp.all(jnp.isfinite(logits)))
    print("KERNEL_OK")
</pallas_src>

<mosaic_0001>
module attributes {stable_mosaic.version = 11 : i64} {
  func.func @hgt_aug_p_kernel(%arg0: memref<32x32xf32, #tpu.memory_space<vmem>>, %arg1: memref<32x2xf32, #tpu.memory_space<vmem>>, %arg2: memref<2x32x32xf32, #tpu.memory_space<vmem>>, %arg3: memref<16x32xf32, #tpu.memory_space<vmem>>, %arg4: memref<16x24xf32, #tpu.memory_space<vmem>>, %arg5: memref<32x2xf32, #tpu.memory_space<vmem>>, %arg6: memref<2x32x32xf32, #tpu.memory_space<vmem>>, %arg7: memref<24x48xf32, #tpu.memory_space<vmem>>, %arg8: memref<1x48xf32, #tpu.memory_space<vmem>>, %arg9: memref<32x192xf32, #tpu.memory_space<vmem>>, %arg10: memref<2x32x32xf32, #tpu.memory_space<vmem>>, %arg11: memref<2x32x32xf32, #tpu.memory_space<vmem>>, %arg12: memref<32x64xf32, #tpu.memory_space<vmem>>, %arg13: memref<2x1xf32, #tpu.memory_space<vmem>>, %arg14: memref<32x96xf32, #tpu.memory_space<vmem>>, %arg15: memref<2x16x16xf32, #tpu.memory_space<vmem>>, %arg16: memref<2x16x16xf32, #tpu.memory_space<vmem>>, %arg17: memref<16x32xf32, #tpu.memory_space<vmem>>, %arg18: memref<2x1xf32, #tpu.memory_space<vmem>>, %arg19: memref<48x192xf32, #tpu.memory_space<vmem>>, %arg20: memref<2x32x32xf32, #tpu.memory_space<vmem>>, %arg21: memref<2x32x32xf32, #tpu.memory_space<vmem>>, %arg22: memref<32x64xf32, #tpu.memory_space<vmem>>, %arg23: memref<2x1xf32, #tpu.memory_space<vmem>>, %arg24: memref<32x48xf32, #tpu.memory_space<vmem>>, %arg25: memref<2x8x8xf32, #tpu.memory_space<vmem>>, %arg26: memref<2x8x8xf32, #tpu.memory_space<vmem>>, %arg27: memref<8x16xf32, #tpu.memory_space<vmem>>, %arg28: memref<2x1xf32, #tpu.memory_space<vmem>>, %arg29: memref<16x8xf32, #tpu.memory_space<vmem>>, %arg30: memref<32x48xf32, #tpu.memory_space<vmem>>) attributes {dimension_semantics = [], scalar_prefetch = 0 : i64, scratch_operands = 1 : i64, tpu.core_type = #tpu.core_type<tc>} {
    %c0 = arith.constant 0 : index
    %c0_0 = arith.constant 0 : index
    %0 = vector.load %arg0[%c0, %c0_0] : memref<32x32xf32, #tpu.memory_space<vmem>>, vector<32x32xf32>
    %c0_1 = arith.constant 0 : index
    %c0_2 = arith.constant 0 : index
    %1 = vector.load %arg1[%c0_1, %c0_2] : memref<32x2xf32, #tpu.memory_space<vmem>>, vector<32x2xf32>
    %c0_3 = arith.constant 0 : index
    %c0_4 = arith.constant 0 : index
    %c0_5 = arith.constant 0 : index
    %2 = vector.load %arg2[%c0_3, %c0_4, %c0_5] : memref<2x32x32xf32, #tpu.memory_space<vmem>>, vector<2x32x32xf32>
    %c0_6 = arith.constant 0 : index
    %c0_7 = arith.constant 0 : index
    %3 = vector.load %arg9[%c0_6, %c0_7] : memref<32x192xf32, #tpu.memory_space<vmem>>, vector<32x192xf32>
    %cst = arith.constant dense<0.000000e+00> : vector<32x192xf32>
    %4 = tpu.matmul %0, %3, %cst {dimension_numbers = #tpu.dot_dimension_numbers<[1], [0], [0], [1], [0, 0, 1, 1], [], []>} : vector<32x32xf32>, vector<32x192xf32>, vector<32x192xf32> -> vector<32x192xf32>
    %5 = vector.extract_strided_slice %1 {offsets = [0, 0], sizes = [32, 1], strides = [1, 1]} : vector<32x2xf32> to vector<32x1xf32>
    %6 = vector.extract_strided_slice %4 {offsets = [0, 0], sizes = [32, 96], strides = [1, 1]} : vector<32x192xf32> to vector<32x96xf32>
    %7 = vector.broadcast %5 : vector<32x1xf32> to vector<32x96xf32>
    %8 = arith.mulf %7, %6 : vector<32x96xf32>
    %9 = vector.extract_strided_slice %1 {offsets = [0, 1], sizes = [32, 1], strides = [1, 1]} : vector<32x2xf32> to vector<32x1xf32>
    %10 = vector.extract_strided_slice %4 {offsets = [0, 96], sizes = [32, 96], strides = [1, 1]} : vector<32x192xf32> to vector<32x96xf32>
    %11 = vector.broadcast %9 : vector<32x1xf32> to vector<32x96xf32>
    %12 = arith.mulf %11, %10 : vector<32x96xf32>
    %13 = arith.addf %8, %12 : vector<32x96xf32>
    %14 = vector.extract_strided_slice %13 {offsets = [0, 0], sizes = [32, 32], strides = [1, 1]} : vector<32x96xf32> to vector<32x32xf32>
    %15 = vector.extract_strided_slice %13 {offsets = [0, 32], sizes = [32, 32], strides = [1, 1]} : vector<32x96xf32> to vector<32x32xf32>
    %16 = vector.extract_strided_slice %13 {offsets = [0, 64], sizes = [32, 32], strides = [1, 1]} : vector<32x96xf32> to vector<32x32xf32>
    %c0_8 = arith.constant 0 : index
    %c0_9 = arith.constant 0 : index
    %c0_10 = arith.constant 0 : index
    %17 = vector.load %arg10[%c0_8, %c0_9, %c0_10] : memref<2x32x32xf32, #tpu.memory_space<vmem>>, vector<2x32x32xf32>
    %c0_11 = arith.constant 0 : index
    %c0_12 = arith.constant 0 : index
    %c0_13 = arith.constant 0 : index
    %18 = vector.load %arg11[%c0_11, %c0_12, %c0_13] : memref<2x32x32xf32, #tpu.memory_space<vmem>>, vector<2x32x32xf32>
    %19 = vector.extract_strided_slice %17 {offsets = [0, 0, 0], sizes = [1, 32, 32], strides = [1, 1, 1]} : vector<2x32x32xf32> to vector<1x32x32xf32>
    %20 = vector.shape_cast %19 : vector<1x32x32xf32> to vector<32x32xf32>
    %cst_14 = arith.constant dense<0.000000e+00> : vector<32x32xf32>
    %21 = tpu.matmul %14, %20, %cst_14 {dimension_numbers = #tpu.dot_dimension_numbers<[1], [0], [0], [1], [0, 0, 1, 1], [], []>} : vector<32x32xf32>, vector<32x32xf32>, vector<32x32xf32> -> vector<32x32xf32>
    %22 = tpu.transpose %21, [1, 0] : vector<32x32xf32> -> vector<32x32xf32>
    %23 = vector.extract_strided_slice %18 {offsets = [0, 0, 0], sizes = [1, 32, 32], strides = [1, 1, 1]} : vector<2x32x32xf32> to vector<1x32x32xf32>
    %24 = vector.shape_cast %23 : vector<1x32x32xf32> to vector<32x32xf32>
    %cst_15 = arith.constant dense<0.000000e+00> : vector<32x32xf32>
    %25 = tpu.matmul %16, %24, %cst_15 {dimension_numbers = #tpu.dot_dimension_numbers<[1], [0], [0], [1], [0, 0, 1, 1], [], []>} : vector<32x32xf32>, vector<32x32xf32>, vector<32x32xf32> -> vector<32x32xf32>
    %26 = vector.extract_strided_slice %17 {offsets = [1, 0, 0], sizes = [1, 32, 32], strides = [1, 1, 1]} : vector<2x32x32xf32> to vector<1x32x32xf32>
    %27 = vector.shape_cast %26 : vector<1x32x32xf32> to vector<32x32xf32>
    %cst_16 = arith.constant dense<0.000000e+00> : vector<32x32xf32>
    %28 = tpu.matmul %14, %27, %cst_16 {dimension_numbers = #tpu.dot_dimension_numbers<[1], [0], [0], [1], [0, 0, 1, 1], [], []>} : vector<32x32xf32>, vector<32x32xf32>, vector<32x32xf32> -> vector<32x32xf32>
    %29 = tpu.transpose %28, [1, 0] : vector<32x32xf32> -> vector<32x32xf32>
    %30 = vector.extract_strided_slice %18 {offsets = [1, 0, 0], sizes = [1, 32, 32], strides = [1, 1, 1]} : vector<2x32x32xf32> to vector<1x32x32xf32>
    %31 = vector.shape_cast %30 : vector<1x32x32xf32> to vector<32x32xf32>
    %cst_17 = arith.constant dense<0.000000e+00> : vector<32x32xf32>
    %32 = tpu.matmul %16, %31, %cst_17 {dimension_numbers = #tpu.dot_dimension_numbers<[1], [0], [0], [1], [0, 0, 1, 1], [], []>} : vector<32x32xf32>, vector<32x32xf32>, vector<32x32xf32> -> vector<32x32xf32>
    %33 = vector.extract_strided_slice %2 {offsets = [0, 0, 0], sizes = [1, 32, 32], strides = [1, 1, 1]} : vector<2x32x32xf32> to vector<1x32x32xf32>
    %34 = vector.shape_cast %33 : vector<1x32x32xf32> to vector<32x32xf32>
    %35 = vector.extract_strided_slice %2 {offsets = [1, 0, 0], sizes = [1, 32, 32], strides = [1, 1, 1]} : vector<2x32x32xf32> to vector<1x32x32xf32>
    %36 = vector.shape_cast %35 : vector<1x32x32xf32> to vector<32x32xf32>
    %37 = arith.addf %34, %36 : vector<32x32xf32>
    %cst_18 = arith.constant 0.000000e+00 : f32
    %38 = vector.broadcast %cst_18 : f32 to vector<32x32xf32>
    %39 = arith.cmpf ogt, %37, %38 : vector<32x32xf32>
    %c0_19 = arith.constant 0 : index
    %c0_20 = arith.constant 0 : index
    %40 = vector.load %arg12[%c0_19, %c0_20] : memref<32x64xf32, #tpu.memory_space<vmem>>, vector<32x64xf32>
    %cst_21 = arith.constant 0.000000e+00 : f32
    %41 = vector.broadcast %cst_21 : f32 to vector<32x64xf32>
    %42 = vector.extract_strided_slice %15 {offsets = [0, 0], sizes = [32, 8], strides = [1, 1]} : vector<32x32xf32> to vector<32x8xf32>
    %43 = vector.extract_strided_slice %22 {offsets = [0, 0], sizes = [8, 32], strides = [1, 1]} : vector<32x32xf32> to vector<8x32xf32>
    %cst_22 = arith.constant dense<0.000000e+00> : vector<32x32xf32>
    %44 = tpu.matmul %42, %43, %cst_22 {dimension_numbers = #tpu.dot_dimension_numbers<[1], [0], [0], [1], [0, 0, 1, 1], [], []>} : vector<32x8xf32>, vector<8x32xf32>, vector<32x32xf32> -> vector<32x32xf32>
    %45 = arith.mulf %34, %44 : vector<32x32xf32>
    %46 = vector.extract_strided_slice %29 {offsets = [0, 0], sizes = [8, 32], strides = [1, 1]} : vector<32x32xf32> to vector<8x32xf32>
    %cst_23 = arith.constant dense<0.000000e+00> : vector<32x32xf32>
    %47 = tpu.matmul %42, %46, %cst_23 {dimension_numbers = #tpu.dot_dimension_numbers<[1], [0], [0], [1], [0, 0, 1, 1], [], []>} : vector<32x8xf32>, vector<8x32xf32>, vector<32x32xf32> -> vector<32x32xf32>
    %48 = arith.mulf %36, %47 : vector<32x32xf32>
    %49 = arith.addf %45, %48 : vector<32x32xf32>
    %cst_24 = arith.constant -1.000000e+30 : f32
    %50 = vector.broadcast %cst_24 : f32 to vector<32x32xf32>
    %51 = arith.select %39, %49, %50 : vector<32x32xi1>, vector<32x32xf32>
    %cst_25 = arith.constant dense<0xFF800000> : vector<32xf32>
    %52 = vector.multi_reduction <maximumf>, %51, %cst_25 [1] : vector<32x32xf32> to vector<32xf32>
    %53 = vector.shape_cast %52 : vector<32xf32> to vector<32x1xf32>
    %54 = vector.broadcast %53 : vector<32x1xf32> to vector<32x32xf32>
    %55 = arith.subf %51, %54 : vector<32x32xf32>
    %56 = math.exp %55 : vector<32x32xf32>
    %cst_26 = arith.constant 0.000000e+00 : f32
    %57 = vector.broadcast %cst_26 : f32 to vector<32x32xf32>
    %58 = arith.select %39, %56, %57 : vector<32x32xi1>, vector<32x32xf32>
    %cst_27 = arith.constant dense<0.000000e+00> : vector<32xf32>
    %59 = vector.multi_reduction <add>, %58, %cst_27 [1] : vector<32x32xf32> to vector<32xf32>
    %60 = vector.shape_cast %59 : vector<32xf32> to vector<32x1xf32>
    %cst_28 = arith.constant 0.000000e+00 : f32
    %61 = vector.broadcast %cst_28 : f32 to vector<32x1xf32>
    %62 = arith.cmpf oeq, %60, %61 : vector<32x1xf32>
    %cst_29 = arith.constant 1.000000e+00 : f32
    %63 = vector.broadcast %cst_29 : f32 to vector<32x1xf32>
    %64 = arith.select %62, %63, %60 : vector<32x1xi1>, vector<32x1xf32>
    %65 = tpu.reciprocal %64 {approx = true} : vector<32x1xf32> -> vector<32x1xf32>
    %66 = vector.broadcast %65 : vector<32x1xf32> to vector<32x32xf32>
    %67 = arith.mulf %58, %66 : vector<32x32xf32>
    %68 = arith.mulf %67, %34 : vector<32x32xf32>
    %69 = vector.extract_strided_slice %25 {offsets = [0, 0], sizes = [32, 8], strides = [1, 1]} : vector<32x32xf32> to vector<32x8xf32>
    %cst_30 = arith.constant dense<0.000000e+00> : vector<32x8xf32>
    %70 = tpu.matmul %68, %69, %cst_30 {dimension_numbers = #tpu.dot_dimension_numbers<[1], [0], [0], [1], [0, 0, 1, 1], [], []>} : vector<32x32xf32>, vector<32x8xf32>, vector<32x8xf32> -> vector<32x8xf32>
    %71 = arith.mulf %67, %36 : vector<32x32xf32>
    %72 = vector.extract_strided_slice %32 {offsets = [0, 0], sizes = [32, 8], strides = [1, 1]} : vector<32x32xf32> to vector<32x8xf32>
    %cst_31 = arith.constant dense<0.000000e+00> : vector<32x8xf32>
    %73 = tpu.matmul %71, %72, %cst_31 {dimension_numbers = #tpu.dot_dimension_numbers<[1], [0], [0], [1], [0, 0, 1, 1], [], []>} : vector<32x32xf32>, vector<32x8xf32>, vector<32x8xf32> -> vector<32x8xf32>
    %74 = arith.addf %70, %73 : vector<32x8xf32>
    %75 = vector.extract_strided_slice %40 {offsets = [0, 0], sizes = [8, 64], strides = [1, 1]} : vector<32x64xf32> to vector<8x64xf32>
    %cst_32 = arith.constant dense<0.000000e+00> : vector<32x64xf32>
    %76 = tpu.matmul %74, %75, %cst_32 {dimension_numbers = #tpu.dot_dimension_numbers<[1], [0], [0], [1], [0, 0, 1, 1], [], []>} : vector<32x8xf32>, vector<8x64xf32>, vector<32x64xf32> -> vector<32x64xf32>
    %77 = arith.addf %41, %76 : vector<32x64xf32>
    %78 = vector.extract_strided_slice %15 {offsets = [0, 8], sizes = [32, 8], strides = [1, 1]} : vector<32x32xf32> to vector<32x8xf32>
    %79 = vector.extract_strided_slice %22 {offsets = [8, 0], sizes = [8, 32], strides = [1, 1]} : vector<32x32xf32> to vector<8x32xf32>
    %cst_33 = arith.constant dense<0.000000e+00> : vector<32x32xf32>
    %80 = tpu.matmul %78, %79, %cst_33 {dimension_numbers = #tpu.dot_dimension_numbers<[1], [0], [0], [1], [0, 0, 1, 1], [], []>} : vector<32x8xf32>, vector<8x32xf32>, vector<32x32xf32> -> vector<32x32xf32>
    %81 = arith.mulf %34, %80 : vector<32x32xf32>
    %82 = vector.extract_strided_slice %29 {offsets = [8, 0], sizes = [8, 32], strides = [1, 1]} : vector<32x32xf32> to vector<8x32xf32>
    %cst_34 = arith.constant dense<0.000000e+00> : vector<32x32xf32>
    %83 = tpu.matmul %78, %82, %cst_34 {dimension_numbers = #tpu.dot_dimension_numbers<[1], [0], [0], [1], [0, 0, 1, 1], [], []>} : vector<32x8xf32>, vector<8x32xf32>, vector<32x32xf32> -> vector<32x32xf32>
    %84 = arith.mulf %36, %83 : vector<32x32xf32>
    %85 = arith.addf %81, %84 : vector<32x32xf32>
    %cst_35 = arith.constant -1.000000e+30 : f32
    %86 = vector.broadcast %cst_35 : f32 to vector<32x32xf32>
    %87 = arith.select %39, %85, %86 : vector<32x32xi1>, vector<32x32xf32>
    %cst_36 = arith.constant dense<0xFF800000> : vector<32xf32>
    %88 = vector.multi_reduction <maximumf>, %87, %cst_36 [1] : vector<32x32xf32> to vector<32xf32>
    %89 = vector.shape_cast %88 : vector<32xf32> to vector<32x1xf32>
    %90 = vector.broadcast %89 : vector<32x1xf32> to vector<32x32xf32>
    %91 = arith.subf %87, %90 : vector<32x32xf32>
    %92 = math.exp %91 : vector<32x32xf32>
    %cst_37 = arith.constant 0.000000e+00 : f32
    %93 = vector.broadcast %cst_37 : f32 to vector<32x32xf32>
    %94 = arith.select %39, %92, %93 : vector<32x32xi1>, vector<32x32xf32>
    %cst_38 = arith.constant dense<0.000000e+00> : vector<32xf32>
    %95 = vector.multi_reduction <add>, %94, %cst_38 [1] : vector<32x32xf32> to vector<32xf32>
    %96 = vector.shape_cast %95 : vector<32xf32> to vector<32x1xf32>
    %cst_39 = arith.constant 0.000000e+00 : f32
    %97 = vector.broadcast %cst_39 : f32 to vector<32x1xf32>
    %98 = arith.cmpf oeq, %96, %97 : vector<32x1xf32>
    %cst_40 = arith.constant 1.000000e+00 : f32
    %99 = vector.broadcast %cst_40 : f32 to vector<32x1xf32>
    %100 = arith.select %98, %99, %96 : vector<32x1xi1>, vector<32x1xf32>
    %101 = tpu.reciprocal %100 {approx = true} : vector<32x1xf32> -> vector<32x1xf32>
    %102 = vector.broadcast %101 : vector<32x1xf32> to vector<32x32xf32>
    %103 = arith.mulf %94, %102 : vector<32x32xf32>
    %104 = arith.mulf %103, %34 : vector<32x32xf32>
    %105 = vector.extract_strided_slice %25 {offsets = [0, 8], sizes = [32, 8], strides = [1, 1]} : vector<32x32xf32> to vector<32x8xf32>
    %cst_41 = arith.constant dense<0.000000e+00> : vector<32x8xf32>
    %106 = tpu.matmul %104, %105, %cst_41 {dimension_numbers = #tpu.dot_dimension_numbers<[1], [0], [0], [1], [0, 0, 1, 1], [], []>} : vector<32x32xf32>, vector<32x8xf32>, vector<32x8xf32> -> vector<32x8xf32>
    %107 = arith.mulf %103, %36 : vector<32x32xf32>
    %108 = vector.extract_strided_slice %32 {offsets = [0, 8], sizes = [32, 8], strides = [1, 1]} : vector<32x32xf32> to vector<32x8xf32>
    %cst_42 = arith.constant dense<0.000000e+00> : vector<32x8xf32>
    %109 = tpu.matmul %107, %108, %cst_42 {dimension_numbers = #tpu.dot_dimension_numbers<[1], [0], [0], [1], [0, 0, 1, 1], [], []>} : vector<32x32xf32>, vector<32x8xf32>, vector<32x8xf32> -> vector<32x8xf32>
    %110 = arith.addf %106, %109 : vector<32x8xf32>
    %111 = vector.extract_strided_slice %40 {offsets = [8, 0], sizes = [8, 64], strides = [1, 1]} : vector<32x64xf32> to vector<8x64xf32>
    %cst_43 = arith.constant dense<0.000000e+00> : vector<32x64xf32>
    %112 = tpu.matmul %110, %111, %cst_43 {dimension_numbers = #tpu.dot_dimension_numbers<[1], [0], [0], [1], [0, 0, 1, 1], [], []>} : vector<32x8xf32>, vector<8x64xf32>, vector<32x64xf32> -> vector<32x64xf32>
    %113 = arith.addf %77, %112 : vector<32x64xf32>
    %114 = vector.extract_strided_slice %15 {offsets = [0, 16], sizes = [32, 8], strides = [1, 1]} : vector<32x32xf32> to vector<32x8xf32>
    %115 = vector.extract_strided_slice %22 {offsets = [16, 0], sizes = [8, 32], strides = [1, 1]} : vector<32x32xf32> to vector<8x32xf32>
    %cst_44 = arith.constant dense<0.000000e+00> : vector<32x32xf32>
    %116 = tpu.matmul %114, %115, %cst_44 {dimension_numbers = #tpu.dot_dimension_numbers<[1], [0], [0], [1], [0, 0, 1, 1], [], []>} : vector<32x8xf32>, vector<8x32xf32>, vector<32x32xf32> -> vector<32x32xf32>
    %117 = arith.mulf %34, %116 : vector<32x32xf32>
    %118 = vector.extract_strided_slice %29 {offsets = [16, 0], sizes = [8, 32], strides = [1, 1]} : vector<32x32xf32> to vector<8x32xf32>
    %cst_45 = arith.constant dense<0.000000e+00> : vector<32x32xf32>
    %119 = tpu.matmul %114, %118, %cst_45 {dimension_numbers = #tpu.dot_dimension_numbers<[1], [0], [0], [1], [0, 0, 1, 1], [], []>} : vector<32x8xf32>, vector<8x32xf32>, vector<32x32xf32> -> vector<32x32xf32>
    %120 = arith.mulf %36, %119 : vector<32x32xf32>
    %121 = arith.addf %117, %120 : vector<32x32xf32>
    %cst_46 = arith.constant -1.000000e+30 : f32
    %122 = vector.broadcast %cst_46 : f32 to vector<32x32xf32>
    %123 = arith.select %39, %121, %122 : vector<32x32xi1>, vector<32x32xf32>
    %cst_47 = arith.constant dense<0xFF800000> : vector<32xf32>
    %124 = vector.multi_reduction <maximumf>, %123, %cst_47 [1] : vector<32x32xf32> to vector<32xf32>
    %125 = vector.shape_cast %124 : vector<32xf32> to vector<32x1xf32>
    %126 = vector.broadcast %125 : vector<32x1xf32> to vector<32x32xf32>
    %127 = arith.subf %123, %126 : vector<32x32xf32>
    %128 = math.exp %127 : vector<32x32xf32>
    %cst_48 = arith.constant 0.000000e+00 : f32
    %129 = vector.broadcast %cst_48 : f32 to vector<32x32xf32>
    %130 = arith.select %39, %128, %129 : vector<32x32xi1>, vector<32x32xf32>
    %cst_49 = arith.constant dense<0.000000e+00> : vector<32xf32>
    %131 = vector.multi_reduction <add>, %130, %cst_49 [1] : vector<32x32xf32> to vector<32xf32>
    %132 = vector.shape_cast %131 : vector<32xf32> to vector<32x1xf32>
    %cst_50 = arith.constant 0.000000e+00 : f32
    %133 = vector.broadcast %cst_50 : f32 to vector<32x1xf32>
    %134 = arith.cmpf oeq, %132, %133 : vector<32x1xf32>
    %cst_51 = arith.constant 1.000000e+00 : f32
    %135 = vector.broadcast %cst_51 : f32 to vector<32x1xf32>
    %136 = arith.select %134, %135, %132 : vector<32x1xi1>, vector<32x1xf32>
    %137 = tpu.reciprocal %136 {approx = true} : vector<32x1xf32> -> vector<32x1xf32>
    %138 = vector.broadcast %137 : vector<32x1xf32> to vector<32x32xf32>
    %139 = arith.mulf %130, %138 : vector<32x32xf32>
    %140 = arith.mulf %139, %34 : vector<32x32xf32>
    %141 = vector.extract_strided_slice %25 {offsets = [0, 16], sizes = [32, 8], strides = [1, 1]} : vector<32x32xf32> to vector<32x8xf32>
    %cst_52 = arith.constant dense<0.000000e+00> : vector<32x8xf32>
    %142 = tpu.matmul %140, %141, %cst_52 {dimension_numbers = #tpu.dot_dimension_numbers<[1], [0], [0], [1], [0, 0, 1, 1], [], []>} : vector<32x32xf32>, vector<32x8xf32>, vector<32x8xf32> -> vector<32x8xf32>
    %143 = arith.mulf %139, %36 : vector<32x32xf32>
    %144 = vector.extract_strided_slice %32 {offsets = [0, 16], sizes = [32, 8], strides = [1, 1]} : vector<32x32xf32> to vector<32x8xf32>
    %cst_53 = arith.constant dense<0.000000e+00> : vector<32x8xf32>
    %145 = tpu.matmul %143, %144, %cst_53 {dimension_numbers = #tpu.dot_dimension_numbers<[1], [0], [0], [1], [0, 0, 1, 1], [], []>} : vector<32x32xf32>, vector<32x8xf32>, vector<32x8xf32> -> vector<32x8xf32>
    %146 = arith.addf %142, %145 : vector<32x8xf32>
    %147 = vector.extract_strided_slice %40 {offsets = [16, 0], sizes = [8, 64], strides = [1, 1]} : vector<32x64xf32> to vector<8x64xf32>
    %cst_54 = arith.constant dense<0.000000e+00> : vector<32x64xf32>
    %148 = tpu.matmul %146, %147, %cst_54 {dimension_numbers = #tpu.dot_dimension_numbers<[1], [0], [0], [1], [0, 0, 1, 1], [], []>} : vector<32x8xf32>, vector<8x64xf32>, vector<32x64xf32> -> vector<32x64xf32>
    %149 = arith.addf %113, %148 : vector<32x64xf32>
    %150 = vector.extract_strided_slice %15 {offsets = [0, 24], sizes = [32, 8], strides = [1, 1]} : vector<32x32xf32> to vector<32x8xf32>
    %151 = vector.extract_strided_slice %22 {offsets = [24, 0], sizes = [8, 32], strides = [1, 1]} : vector<32x32xf32> to vector<8x32xf32>
    %cst_55 = arith.constant dense<0.000000e+00> : vector<32x32xf32>
    %152 = tpu.matmul %150, %151, %cst_55 {dimension_numbers = #tpu.dot_dimension_numbers<[1], [0], [0], [1], [0, 0, 1, 1], [], []>} : vector<32x8xf32>, vector<8x32xf32>, vector<32x32xf32> -> vector<32x32xf32>
    %153 = arith.mulf %34, %152 : vector<32x32xf32>
    %154 = vector.extract_strided_slice %29 {offsets = [24, 0], sizes = [8, 32], strides = [1, 1]} : vector<32x32xf32> to vector<8x32xf32>
    %cst_56 = arith.constant dense<0.000000e+00> : vector<32x32xf32>
    %155 = tpu.matmul %150, %154, %cst_56 {dimension_numbers = #tpu.dot_dimension_numbers<[1], [0], [0], [1], [0, 0, 1, 1], [], []>} : vector<32x8xf32>, vector<8x32xf32>, vector<32x32xf32> -> vector<32x32xf32>
    %156 = arith.mulf %36, %155 : vector<32x32xf32>
    %157 = arith.addf %153, %156 : vector<32x32xf32>
    %cst_57 = arith.constant -1.000000e+30 : f32
    %158 = vector.broadcast %cst_57 : f32 to vector<32x32xf32>
    %159 = arith.select %39, %157, %158 : vector<32x32xi1>, vector<32x32xf32>
    %cst_58 = arith.constant dense<0xFF800000> : vector<32xf32>
    %160 = vector.multi_reduction <maximumf>, %159, %cst_58 [1] : vector<32x32xf32> to vector<32xf32>
    %161 = vector.shape_cast %160 : vector<32xf32> to vector<32x1xf32>
    %162 = vector.broadcast %161 : vector<32x1xf32> to vector<32x32xf32>
    %163 = arith.subf %159, %162 : vector<32x32xf32>
    %164 = math.exp %163 : vector<32x32xf32>
    %cst_59 = arith.constant 0.000000e+00 : f32
    %165 = vector.broadcast %cst_59 : f32 to vector<32x32xf32>
    %166 = arith.select %39, %164, %165 : vector<32x32xi1>, vector<32x32xf32>
    %cst_60 = arith.constant dense<0.000000e+00> : vector<32xf32>
    %167 = vector.multi_reduction <add>, %166, %cst_60 [1] : vector<32x32xf32> to vector<32xf32>
    %168 = vector.shape_cast %167 : vector<32xf32> to vector<32x1xf32>
    %cst_61 = arith.constant 0.000000e+00 : f32
    %169 = vector.broadcast %cst_61 : f32 to vector<32x1xf32>
    %170 = arith.cmpf oeq, %168, %169 : vector<32x1xf32>
    %cst_62 = arith.constant 1.000000e+00 : f32
    %171 = vector.broadcast %cst_62 : f32 to vector<32x1xf32>
    %172 = arith.select %170, %171, %168 : vector<32x1xi1>, vector<32x1xf32>
    %173 = tpu.reciprocal %172 {approx = true} : vector<32x1xf32> -> vector<32x1xf32>
    %174 = vector.broadcast %173 : vector<32x1xf32> to vector<32x32xf32>
    %175 = arith.mulf %166, %174 : vector<32x32xf32>
    %176 = arith.mulf %175, %34 : vector<32x32xf32>
    %177 = vector.extract_strided_slice %25 {offsets = [0, 24], sizes = [32, 8], strides = [1, 1]} : vector<32x32xf32> to vector<32x8xf32>
    %cst_63 = arith.constant dense<0.000000e+00> : vector<32x8xf32>
    %178 = tpu.matmul %176, %177, %cst_63 {dimension_numbers = #tpu.dot_dimension_numbers<[1], [0], [0], [1], [0, 0, 1, 1], [], []>} : vector<32x32xf32>, vector<32x8xf32>, vector<32x8xf32> -> vector<32x8xf32>
    %179 = arith.mulf %175, %36 : vector<32x32xf32>
    %180 = vector.extract_strided_slice %32 {offsets = [0, 24], sizes = [32, 8], strides = [1, 1]} : vector<32x32xf32> to vector<32x8xf32>
    %cst_64 = arith.constant dense<0.000000e+00> : vector<32x8xf32>
    %181 = tpu.matmul %179, %180, %cst_64 {dimension_numbers = #tpu.dot_dimension_numbers<[1], [0], [0], [1], [0, 0, 1, 1], [], []>} : vector<32x32xf32>, vector<32x8xf32>, vector<32x8xf32> -> vector<32x8xf32>
    %182 = arith.addf %178, %181 : vector<32x8xf32>
    %183 = vector.extract_strided_slice %40 {offsets = [24, 0], sizes = [8, 64], strides = [1, 1]} : vector<32x64xf32> to vector<8x64xf32>
    %cst_65 = arith.constant dense<0.000000e+00> : vector<32x64xf32>
    %184 = tpu.matmul %182, %183, %cst_65 {dimension_numbers = #tpu.dot_dimension_numbers<[1], [0], [0], [1], [0, 0, 1, 1], [], []>} : vector<32x8xf32>, vector<8x64xf32>, vector<32x64xf32> -> vector<32x64xf32>
    %185 = arith.addf %149, %184 : vector<32x64xf32>
    %186 = vector.extract_strided_slice %1 {offsets = [0, 0], sizes = [32, 1], strides = [1, 1]} : vector<32x2xf32> to vector<32x1xf32>
    %187 = vector.extract_strided_slice %185 {offsets = [0, 0], sizes = [32, 32], strides = [1, 1]} : vector<32x64xf32> to vector<32x32xf32>
    %188 = vector.broadcast %186 : vector<32x1xf32> to vector<32x32xf32>
    %189 = arith.mulf %188, %187 : vector<32x32xf32>
    %190 = vector.extract_strided_slice %1 {offsets = [0, 1], sizes = [32, 1], strides = [1, 1]} : vector<32x2xf32> to vector<32x1xf32>
    %191 = vector.extract_strided_slice %185 {offsets = [0, 32], sizes = [32, 32], strides = [1, 1]} : vector<32x64xf32> to vector<32x32xf32>
    %192 = vector.broadcast %190 : vector<32x1xf32> to vector<32x32xf32>
    %193 = arith.mulf %192, %191 : vector<32x32xf32>
    %194 = arith.addf %189, %193 : vector<32x32xf32>
    %c0_66 = arith.constant 0 : index
    %c0_67 = arith.constant 0 : index
    %195 = vector.load %arg13[%c0_66, %c0_67] : memref<2x1xf32, #tpu.memory_space<vmem>>, vector<2x1xf32>
    %cst_68 = arith.constant dense<0.000000e+00> : vector<32x1xf32>
    %196 = tpu.matmul %1, %195, %cst_68 {dimension_numbers = #tpu.dot_dimension_numbers<[1], [0], [0], [1], [0, 0, 1, 1], [], []>} : vector<32x2xf32>, vector<2x1xf32>, vector<32x1xf32> -> vector<32x1xf32>
    %cst_69 = arith.constant 0.000000e+00 : f32
    %197 = vector.broadcast %cst_69 : f32 to vector<32x1xf32>
    %198 = arith.subf %197, %196 : vector<32x1xf32>
    %199 = math.exp %198 : vector<32x1xf32>
    %cst_70 = arith.constant 1.000000e+00 : f32
    %200 = vector.broadcast %cst_70 : f32 to vector<32x1xf32>
    %201 = arith.addf %200, %199 : vector<32x1xf32>
    %cst_71 = arith.constant 1.000000e+00 : f32
    %202 = vector.broadcast %cst_71 : f32 to vector<32x1xf32>
    %203 = arith.divf %202, %201 : vector<32x1xf32>
    %204 = vector.broadcast %203 : vector<32x1xf32> to vector<32x32xf32>
    %205 = arith.mulf %194, %204 : vector<32x32xf32>
    %cst_72 = arith.constant 1.000000e+00 : f32
    %206 = vector.broadcast %cst_72 : f32 to vector<32x1xf32>
    %207 = arith.subf %206, %203 : vector<32x1xf32>
    %208 = vector.broadcast %207 : vector<32x1xf32> to vector<32x32xf32>
    %209 = arith.mulf %0, %208 : vector<32x32xf32>
    %210 = arith.addf %205, %209 : vector<32x32xf32>
    %c0_73 = arith.constant 0 : index
    %c0_74 = arith.constant 0 : index
    %211 = vector.load %arg14[%c0_73, %c0_74] : memref<32x96xf32, #tpu.memory_space<vmem>>, vector<32x96xf32>
    %cst_75 = arith.constant dense<0.000000e+00> : vector<32x96xf32>
    %212 = tpu.matmul %210, %211, %cst_75 {dimension_numbers = #tpu.dot_dimension_numbers<[1], [0], [0], [1], [0, 0, 1, 1], [], []>} : vector<32x32xf32>, vector<32x96xf32>, vector<32x96xf32> -> vector<32x96xf32>
    %213 = vector.extract_strided_slice %1 {offsets = [0, 0], sizes = [32, 1], strides = [1, 1]} : vector<32x2xf32> to vector<32x1xf32>
    %214 = vector.extract_strided_slice %212 {offsets = [0, 0], sizes = [32, 48], strides = [1, 1]} : vector<32x96xf32> to vector<32x48xf32>
    %215 = vector.broadcast %213 : vector<32x1xf32> to vector<32x48xf32>
    %216 = arith.mulf %215, %214 : vector<32x48xf32>
    %217 = vector.extract_strided_slice %1 {offsets = [0, 1], sizes = [32, 1], strides = [1, 1]} : vector<32x2xf32> to vector<32x1xf32>
    %218 = vector.extract_strided_slice %212 {offsets = [0, 48], sizes = [32, 48], strides = [1, 1]} : vector<32x96xf32> to vector<32x48xf32>
    %219 = vector.broadcast %217 : vector<32x1xf32> to vector<32x48xf32>
    %220 = arith.mulf %219, %218 : vector<32x48xf32>
    %221 = arith.addf %216, %220 : vector<32x48xf32>
    %222 = vector.extract_strided_slice %221 {offsets = [0, 0], sizes = [32, 16], strides = [1, 1]} : vector<32x48xf32> to vector<32x16xf32>
    %223 = vector.extract_strided_slice %221 {offsets = [0, 16], sizes = [32, 16], strides = [1, 1]} : vector<32x48xf32> to vector<32x16xf32>
    %224 = vector.extract_strided_slice %221 {offsets = [0, 32], sizes = [32, 16], strides = [1, 1]} : vector<32x48xf32> to vector<32x16xf32>
    %c0_76 = arith.constant 0 : index
    %c0_77 = arith.constant 0 : index
    %c0_78 = arith.constant 0 : index
    %225 = vector.load %arg15[%c0_76, %c0_77, %c0_78] : memref<2x16x16xf32, #tpu.memory_space<vmem>>, vector<2x16x16xf32>
    %c0_79 = arith.constant 0 : index
    %c0_80 = arith.constant 0 : index
    %c0_81 = arith.constant 0 : index
    %226 = vector.load %arg16[%c0_79, %c0_80, %c0_81] : memref<2x16x16xf32, #tpu.memory_space<vmem>>, vector<2x16x16xf32>
    %227 = vector.extract_strided_slice %225 {offsets = [0, 0, 0], sizes = [1, 16, 16], strides = [1, 1, 1]} : vector<2x16x16xf32> to vector<1x16x16xf32>
    %228 = vector.shape_cast %227 : vector<1x16x16xf32> to vector<16x16xf32>
    %cst_82 = arith.constant dense<0.000000e+00> : vector<32x16xf32>
    %229 = tpu.matmul %222, %228, %cst_82 {dimension_numbers = #tpu.dot_dimension_numbers<[1], [0], [0], [1], [0, 0, 1, 1], [], []>} : vector<32x16xf32>, vector<16x16xf32>, vector<32x16xf32> -> vector<32x16xf32>
    %230 = tpu.transpose %229, [1, 0] : vector<32x16xf32> -> vector<16x32xf32>
    %231 = vector.extract_strided_slice %226 {offsets = [0, 0, 0], sizes = [1, 16, 16], strides = [1, 1, 1]} : vector<2x16x16xf32> to vector<1x16x16xf32>
    %232 = vector.shape_cast %231 : vector<1x16x16xf32> to vector<16x16xf32>
    %cst_83 = arith.constant dense<0.000000e+00> : vector<32x16xf32>
    %233 = tpu.matmul %224, %232, %cst_83 {dimension_numbers = #tpu.dot_dimension_numbers<[1], [0], [0], [1], [0, 0, 1, 1], [], []>} : vector<32x16xf32>, vector<16x16xf32>, vector<32x16xf32> -> vector<32x16xf32>
    %234 = vector.extract_strided_slice %225 {offsets = [1, 0, 0], sizes = [1, 16, 16], strides = [1, 1, 1]} : vector<2x16x16xf32> to vector<1x16x16xf32>
    %235 = vector.shape_cast %234 : vector<1x16x16xf32> to vector<16x16xf32>
    %cst_84 = arith.constant dense<0.000000e+00> : vector<32x16xf32>
    %236 = tpu.matmul %222, %235, %cst_84 {dimension_numbers = #tpu.dot_dimension_numbers<[1], [0], [0], [1], [0, 0, 1, 1], [], []>} : vector<32x16xf32>, vector<16x16xf32>, vector<32x16xf32> -> vector<32x16xf32>
    %237 = tpu.transpose %236, [1, 0] : vector<32x16xf32> -> vector<16x32xf32>
    %238 = vector.extract_strided_slice %226 {offsets = [1, 0, 0], sizes = [1, 16, 16], strides = [1, 1, 1]} : vector<2x16x16xf32> to vector<1x16x16xf32>
    %239 = vector.shape_cast %238 : vector<1x16x16xf32> to vector<16x16xf32>
    %cst_85 = arith.constant dense<0.000000e+00> : vector<32x16xf32>
    %240 = tpu.matmul %224, %239, %cst_85 {dimension_numbers = #tpu.dot_dimension_numbers<[1], [0], [0], [1], [0, 0, 1, 1], [], []>} : vector<32x16xf32>, vector<16x16xf32>, vector<32x16xf32> -> vector<32x16xf32>
    %241 = vector.extract_strided_slice %2 {offsets = [0, 0, 0], sizes = [1, 32, 32], strides = [1, 1, 1]} : vector<2x32x32xf32> to vector<1x32x32xf32>
    %242 = vector.shape_cast %241 : vector<1x32x32xf32> to vector<32x32xf32>
    %243 = vector.extract_strided_slice %2 {offsets = [1, 0, 0], sizes = [1, 32, 32], strides = [1, 1, 1]} : vector<2x32x32xf32> to vector<1x32x32xf32>
    %244 = vector.shape_cast %243 : vector<1x32x32xf32> to vector<32x32xf32>
    %245 = arith.addf %242, %244 : vector<32x32xf32>
    %cst_86 = arith.constant 0.000000e+00 : f32
    %246 = vector.broadcast %cst_86 : f32 to vector<32x32xf32>
    %247 = arith.cmpf ogt, %245, %246 : vector<32x32xf32>
    %c0_87 = arith.constant 0 : index
    %c0_88 = arith.constant 0 : index
    %248 = vector.load %arg17[%c0_87, %c0_88] : memref<16x32xf32, #tpu.memory_space<vmem>>, vector<16x32xf32>
    %cst_89 = arith.constant 0.000000e+00 : f32
    %249 = vector.broadcast %cst_89 : f32 to vector<32x32xf32>
    %cst_90 = arith.constant dense<0.000000e+00> : vector<32x32xf32>
    %250 = tpu.matmul %223, %230, %cst_90 {dimension_numbers = #tpu.dot_dimension_numbers<[1], [0], [0], [1], [0, 0, 1, 1], [], []>} : vector<32x16xf32>, vector<16x32xf32>, vector<32x32xf32> -> vector<32x32xf32>
    %251 = arith.mulf %242, %250 : vector<32x32xf32>
    %cst_91 = arith.constant dense<0.000000e+00> : vector<32x32xf32>
    %252 = tpu.matmul %223, %237, %cst_91 {dimension_numbers = #tpu.dot_dimension_numbers<[1], [0], [0], [1], [0, 0, 1, 1], [], []>} : vector<32x16xf32>, vector<16x32xf32>, vector<32x32xf32> -> vector<32x32xf32>
    %253 = arith.mulf %244, %252 : vector<32x32xf32>
    %254 = arith.addf %251, %253 : vector<32x32xf32>
    %cst_92 = arith.constant -1.000000e+30 : f32
    %255 = vector.broadcast %cst_92 : f32 to vector<32x32xf32>
    %256 = arith.select %247, %254, %255 : vector<32x32xi1>, vector<32x32xf32>
    %cst_93 = arith.constant dense<0xFF800000> : vector<32xf32>
    %257 = vector.multi_reduction <maximumf>, %256, %cst_93 [1] : vector<32x32xf32> to vector<32xf32>
    %258 = vector.shape_cast %257 : vector<32xf32> to vector<32x1xf32>
    %259 = vector.broadcast %258 : vector<32x1xf32> to vector<32x32xf32>
    %260 = arith.subf %256, %259 : vector<32x32xf32>
    %261 = math.exp %260 : vector<32x32xf32>
    %cst_94 = arith.constant 0.000000e+00 : f32
    %262 = vector.broadcast %cst_94 : f32 to vector<32x32xf32>
    %263 = arith.select %247, %261, %262 : vector<32x32xi1>, vector<32x32xf32>
    %cst_95 = arith.constant dense<0.000000e+00> : vector<32xf32>
    %264 = vector.multi_reduction <add>, %263, %cst_95 [1] : vector<32x32xf32> to vector<32xf32>
    %265 = vector.shape_cast %264 : vector<32xf32> to vector<32x1xf32>
    %cst_96 = arith.constant 0.000000e+00 : f32
    %266 = vector.broadcast %cst_96 : f32 to vector<32x1xf32>
    %267 = arith.cmpf oeq, %265, %266 : vector<32x1xf32>
    %cst_97 = arith.constant 1.000000e+00 : f32
    %268 = vector.broadcast %cst_97 : f32 to vector<32x1xf32>
    %269 = arith.select %267, %268, %265 : vector<32x1xi1>, vector<32x1xf32>
    %270 = tpu.reciprocal %269 {approx = true} : vector<32x1xf32> -> vector<32x1xf32>
    %271 = vector.broadcast %270 : vector<32x1xf32> to vector<32x32xf32>
    %272 = arith.mulf %263, %271 : vector<32x32xf32>
    %273 = arith.mulf %272, %242 : vector<32x32xf32>
    %cst_98 = arith.constant dense<0.000000e+00> : vector<32x16xf32>
    %274 = tpu.matmul %273, %233, %cst_98 {dimension_numbers = #tpu.dot_dimension_numbers<[1], [0], [0], [1], [0, 0, 1, 1], [], []>} : vector<32x32xf32>, vector<32x16xf32>, vector<32x16xf32> -> vector<32x16xf32>
    %275 = arith.mulf %272, %244 : vector<32x32xf32>
    %cst_99 = arith.constant dense<0.000000e+00> : vector<32x16xf32>
    %276 = tpu.matmul %275, %240, %cst_99 {dimension_numbers = #tpu.dot_dimension_numbers<[1], [0], [0], [1], [0, 0, 1, 1], [], []>} : vector<32x32xf32>, vector<32x16xf32>, vector<32x16xf32> -> vector<32x16xf32>
    %277 = arith.addf %274, %276 : vector<32x16xf32>
    %cst_100 = arith.constant dense<0.000000e+00> : vector<32x32xf32>
    %278 = tpu.matmul %277, %248, %cst_100 {dimension_numbers = #tpu.dot_dimension_numbers<[1], [0], [0], [1], [0, 0, 1, 1], [], []>} : vector<32x16xf32>, vector<16x32xf32>, vector<32x32xf32> -> vector<32x32xf32>
    %279 = arith.addf %249, %278 : vector<32x32xf32>
    %280 = vector.extract_strided_slice %1 {offsets = [0, 0], sizes = [32, 1], strides = [1, 1]} : vector<32x2xf32> to vector<32x1xf32>
    %281 = vector.extract_strided_slice %279 {offsets = [0, 0], sizes = [32, 16], strides = [1, 1]} : vector<32x32xf32> to vector<32x16xf32>
    %282 = vector.broadcast %280 : vector<32x1xf32> to vector<32x16xf32>
    %283 = arith.mulf %282, %281 : vector<32x16xf32>
    %284 = vector.extract_strided_slice %1 {offsets = [0, 1], sizes = [32, 1], strides = [1, 1]} : vector<32x2xf32> to vector<32x1xf32>
    %285 = vector.extract_strided_slice %279 {offsets = [0, 16], sizes = [32, 16], strides = [1, 1]} : vector<32x32xf32> to vector<32x16xf32>
    %286 = vector.broadcast %284 : vector<32x1xf32> to vector<32x16xf32>
    %287 = arith.mulf %286, %285 : vector<32x16xf32>
    %288 = arith.addf %283, %287 : vector<32x16xf32>
    %c0_101 = arith.constant 0 : index
    %c0_102 = arith.constant 0 : index
    %289 = vector.load %arg18[%c0_101, %c0_102] : memref<2x1xf32, #tpu.memory_space<vmem>>, vector<2x1xf32>
    %cst_103 = arith.constant dense<0.000000e+00> : vector<32x1xf32>
    %290 = tpu.matmul %1, %289, %cst_103 {dimension_numbers = #tpu.dot_dimension_numbers<[1], [0], [0], [1], [0, 0, 1, 1], [], []>} : vector<32x2xf32>, vector<2x1xf32>, vector<32x1xf32> -> vector<32x1xf32>
    %cst_104 = arith.constant 0.000000e+00 : f32
    %291 = vector.broadcast %cst_104 : f32 to vector<32x1xf32>
    %292 = arith.subf %291, %290 : vector<32x1xf32>
    %293 = math.exp %292 : vector<32x1xf32>
    %cst_105 = arith.constant 1.000000e+00 : f32
    %294 = vector.broadcast %cst_105 : f32 to vector<32x1xf32>
    %295 = arith.addf %294, %293 : vector<32x1xf32>
    %cst_106 = arith.constant 1.000000e+00 : f32
    %296 = vector.broadcast %cst_106 : f32 to vector<32x1xf32>
    %297 = arith.divf %296, %295 : vector<32x1xf32>
    %298 = vector.broadcast %297 : vector<32x1xf32> to vector<32x16xf32>
    %299 = arith.mulf %288, %298 : vector<32x16xf32>
    %300 = vector.extract_strided_slice %299 {offsets = [0, 0], sizes = [16, 16], strides = [1, 1]} : vector<32x16xf32> to vector<16x16xf32>
    %c0_107 = arith.constant 0 : index
    %c0_108 = arith.constant 0 : index
    %301 = vector.load %arg3[%c0_107, %c0_108] : memref<16x32xf32, #tpu.memory_space<vmem>>, vector<16x32xf32>
    %c0_109 = arith.constant 0 : index
    %c0_110 = arith.constant 0 : index
    %302 = vector.load %arg30[%c0_109, %c0_110] : memref<32x48xf32, #tpu.memory_space<vmem>>, vector<16x32xf32>
    tpu.vector_store %arg30[%c0_109, %c0_110], %301 {strides = array<i32>} : memref<32x48xf32, #tpu.memory_space<vmem>>, vector<16x32xf32>,
    %c0_111 = arith.constant 0 : index
    %c32 = arith.constant 32 : index
    %303 = vector.load %arg30[%c0_111, %c32] : memref<32x48xf32, #tpu.memory_space<vmem>>, vector<16x16xf32>
    tpu.vector_store %arg30[%c0_111, %c32], %300 {strides = array<i32>} : memref<32x48xf32, #tpu.memory_space<vmem>>, vector<16x16xf32>,
    %c0_112 = arith.constant 0 : index
    %c0_113 = arith.constant 0 : index
    %304 = vector.load %arg4[%c0_112, %c0_113] : memref<16x24xf32, #tpu.memory_space<vmem>>, vector<16x24xf32>
    %c0_114 = arith.constant 0 : index
    %c0_115 = arith.constant 0 : index
    %305 = vector.load %arg7[%c0_114, %c0_115] : memref<24x48xf32, #tpu.memory_space<vmem>>, vector<24x48xf32>
    %cst_116 = arith.constant dense<0.000000e+00> : vector<16x48xf32>
    %306 = tpu.matmul %304, %305, %cst_116 {dimension_numbers = #tpu.dot_dimension_numbers<[1], [0], [0], [1], [0, 0, 1, 1], [], []>} : vector<16x24xf32>, vector<24x48xf32>, vector<16x48xf32> -> vector<16x48xf32>
    %c0_117 = arith.constant 0 : index
    %c0_118 = arith.constant 0 : index
    %307 = vector.load %arg8[%c0_117, %c0_118] : memref<1x48xf32, #tpu.memory_space<vmem>>, vector<1x48xf32>
    %308 = vector.broadcast %307 : vector<1x48xf32> to vector<16x48xf32>
    %309 = arith.addf %306, %308 : vector<16x48xf32>
    %c16 = arith.constant 16 : index
    %c0_119 = arith.constant 0 : index
    %310 = vector.load %arg30[%c16, %c0_119] : memref<32x48xf32, #tpu.memory_space<vmem>>, vector<16x48xf32>
    tpu.vector_store %arg30[%c16, %c0_119], %309 {strides = array<i32>} : memref<32x48xf32, #tpu.memory_space<vmem>>, vector<16x48xf32>,
    %c0_120 = arith.constant 0 : index
    %c0_121 = arith.constant 0 : index
    %311 = vector.load %arg30[%c0_120, %c0_121] : memref<32x48xf32, #tpu.memory_space<vmem>>, vector<32x48xf32>
    %c0_122 = arith.constant 0 : index
    %c0_123 = arith.constant 0 : index
    %312 = vector.load %arg5[%c0_122, %c0_123] : memref<32x2xf32, #tpu.memory_space<vmem>>, vector<32x2xf32>
    %c0_124 = arith.constant 0 : index
    %c0_125 = arith.constant 0 : index
    %c0_126 = arith.constant 0 : index
    %313 = vector.load %arg6[%c0_124, %c0_125, %c0_126] : memref<2x32x32xf32, #tpu.memory_space<vmem>>, vector<2x32x32xf32>
    %c0_127 = arith.constant 0 : index
    %c0_128 = arith.constant 0 : index
    %314 = vector.load %arg19[%c0_127, %c0_128] : memref<48x192xf32, #tpu.memory_space<vmem>>, vector<48x192xf32>
    %cst_129 = arith.constant dense<0.000000e+00> : vector<32x192xf32>
    %315 = tpu.matmul %311, %314, %cst_129 {dimension_numbers = #tpu.dot_dimension_numbers<[1], [0], [0], [1], [0, 0, 1, 1], [], []>} : vector<32x48xf32>, vector<48x192xf32>, vector<32x192xf32> -> vector<32x192xf32>
    %316 = vector.extract_strided_slice %312 {offsets = [0, 0], sizes = [32, 1], strides = [1, 1]} : vector<32x2xf32> to vector<32x1xf32>
    %317 = vector.extract_strided_slice %315 {offsets = [0, 0], sizes = [32, 96], strides = [1, 1]} : vector<32x192xf32> to vector<32x96xf32>
    %318 = vector.broadcast %316 : vector<32x1xf32> to vector<32x96xf32>
    %319 = arith.mulf %318, %317 : vector<32x96xf32>
    %320 = vector.extract_strided_slice %312 {offsets = [0, 1], sizes = [32, 1], strides = [1, 1]} : vector<32x2xf32> to vector<32x1xf32>
    %321 = vector.extract_strided_slice %315 {offsets = [0, 96], sizes = [32, 96], strides = [1, 1]} : vector<32x192xf32> to vector<32x96xf32>
    %322 = vector.broadcast %320 : vector<32x1xf32> to vector<32x96xf32>
    %323 = arith.mulf %322, %321 : vector<32x96xf32>
    %324 = arith.addf %319, %323 : vector<32x96xf32>
    %325 = vector.extract_strided_slice %324 {offsets = [0, 0], sizes = [32, 32], strides = [1, 1]} : vector<32x96xf32> to vector<32x32xf32>
    %326 = vector.extract_strided_slice %324 {offsets = [0, 32], sizes = [32, 32], strides = [1, 1]} : vector<32x96xf32> to vector<32x32xf32>
    %327 = vector.extract_strided_slice %324 {offsets = [0, 64], sizes = [32, 32], strides = [1, 1]} : vector<32x96xf32> to vector<32x32xf32>
    %c0_130 = arith.constant 0 : index
    %c0_131 = arith.constant 0 : index
    %c0_132 = arith.constant 0 : index
    %328 = vector.load %arg20[%c0_130, %c0_131, %c0_132] : memref<2x32x32xf32, #tpu.memory_space<vmem>>, vector<2x32x32xf32>
    %c0_133 = arith.constant 0 : index
    %c0_134 = arith.constant 0 : index
    %c0_135 = arith.constant 0 : index
    %329 = vector.load %arg21[%c0_133, %c0_134, %c0_135] : memref<2x32x32xf32, #tpu.memory_space<vmem>>, vector<2x32x32xf32>
    %330 = vector.extract_strided_slice %328 {offsets = [0, 0, 0], sizes = [1, 32, 32], strides = [1, 1, 1]} : vector<2x32x32xf32> to vector<1x32x32xf32>
    %331 = vector.shape_cast %330 : vector<1x32x32xf32> to vector<32x32xf32>
    %cst_136 = arith.constant dense<0.000000e+00> : vector<32x32xf32>
    %332 = tpu.matmul %325, %331, %cst_136 {dimension_numbers = #tpu.dot_dimension_numbers<[1], [0], [0], [1], [0, 0, 1, 1], [], []>} : vector<32x32xf32>, vector<32x32xf32>, vector<32x32xf32> -> vector<32x32xf32>
    %333 = tpu.transpose %332, [1, 0] : vector<32x32xf32> -> vector<32x32xf32>
    %334 = vector.extract_strided_slice %329 {offsets = [0, 0, 0], sizes = [1, 32, 32], strides = [1, 1, 1]} : vector<2x32x32xf32> to vector<1x32x32xf32>
    %335 = vector.shape_cast %334 : vector<1x32x32xf32> to vector<32x32xf32>
    %cst_137 = arith.constant dense<0.000000e+00> : vector<32x32xf32>
    %336 = tpu.matmul %327, %335, %cst_137 {dimension_numbers = #tpu.dot_dimension_numbers<[1], [0], [0], [1], [0, 0, 1, 1], [], []>} : vector<32x32xf32>, vector<32x32xf32>, vector<32x32xf32> -> vector<32x32xf32>
    %337 = vector.extract_strided_slice %328 {offsets = [1, 0, 0], sizes = [1, 32, 32], strides = [1, 1, 1]} : vector<2x32x32xf32> to vector<1x32x32xf32>
    %338 = vector.shape_cast %337 : vector<1x32x32xf32> to vector<32x32xf32>
    %cst_138 = arith.constant dense<0.000000e+00> : vector<32x32xf32>
    %339 = tpu.matmul %325, %338, %cst_138 {dimension_numbers = #tpu.dot_dimension_numbers<[1], [0], [0], [1], [0, 0, 1, 1], [], []>} : vector<32x32xf32>, vector<32x32xf32>, vector<32x32xf32> -> vector<32x32xf32>
    %340 = tpu.transpose %339, [1, 0] : vector<32x32xf32> -> vector<32x32xf32>
    %341 = vector.extract_strided_slice %329 {offsets = [1, 0, 0], sizes = [1, 32, 32], strides = [1, 1, 1]} : vector<2x32x32xf32> to vector<1x32x32xf32>
    %342 = vector.shape_cast %341 : vector<1x32x32xf32> to vector<32x32xf32>
    %cst_139 = arith.constant dense<0.000000e+00> : vector<32x32xf32>
    %343 = tpu.matmul %327, %342, %cst_139 {dimension_numbers = #tpu.dot_dimension_numbers<[1], [0], [0], [1], [0, 0, 1, 1], [], []>} : vector<32x32xf32>, vector<32x32xf32>, vector<32x32xf32> -> vector<32x32xf32>
    %344 = vector.extract_strided_slice %313 {offsets = [0, 0, 0], sizes = [1, 32, 32], strides = [1, 1, 1]} : vector<2x32x32xf32> to vector<1x32x32xf32>
    %345 = vector.shape_cast %344 : vector<1x32x32xf32> to vector<32x32xf32>
    %346 = vector.extract_strided_slice %313 {offsets = [1, 0, 0], sizes = [1, 32, 32], strides = [1, 1, 1]} : vector<2x32x32xf32> to vector<1x32x32xf32>
    %347 = vector.shape_cast %346 : vector<1x32x32xf32> to vector<32x32xf32>
    %348 = arith.addf %345, %347 : vector<32x32xf32>
    %cst_140 = arith.constant 0.000000e+00 : f32
    %349 = vector.broadcast %cst_140 : f32 to vector<32x32xf32>
    %350 = arith.cmpf ogt, %348, %349 : vector<32x32xf32>
    %c0_141 = arith.constant 0 : index
    %c0_142 = arith.constant 0 : index
    %351 = vector.load %arg22[%c0_141, %c0_142] : memref<32x64xf32, #tpu.memory_space<vmem>>, vector<32x64xf32>
    %cst_143 = arith.constant 0.000000e+00 : f32
    %352 = vector.broadcast %cst_143 : f32 to vector<32x64xf32>
    %353 = vector.extract_strided_slice %326 {offsets = [0, 0], sizes = [32, 8], strides = [1, 1]} : vector<32x32xf32> to vector<32x8xf32>
    %354 = vector.extract_strided_slice %333 {offsets = [0, 0], sizes = [8, 32], strides = [1, 1]} : vector<32x32xf32> to vector<8x32xf32>
    %cst_144 = arith.constant dense<0.000000e+00> : vector<32x32xf32>
    %355 = tpu.matmul %353, %354, %cst_144 {dimension_numbers = #tpu.dot_dimension_numbers<[1], [0], [0], [1], [0, 0, 1, 1], [], []>} : vector<32x8xf32>, vector<8x32xf32>, vector<32x32xf32> -> vector<32x32xf32>
    %356 = arith.mulf %345, %355 : vector<32x32xf32>
    %357 = vector.extract_strided_slice %340 {offsets = [0, 0], sizes = [8, 32], strides = [1, 1]} : vector<32x32xf32> to vector<8x32xf32>
    %cst_145 = arith.constant dense<0.000000e+00> : vector<32x32xf32>
    %358 = tpu.matmul %353, %357, %cst_145 {dimension_numbers = #tpu.dot_dimension_numbers<[1], [0], [0], [1], [0, 0, 1, 1], [], []>} : vector<32x8xf32>, vector<8x32xf32>, vector<32x32xf32> -> vector<32x32xf32>
    %359 = arith.mulf %347, %358 : vector<32x32xf32>
    %360 = arith.addf %356, %359 : vector<32x32xf32>
    %cst_146 = arith.constant -1.000000e+30 : f32
    %361 = vector.broadcast %cst_146 : f32 to vector<32x32xf32>
    %362 = arith.select %350, %360, %361 : vector<32x32xi1>, vector<32x32xf32>
    %cst_147 = arith.constant dense<0xFF800000> : vector<32xf32>
    %363 = vector.multi_reduction <maximumf>, %362, %cst_147 [1] : vector<32x32xf32> to vector<32xf32>
    %364 = vector.shape_cast %363 : vector<32xf32> to vector<32x1xf32>
    %365 = vector.broadcast %364 : vector<32x1xf32> to vector<32x32xf32>
    %366 = arith.subf %362, %365 : vector<32x32xf32>
    %367 = math.exp %366 : vector<32x32xf32>
    %cst_148 = arith.constant 0.000000e+00 : f32
    %368 = vector.broadcast %cst_148 : f32 to vector<32x32xf32>
    %369 = arith.select %350, %367, %368 : vector<32x32xi1>, vector<32x32xf32>
    %cst_149 = arith.constant dense<0.000000e+00> : vector<32xf32>
    %370 = vector.multi_reduction <add>, %369, %cst_149 [1] : vector<32x32xf32> to vector<32xf32>
    %371 = vector.shape_cast %370 : vector<32xf32> to vector<32x1xf32>
    %cst_150 = arith.constant 0.000000e+00 : f32
    %372 = vector.broadcast %cst_150 : f32 to vector<32x1xf32>
    %373 = arith.cmpf oeq, %371, %372 : vector<32x1xf32>
    %cst_151 = arith.constant 1.000000e+00 : f32
    %374 = vector.broadcast %cst_151 : f32 to vector<32x1xf32>
    %375 = arith.select %373, %374, %371 : vector<32x1xi1>, vector<32x1xf32>
    %376 = tpu.reciprocal %375 {approx = true} : vector<32x1xf32> -> vector<32x1xf32>
    %377 = vector.broadcast %376 : vector<32x1xf32> to vector<32x32xf32>
    %378 = arith.mulf %369, %377 : vector<32x32xf32>
    %379 = arith.mulf %378, %345 : vector<32x32xf32>
    %380 = vector.extract_strided_slice %336 {offsets = [0, 0], sizes = [32, 8], strides = [1, 1]} : vector<32x32xf32> to vector<32x8xf32>
    %cst_152 = arith.constant dense<0.000000e+00> : vector<32x8xf32>
    %381 = tpu.matmul %379, %380, %cst_152 {dimension_numbers = #tpu.dot_dimension_numbers<[1], [0], [0], [1], [0, 0, 1, 1], [], []>} : vector<32x32xf32>, vector<32x8xf32>, vector<32x8xf32> -> vector<32x8xf32>
    %382 = arith.mulf %378, %347 : vector<32x32xf32>
    %383 = vector.extract_strided_slice %343 {offsets = [0, 0], sizes = [32, 8], strides = [1, 1]} : vector<32x32xf32> to vector<32x8xf32>
    %cst_153 = arith.constant dense<0.000000e+00> : vector<32x8xf32>
    %384 = tpu.matmul %382, %383, %cst_153 {dimension_numbers = #tpu.dot_dimension_numbers<[1], [0], [0], [1], [0, 0, 1, 1], [], []>} : vector<32x32xf32>, vector<32x8xf32>, vector<32x8xf32> -> vector<32x8xf32>
    %385 = arith.addf %381, %384 : vector<32x8xf32>
    %386 = vector.extract_strided_slice %351 {offsets = [0, 0], sizes = [8, 64], strides = [1, 1]} : vector<32x64xf32> to vector<8x64xf32>
    %cst_154 = arith.constant dense<0.000000e+00> : vector<32x64xf32>
    %387 = tpu.matmul %385, %386, %cst_154 {dimension_numbers = #tpu.dot_dimension_numbers<[1], [0], [0], [1], [0, 0, 1, 1], [], []>} : vector<32x8xf32>, vector<8x64xf32>, vector<32x64xf32> -> vector<32x64xf32>
    %388 = arith.addf %352, %387 : vector<32x64xf32>
    %389 = vector.extract_strided_slice %326 {offsets = [0, 8], sizes = [32, 8], strides = [1, 1]} : vector<32x32xf32> to vector<32x8xf32>
    %390 = vector.extract_strided_slice %333 {offsets = [8, 0], sizes = [8, 32], strides = [1, 1]} : vector<32x32xf32> to vector<8x32xf32>
    %cst_155 = arith.constant dense<0.000000e+00> : vector<32x32xf32>
    %391 = tpu.matmul %389, %390, %cst_155 {dimension_numbers = #tpu.dot_dimension_numbers<[1], [0], [0], [1], [0, 0, 1, 1], [], []>} : vector<32x8xf32>, vector<8x32xf32>, vector<32x32xf32> -> vector<32x32xf32>
    %392 = arith.mulf %345, %391 : vector<32x32xf32>
    %393 = vector.extract_strided_slice %340 {offsets = [8, 0], sizes = [8, 32], strides = [1, 1]} : vector<32x32xf32> to vector<8x32xf32>
    %cst_156 = arith.constant dense<0.000000e+00> : vector<32x32xf32>
    %394 = tpu.matmul %389, %393, %cst_156 {dimension_numbers = #tpu.dot_dimension_numbers<[1], [0], [0], [1], [0, 0, 1, 1], [], []>} : vector<32x8xf32>, vector<8x32xf32>, vector<32x32xf32> -> vector<32x32xf32>
    %395 = arith.mulf %347, %394 : vector<32x32xf32>
    %396 = arith.addf %392, %395 : vector<32x32xf32>
    %cst_157 = arith.constant -1.000000e+30 : f32
    %397 = vector.broadcast %cst_157 : f32 to vector<32x32xf32>
    %398 = arith.select %350, %396, %397 : vector<32x32xi1>, vector<32x32xf32>
    %cst_158 = arith.constant dense<0xFF800000> : vector<32xf32>
    %399 = vector.multi_reduction <maximumf>, %398, %cst_158 [1] : vector<32x32xf32> to vector<32xf32>
    %400 = vector.shape_cast %399 : vector<32xf32> to vector<32x1xf32>
    %401 = vector.broadcast %400 : vector<32x1xf32> to vector<32x32xf32>
    %402 = arith.subf %398, %401 : vector<32x32xf32>
    %403 = math.exp %402 : vector<32x32xf32>
    %cst_159 = arith.constant 0.000000e+00 : f32
    %404 = vector.broadcast %cst_159 : f32 to vector<32x32xf32>
    %405 = arith.select %350, %403, %404 : vector<32x32xi1>, vector<32x32xf32>
    %cst_160 = arith.constant dense<0.000000e+00> : vector<32xf32>
    %406 = vector.multi_reduction <add>, %405, %cst_160 [1] : vector<32x32xf32> to vector<32xf32>
    %407 = vector.shape_cast %406 : vector<32xf32> to vector<32x1xf32>
    %cst_161 = arith.constant 0.000000e+00 : f32
    %408 = vector.broadcast %cst_161 : f32 to vector<32x1xf32>
    %409 = arith.cmpf oeq, %407, %408 : vector<32x1xf32>
    %cst_162 = arith.constant 1.000000e+00 : f32
    %410 = vector.broadcast %cst_162 : f32 to vector<32x1xf32>
    %411 = arith.select %409, %410, %407 : vector<32x1xi1>, vector<32x1xf32>
    %412 = tpu.reciprocal %411 {approx = true} : vector<32x1xf32> -> vector<32x1xf32>
    %413 = vector.broadcast %412 : vector<32x1xf32> to vector<32x32xf32>
    %414 = arith.mulf %405, %413 : vector<32x32xf32>
    %415 = arith.mulf %414, %345 : vector<32x32xf32>
    %416 = vector.extract_strided_slice %336 {offsets = [0, 8], sizes = [32, 8], strides = [1, 1]} : vector<32x32xf32> to vector<32x8xf32>
    %cst_163 = arith.constant dense<0.000000e+00> : vector<32x8xf32>
    %417 = tpu.matmul %415, %416, %cst_163 {dimension_numbers = #tpu.dot_dimension_numbers<[1], [0], [0], [1], [0, 0, 1, 1], [], []>} : vector<32x32xf32>, vector<32x8xf32>, vector<32x8xf32> -> vector<32x8xf32>
    %418 = arith.mulf %414, %347 : vector<32x32xf32>
    %419 = vector.extract_strided_slice %343 {offsets = [0, 8], sizes = [32, 8], strides = [1, 1]} : vector<32x32xf32> to vector<32x8xf32>
    %cst_164 = arith.constant dense<0.000000e+00> : vector<32x8xf32>
    %420 = tpu.matmul %418, %419, %cst_164 {dimension_numbers = #tpu.dot_dimension_numbers<[1], [0], [0], [1], [0, 0, 1, 1], [], []>} : vector<32x32xf32>, vector<32x8xf32>, vector<32x8xf32> -> vector<32x8xf32>
    %421 = arith.addf %417, %420 : vector<32x8xf32>
    %422 = vector.extract_strided_slice %351 {offsets = [8, 0], sizes = [8, 64], strides = [1, 1]} : vector<32x64xf32> to vector<8x64xf32>
    %cst_165 = arith.constant dense<0.000000e+00> : vector<32x64xf32>
    %423 = tpu.matmul %421, %422, %cst_165 {dimension_numbers = #tpu.dot_dimension_numbers<[1], [0], [0], [1], [0, 0, 1, 1], [], []>} : vector<32x8xf32>, vector<8x64xf32>, vector<32x64xf32> -> vector<32x64xf32>
    %424 = arith.addf %388, %423 : vector<32x64xf32>
    %425 = vector.extract_strided_slice %326 {offsets = [0, 16], sizes = [32, 8], strides = [1, 1]} : vector<32x32xf32> to vector<32x8xf32>
    %426 = vector.extract_strided_slice %333 {offsets = [16, 0], sizes = [8, 32], strides = [1, 1]} : vector<32x32xf32> to vector<8x32xf32>
    %cst_166 = arith.constant dense<0.000000e+00> : vector<32x32xf32>
    %427 = tpu.matmul %425, %426, %cst_166 {dimension_numbers = #tpu.dot_dimension_numbers<[1], [0], [0], [1], [0, 0, 1, 1], [], []>} : vector<32x8xf32>, vector<8x32xf32>, vector<32x32xf32> -> vector<32x32xf32>
    %428 = arith.mulf %345, %427 : vector<32x32xf32>
    %429 = vector.extract_strided_slice %340 {offsets = [16, 0], sizes = [8, 32], strides = [1, 1]} : vector<32x32xf32> to vector<8x32xf32>
    %cst_167 = arith.constant dense<0.000000e+00> : vector<32x32xf32>
    %430 = tpu.matmul %425, %429, %cst_167 {dimension_numbers = #tpu.dot_dimension_numbers<[1], [0], [0], [1], [0, 0, 1, 1], [], []>} : vector<32x8xf32>, vector<8x32xf32>, vector<32x32xf32> -> vector<32x32xf32>
    %431 = arith.mulf %347, %430 : vector<32x32xf32>
    %432 = arith.addf %428, %431 : vector<32x32xf32>
    %cst_168 = arith.constant -1.000000e+30 : f32
    %433 = vector.broadcast %cst_168 : f32 to vector<32x32xf32>
    %434 = arith.select %350, %432, %433 : vector<32x32xi1>, vector<32x32xf32>
    %cst_169 = arith.constant dense<0xFF800000> : vector<32xf32>
    %435 = vector.multi_reduction <maximumf>, %434, %cst_169 [1] : vector<32x32xf32> to vector<32xf32>
    %436 = vector.shape_cast %435 : vector<32xf32> to vector<32x1xf32>
    %437 = vector.broadcast %436 : vector<32x1xf32> to vector<32x32xf32>
    %438 = arith.subf %434, %437 : vector<32x32xf32>
    %439 = math.exp %438 : vector<32x32xf32>
    %cst_170 = arith.constant 0.000000e+00 : f32
    %440 = vector.broadcast %cst_170 : f32 to vector<32x32xf32>
    %441 = arith.select %350, %439, %440 : vector<32x32xi1>, vector<32x32xf32>
    %cst_171 = arith.constant dense<0.000000e+00> : vector<32xf32>
    %442 = vector.multi_reduction <add>, %441, %cst_171 [1] : vector<32x32xf32> to vector<32xf32>
    %443 = vector.shape_cast %442 : vector<32xf32> to vector<32x1xf32>
    %cst_172 = arith.constant 0.000000e+00 : f32
    %444 = vector.broadcast %cst_172 : f32 to vector<32x1xf32>
    %445 = arith.cmpf oeq, %443, %444 : vector<32x1xf32>
    %cst_173 = arith.constant 1.000000e+00 : f32
    %446 = vector.broadcast %cst_173 : f32 to vector<32x1xf32>
    %447 = arith.select %445, %446, %443 : vector<32x1xi1>, vector<32x1xf32>
    %448 = tpu.reciprocal %447 {approx = true} : vector<32x1xf32> -> vector<32x1xf32>
    %449 = vector.broadcast %448 : vector<32x1xf32> to vector<32x32xf32>
    %450 = arith.mulf %441, %449 : vector<32x32xf32>
    %451 = arith.mulf %450, %345 : vector<32x32xf32>
    %452 = vector.extract_strided_slice %336 {offsets = [0, 16], sizes = [32, 8], strides = [1, 1]} : vector<32x32xf32> to vector<32x8xf32>
    %cst_174 = arith.constant dense<0.000000e+00> : vector<32x8xf32>
    %453 = tpu.matmul %451, %452, %cst_174 {dimension_numbers = #tpu.dot_dimension_numbers<[1], [0], [0], [1], [0, 0, 1, 1], [], []>} : vector<32x32xf32>, vector<32x8xf32>, vector<32x8xf32> -> vector<32x8xf32>
    %454 = arith.mulf %450, %347 : vector<32x32xf32>
    %455 = vector.extract_strided_slice %343 {offsets = [0, 16], sizes = [32, 8], strides = [1, 1]} : vector<32x32xf32> to vector<32x8xf32>
    %cst_175 = arith.constant dense<0.000000e+00> : vector<32x8xf32>
    %456 = tpu.matmul %454, %455, %cst_175 {dimension_numbers = #tpu.dot_dimension_numbers<[1], [0], [0], [1], [0, 0, 1, 1], [], []>} : vector<32x32xf32>, vector<32x8xf32>, vector<32x8xf32> -> vector<32x8xf32>
    %457 = arith.addf %453, %456 : vector<32x8xf32>
    %458 = vector.extract_strided_slice %351 {offsets = [16, 0], sizes = [8, 64], strides = [1, 1]} : vector<32x64xf32> to vector<8x64xf32>
    %cst_176 = arith.constant dense<0.000000e+00> : vector<32x64xf32>
    %459 = tpu.matmul %457, %458, %cst_176 {dimension_numbers = #tpu.dot_dimension_numbers<[1], [0], [0], [1], [0, 0, 1, 1], [], []>} : vector<32x8xf32>, vector<8x64xf32>, vector<32x64xf32> -> vector<32x64xf32>
    %460 = arith.addf %424, %459 : vector<32x64xf32>
    %461 = vector.extract_strided_slice %326 {offsets = [0, 24], sizes = [32, 8], strides = [1, 1]} : vector<32x32xf32> to vector<32x8xf32>
    %462 = vector.extract_strided_slice %333 {offsets = [24, 0], sizes = [8, 32], strides = [1, 1]} : vector<32x32xf32> to vector<8x32xf32>
    %cst_177 = arith.constant dense<0.000000e+00> : vector<32x32xf32>
    %463 = tpu.matmul %461, %462, %cst_177 {dimension_numbers = #tpu.dot_dimension_numbers<[1], [0], [0], [1], [0, 0, 1, 1], [], []>} : vector<32x8xf32>, vector<8x32xf32>, vector<32x32xf32> -> vector<32x32xf32>
    %464 = arith.mulf %345, %463 : vector<32x32xf32>
    %465 = vector.extract_strided_slice %340 {offsets = [24, 0], sizes = [8, 32], strides = [1, 1]} : vector<32x32xf32> to vector<8x32xf32>
    %cst_178 = arith.constant dense<0.000000e+00> : vector<32x32xf32>
    %466 = tpu.matmul %461, %465, %cst_178 {dimension_numbers = #tpu.dot_dimension_numbers<[1], [0], [0], [1], [0, 0, 1, 1], [], []>} : vector<32x8xf32>, vector<8x32xf32>, vector<32x32xf32> -> vector<32x32xf32>
    %467 = arith.mulf %347, %466 : vector<32x32xf32>
    %468 = arith.addf %464, %467 : vector<32x32xf32>
    %cst_179 = arith.constant -1.000000e+30 : f32
    %469 = vector.broadcast %cst_179 : f32 to vector<32x32xf32>
    %470 = arith.select %350, %468, %469 : vector<32x32xi1>, vector<32x32xf32>
    %cst_180 = arith.constant dense<0xFF800000> : vector<32xf32>
    %471 = vector.multi_reduction <maximumf>, %470, %cst_180 [1] : vector<32x32xf32> to vector<32xf32>
    %472 = vector.shape_cast %471 : vector<32xf32> to vector<32x1xf32>
    %473 = vector.broadcast %472 : vector<32x1xf32> to vector<32x32xf32>
    %474 = arith.subf %470, %473 : vector<32x32xf32>
    %475 = math.exp %474 : vector<32x32xf32>
    %cst_181 = arith.constant 0.000000e+00 : f32
    %476 = vector.broadcast %cst_181 : f32 to vector<32x32xf32>
    %477 = arith.select %350, %475, %476 : vector<32x32xi1>, vector<32x32xf32>
    %cst_182 = arith.constant dense<0.000000e+00> : vector<32xf32>
    %478 = vector.multi_reduction <add>, %477, %cst_182 [1] : vector<32x32xf32> to vector<32xf32>
    %479 = vector.shape_cast %478 : vector<32xf32> to vector<32x1xf32>
    %cst_183 = arith.constant 0.000000e+00 : f32
    %480 = vector.broadcast %cst_183 : f32 to vector<32x1xf32>
    %481 = arith.cmpf oeq, %479, %480 : vector<32x1xf32>
    %cst_184 = arith.constant 1.000000e+00 : f32
    %482 = vector.broadcast %cst_184 : f32 to vector<32x1xf32>
    %483 = arith.select %481, %482, %479 : vector<32x1xi1>, vector<32x1xf32>
    %484 = tpu.reciprocal %483 {approx = true} : vector<32x1xf32> -> vector<32x1xf32>
    %485 = vector.broadcast %484 : vector<32x1xf32> to vector<32x32xf32>
    %486 = arith.mulf %477, %485 : vector<32x32xf32>
    %487 = arith.mulf %486, %345 : vector<32x32xf32>
    %488 = vector.extract_strided_slice %336 {offsets = [0, 24], sizes = [32, 8], strides = [1, 1]} : vector<32x32xf32> to vector<32x8xf32>
    %cst_185 = arith.constant dense<0.000000e+00> : vector<32x8xf32>
    %489 = tpu.matmul %487, %488, %cst_185 {dimension_numbers = #tpu.dot_dimension_numbers<[1], [0], [0], [1], [0, 0, 1, 1], [], []>} : vector<32x32xf32>, vector<32x8xf32>, vector<32x8xf32> -> vector<32x8xf32>
    %490 = arith.mulf %486, %347 : vector<32x32xf32>
    %491 = vector.extract_strided_slice %343 {offsets = [0, 24], sizes = [32, 8], strides = [1, 1]} : vector<32x32xf32> to vector<32x8xf32>
    %cst_186 = arith.constant dense<0.000000e+00> : vector<32x8xf32>
    %492 = tpu.matmul %490, %491, %cst_186 {dimension_numbers = #tpu.dot_dimension_numbers<[1], [0], [0], [1], [0, 0, 1, 1], [], []>} : vector<32x32xf32>, vector<32x8xf32>, vector<32x8xf32> -> vector<32x8xf32>
    %493 = arith.addf %489, %492 : vector<32x8xf32>
    %494 = vector.extract_strided_slice %351 {offsets = [24, 0], sizes = [8, 64], strides = [1, 1]} : vector<32x64xf32> to vector<8x64xf32>
    %cst_187 = arith.constant dense<0.000000e+00> : vector<32x64xf32>
    %495 = tpu.matmul %493, %494, %cst_187 {dimension_numbers = #tpu.dot_dimension_numbers<[1], [0], [0], [1], [0, 0, 1, 1], [], []>} : vector<32x8xf32>, vector<8x64xf32>, vector<32x64xf32> -> vector<32x64xf32>
    %496 = arith.addf %460, %495 : vector<32x64xf32>
    %497 = vector.extract_strided_slice %312 {offsets = [0, 0], sizes = [32, 1], strides = [1, 1]} : vector<32x2xf32> to vector<32x1xf32>
    %498 = vector.extract_strided_slice %496 {offsets = [0, 0], sizes = [32, 32], strides = [1, 1]} : vector<32x64xf32> to vector<32x32xf32>
    %499 = vector.broadcast %497 : vector<32x1xf32> to vector<32x32xf32>
    %500 = arith.mulf %499, %498 : vector<32x32xf32>
    %501 = vector.extract_strided_slice %312 {offsets = [0, 1], sizes = [32, 1], strides = [1, 1]} : vector<32x2xf32> to vector<32x1xf32>
    %502 = vector.extract_strided_slice %496 {offsets = [0, 32], sizes = [32, 32], strides = [1, 1]} : vector<32x64xf32> to vector<32x32xf32>
    %503 = vector.broadcast %501 : vector<32x1xf32> to vector<32x32xf32>
    %504 = arith.mulf %503, %502 : vector<32x32xf32>
    %505 = arith.addf %500, %504 : vector<32x32xf32>
    %c0_188 = arith.constant 0 : index
    %c0_189 = arith.constant 0 : index
    %506 = vector.load %arg23[%c0_188, %c0_189] : memref<2x1xf32, #tpu.memory_space<vmem>>, vector<2x1xf32>
    %cst_190 = arith.constant dense<0.000000e+00> : vector<32x1xf32>
    %507 = tpu.matmul %312, %506, %cst_190 {dimension_numbers = #tpu.dot_dimension_numbers<[1], [0], [0], [1], [0, 0, 1, 1], [], []>} : vector<32x2xf32>, vector<2x1xf32>, vector<32x1xf32> -> vector<32x1xf32>
    %cst_191 = arith.constant 0.000000e+00 : f32
    %508 = vector.broadcast %cst_191 : f32 to vector<32x1xf32>
    %509 = arith.subf %508, %507 : vector<32x1xf32>
    %510 = math.exp %509 : vector<32x1xf32>
    %cst_192 = arith.constant 1.000000e+00 : f32
    %511 = vector.broadcast %cst_192 : f32 to vector<32x1xf32>
    %512 = arith.addf %511, %510 : vector<32x1xf32>
    %cst_193 = arith.constant 1.000000e+00 : f32
    %513 = vector.broadcast %cst_193 : f32 to vector<32x1xf32>
    %514 = arith.divf %513, %512 : vector<32x1xf32>
    %515 = vector.broadcast %514 : vector<32x1xf32> to vector<32x32xf32>
    %516 = arith.mulf %505, %515 : vector<32x32xf32>
    %c0_194 = arith.constant 0 : index
    %c0_195 = arith.constant 0 : index
    %517 = vector.load %arg24[%c0_194, %c0_195] : memref<32x48xf32, #tpu.memory_space<vmem>>, vector<32x48xf32>
    %cst_196 = arith.constant dense<0.000000e+00> : vector<32x48xf32>
    %518 = tpu.matmul %516, %517, %cst_196 {dimension_numbers = #tpu.dot_dimension_numbers<[1], [0], [0], [1], [0, 0, 1, 1], [], []>} : vector<32x32xf32>, vector<32x48xf32>, vector<32x48xf32> -> vector<32x48xf32>
    %519 = vector.extract_strided_slice %312 {offsets = [0, 0], sizes = [32, 1], strides = [1, 1]} : vector<32x2xf32> to vector<32x1xf32>
    %520 = vector.extract_strided_slice %518 {offsets = [0, 0], sizes = [32, 24], strides = [1, 1]} : vector<32x48xf32> to vector<32x24xf32>
    %521 = vector.broadcast %519 : vector<32x1xf32> to vector<32x24xf32>
    %522 = arith.mulf %521, %520 : vector<32x24xf32>
    %523 = vector.extract_strided_slice %312 {offsets = [0, 1], sizes = [32, 1], strides = [1, 1]} : vector<32x2xf32> to vector<32x1xf32>
    %524 = vector.extract_strided_slice %518 {offsets = [0, 24], sizes = [32, 24], strides = [1, 1]} : vector<32x48xf32> to vector<32x24xf32>
    %525 = vector.broadcast %523 : vector<32x1xf32> to vector<32x24xf32>
    %526 = arith.mulf %525, %524 : vector<32x24xf32>
    %527 = arith.addf %522, %526 : vector<32x24xf32>
    %528 = vector.extract_strided_slice %527 {offsets = [0, 0], sizes = [32, 8], strides = [1, 1]} : vector<32x24xf32> to vector<32x8xf32>
    %529 = vector.extract_strided_slice %527 {offsets = [0, 8], sizes = [32, 8], strides = [1, 1]} : vector<32x24xf32> to vector<32x8xf32>
    %530 = vector.extract_strided_slice %527 {offsets = [0, 16], sizes = [32, 8], strides = [1, 1]} : vector<32x24xf32> to vector<32x8xf32>
    %c0_197 = arith.constant 0 : index
    %c0_198 = arith.constant 0 : index
    %c0_199 = arith.constant 0 : index
    %531 = vector.load %arg25[%c0_197, %c0_198, %c0_199] : memref<2x8x8xf32, #tpu.memory_space<vmem>>, vector<2x8x8xf32>
    %c0_200 = arith.constant 0 : index
    %c0_201 = arith.constant 0 : index
    %c0_202 = arith.constant 0 : index
    %532 = vector.load %arg26[%c0_200, %c0_201, %c0_202] : memref<2x8x8xf32, #tpu.memory_space<vmem>>, vector<2x8x8xf32>
    %533 = vector.extract_strided_slice %531 {offsets = [0, 0, 0], sizes = [1, 8, 8], strides = [1, 1, 1]} : vector<2x8x8xf32> to vector<1x8x8xf32>
    %534 = vector.shape_cast %533 : vector<1x8x8xf32> to vector<8x8xf32>
    %cst_203 = arith.constant dense<0.000000e+00> : vector<32x8xf32>
    %535 = tpu.matmul %528, %534, %cst_203 {dimension_numbers = #tpu.dot_dimension_numbers<[1], [0], [0], [1], [0, 0, 1, 1], [], []>} : vector<32x8xf32>, vector<8x8xf32>, vector<32x8xf32> -> vector<32x8xf32>
    %536 = tpu.transpose %535, [1, 0] : vector<32x8xf32> -> vector<8x32xf32>
    %537 = vector.extract_strided_slice %532 {offsets = [0, 0, 0], sizes = [1, 8, 8], strides = [1, 1, 1]} : vector<2x8x8xf32> to vector<1x8x8xf32>
    %538 = vector.shape_cast %537 : vector<1x8x8xf32> to vector<8x8xf32>
    %cst_204 = arith.constant dense<0.000000e+00> : vector<32x8xf32>
    %539 = tpu.matmul %530, %538, %cst_204 {dimension_numbers = #tpu.dot_dimension_numbers<[1], [0], [0], [1], [0, 0, 1, 1], [], []>} : vector<32x8xf32>, vector<8x8xf32>, vector<32x8xf32> -> vector<32x8xf32>
    %540 = vector.extract_strided_slice %531 {offsets = [1, 0, 0], sizes = [1, 8, 8], strides = [1, 1, 1]} : vector<2x8x8xf32> to vector<1x8x8xf32>
    %541 = vector.shape_cast %540 : vector<1x8x8xf32> to vector<8x8xf32>
    %cst_205 = arith.constant dense<0.000000e+00> : vector<32x8xf32>
    %542 = tpu.matmul %528, %541, %cst_205 {dimension_numbers = #tpu.dot_dimension_numbers<[1], [0], [0], [1], [0, 0, 1, 1], [], []>} : vector<32x8xf32>, vector<8x8xf32>, vector<32x8xf32> -> vector<32x8xf32>
    %543 = tpu.transpose %542, [1, 0] : vector<32x8xf32> -> vector<8x32xf32>
    %544 = vector.extract_strided_slice %532 {offsets = [1, 0, 0], sizes = [1, 8, 8], strides = [1, 1, 1]} : vector<2x8x8xf32> to vector<1x8x8xf32>
    %545 = vector.shape_cast %544 : vector<1x8x8xf32> to vector<8x8xf32>
    %cst_206 = arith.constant dense<0.000000e+00> : vector<32x8xf32>
    %546 = tpu.matmul %530, %545, %cst_206 {dimension_numbers = #tpu.dot_dimension_numbers<[1], [0], [0], [1], [0, 0, 1, 1], [], []>} : vector<32x8xf32>, vector<8x8xf32>, vector<32x8xf32> -> vector<32x8xf32>
    %547 = vector.extract_strided_slice %313 {offsets = [0, 0, 0], sizes = [1, 32, 32], strides = [1, 1, 1]} : vector<2x32x32xf32> to vector<1x32x32xf32>
    %548 = vector.shape_cast %547 : vector<1x32x32xf32> to vector<32x32xf32>
    %549 = vector.extract_strided_slice %313 {offsets = [1, 0, 0], sizes = [1, 32, 32], strides = [1, 1, 1]} : vector<2x32x32xf32> to vector<1x32x32xf32>
    %550 = vector.shape_cast %549 : vector<1x32x32xf32> to vector<32x32xf32>
    %551 = arith.addf %548, %550 : vector<32x32xf32>
    %cst_207 = arith.constant 0.000000e+00 : f32
    %552 = vector.broadcast %cst_207 : f32 to vector<32x32xf32>
    %553 = arith.cmpf ogt, %551, %552 : vector<32x32xf32>
    %c0_208 = arith.constant 0 : index
    %c0_209 = arith.constant 0 : index
    %554 = vector.load %arg27[%c0_208, %c0_209] : memref<8x16xf32, #tpu.memory_space<vmem>>, vector<8x16xf32>
    %cst_210 = arith.constant 0.000000e+00 : f32
    %555 = vector.broadcast %cst_210 : f32 to vector<32x16xf32>
    %cst_211 = arith.constant dense<0.000000e+00> : vector<32x32xf32>
    %556 = tpu.matmul %529, %536, %cst_211 {dimension_numbers = #tpu.dot_dimension_numbers<[1], [0], [0], [1], [0, 0, 1, 1], [], []>} : vector<32x8xf32>, vector<8x32xf32>, vector<32x32xf32> -> vector<32x32xf32>
    %557 = arith.mulf %548, %556 : vector<32x32xf32>
    %cst_212 = arith.constant dense<0.000000e+00> : vector<32x32xf32>
    %558 = tpu.matmul %529, %543, %cst_212 {dimension_numbers = #tpu.dot_dimension_numbers<[1], [0], [0], [1], [0, 0, 1, 1], [], []>} : vector<32x8xf32>, vector<8x32xf32>, vector<32x32xf32> -> vector<32x32xf32>
    %559 = arith.mulf %550, %558 : vector<32x32xf32>
    %560 = arith.addf %557, %559 : vector<32x32xf32>
    %cst_213 = arith.constant -1.000000e+30 : f32
    %561 = vector.broadcast %cst_213 : f32 to vector<32x32xf32>
    %562 = arith.select %553, %560, %561 : vector<32x32xi1>, vector<32x32xf32>
    %cst_214 = arith.constant dense<0xFF800000> : vector<32xf32>
    %563 = vector.multi_reduction <maximumf>, %562, %cst_214 [1] : vector<32x32xf32> to vector<32xf32>
    %564 = vector.shape_cast %563 : vector<32xf32> to vector<32x1xf32>
    %565 = vector.broadcast %564 : vector<32x1xf32> to vector<32x32xf32>
    %566 = arith.subf %562, %565 : vector<32x32xf32>
    %567 = math.exp %566 : vector<32x32xf32>
    %cst_215 = arith.constant 0.000000e+00 : f32
    %568 = vector.broadcast %cst_215 : f32 to vector<32x32xf32>
    %569 = arith.select %553, %567, %568 : vector<32x32xi1>, vector<32x32xf32>
    %cst_216 = arith.constant dense<0.000000e+00> : vector<32xf32>
    %570 = vector.multi_reduction <add>, %569, %cst_216 [1] : vector<32x32xf32> to vector<32xf32>
    %571 = vector.shape_cast %570 : vector<32xf32> to vector<32x1xf32>
    %cst_217 = arith.constant 0.000000e+00 : f32
    %572 = vector.broadcast %cst_217 : f32 to vector<32x1xf32>
    %573 = arith.cmpf oeq, %571, %572 : vector<32x1xf32>
    %cst_218 = arith.constant 1.000000e+00 : f32
    %574 = vector.broadcast %cst_218 : f32 to vector<32x1xf32>
    %575 = arith.select %573, %574, %571 : vector<32x1xi1>, vector<32x1xf32>
    %576 = tpu.reciprocal %575 {approx = true} : vector<32x1xf32> -> vector<32x1xf32>
    %577 = vector.broadcast %576 : vector<32x1xf32> to vector<32x32xf32>
    %578 = arith.mulf %569, %577 : vector<32x32xf32>
    %579 = arith.mulf %578, %548 : vector<32x32xf32>
    %cst_219 = arith.constant dense<0.000000e+00> : vector<32x8xf32>
    %580 = tpu.matmul %579, %539, %cst_219 {dimension_numbers = #tpu.dot_dimension_numbers<[1], [0], [0], [1], [0, 0, 1, 1], [], []>} : vector<32x32xf32>, vector<32x8xf32>, vector<32x8xf32> -> vector<32x8xf32>
    %581 = arith.mulf %578, %550 : vector<32x32xf32>
    %cst_220 = arith.constant dense<0.000000e+00> : vector<32x8xf32>
    %582 = tpu.matmul %581, %546, %cst_220 {dimension_numbers = #tpu.dot_dimension_numbers<[1], [0], [0], [1], [0, 0, 1, 1], [], []>} : vector<32x32xf32>, vector<32x8xf32>, vector<32x8xf32> -> vector<32x8xf32>
    %583 = arith.addf %580, %582 : vector<32x8xf32>
    %cst_221 = arith.constant dense<0.000000e+00> : vector<32x16xf32>
    %584 = tpu.matmul %583, %554, %cst_221 {dimension_numbers = #tpu.dot_dimension_numbers<[1], [0], [0], [1], [0, 0, 1, 1], [], []>} : vector<32x8xf32>, vector<8x16xf32>, vector<32x16xf32> -> vector<32x16xf32>
    %585 = arith.addf %555, %584 : vector<32x16xf32>
    %586 = vector.extract_strided_slice %312 {offsets = [0, 0], sizes = [32, 1], strides = [1, 1]} : vector<32x2xf32> to vector<32x1xf32>
    %587 = vector.extract_strided_slice %585 {offsets = [0, 0], sizes = [32, 8], strides = [1, 1]} : vector<32x16xf32> to vector<32x8xf32>
    %588 = vector.broadcast %586 : vector<32x1xf32> to vector<32x8xf32>
    %589 = arith.mulf %588, %587 : vector<32x8xf32>
    %590 = vector.extract_strided_slice %312 {offsets = [0, 1], sizes = [32, 1], strides = [1, 1]} : vector<32x2xf32> to vector<32x1xf32>
    %591 = vector.extract_strided_slice %585 {offsets = [0, 8], sizes = [32, 8], strides = [1, 1]} : vector<32x16xf32> to vector<32x8xf32>
    %592 = vector.broadcast %590 : vector<32x1xf32> to vector<32x8xf32>
    %593 = arith.mulf %592, %591 : vector<32x8xf32>
    %594 = arith.addf %589, %593 : vector<32x8xf32>
    %c0_222 = arith.constant 0 : index
    %c0_223 = arith.constant 0 : index
    %595 = vector.load %arg28[%c0_222, %c0_223] : memref<2x1xf32, #tpu.memory_space<vmem>>, vector<2x1xf32>
    %cst_224 = arith.constant dense<0.000000e+00> : vector<32x1xf32>
    %596 = tpu.matmul %312, %595, %cst_224 {dimension_numbers = #tpu.dot_dimension_numbers<[1], [0], [0], [1], [0, 0, 1, 1], [], []>} : vector<32x2xf32>, vector<2x1xf32>, vector<32x1xf32> -> vector<32x1xf32>
    %cst_225 = arith.constant 0.000000e+00 : f32
    %597 = vector.broadcast %cst_225 : f32 to vector<32x1xf32>
    %598 = arith.subf %597, %596 : vector<32x1xf32>
    %599 = math.exp %598 : vector<32x1xf32>
    %cst_226 = arith.constant 1.000000e+00 : f32
    %600 = vector.broadcast %cst_226 : f32 to vector<32x1xf32>
    %601 = arith.addf %600, %599 : vector<32x1xf32>
    %cst_227 = arith.constant 1.000000e+00 : f32
    %602 = vector.broadcast %cst_227 : f32 to vector<32x1xf32>
    %603 = arith.divf %602, %601 : vector<32x1xf32>
    %604 = vector.broadcast %603 : vector<32x1xf32> to vector<32x8xf32>
    %605 = arith.mulf %594, %604 : vector<32x8xf32>
    %606 = vector.extract_strided_slice %605 {offsets = [0, 0], sizes = [16, 8], strides = [1, 1]} : vector<32x8xf32> to vector<16x8xf32>
    %c0_228 = arith.constant 0 : index
    %c0_229 = arith.constant 0 : index
    %607 = vector.load %arg29[%c0_228, %c0_229] : memref<16x8xf32, #tpu.memory_space<vmem>>, vector<16x8xf32>
    tpu.vector_store %arg29[%c0_228, %c0_229], %606 {strides = array<i32>} : memref<16x8xf32, #tpu.memory_space<vmem>>, vector<16x8xf32>,
    return
  }
}

</mosaic_0001>

<llo_original>
// kernel: tpu_custom_call.1
$region0: #{tpu_custom_call.1}
  #allocation0 [shape = 'u32[]', space=smem, size = 0x4, offset = 0x4, fixed_abs, tag = 'smem constant byte address 0x4 - core index']
  #allocation1 [shape = 'u32[144,128]{1,0:T(1,128)}', space=vmem, size = 0x12000, scoped, tag = 'internal scratch']
  #allocation2 [shape = 'f32[32,48]{1,0:T(8,128)}', space=vmem, size = 0x4000, scoped, tag = 'scratch operand']
  %s0 = inlined_call_operand.smem [shape: u32[30], index: -1, kind: input, shape index: {}]
  %s1 = sld [smem:[%s0]]
  %s2 = scalar_lea.smem %s0, 1
  %s3 = sld [smem:[%s2]]
  %s4 = scalar_lea.smem %s0, 2
  %s5 = sld [smem:[%s4]]
  %s6 = scalar_lea.smem %s0, 3
  %s7 = sld [smem:[%s6]]
  %s8 = scalar_lea.smem %s0, 4
  %s9 = sld [smem:[%s8]]
  %s10 = scalar_lea.smem %s0, 5
  %s11 = sld [smem:[%s10]]
  %s12 = scalar_lea.smem %s0, 6
  %s13 = sld [smem:[%s12]]
  %s14 = scalar_lea.smem %s0, 7
  %s15 = sld [smem:[%s14]]
  %s16 = scalar_lea.smem %s0, 8
  %s17 = sld [smem:[%s16]]
  %s18 = scalar_lea.smem %s0, 9
  %s19 = sld [smem:[%s18]]
  %s20 = scalar_lea.smem %s0, 10
  %s21 = sld [smem:[%s20]]
  %s22 = scalar_lea.smem %s0, 11
  %s23 = sld [smem:[%s22]]
  %s24 = scalar_lea.smem %s0, 12
  %s25 = sld [smem:[%s24]]
  %s26 = scalar_lea.smem %s0, 13
  %s27 = sld [smem:[%s26]]
  %s28 = scalar_lea.smem %s0, 14
  %s29 = sld [smem:[%s28]]
  %s30 = scalar_lea.smem %s0, 15
  %s31 = sld [smem:[%s30]]
  %s32 = scalar_lea.smem %s0, 16
  %s33 = sld [smem:[%s32]]
  %s34 = scalar_lea.smem %s0, 17
  %s35 = sld [smem:[%s34]]
  %s36 = scalar_lea.smem %s0, 18
  %s37 = sld [smem:[%s36]]
  %s38 = scalar_lea.smem %s0, 19
  %s39 = sld [smem:[%s38]]
  %s40 = scalar_lea.smem %s0, 20
  %s41 = sld [smem:[%s40]]
  %s42 = scalar_lea.smem %s0, 21
  %s43 = sld [smem:[%s42]]
  %s44 = scalar_lea.smem %s0, 22
  %s45 = sld [smem:[%s44]]
  %s46 = scalar_lea.smem %s0, 23
  %s47 = sld [smem:[%s46]]
  %s48 = scalar_lea.smem %s0, 24
  %s49 = sld [smem:[%s48]]
  %s50 = scalar_lea.smem %s0, 25
  %s51 = sld [smem:[%s50]]
  %s52 = scalar_lea.smem %s0, 26
  %s53 = sld [smem:[%s52]]
  %s54 = scalar_lea.smem %s0, 27
  %s55 = sld [smem:[%s54]]
  %s56 = scalar_lea.smem %s0, 28
  %s57 = sld [smem:[%s56]]
  %s58 = scalar_lea.smem %s0, 29
  %s59 = sld [smem:[%s58]]
  %s60 = sld [smem:[#allocation0]]
  $region206: #{tpu_custom_call.1} parent=0
    _
  %s62 = ssub.s32 1, %s60
  %s63 = scalar_select 0, %s62, %s60
  $region1: #{tpu_custom_call.1} parent=0
    #allocation3 [shape = 'u8[16384]{0}', space=vmem, size = 0x4000, scoped, tag = 'input window, operand 0, single buffered']
    #allocation4 [shape = 's32[1]{0}', space=sflag, size = 0x4, scoped, tag = 'scoped memory for tpu_custom_call.1']
    #allocation5 [shape = 'u8[32768]{0}', space=vmem, size = 0x8000, scoped, tag = 'input window, operand 2, single buffered']
    #allocation6 [shape = 's32[1]{0}', space=sflag, size = 0x4, scoped, tag = 'scoped memory for tpu_custom_call.1']
    #allocation7 [shape = 'u8[8192]{0}', space=vmem, size = 0x2000, scoped, tag = 'input window, operand 4, single buffered']
    #allocation8 [shape = 'u8[32768]{0}', space=vmem, size = 0x8000, scoped, tag = 'input window, operand 6, single buffered']
    #allocation9 [shape = 's32[1]{0}', space=sflag, size = 0x4, scoped, tag = 'scoped memory for tpu_custom_call.1']
    #allocation10 [shape = 'u8[12288]{0}', space=vmem, size = 0x3000, scoped, tag = 'input window, operand 7, single buffered']
    #allocation11 [shape = 'u8[512]{0}', space=vmem, size = 0x400, scoped, tag = 'input window, operand 8, single buffered']
    #allocation12 [shape = 's32[1]{0}', space=sflag, size = 0x4, scoped, tag = 'scoped memory for tpu_custom_call.1']
    #allocation13 [shape = 'u8[32768]{0}', space=vmem, size = 0x8000, scoped, tag = 'input window, operand 9, single buffered']
    #allocation14 [shape = 'u8[32768]{0}', space=vmem, size = 0x8000, scoped, tag = 'input window, operand 10, single buffered']
    #allocation15 [shape = 's32[1]{0}', space=sflag, size = 0x4, scoped, tag = 'scoped memory for tpu_custom_call.1']
    #allocation16 [shape = 'u8[32768]{0}', space=vmem, size = 0x8000, scoped, tag = 'input window, operand 11, single buffered']
    #allocation17 [shape = 'u8[16384]{0}', space=vmem, size = 0x4000, scoped, tag = 'input window, operand 12, single buffered']
    #allocation18 [shape = 's32[1]{0}', space=sflag, size = 0x4, scoped, tag = 'scoped memory for tpu_custom_call.1']
    #allocation19 [shape = 'u8[16384]{0}', space=vmem, size = 0x4000, scoped, tag = 'input window, operand 14, single buffered']
    #allocation20 [shape = 'u8[16384]{0}', space=vmem, size = 0x4000, scoped, tag = 'input window, operand 15, single buffered']
    #allocation21 [shape = 's32[1]{0}', space=sflag, size = 0x4, scoped, tag = 'scoped memory for tpu_custom_call.1']
    #allocation22 [shape = 'u8[16384]{0}', space=vmem, size = 0x4000, scoped, tag = 'input window, operand 16, single buffered']
    #allocation23 [shape = 'u8[8192]{0}', space=vmem, size = 0x2000, scoped, tag = 'input window, operand 17, single buffered']
    #allocation24 [shape = 's32[1]{0}', space=sflag, size = 0x4, scoped, tag = 'scoped memory for tpu_custom_call.1']
    #allocation25 [shape = 'u8[32768]{0}', space=vmem, size = 0x8000, scoped, tag = 'input window, operand 20, single buffered']
    #allocation26 [shape = 'u8[32768]{0}', space=vmem, size = 0x8000, scoped, tag = 'input window, operand 21, single buffered']
    #allocation27 [shape = 's32[1]{0}', space=sflag, size = 0x4, scoped, tag = 'scoped memory for tpu_custom_call.1']
    #allocation28 [shape = 'u8[16384]{0}', space=vmem, size = 0x4000, scoped, tag = 'input window, operand 22, single buffered']
    #allocation29 [shape = 'u8[16384]{0}', space=vmem, size = 0x4000, scoped, tag = 'input window, operand 24, single buffered']
    #allocation30 [shape = 's32[1]{0}', space=sflag, size = 0x4, scoped, tag = 'scoped memory for tpu_custom_call.1']
    #allocation31 [shape = 'u8[8192]{0}', space=vmem, size = 0x2000, scoped, tag = 'input window, operand 25, single buffered']
    #allocation32 [shape = 'u8[8192]{0}', space=vmem, size = 0x2000, scoped, tag = 'input window, operand 26, single buffered']
    #allocation33 [shape = 's32[1]{0}', space=sflag, size = 0x4, scoped, tag = 'scoped memory for tpu_custom_call.1']
    %64 = vsyncpa [#allocation4], 0
    %65 = vsyncpa [#allocation6], 0
    %66 = vsyncpa [#allocation9], 0
    %67 = vsyncpa [#allocation12], 0
    %68 = vsyncpa [#allocation15], 0
    %69 = vsyncpa [#allocation18], 0
    %70 = vsyncpa [#allocation21], 0
    %71 = vsyncpa [#allocation24], 0
    %72 = vsyncpa [#allocation27], 0
    %73 = vsyncpa [#allocation30], 0
    %74 = vsyncpa [#allocation33], 0
    // Predicated region
    $region2: #{tpu_custom_call.1} parent=1 // pred_check
      _
    $region3: #{tpu_custom_call.1} parent=1 // pred_check_branch
      %76 = sbr.rel (0) target = $region5
    $region4: #{tpu_custom_call.1} parent=1 // pred_region
      %s78 = ssub.s32 512, 512
      %79 = vsyncadd [#allocation4], %s78
      %s80 = sshll.u32 [#allocation3], 4
      %s81 = int_to_ptr.vmem [resolvable:$true] %s80
      %86 = dma.hbm_to_vmem [thread:$0]  %s1, 512, %s81, [#allocation4], 128, 128, 8
    $region5: #{tpu_custom_call.1} parent=1 // pred_fallthru
      _
    // Predicated region
    $region6: #{tpu_custom_call.1} parent=1 // pred_check
      _
    $region7: #{tpu_custom_call.1} parent=1 // pred_check_branch
      %88 = sbr.rel (0) target = $region9
    $region8: #{tpu_custom_call.1} parent=1 // pred_region
      _
    $region9: #{tpu_custom_call.1} parent=1 // pred_fallthru
      _
    // Predicated region
    $region10: #{tpu_custom_call.1} parent=1 // pred_check
      _
    $region11: #{tpu_custom_call.1} parent=1 // pred_check_branch
      %90 = sbr.rel (0) target = $region13
    $region12: #{tpu_custom_call.1} parent=1 // pred_region
      %s92 = ssub.s32 1024, 1024
      %93 = vsyncadd [#allocation6], %s92
      %s94 = sshll.u32 [#allocation5], 4
      %s95 = int_to_ptr.vmem [resolvable:$true] %s94
      %100 = dma.hbm_to_vmem [thread:$0]  %s5, 1024, %s95, [#allocation6], 128, 128, 8
    $region13: #{tpu_custom_call.1} parent=1 // pred_fallthru
      _
    // Predicated region
    $region14: #{tpu_custom_call.1} parent=1 // pred_check
      _
    $region15: #{tpu_custom_call.1} parent=1 // pred_check_branch
      %102 = sbr.rel (0) target = $region17
    $region16: #{tpu_custom_call.1} parent=1 // pred_region
      _
    $region17: #{tpu_custom_call.1} parent=1 // pred_fallthru
      _
    // Predicated region
    $region18: #{tpu_custom_call.1} parent=1 // pred_check
      _
    $region19: #{tpu_custom_call.1} parent=1 // pred_check_branch
      %104 = sbr.rel (0) target = $region21
    $region20: #{tpu_custom_call.1} parent=1 // pred_region
      %s106 = ssub.s32 256, 256
      %107 = vsyncadd [#allocation6], %s106
      %s108 = sshll.u32 [#allocation7], 4
      %s109 = int_to_ptr.vmem [resolvable:$true] %s108
      %114 = dma.hbm_to_vmem [thread:$0]  %s9, 256, %s109, [#allocation6], 128, 128, 8
    $region21: #{tpu_custom_call.1} parent=1 // pred_fallthru
      _
    // Predicated region
    $region22: #{tpu_custom_call.1} parent=1 // pred_check
      _
    $region23: #{tpu_custom_call.1} parent=1 // pred_check_branch
      %116 = sbr.rel (0) target = $region25
    $region24: #{tpu_custom_call.1} parent=1 // pred_region
      _
    $region25: #{tpu_custom_call.1} parent=1 // pred_fallthru
      _
    // Predicated region
    $region26: #{tpu_custom_call.1} parent=1 // pred_check
      _
    $region27: #{tpu_custom_call.1} parent=1 // pred_check_branch
      %118 = sbr.rel (0) target = $region29
    $region28: #{tpu_custom_call.1} parent=1 // pred_region
      %s120 = ssub.s32 1024, 1024
      %121 = vsyncadd [#allocation9], %s120
      %s122 = sshll.u32 [#allocation8], 4
      %s123 = int_to_ptr.vmem [resolvable:$true] %s122
      %128 = dma.hbm_to_vmem [thread:$0]  %s13, 1024, %s123, [#allocation9], 128, 128, 8
    $region29: #{tpu_custom_call.1} parent=1 // pred_fallthru
      _
    // Predicated region
    $region30: #{tpu_custom_call.1} parent=1 // pred_check
      _
    $region31: #{tpu_custom_call.1} parent=1 // pred_check_branch
      %130 = sbr.rel (0) target = $region33
    $region32: #{tpu_custom_call.1} parent=1 // pred_region
      %s132 = ssub.s32 384, 384
      %133 = vsyncadd [#allocation9], %s132
      %s134 = sshll.u32 [#allocation10], 4
      %s135 = int_to_ptr.vmem [resolvable:$true] %s134
      %140 = dma.hbm_to_vmem [thread:$0]  %s15, 384, %s135, [#allocation9], 128, 128, 8
    $region33: #{tpu_custom_call.1} parent=1 // pred_fallthru
      _
    // Predicated region
    $region34: #{tpu_custom_call.1} parent=1 // pred_check
      _
    $region35: #{tpu_custom_call.1} parent=1 // pred_check_branch
      %142 = sbr.rel (0) target = $region37
    $region36: #{tpu_custom_call.1} parent=1 // pred_region
      %s144 = ssub.s32 16, 16
      %145 = vsyncadd [#allocation12], %s144
      %s147 = sshll.u32 [#allocation11], 4
      %s148 = int_to_ptr.vmem [resolvable:$true] %s147
      %150 = dma.hbm_to_vmem [thread:$0]  %s17, 16, %s148, [#allocation12]
    $region37: #{tpu_custom_call.1} parent=1 // pred_fallthru
      _
    // Predicated region
    $region38: #{tpu_custom_call.1} parent=1 // pred_check
      _
    $region39: #{tpu_custom_call.1} parent=1 // pred_check_branch
      %152 = sbr.rel (0) target = $region41
    $region40: #{tpu_custom_call.1} parent=1 // pred_region
      %s154 = ssub.s32 1024, 1024
      %155 = vsyncadd [#allocation12], %s154
      %s156 = sshll.u32 [#allocation13], 4
      %s157 = int_to_ptr.vmem [resolvable:$true] %s156
      %162 = dma.hbm_to_vmem [thread:$0]  %s19, 1024, %s157, [#allocation12], 256, 256, 16
    $region41: #{tpu_custom_call.1} parent=1 // pred_fallthru
      _
    // Predicated region
    $region42: #{tpu_custom_call.1} parent=1 // pred_check
      _
    $region43: #{tpu_custom_call.1} parent=1 // pred_check_branch
      %164 = sbr.rel (0) target = $region45
    $region44: #{tpu_custom_call.1} parent=1 // pred_region
      %s166 = ssub.s32 1024, 1024
      %167 = vsyncadd [#allocation15], %s166
      %s168 = sshll.u32 [#allocation14], 4
      %s169 = int_to_ptr.vmem [resolvable:$true] %s168
      %174 = dma.hbm_to_vmem [thread:$0]  %s21, 1024, %s169, [#allocation15], 128, 128, 8
    $region45: #{tpu_custom_call.1} parent=1 // pred_fallthru
      _
    // Predicated region
    $region46: #{tpu_custom_call.1} parent=1 // pred_check
      _
    $region47: #{tpu_custom_call.1} parent=1 // pred_check_branch
      %176 = sbr.rel (0) target = $region49
    $region48: #{tpu_custom_call.1} parent=1 // pred_region
      %s178 = ssub.s32 1024, 1024
      %179 = vsyncadd [#allocation15], %s178
      %s180 = sshll.u32 [#allocation16], 4
      %s181 = int_to_ptr.vmem [resolvable:$true] %s180
      %186 = dma.hbm_to_vmem [thread:$0]  %s23, 1024, %s181, [#allocation15], 128, 128, 8
    $region49: #{tpu_custom_call.1} parent=1 // pred_fallthru
      _
    // Predicated region
    $region50: #{tpu_custom_call.1} parent=1 // pred_check
      _
    $region51: #{tpu_custom_call.1} parent=1 // pred_check_branch
      %188 = sbr.rel (0) target = $region53
    $region52: #{tpu_custom_call.1} parent=1 // pred_region
      %s190 = ssub.s32 512, 512
      %191 = vsyncadd [#allocation18], %s190
      %s192 = sshll.u32 [#allocation17], 4
      %s193 = int_to_ptr.vmem [resolvable:$true] %s192
      %198 = dma.hbm_to_vmem [thread:$0]  %s25, 512, %s193, [#allocation18], 128, 128, 8
    $region53: #{tpu_custom_call.1} parent=1 // pred_fallthru
      _
    // Predicated region
    $region54: #{tpu_custom_call.1} parent=1 // pred_check
      _
    $region55: #{tpu_custom_call.1} parent=1 // pred_check_branch
      %200 = sbr.rel (0) target = $region57
    $region56: #{tpu_custom_call.1} parent=1 // pred_region
      _
    $region57: #{tpu_custom_call.1} parent=1 // pred_fallthru
      _
    // Predicated region
    $region58: #{tpu_custom_call.1} parent=1 // pred_check
      _
    $region59: #{tpu_custom_call.1} parent=1 // pred_check_branch
      %202 = sbr.rel (0) target = $region61
    $region60: #{tpu_custom_call.1} parent=1 // pred_region
      %s204 = ssub.s32 512, 512
      %205 = vsyncadd [#allocation18], %s204
      %s206 = sshll.u32 [#allocation19], 4
      %s207 = int_to_ptr.vmem [resolvable:$true] %s206
      %212 = dma.hbm_to_vmem [thread:$0]  %s29, 512, %s207, [#allocation18], 128, 128, 8
    $region61: #{tpu_custom_call.1} parent=1 // pred_fallthru
      _
    // Predicated region
    $region62: #{tpu_custom_call.1} parent=1 // pred_check
      _
    $region63: #{tpu_custom_call.1} parent=1 // pred_check_branch
      %214 = sbr.rel (0) target = $region65
    $region64: #{tpu_custom_call.1} parent=1 // pred_region
      %s216 = ssub.s32 512, 512
      %217 = vsyncadd [#allocation21], %s216
      %s218 = sshll.u32 [#allocation20], 4
      %s219 = int_to_ptr.vmem [resolvable:$true] %s218
      %224 = dma.hbm_to_vmem [thread:$0]  %s31, 512, %s219, [#allocation21], 128, 128, 8
    $region65: #{tpu_custom_call.1} parent=1 // pred_fallthru
      _
    // Predicated region
    $region66: #{tpu_custom_call.1} parent=1 // pred_check
      _
    $region67: #{tpu_custom_call.1} parent=1 // pred_check_branch
      %226 = sbr.rel (0) target = $region69
    $region68: #{tpu_custom_call.1} parent=1 // pred_region
      %s228 = ssub.s32 512, 512
      %229 = vsyncadd [#allocation21], %s228
      %s230 = sshll.u32 [#allocation22], 4
      %s231 = int_to_ptr.vmem [resolvable:$true] %s230
      %236 = dma.hbm_to_vmem [thread:$0]  %s33, 512, %s231, [#allocation21], 128, 128, 8
    $region69: #{tpu_custom_call.1} parent=1 // pred_fallthru
      _
    // Predicated region
    $region70: #{tpu_custom_call.1} parent=1 // pred_check
      _
    $region71: #{tpu_custom_call.1} parent=1 // pred_check_branch
      %238 = sbr.rel (0) target = $region73
    $region72: #{tpu_custom_call.1} parent=1 // pred_region
      %s240 = ssub.s32 256, 256
      %241 = vsyncadd [#allocation24], %s240
      %s242 = sshll.u32 [#allocation23], 4
      %s243 = int_to_ptr.vmem [resolvable:$true] %s242
      %248 = dma.hbm_to_vmem [thread:$0]  %s35, 256, %s243, [#allocation24], 128, 128, 8
    $region73: #{tpu_custom_call.1} parent=1 // pred_fallthru
      _
    // Predicated region
    $region74: #{tpu_custom_call.1} parent=1 // pred_check
      _
    $region75: #{tpu_custom_call.1} parent=1 // pred_check_branch
      %250 = sbr.rel (0) target = $region77
    $region76: #{tpu_custom_call.1} parent=1 // pred_region
      _
    $region77: #{tpu_custom_call.1} parent=1 // pred_fallthru
      _
    // Predicated region
    $region78: #{tpu_custom_call.1} parent=1 // pred_check
      _
    $region79: #{tpu_custom_call.1} parent=1 // pred_check_branch
      %252 = sbr.rel (0) target = $region81
    $region80: #{tpu_custom_call.1} parent=1 // pred_region
      _
    $region81: #{tpu_custom_call.1} parent=1 // pred_fallthru
      _
    // Predicated region
    $region82: #{tpu_custom_call.1} parent=1 // pred_check
      _
    $region83: #{tpu_custom_call.1} parent=1 // pred_check_branch
      %254 = sbr.rel (0) target = $region85
    $region84: #{tpu_custom_call.1} parent=1 // pred_region
      %s256 = ssub.s32 1024, 1024
      %257 = vsyncadd [#allocation24], %s256
      %s258 = sshll.u32 [#allocation25], 4
      %s259 = int_to_ptr.vmem [resolvable:$true] %s258
      %264 = dma.hbm_to_vmem [thread:$0]  %s41, 1024, %s259, [#allocation24], 128, 128, 8
    $region85: #{tpu_custom_call.1} parent=1 // pred_fallthru
      _
    // Predicated region
    $region86: #{tpu_custom_call.1} parent=1 // pred_check
      _
    $region87: #{tpu_custom_call.1} parent=1 // pred_check_branch
      %266 = sbr.rel (0) target = $region89
    $region88: #{tpu_custom_call.1} parent=1 // pred_region
      %s268 = ssub.s32 1024, 1024
      %269 = vsyncadd [#allocation27], %s268
      %s270 = sshll.u32 [#allocation26], 4
      %s271 = int_to_ptr.vmem [resolvable:$true] %s270
      %276 = dma.hbm_to_vmem [thread:$0]  %s43, 1024, %s271, [#allocation27], 128, 128, 8
    $region89: #{tpu_custom_call.1} parent=1 // pred_fallthru
      _
    // Predicated region
    $region90: #{tpu_custom_call.1} parent=1 // pred_check
      _
    $region91: #{tpu_custom_call.1} parent=1 // pred_check_branch
      %278 = sbr.rel (0) target = $region93
    $region92: #{tpu_custom_call.1} parent=1 // pred_region
      %s280 = ssub.s32 512, 512
      %281 = vsyncadd [#allocation27], %s280
      %s282 = sshll.u32 [#allocation28], 4
      %s283 = int_to_ptr.vmem [resolvable:$true] %s282
      %288 = dma.hbm_to_vmem [thread:$0]  %s45, 512, %s283, [#allocation27], 128, 128, 8
    $region93: #{tpu_custom_call.1} parent=1 // pred_fallthru
      _
    // Predicated region
    $region94: #{tpu_custom_call.1} parent=1 // pred_check
      _
    $region95: #{tpu_custom_call.1} parent=1 // pred_check_branch
      %290 = sbr.rel (0) target = $region97
    $region96: #{tpu_custom_call.1} parent=1 // pred_region
      _
    $region97: #{tpu_custom_call.1} parent=1 // pred_fallthru
      _
    // Predicated region
    $region98: #{tpu_custom_call.1} parent=1 // pred_check
      _
    $region99: #{tpu_custom_call.1} parent=1 // pred_check_branch
      %292 = sbr.rel (0) target = $region101
    $region100: #{tpu_custom_call.1} parent=1 // pred_region
      %s294 = ssub.s32 512, 512
      %295 = vsyncadd [#allocation30], %s294
      %s296 = sshll.u32 [#allocation29], 4
      %s297 = int_to_ptr.vmem [resolvable:$true] %s296
      %302 = dma.hbm_to_vmem [thread:$0]  %s49, 512, %s297, [#allocation30], 128, 128, 8
    $region101: #{tpu_custom_call.1} parent=1 // pred_fallthru
      _
    // Predicated region
    $region102: #{tpu_custom_call.1} parent=1 // pred_check
      _
    $region103: #{tpu_custom_call.1} parent=1 // pred_check_branch
      %304 = sbr.rel (0) target = $region105
    $region104: #{tpu_custom_call.1} parent=1 // pred_region
      %s306 = ssub.s32 256, 256
      %307 = vsyncadd [#allocation30], %s306
      %s308 = sshll.u32 [#allocation31], 4
      %s309 = int_to_ptr.vmem [resolvable:$true] %s308
      %314 = dma.hbm_to_vmem [thread:$0]  %s51, 256, %s309, [#allocation30], 128, 128, 8
    $region105: #{tpu_custom_call.1} parent=1 // pred_fallthru
      _
    // Predicated region
    $region106: #{tpu_custom_call.1} parent=1 // pred_check
      _
    $region107: #{tpu_custom_call.1} parent=1 // pred_check_branch
      %316 = sbr.rel (0) target = $region109
    $region108: #{tpu_custom_call.1} parent=1 // pred_region
      %s318 = ssub.s32 256, 256
      %319 = vsyncadd [#allocation33], %s318
      %s320 = sshll.u32 [#allocation32], 4
      %s321 = int_to_ptr.vmem [resolvable:$true] %s320
      %326 = dma.hbm_to_vmem [thread:$0]  %s53, 256, %s321, [#allocation33], 128, 128, 8
    $region109: #{tpu_custom_call.1} parent=1 // pred_fallthru
      _
    // Predicated region
    $region110: #{tpu_custom_call.1} parent=1 // pred_check
      _
    $region111: #{tpu_custom_call.1} parent=1 // pred_check_branch
      %328 = sbr.rel (0) target = $region113
    $region112: #{tpu_custom_call.1} parent=1 // pred_region
      _
    $region113: #{tpu_custom_call.1} parent=1 // pred_fallthru
      _
    // Predicated region
    $region114: #{tpu_custom_call.1} parent=1 // pred_check
      _
    $region115: #{tpu_custom_call.1} parent=1 // pred_check_branch
      %330 = sbr.rel (0) target = $region117
    $region116: #{tpu_custom_call.1} parent=1 // pred_region
      _
    $region117: #{tpu_custom_call.1} parent=1 // pred_fallthru
      _
    // Predicated region
    $region118: #{tpu_custom_call.1} parent=1 // pred_check
      _
    $region119: #{tpu_custom_call.1} parent=1 // pred_check_branch
      %332 = sbr.rel (0) target = $region121
    $region120: #{tpu_custom_call.1} parent=1 // pred_region
      %333 = dma.done [#allocation4], 512
    $region121: #{tpu_custom_call.1} parent=1 // pred_fallthru
      _
    // Predicated region
    $region122: #{tpu_custom_call.1} parent=1 // pred_check
      _
    $region123: #{tpu_custom_call.1} parent=1 // pred_check_branch
      %335 = sbr.rel (0) target = $region125
    $region124: #{tpu_custom_call.1} parent=1 // pred_region
      %336 = dma.done [#allocation6], 1024
    $region125: #{tpu_custom_call.1} parent=1 // pred_fallthru
      _
    // Predicated region
    $region126: #{tpu_custom_call.1} parent=1 // pred_check
      _
    $region127: #{tpu_custom_call.1} parent=1 // pred_check_branch
      %338 = sbr.rel (0) target = $region129
    $region128: #{tpu_custom_call.1} parent=1 // pred_region
      %339 = dma.done [#allocation6], 256
    $region129: #{tpu_custom_call.1} parent=1 // pred_fallthru
      _
    // Predicated region
    $region130: #{tpu_custom_call.1} parent=1 // pred_check
      _
    $region131: #{tpu_custom_call.1} parent=1 // pred_check_branch
      %341 = sbr.rel (0) target = $region133
    $region132: #{tpu_custom_call.1} parent=1 // pred_region
      %342 = dma.done [#allocation9], 1024
    $region133: #{tpu_custom_call.1} parent=1 // pred_fallthru
      _
    // Predicated region
    $region134: #{tpu_custom_call.1} parent=1 // pred_check
      _
    $region135: #{tpu_custom_call.1} parent=1 // pred_check_branch
      %344 = sbr.rel (0) target = $region137
    $region136: #{tpu_custom_call.1} parent=1 // pred_region
      %345 = dma.done [#allocation9], 384
    $region137: #{tpu_custom_call.1} parent=1 // pred_fallthru
      _
    // Predicated region
    $region138: #{tpu_custom_call.1} parent=1 // pred_check
      _
    $region139: #{tpu_custom_call.1} parent=1 // pred_check_branch
      %347 = sbr.rel (0) target = $region141
    $region140: #{tpu_custom_call.1} parent=1 // pred_region
      %348 = dma.done [#allocation12], 16
    $region141: #{tpu_custom_call.1} parent=1 // pred_fallthru
      _
    // Predicated region
    $region142: #{tpu_custom_call.1} parent=1 // pred_check
      _
    $region143: #{tpu_custom_call.1} parent=1 // pred_check_branch
      %350 = sbr.rel (0) target = $region145
    $region144: #{tpu_custom_call.1} parent=1 // pred_region
      %351 = dma.done [#allocation12], 1024
    $region145: #{tpu_custom_call.1} parent=1 // pred_fallthru
      _
    // Predicated region
    $region146: #{tpu_custom_call.1} parent=1 // pred_check
      _
    $region147: #{tpu_custom_call.1} parent=1 // pred_check_branch
      %353 = sbr.rel (0) target = $region149
    $region148: #{tpu_custom_call.1} parent=1 // pred_region
      %354 = dma.done [#allocation15], 1024
    $region149: #{tpu_custom_call.1} parent=1 // pred_fallthru
      _
    // Predicated region
    $region150: #{tpu_custom_call.1} parent=1 // pred_check
      _
    $region151: #{tpu_custom_call.1} parent=1 // pred_check_branch
      %356 = sbr.rel (0) target = $region153
    $region152: #{tpu_custom_call.1} parent=1 // pred_region
      %357 = dma.done [#allocation15], 1024
    $region153: #{tpu_custom_call.1} parent=1 // pred_fallthru
      _
    // Predicated region
    $region154: #{tpu_custom_call.1} parent=1 // pred_check
      _
    $region155: #{tpu_custom_call.1} parent=1 // pred_check_branch
      %359 = sbr.rel (0) target = $region157
    $region156: #{tpu_custom_call.1} parent=1 // pred_region
      %360 = dma.done [#allocation18], 512
    $region157: #{tpu_custom_call.1} parent=1 // pred_fallthru
      _
    // Predicated region
    $region158: #{tpu_custom_call.1} parent=1 // pred_check
      _
    $region159: #{tpu_custom_call.1} parent=1 // pred_check_branch
      %362 = sbr.rel (0) target = $region161
    $region160: #{tpu_custom_call.1} parent=1 // pred_region
      %363 = dma.done [#allocation18], 512
    $region161: #{tpu_custom_call.1} parent=1 // pred_fallthru
      _
    // Predicated region
    $region162: #{tpu_custom_call.1} parent=1 // pred_check
      _
    $region163: #{tpu_custom_call.1} parent=1 // pred_check_branch
      %365 = sbr.rel (0) target = $region165
    $region164: #{tpu_custom_call.1} parent=1 // pred_region
      %366 = dma.done [#allocation21], 512
    $region165: #{tpu_custom_call.1} parent=1 // pred_fallthru
      _
    // Predicated region
    $region166: #{tpu_custom_call.1} parent=1 // pred_check
      _
    $region167: #{tpu_custom_call.1} parent=1 // pred_check_branch
      %368 = sbr.rel (0) target = $region169
    $region168: #{tpu_custom_call.1} parent=1 // pred_region
      %369 = dma.done [#allocation21], 512
    $region169: #{tpu_custom_call.1} parent=1 // pred_fallthru
      _
    // Predicated region
    $region170: #{tpu_custom_call.1} parent=1 // pred_check
      _
    $region171: #{tpu_custom_call.1} parent=1 // pred_check_branch
      %371 = sbr.rel (0) target = $region173
    $region172: #{tpu_custom_call.1} parent=1 // pred_region
      %372 = dma.done [#allocation24], 256
    $region173: #{tpu_custom_call.1} parent=1 // pred_fallthru
      _
    // Predicated region
    $region174: #{tpu_custom_call.1} parent=1 // pred_check
      _
    $region175: #{tpu_custom_call.1} parent=1 // pred_check_branch
      %374 = sbr.rel (0) target = $region177
    $region176: #{tpu_custom_call.1} parent=1 // pred_region
      %375 = dma.done [#allocation24], 1024
    $region177: #{tpu_custom_call.1} parent=1 // pred_fallthru
      _
    // Predicated region
    $region178: #{tpu_custom_call.1} parent=1 // pred_check
      _
    $region179: #{tpu_custom_call.1} parent=1 // pred_check_branch
      %377 = sbr.rel (0) target = $region181
    $region180: #{tpu_custom_call.1} parent=1 // pred_region
      %378 = dma.done [#allocation27], 1024
    $region181: #{tpu_custom_call.1} parent=1 // pred_fallthru
      _
    // Predicated region
    $region182: #{tpu_custom_call.1} parent=1 // pred_check
      _
    $region183: #{tpu_custom_call.1} parent=1 // pred_check_branch
      %380 = sbr.rel (0) target = $region185
    $region184: #{tpu_custom_call.1} parent=1 // pred_region
      %381 = dma.done [#allocation27], 512
    $region185: #{tpu_custom_call.1} parent=1 // pred_fallthru
      _
    // Predicated region
    $region186: #{tpu_custom_call.1} parent=1 // pred_check
      _
    $region187: #{tpu_custom_call.1} parent=1 // pred_check_branch
      %383 = sbr.rel (0) target = $region189
    $region188: #{tpu_custom_call.1} parent=1 // pred_region
      %384 = dma.done [#allocation30], 512
    $region189: #{tpu_custom_call.1} parent=1 // pred_fallthru
      _
    // Predicated region
    $region190: #{tpu_custom_call.1} parent=1 // pred_check
      _
    $region191: #{tpu_custom_call.1} parent=1 // pred_check_branch
      %386 = sbr.rel (0) target = $region193
    $region192: #{tpu_custom_call.1} parent=1 // pred_region
      %387 = dma.done [#allocation30], 256
    $region193: #{tpu_custom_call.1} parent=1 // pred_fallthru
      _
    // Predicated region
    $region194: #{tpu_custom_call.1} parent=1 // pred_check
      _
    $region195: #{tpu_custom_call.1} parent=1 // pred_check_branch
      %389 = sbr.rel (0) target = $region197
    $region196: #{tpu_custom_call.1} parent=1 // pred_region
      %390 = dma.done [#allocation33], 256
    $region197: #{tpu_custom_call.1} parent=1 // pred_fallthru
      _
    %v391 = vld [vmem:[#allocation3] sm:$0xff]
    %v392 = vld [vmem:[#allocation3 + $0x8] sm:$0xff]
    %v393 = vld [vmem:[#allocation3 + $0x10] sm:$0xff]
    %v394 = vld [vmem:[#allocation3 + $0x18] sm:$0xff]
    %v395 = vld [vmem:[%s3] sm:$0xff]
    %v396 = vld [vmem:[%s3 + $0x8] sm:$0xff]
    %v397 = vld [vmem:[%s3 + $0x10] sm:$0xff]
    %v398 = vld [vmem:[%s3 + $0x18] sm:$0xff]
    %v399 = vld [vmem:[#allocation5] sm:$0xff]
    %v400 = vld [vmem:[#allocation5 + $0x8] sm:$0xff]
    %v401 = vld [vmem:[#allocation5 + $0x10] sm:$0xff]
    %v402 = vld [vmem:[#allocation5 + $0x18] sm:$0xff]
    %v403 = vld [vmem:[#allocation5 + $0x20] sm:$0xff]
    %v404 = vld [vmem:[#allocation5 + $0x28] sm:$0xff]
    %v405 = vld [vmem:[#allocation5 + $0x30] sm:$0xff]
    %v406 = vld [vmem:[#allocation5 + $0x38] sm:$0xff]
    %v407 = vld [vmem:[#allocation13] sm:$0xff]
    %v408 = vld [vmem:[#allocation13 + $0x8] sm:$0xff]
    %v409 = vld [vmem:[#allocation13 + $0x10] sm:$0xff]
    %v410 = vld [vmem:[#allocation13 + $0x18] sm:$0xff]
    %v411 = vld [vmem:[#allocation13 + $0x20] sm:$0xff]
    %v412 = vld [vmem:[#allocation13 + $0x28] sm:$0xff]
    %v413 = vld [vmem:[#allocation13 + $0x30] sm:$0xff]
    %v414 = vld [vmem:[#allocation13 + $0x38] sm:$0xff]
    %vm415 = vcmask 261120
    %v417 = vsel %vm415, %v391, 0
    %v420 = vsel %vm415, %v392, 0
    %v423 = vsel %vm415, %v393, 0
    %v426 = vsel %vm415, %v394, 0
    %428 = vmatprep.subr.mxu0 0.0
    %429 = vmatpush1.msra.mxu0 0.0
    %430 = vmatprep.subr.mxu0 0.0
    %431 = vmatpush1.msra.mxu0 0.0
    %432 = vmatprep.subr.mxu0 0.0
    %433 = vmatpush1.msra.mxu0 0.0
    %434 = vmatprep.subr.mxu0 0.0
    %435 = vmatpush1.msra.mxu0 0.0
    %436 = vmatprep.subr.mxu0 0.0
    %437 = vmatpush1.msra.mxu0 0.0
    %438 = vmatprep.subr.mxu0 0.0
    %439 = vmatpush1.msra.mxu0 0.0
    %440 = vmatprep.subr.mxu0 0.0
    %441 = vmatpush1.msra.mxu0 0.0
    %442 = vmatprep.subr.mxu0 0.0
    %443 = vmatpush1.msra.mxu0 0.0
    %444 = vmatprep.subr.mxu0 0.0
    %445 = vmatpush1.msra.mxu0 0.0
    %446 = vmatprep.subr.mxu0 0.0
    %447 = vmatpush1.msra.mxu0 0.0
    %448 = vmatprep.subr.mxu0 0.0
    %449 = vmatpush1.msra.mxu0 0.0
    %450 = vmatprep.subr.mxu0 0.0
    %451 = vmatpush1.msra.mxu0 0.0
    %452 = vmatprep.subr.mxu0 %v414
    %453 = vmatpush1.msra.mxu0 %v413
    %454 = vmatprep.subr.mxu0 %v412
    %455 = vmatpush1.msra.mxu0 %v411
    %456 = vmatprep.subr.mxu0 %v410
    %457 = vmatpush1.msra.mxu0 %v409
    %458 = vmatprep.subr.mxu0 %v408
    %459 = vmatpush1.msra.mxu0 %v407
    %460 = vmatprep.subr.mxu0 0.0
    %461 = vmatpush2.msra.mxu0 0.0
    %462 = vmatprep.subr.mxu0 0.0
    %463 = vmatpush2.msra.mxu0 0.0
    %464 = vmatprep.subr.mxu0 0.0
    %465 = vmatpush2.msra.mxu0 0.0
    %466 = vmatprep.subr.mxu0 0.0
    %467 = vmatpush2.msra.mxu0 0.0
    %468 = vmatprep.subr.mxu0 0.0
    %469 = vmatpush2.msra.mxu0 0.0
    %470 = vmatprep.subr.mxu0 0.0
    %471 = vmatpush2.msra.mxu0 0.0
    %472 = vmatprep.subr.mxu0 0.0
    %473 = vmatpush2.msra.mxu0 0.0
    %474 = vmatprep.subr.mxu0 0.0
    %475 = vmatpush2.msra.mxu0 0.0
    %476 = vmatprep.subr.mxu0 0.0
    %477 = vmatpush2.msra.mxu0 0.0
    %478 = vmatprep.subr.mxu0 0.0
    %479 = vmatpush2.msra.mxu0 0.0
    %480 = vmatprep.subr.mxu0 0.0
    %481 = vmatpush2.msra.mxu0 0.0
    %482 = vmatprep.subr.mxu0 0.0
    %483 = vmatpush2.msra.mxu0 0.0
    %484 = vmatprep.subr.mxu0 0.0
    %485 = vmatpush2.msra.mxu0 0.0
    %486 = vmatprep.subr.mxu0 0.0
    %487 = vmatpush2.msra.mxu0 0.0
    %488 = vmatprep.subr.mxu0 0.0
    %489 = vmatpush2.msra.mxu0 0.0
    %490 = vmatprep.subr.mxu0 0.0
    %491 = vmatpush2.msra.mxu0 0.0
    %492 = vmatprep.mubr.f32.mxu0 0.0
    %493 = vmatmul.mubr.f32.gmra.mxu0 %v417
    %v494 = vpop.f32.mrf.mxu0
    %v495 = vadd.f32 0.0, %v494
    %v496 = vpop.f32.mrf.mxu0
    %v497 = vadd.f32 0.0, %v496
    %498 = vmatprep.mubr.f32.mxu0 0.0
    %499 = vmatmul.mubr.f32.gmra.mxu0 %v420
    %v500 = vpop.f32.mrf.mxu0
    %v501 = vadd.f32 0.0, %v500
    %v502 = vpop.f32.mrf.mxu0
    %v503 = vadd.f32 0.0, %v502
    %504 = vmatprep.mubr.f32.mxu0 0.0
    %505 = vmatmul.mubr.f32.gmra.mxu0 %v423
    %v506 = vpop.f32.mrf.mxu0
    %v507 = vadd.f32 0.0, %v506
    %v508 = vpop.f32.mrf.mxu0
    %v509 = vadd.f32 0.0, %v508
    %510 = vmatprep.mubr.f32.mxu0 0.0
    %511 = vmatmul.mubr.f32.gmra.mxu0 %v426
    %v512 = vpop.f32.mrf.mxu0
    %v513 = vadd.f32 0.0, %v512
    %v514 = vpop.f32.mrf.mxu0
    %v515 = vadd.f32 0.0, %v514
    %516 = vdwg.mxu0
    %518 = vset.pattern.permute.xlu0 0
    %519 = vperm.xlu0 %518, %v395
    %v520 = vpop.permute.xlu0 %519
    %523 = vset.pattern.permute.xlu0 0
    %524 = vperm.xlu0 %523, %v396
    %v525 = vpop.permute.xlu0 %524
    %528 = vset.pattern.permute.xlu0 0
    %529 = vperm.xlu0 %528, %v397
    %v530 = vpop.permute.xlu0 %529
    %533 = vset.pattern.permute.xlu0 0
    %534 = vperm.xlu0 %533, %v398
    %v535 = vpop.permute.xlu0 %534
    %v537 = vmul.f32 %v520, %v495
    %v538 = vmul.f32 %v525, %v501
    %v539 = vmul.f32 %v530, %v507
    %v540 = vmul.f32 %v535, %v513
    %541 = vset.pattern.permute.xlu0 1
    %542 = vperm.xlu0 %541, %v395
    %v543 = vpop.permute.xlu0 %542
    %545 = vset.pattern.permute.xlu0 1
    %546 = vperm.xlu0 %545, %v396
    %v547 = vpop.permute.xlu0 %546
    %549 = vset.pattern.permute.xlu0 1
    %550 = vperm.xlu0 %549, %v397
    %v551 = vpop.permute.xlu0 %550
    %553 = vset.pattern.permute.xlu0 1
    %554 = vperm.xlu0 %553, %v398
    %v555 = vpop.permute.xlu0 %554
    %v557 = vmul.f32 %v543, %v495
    %v558 = vmul.f32 %v543, %v497
    %v559 = vmul.f32 %v547, %v501
    %v560 = vmul.f32 %v547, %v503
    %v561 = vmul.f32 %v551, %v507
    %v562 = vmul.f32 %v551, %v509
    %v563 = vmul.f32 %v555, %v513
    %v564 = vmul.f32 %v555, %v515
    %573 = vrot.lane.b32.xlu0 %v557, 32
    %v574 = vpop.permute.xlu0 %573
    %575 = vrot.lane.b32.xlu0 %v558, 32
    %v576 = vpop.permute.xlu0 %575
    %577 = vrot.lane.b32.xlu0 %v559, 32
    %v578 = vpop.permute.xlu0 %577
    %579 = vrot.lane.b32.xlu0 %v560, 32
    %v580 = vpop.permute.xlu0 %579
    %581 = vrot.lane.b32.xlu0 %v561, 32
    %v582 = vpop.permute.xlu0 %581
    %583 = vrot.lane.b32.xlu0 %v562, 32
    %v584 = vpop.permute.xlu0 %583
    %585 = vrot.lane.b32.xlu0 %v563, 32
    %v586 = vpop.permute.xlu0 %585
    %587 = vrot.lane.b32.xlu0 %v564, 32
    %v588 = vpop.permute.xlu0 %587
    %v589 = vsel %vm415, %v574, %v576
    %v590 = vsel %vm415, %v578, %v580
    %v591 = vsel %vm415, %v582, %v584
    %v592 = vsel %vm415, %v586, %v588
    %v597 = vadd.f32 %v537, %v589
    %v598 = vadd.f32 %v538, %v590
    %v599 = vadd.f32 %v539, %v591
    %v600 = vadd.f32 %v540, %v592
    %v601 = vld [vmem:[#allocation14] sm:$0xff]
    %v602 = vld [vmem:[#allocation14 + $0x8] sm:$0xff]
    %v603 = vld [vmem:[#allocation14 + $0x10] sm:$0xff]
    %v604 = vld [vmem:[#allocation14 + $0x18] sm:$0xff]
    %v605 = vld [vmem:[#allocation14 + $0x20] sm:$0xff]
    %v606 = vld [vmem:[#allocation14 + $0x28] sm:$0xff]
    %v607 = vld [vmem:[#allocation14 + $0x30] sm:$0xff]
    %v608 = vld [vmem:[#allocation14 + $0x38] sm:$0xff]
    %v609 = vld [vmem:[#allocation16] sm:$0xff]
    %v610 = vld [vmem:[#allocation16 + $0x8] sm:$0xff]
    %v611 = vld [vmem:[#allocation16 + $0x10] sm:$0xff]
    %v612 = vld [vmem:[#allocation16 + $0x18] sm:$0xff]
    %v613 = vld [vmem:[#allocation16 + $0x20] sm:$0xff]
    %v614 = vld [vmem:[#allocation16 + $0x28] sm:$0xff]
    %v615 = vld [vmem:[#allocation16 + $0x30] sm:$0xff]
    %v616 = vld [vmem:[#allocation16 + $0x38] sm:$0xff]
    %v618 = vsel %vm415, %v597, 0
    %v621 = vsel %vm415, %v598, 0
    %v624 = vsel %vm415, %v599, 0
    %v627 = vsel %vm415, %v600, 0
    %629 = vmatprep.subr.mxu0 0.0
    %630 = vmatpush1.msra.mxu0 0.0
    %631 = vmatprep.subr.mxu0 0.0
    %632 = vmatpush1.msra.mxu0 0.0
    %633 = vmatprep.subr.mxu0 0.0
    %634 = vmatpush1.msra.mxu0 0.0
    %635 = vmatprep.subr.mxu0 0.0
    %636 = vmatpush1.msra.mxu0 0.0
    %637 = vmatprep.subr.mxu0 0.0
    %638 = vmatpush1.msra.mxu0 0.0
    %639 = vmatprep.subr.mxu0 0.0
    %640 = vmatpush1.msra.mxu0 0.0
    %641 = vmatprep.subr.mxu0 0.0
    %642 = vmatpush1.msra.mxu0 0.0
    %643 = vmatprep.subr.mxu0 0.0
    %644 = vmatpush1.msra.mxu0 0.0
    %645 = vmatprep.subr.mxu0 0.0
    %646 = vmatpush1.msra.mxu0 0.0
    %647 = vmatprep.subr.mxu0 0.0
    %648 = vmatpush1.msra.mxu0 0.0
    %649 = vmatprep.subr.mxu0 0.0
    %650 = vmatpush1.msra.mxu0 0.0
    %651 = vmatprep.subr.mxu0 0.0
    %652 = vmatpush1.msra.mxu0 0.0
    %653 = vmatprep.subr.mxu0 0.0
    %654 = vmatpush1.msra.mxu0 %v604
    %655 = vmatprep.subr.mxu0 0.0
    %656 = vmatpush1.msra.mxu0 %v603
    %657 = vmatprep.subr.mxu0 0.0
    %658 = vmatpush1.msra.mxu0 %v602
    %659 = vmatprep.subr.mxu0 0.0
    %660 = vmatpush1.msra.mxu0 %v601
    %661 = vmatprep.subr.mxu0 0.0
    %662 = vmatpush2.msra.mxu0 0.0
    %663 = vmatprep.subr.mxu0 0.0
    %664 = vmatpush2.msra.mxu0 0.0
    %665 = vmatprep.subr.mxu0 0.0
    %666 = vmatpush2.msra.mxu0 0.0
    %667 = vmatprep.subr.mxu0 0.0
    %668 = vmatpush2.msra.mxu0 0.0
    %669 = vmatprep.subr.mxu0 0.0
    %670 = vmatpush2.msra.mxu0 0.0
    %671 = vmatprep.subr.mxu0 0.0
    %672 = vmatpush2.msra.mxu0 0.0
    %673 = vmatprep.subr.mxu0 0.0
    %674 = vmatpush2.msra.mxu0 0.0
    %675 = vmatprep.subr.mxu0 0.0
    %676 = vmatpush2.msra.mxu0 0.0
    %677 = vmatprep.subr.mxu0 0.0
    %678 = vmatpush2.msra.mxu0 0.0
    %679 = vmatprep.subr.mxu0 0.0
    %680 = vmatpush2.msra.mxu0 0.0
    %681 = vmatprep.subr.mxu0 0.0
    %682 = vmatpush2.msra.mxu0 0.0
    %683 = vmatprep.subr.mxu0 0.0
    %684 = vmatpush2.msra.mxu0 0.0
    %685 = vmatprep.subr.mxu0 0.0
    %686 = vmatpush2.msra.mxu0 0.0
    %687 = vmatprep.subr.mxu0 0.0
    %688 = vmatpush2.msra.mxu0 0.0
    %689 = vmatprep.subr.mxu0 0.0
    %690 = vmatpush2.msra.mxu0 0.0
    %691 = vmatprep.subr.mxu0 0.0
    %692 = vmatpush2.msra.mxu0 0.0
    %693 = vmatprep.mubr.f32.mxu0 0.0
    %694 = vmatmul.mubr.f32.gmra.mxu0 %v618
    %v695 = vpop.f32.mrf.mxu0
    %v696 = vadd.f32 0.0, %v695
    %v697 = vpop.f32.mrf.mxu0
    %698 = vmatprep.mubr.f32.mxu0 0.0
    %699 = vmatmul.mubr.f32.gmra.mxu0 %v621
    %v700 = vpop.f32.mrf.mxu0
    %v701 = vadd.f32 0.0, %v700
    %v702 = vpop.f32.mrf.mxu0
    %703 = vmatprep.mubr.f32.mxu0 0.0
    %704 = vmatmul.mubr.f32.gmra.mxu0 %v624
    %v705 = vpop.f32.mrf.mxu0
    %v706 = vadd.f32 0.0, %v705
    %v707 = vpop.f32.mrf.mxu0
    %708 = vmatprep.mubr.f32.mxu0 0.0
    %709 = vmatmul.mubr.f32.gmra.mxu0 %v627
    %v710 = vpop.f32.mrf.mxu0
    %v711 = vadd.f32 0.0, %v710
    %v712 = vpop.f32.mrf.mxu0
    %713 = vdwg.mxu0
    %714 = vrot.lane.b32.xlu0 %v597, 64
    %v715 = vpop.permute.xlu0 %714
    %716 = vrot.lane.b32.xlu0 %v598, 64
    %v717 = vpop.permute.xlu0 %716
    %718 = vrot.lane.b32.xlu0 %v599, 64
    %v719 = vpop.permute.xlu0 %718
    %720 = vrot.lane.b32.xlu0 %v600, 64
    %v721 = vpop.permute.xlu0 %720
    %v722 = vsel %vm415, %v715, 0
    %v724 = vsel %vm415, %v717, 0
    %v726 = vsel %vm415, %v719, 0
    %v728 = vsel %vm415, %v721, 0
    %730 = vmatprep.subr.mxu0 0.0
    %731 = vmatpush1.msra.mxu0 0.0
    %732 = vmatprep.subr.mxu0 0.0
    %733 = vmatpush1.msra.mxu0 0.0
    %734 = vmatprep.subr.mxu0 0.0
    %735 = vmatpush1.msra.mxu0 0.0
    %736 = vmatprep.subr.mxu0 0.0
    %737 = vmatpush1.msra.mxu0 0.0
    %738 = vmatprep.subr.mxu0 0.0
    %739 = vmatpush1.msra.mxu0 0.0
    %740 = vmatprep.subr.mxu0 0.0
    %741 = vmatpush1.msra.mxu0 0.0
    %742 = vmatprep.subr.mxu0 0.0
    %743 = vmatpush1.msra.mxu0 0.0
    %744 = vmatprep.subr.mxu0 0.0
    %745 = vmatpush1.msra.mxu0 0.0
    %746 = vmatprep.subr.mxu0 0.0
    %747 = vmatpush1.msra.mxu0 0.0
    %748 = vmatprep.subr.mxu0 0.0
    %749 = vmatpush1.msra.mxu0 0.0
    %750 = vmatprep.subr.mxu0 0.0
    %751 = vmatpush1.msra.mxu0 0.0
    %752 = vmatprep.subr.mxu0 0.0
    %753 = vmatpush1.msra.mxu0 0.0
    %754 = vmatprep.subr.mxu0 0.0
    %755 = vmatpush1.msra.mxu0 %v612
    %756 = vmatprep.subr.mxu0 0.0
    %757 = vmatpush1.msra.mxu0 %v611
    %758 = vmatprep.subr.mxu0 0.0
    %759 = vmatpush1.msra.mxu0 %v610
    %760 = vmatprep.subr.mxu0 0.0
    %761 = vmatpush1.msra.mxu0 %v609
    %762 = vmatprep.subr.mxu0 0.0
    %763 = vmatpush2.msra.mxu0 0.0
    %764 = vmatprep.subr.mxu0 0.0
    %765 = vmatpush2.msra.mxu0 0.0
    %766 = vmatprep.subr.mxu0 0.0
    %767 = vmatpush2.msra.mxu0 0.0
    %768 = vmatprep.subr.mxu0 0.0
    %769 = vmatpush2.msra.mxu0 0.0
    %770 = vmatprep.subr.mxu0 0.0
    %771 = vmatpush2.msra.mxu0 0.0
    %772 = vmatprep.subr.mxu0 0.0
    %773 = vmatpush2.msra.mxu0 0.0
    %774 = vmatprep.subr.mxu0 0.0
    %775 = vmatpush2.msra.mxu0 0.0
    %776 = vmatprep.subr.mxu0 0.0
    %777 = vmatpush2.msra.mxu0 0.0
    %778 = vmatprep.subr.mxu0 0.0
    %779 = vmatpush2.msra.mxu0 0.0
    %780 = vmatprep.subr.mxu0 0.0
    %781 = vmatpush2.msra.mxu0 0.0
    %782 = vmatprep.subr.mxu0 0.0
    %783 = vmatpush2.msra.mxu0 0.0
    %784 = vmatprep.subr.mxu0 0.0
    %785 = vmatpush2.msra.mxu0 0.0
    %786 = vmatprep.subr.mxu0 0.0
    %787 = vmatpush2.msra.mxu0 0.0
    %788 = vmatprep.subr.mxu0 0.0
    %789 = vmatpush2.msra.mxu0 0.0
    %790 = vmatprep.subr.mxu0 0.0
    %791 = vmatpush2.msra.mxu0 0.0
    %792 = vmatprep.subr.mxu0 0.0
    %793 = vmatpush2.msra.mxu0 0.0
    %794 = vmatprep.mubr.f32.mxu0 0.0
    %795 = vmatmul.mubr.f32.gmra.mxu0 %v722
    %v796 = vpop.f32.mrf.mxu0
    %v797 = vadd.f32 0.0, %v796
    %v798 = vpop.f32.mrf.mxu0
    %799 = vmatprep.mubr.f32.mxu0 0.0
    %800 = vmatmul.mubr.f32.gmra.mxu0 %v724
    %v801 = vpop.f32.mrf.mxu0
    %v802 = vadd.f32 0.0, %v801
    %v803 = vpop.f32.mrf.mxu0
    %804 = vmatprep.mubr.f32.mxu0 0.0
    %805 = vmatmul.mubr.f32.gmra.mxu0 %v726
    %v806 = vpop.f32.mrf.mxu0
    %v807 = vadd.f32 0.0, %v806
    %v808 = vpop.f32.mrf.mxu0
    %809 = vmatprep.mubr.f32.mxu0 0.0
    %810 = vmatmul.mubr.f32.gmra.mxu0 %v728
    %v811 = vpop.f32.mrf.mxu0
    %v812 = vadd.f32 0.0, %v811
    %v813 = vpop.f32.mrf.mxu0
    %814 = vdwg.mxu0
    %815 = vmatprep.subr.mxu0 0.0
    %816 = vmatpush1.msra.mxu0 0.0
    %817 = vmatprep.subr.mxu0 0.0
    %818 = vmatpush1.msra.mxu0 0.0
    %819 = vmatprep.subr.mxu0 0.0
    %820 = vmatpush1.msra.mxu0 0.0
    %821 = vmatprep.subr.mxu0 0.0
    %822 = vmatpush1.msra.mxu0 0.0
    %823 = vmatprep.subr.mxu0 0.0
    %824 = vmatpush1.msra.mxu0 0.0
    %825 = vmatprep.subr.mxu0 0.0
    %826 = vmatpush1.msra.mxu0 0.0
    %827 = vmatprep.subr.mxu0 0.0
    %828 = vmatpush1.msra.mxu0 0.0
    %829 = vmatprep.subr.mxu0 0.0
    %830 = vmatpush1.msra.mxu0 0.0
    %831 = vmatprep.subr.mxu0 0.0
    %832 = vmatpush1.msra.mxu0 0.0
    %833 = vmatprep.subr.mxu0 0.0
    %834 = vmatpush1.msra.mxu0 0.0
    %835 = vmatprep.subr.mxu0 0.0
    %836 = vmatpush1.msra.mxu0 0.0
    %837 = vmatprep.subr.mxu0 0.0
    %838 = vmatpush1.msra.mxu0 0.0
    %839 = vmatprep.subr.mxu0 0.0
    %840 = vmatpush1.msra.mxu0 %v608
    %841 = vmatprep.subr.mxu0 0.0
    %842 = vmatpush1.msra.mxu0 %v607
    %843 = vmatprep.subr.mxu0 0.0
    %844 = vmatpush1.msra.mxu0 %v606
    %845 = vmatprep.subr.mxu0 0.0
    %846 = vmatpush1.msra.mxu0 %v605
    %847 = vmatprep.subr.mxu0 0.0
    %848 = vmatpush2.msra.mxu0 0.0
    %849 = vmatprep.subr.mxu0 0.0
    %850 = vmatpush2.msra.mxu0 0.0
    %851 = vmatprep.subr.mxu0 0.0
    %852 = vmatpush2.msra.mxu0 0.0
    %853 = vmatprep.subr.mxu0 0.0
    %854 = vmatpush2.msra.mxu0 0.0
    %855 = vmatprep.subr.mxu0 0.0
    %856 = vmatpush2.msra.mxu0 0.0
    %857 = vmatprep.subr.mxu0 0.0
    %858 = vmatpush2.msra.mxu0 0.0
    %859 = vmatprep.subr.mxu0 0.0
    %860 = vmatpush2.msra.mxu0 0.0
    %861 = vmatprep.subr.mxu0 0.0
    %862 = vmatpush2.msra.mxu0 0.0
    %863 = vmatprep.subr.mxu0 0.0
    %864 = vmatpush2.msra.mxu0 0.0
    %865 = vmatprep.subr.mxu0 0.0
    %866 = vmatpush2.msra.mxu0 0.0
    %867 = vmatprep.subr.mxu0 0.0
    %868 = vmatpush2.msra.mxu0 0.0
    %869 = vmatprep.subr.mxu0 0.0
    %870 = vmatpush2.msra.mxu0 0.0
    %871 = vmatprep.subr.mxu0 0.0
    %872 = vmatpush2.msra.mxu0 0.0
    %873 = vmatprep.subr.mxu0 0.0
    %874 = vmatpush2.msra.mxu0 0.0
    %875 = vmatprep.subr.mxu0 0.0
    %876 = vmatpush2.msra.mxu0 0.0
    %877 = vmatprep.subr.mxu0 0.0
    %878 = vmatpush2.msra.mxu0 0.0
    %879 = vmatprep.mubr.f32.mxu0 0.0
    %880 = vmatmul.mubr.f32.gmra.mxu0 %v618
    %v881 = vpop.f32.mrf.mxu0
    %v882 = vadd.f32 0.0, %v881
    %v883 = vpop.f32.mrf.mxu0
    %884 = vmatprep.mubr.f32.mxu0 0.0
    %885 = vmatmul.mubr.f32.gmra.mxu0 %v621
    %v886 = vpop.f32.mrf.mxu0
    %v887 = vadd.f32 0.0, %v886
    %v888 = vpop.f32.mrf.mxu0
    %889 = vmatprep.mubr.f32.mxu0 0.0
    %890 = vmatmul.mubr.f32.gmra.mxu0 %v624
    %v891 = vpop.f32.mrf.mxu0
    %v892 = vadd.f32 0.0, %v891
    %v893 = vpop.f32.mrf.mxu0
    %894 = vmatprep.mubr.f32.mxu0 0.0
    %895 = vmatmul.mubr.f32.gmra.mxu0 %v627
    %v896 = vpop.f32.mrf.mxu0
    %v897 = vadd.f32 0.0, %v896
    %v898 = vpop.f32.mrf.mxu0
    %899 = vdwg.mxu0
    %900 = vmatprep.subr.mxu0 0.0
    %901 = vmatpush1.msra.mxu0 0.0
    %902 = vmatprep.subr.mxu0 0.0
    %903 = vmatpush1.msra.mxu0 0.0
    %904 = vmatprep.subr.mxu0 0.0
    %905 = vmatpush1.msra.mxu0 0.0
    %906 = vmatprep.subr.mxu0 0.0
    %907 = vmatpush1.msra.mxu0 0.0
    %908 = vmatprep.subr.mxu0 0.0
    %909 = vmatpush1.msra.mxu0 0.0
    %910 = vmatprep.subr.mxu0 0.0
    %911 = vmatpush1.msra.mxu0 0.0
    %912 = vmatprep.subr.mxu0 0.0
    %913 = vmatpush1.msra.mxu0 0.0
    %914 = vmatprep.subr.mxu0 0.0
    %915 = vmatpush1.msra.mxu0 0.0
    %916 = vmatprep.subr.mxu0 0.0
    %917 = vmatpush1.msra.mxu0 0.0
    %918 = vmatprep.subr.mxu0 0.0
    %919 = vmatpush1.msra.mxu0 0.0
    %920 = vmatprep.subr.mxu0 0.0
    %921 = vmatpush1.msra.mxu0 0.0
    %922 = vmatprep.subr.mxu0 0.0
    %923 = vmatpush1.msra.mxu0 0.0
    %924 = vmatprep.subr.mxu0 0.0
    %925 = vmatpush1.msra.mxu0 %v616
    %926 = vmatprep.subr.mxu0 0.0
    %927 = vmatpush1.msra.mxu0 %v615
    %928 = vmatprep.subr.mxu0 0.0
    %929 = vmatpush1.msra.mxu0 %v614
    %930 = vmatprep.subr.mxu0 0.0
    %931 = vmatpush1.msra.mxu0 %v613
    %932 = vmatprep.subr.mxu0 0.0
    %933 = vmatpush2.msra.mxu0 0.0
    %934 = vmatprep.subr.mxu0 0.0
    %935 = vmatpush2.msra.mxu0 0.0
    %936 = vmatprep.subr.mxu0 0.0
    %937 = vmatpush2.msra.mxu0 0.0
    %938 = vmatprep.subr.mxu0 0.0
    %939 = vmatpush2.msra.mxu0 0.0
    %940 = vmatprep.subr.mxu0 0.0
    %941 = vmatpush2.msra.mxu0 0.0
    %942 = vmatprep.subr.mxu0 0.0
    %943 = vmatpush2.msra.mxu0 0.0
    %944 = vmatprep.subr.mxu0 0.0
    %945 = vmatpush2.msra.mxu0 0.0
    %946 = vmatprep.subr.mxu0 0.0
    %947 = vmatpush2.msra.mxu0 0.0
    %948 = vmatprep.subr.mxu0 0.0
    %949 = vmatpush2.msra.mxu0 0.0
    %950 = vmatprep.subr.mxu0 0.0
    %951 = vmatpush2.msra.mxu0 0.0
    %952 = vmatprep.subr.mxu0 0.0
    %953 = vmatpush2.msra.mxu0 0.0
    %954 = vmatprep.subr.mxu0 0.0
    %955 = vmatpush2.msra.mxu0 0.0
    %956 = vmatprep.subr.mxu0 0.0
    %957 = vmatpush2.msra.mxu0 0.0
    %958 = vmatprep.subr.mxu0 0.0
    %959 = vmatpush2.msra.mxu0 0.0
    %960 = vmatprep.subr.mxu0 0.0
    %961 = vmatpush2.msra.mxu0 0.0
    %962 = vmatprep.subr.mxu0 0.0
    %963 = vmatpush2.msra.mxu0 0.0
    %964 = vmatprep.mubr.f32.mxu0 0.0
    %965 = vmatmul.mubr.f32.gmra.mxu0 %v722
    %v966 = vpop.f32.mrf.mxu0
    %v967 = vadd.f32 0.0, %v966
    %v968 = vpop.f32.mrf.mxu0
    %969 = vmatprep.mubr.f32.mxu0 0.0
    %970 = vmatmul.mubr.f32.gmra.mxu0 %v724
    %v971 = vpop.f32.mrf.mxu0
    %v972 = vadd.f32 0.0, %v971
    %v973 = vpop.f32.mrf.mxu0
    %974 = vmatprep.mubr.f32.mxu0 0.0
    %975 = vmatmul.mubr.f32.gmra.mxu0 %v726
    %v976 = vpop.f32.mrf.mxu0
    %v977 = vadd.f32 0.0, %v976
    %v978 = vpop.f32.mrf.mxu0
    %979 = vmatprep.mubr.f32.mxu0 0.0
    %980 = vmatmul.mubr.f32.gmra.mxu0 %v728
    %v981 = vpop.f32.mrf.mxu0
    %v982 = vadd.f32 0.0, %v981
    %v983 = vpop.f32.mrf.mxu0
    %984 = vdwg.mxu0
    %v985 = vadd.f32 %v399, %v403
    %v986 = vadd.f32 %v400, %v404
    %v987 = vadd.f32 %v401, %v405
    %v988 = vadd.f32 %v402, %v406
    %vm989 = vcmp.gt.f32.partialorder %v985, 0.0
    %vm990 = vcmp.gt.f32.partialorder %v986, 0.0
    %vm991 = vcmp.gt.f32.partialorder %v987, 0.0
    %vm992 = vcmp.gt.f32.partialorder %v988, 0.0
    %v993 = vld [vmem:[#allocation17] sm:$0xff]
    %v994 = vld [vmem:[#allocation17 + $0x8] sm:$0xff]
    %v995 = vld [vmem:[#allocation17 + $0x10] sm:$0xff]
    %v996 = vld [vmem:[#allocation17 + $0x18] sm:$0xff]
    %997 = vrot.lane.b32.xlu0 %v597, 96
    %v998 = vpop.permute.xlu0 %997
    %999 = vrot.lane.b32.xlu0 %v598, 96
    %v1000 = vpop.permute.xlu0 %999
    %1001 = vrot.lane.b32.xlu0 %v599, 96
    %v1002 = vpop.permute.xlu0 %1001
    %1003 = vrot.lane.b32.xlu0 %v600, 96
    %v1004 = vpop.permute.xlu0 %1003
    %vm1005 = vcmask 64512
    %v1006 = vsel %vm1005, %v998, 0
    %v1008 = vsel %vm1005, %v1000, 0
    %v1010 = vsel %vm1005, %v1002, 0
    %v1012 = vsel %vm1005, %v1004, 0
    %v1015 = vsel %vm1005, %v696, 0
    %v1018 = vsel %vm1005, %v701, 0
    %v1021 = vsel %vm1005, %v706, 0
    %v1024 = vsel %vm1005, %v711, 0
    %1026 = vmatprep.subr.mxu0 0.0
    %1027 = vmatpush1.xpose.msra.mxu0 0.0
    %1028 = vmatprep.subr.mxu0 0.0
    %1029 = vmatpush1.xpose.msra.mxu0 0.0
    %1030 = vmatprep.subr.mxu0 0.0
    %1031 = vmatpush1.xpose.msra.mxu0 0.0
    %1032 = vmatprep.subr.mxu0 0.0
    %1033 = vmatpush1.xpose.msra.mxu0 0.0
    %1034 = vmatprep.subr.mxu0 0.0
    %1035 = vmatpush1.xpose.msra.mxu0 0.0
    %1036 = vmatprep.subr.mxu0 0.0
    %1037 = vmatpush1.xpose.msra.mxu0 0.0
    %1038 = vmatprep.subr.mxu0 0.0
    %1039 = vmatpush1.xpose.msra.mxu0 0.0
    %1040 = vmatprep.subr.mxu0 0.0
    %1041 = vmatpush1.xpose.msra.mxu0 0.0
    %1042 = vmatprep.subr.mxu0 0.0
    %1043 = vmatpush1.xpose.msra.mxu0 0.0
    %1044 = vmatprep.subr.mxu0 0.0
    %1045 = vmatpush1.xpose.msra.mxu0 0.0
    %1046 = vmatprep.subr.mxu0 0.0
    %1047 = vmatpush1.xpose.msra.mxu0 0.0
    %1048 = vmatprep.subr.mxu0 0.0
    %1049 = vmatpush1.xpose.msra.mxu0 0.0
    %1050 = vmatprep.subr.mxu0 0.0
    %1051 = vmatpush1.xpose.msra.mxu0 %v1024
    %1052 = vmatprep.subr.mxu0 0.0
    %1053 = vmatpush1.xpose.msra.mxu0 %v1021
    %1054 = vmatprep.subr.mxu0 0.0
    %1055 = vmatpush1.xpose.msra.mxu0 %v1018
    %1056 = vmatprep.subr.mxu0 0.0
    %1057 = vmatpush1.xpose.msra.mxu0 %v1015
    %1058 = vmatprep.subr.mxu0 0.0
    %1059 = vmatpush2.xpose.msra.mxu0 0.0
    %1060 = vmatprep.subr.mxu0 0.0
    %1061 = vmatpush2.xpose.msra.mxu0 0.0
    %1062 = vmatprep.subr.mxu0 0.0
    %1063 = vmatpush2.xpose.msra.mxu0 0.0
    %1064 = vmatprep.subr.mxu0 0.0
    %1065 = vmatpush2.xpose.msra.mxu0 0.0
    %1066 = vmatprep.subr.mxu0 0.0
    %1067 = vmatpush2.xpose.msra.mxu0 0.0
    %1068 = vmatprep.subr.mxu0 0.0
    %1069 = vmatpush2.xpose.msra.mxu0 0.0
    %1070 = vmatprep.subr.mxu0 0.0
    %1071 = vmatpush2.xpose.msra.mxu0 0.0
    %1072 = vmatprep.subr.mxu0 0.0
    %1073 = vmatpush2.xpose.msra.mxu0 0.0
    %1074 = vmatprep.subr.mxu0 0.0
    %1075 = vmatpush2.xpose.msra.mxu0 0.0
    %1076 = vmatprep.subr.mxu0 0.0
    %1077 = vmatpush2.xpose.msra.mxu0 0.0
    %1078 = vmatprep.subr.mxu0 0.0
    %1079 = vmatpush2.xpose.msra.mxu0 0.0
    %1080 = vmatprep.subr.mxu0 0.0
    %1081 = vmatpush2.xpose.msra.mxu0 0.0
    %1082 = vmatprep.subr.mxu0 0.0
    %1083 = vmatpush2.xpose.msra.mxu0 0.0
    %1084 = vmatprep.subr.mxu0 0.0
    %1085 = vmatpush2.xpose.msra.mxu0 0.0
    %1086 = vmatprep.subr.mxu0 0.0
    %1087 = vmatpush2.xpose.msra.mxu0 0.0
    %1088 = vmatprep.subr.mxu0 0.0
    %1089 = vmatpush2.xpose.msra.mxu0 0.0
    %1090 = vmatprep.mubr.f32.mxu0 0.0
    %1091 = vmatmul.mubr.f32.gmra.mxu0 %v1006
    %v1092 = vpop.f32.mrf.mxu0
    %v1093 = vadd.f32 0.0, %v1092
    %v1094 = vpop.f32.mrf.mxu0
    %1095 = vmatprep.mubr.f32.mxu0 0.0
    %1096 = vmatmul.mubr.f32.gmra.mxu0 %v1008
    %v1097 = vpop.f32.mrf.mxu0
    %v1098 = vadd.f32 0.0, %v1097
    %v1099 = vpop.f32.mrf.mxu0
    %1100 = vmatprep.mubr.f32.mxu0 0.0
    %1101 = vmatmul.mubr.f32.gmra.mxu0 %v1010
    %v1102 = vpop.f32.mrf.mxu0
    %v1103 = vadd.f32 0.0, %v1102
    %v1104 = vpop.f32.mrf.mxu0
    %1105 = vmatprep.mubr.f32.mxu0 0.0
    %1106 = vmatmul.mubr.f32.gmra.mxu0 %v1012
    %v1107 = vpop.f32.mrf.mxu0
    %v1108 = vadd.f32 0.0, %v1107
    %v1109 = vpop.f32.mrf.mxu0
    %1110 = vdwg.mxu0
    %v1111 = vmul.f32 %v399, %v1093
    %v1112 = vmul.f32 %v400, %v1098
    %v1113 = vmul.f32 %v401, %v1103
    %v1114 = vmul.f32 %v402, %v1108
    %v1116 = vsel %vm1005, %v882, 0
    %v1119 = vsel %vm1005, %v887, 0
    %v1122 = vsel %vm1005, %v892, 0
    %v1125 = vsel %vm1005, %v897, 0
    %1127 = vmatprep.subr.mxu0 0.0
    %1128 = vmatpush1.xpose.msra.mxu0 0.0
    %1129 = vmatprep.subr.mxu0 0.0
    %1130 = vmatpush1.xpose.msra.mxu0 0.0
    %1131 = vmatprep.subr.mxu0 0.0
    %1132 = vmatpush1.xpose.msra.mxu0 0.0
    %1133 = vmatprep.subr.mxu0 0.0
    %1134 = vmatpush1.xpose.msra.mxu0 0.0
    %1135 = vmatprep.subr.mxu0 0.0
    %1136 = vmatpush1.xpose.msra.mxu0 0.0
    %1137 = vmatprep.subr.mxu0 0.0
    %1138 = vmatpush1.xpose.msra.mxu0 0.0
    %1139 = vmatprep.subr.mxu0 0.0
    %1140 = vmatpush1.xpose.msra.mxu0 0.0
    %1141 = vmatprep.subr.mxu0 0.0
    %1142 = vmatpush1.xpose.msra.mxu0 0.0
    %1143 = vmatprep.subr.mxu0 0.0
    %1144 = vmatpush1.xpose.msra.mxu0 0.0
    %1145 = vmatprep.subr.mxu0 0.0
    %1146 = vmatpush1.xpose.msra.mxu0 0.0
    %1147 = vmatprep.subr.mxu0 0.0
    %1148 = vmatpush1.xpose.msra.mxu0 0.0
    %1149 = vmatprep.subr.mxu0 0.0
    %1150 = vmatpush1.xpose.msra.mxu0 0.0
    %1151 = vmatprep.subr.mxu0 0.0
    %1152 = vmatpush1.xpose.msra.mxu0 %v1125
    %1153 = vmatprep.subr.mxu0 0.0
    %1154 = vmatpush1.xpose.msra.mxu0 %v1122
    %1155 = vmatprep.subr.mxu0 0.0
    %1156 = vmatpush1.xpose.msra.mxu0 %v1119
    %1157 = vmatprep.subr.mxu0 0.0
    %1158 = vmatpush1.xpose.msra.mxu0 %v1116
    %1159 = vmatprep.subr.mxu0 0.0
    %1160 = vmatpush2.xpose.msra.mxu0 0.0
    %1161 = vmatprep.subr.mxu0 0.0
    %1162 = vmatpush2.xpose.msra.mxu0 0.0
    %1163 = vmatprep.subr.mxu0 0.0
    %1164 = vmatpush2.xpose.msra.mxu0 0.0
    %1165 = vmatprep.subr.mxu0 0.0
    %1166 = vmatpush2.xpose.msra.mxu0 0.0
    %1167 = vmatprep.subr.mxu0 0.0
    %1168 = vmatpush2.xpose.msra.mxu0 0.0
    %1169 = vmatprep.subr.mxu0 0.0
    %1170 = vmatpush2.xpose.msra.mxu0 0.0
    %1171 = vmatprep.subr.mxu0 0.0
    %1172 = vmatpush2.xpose.msra.mxu0 0.0
    %1173 = vmatprep.subr.mxu0 0.0
    %1174 = vmatpush2.xpose.msra.mxu0 0.0
    %1175 = vmatprep.subr.mxu0 0.0
    %1176 = vmatpush2.xpose.msra.mxu0 0.0
    %1177 = vmatprep.subr.mxu0 0.0
    %1178 = vmatpush2.xpose.msra.mxu0 0.0
    %1179 = vmatprep.subr.mxu0 0.0
    %1180 = vmatpush2.xpose.msra.mxu0 0.0
    %1181 = vmatprep.subr.mxu0 0.0
    %1182 = vmatpush2.xpose.msra.mxu0 0.0
    %1183 = vmatprep.subr.mxu0 0.0
    %1184 = vmatpush2.xpose.msra.mxu0 0.0
    %1185 = vmatprep.subr.mxu0 0.0
    %1186 = vmatpush2.xpose.msra.mxu0 0.0
    %1187 = vmatprep.subr.mxu0 0.0
    %1188 = vmatpush2.xpose.msra.mxu0 0.0
    %1189 = vmatprep.subr.mxu0 0.0
    %1190 = vmatpush2.xpose.msra.mxu0 0.0
    %1191 = vmatprep.mubr.f32.mxu0 0.0
    %1192 = vmatmul.mubr.f32.gmra.mxu0 %v1006
    %v1193 = vpop.f32.mrf.mxu0
    %v1194 = vadd.f32 0.0, %v1193
    %v1195 = vpop.f32.mrf.mxu0
    %1196 = vmatprep.mubr.f32.mxu0 0.0
    %1197 = vmatmul.mubr.f32.gmra.mxu0 %v1008
    %v1198 = vpop.f32.mrf.mxu0
    %v1199 = vadd.f32 0.0, %v1198
    %v1200 = vpop.f32.mrf.mxu0
    %1201 = vmatprep.mubr.f32.mxu0 0.0
    %1202 = vmatmul.mubr.f32.gmra.mxu0 %v1010
    %v1203 = vpop.f32.mrf.mxu0
    %v1204 = vadd.f32 0.0, %v1203
    %v1205 = vpop.f32.mrf.mxu0
    %1206 = vmatprep.mubr.f32.mxu0 0.0
    %1207 = vmatmul.mubr.f32.gmra.mxu0 %v1012
    %v1208 = vpop.f32.mrf.mxu0
    %v1209 = vadd.f32 0.0, %v1208
    %v1210 = vpop.f32.mrf.mxu0
    %1211 = vdwg.mxu0
    %v1212 = vmul.f32 %v403, %v1194
    %v1213 = vmul.f32 %v404, %v1199
    %v1214 = vmul.f32 %v405, %v1204
    %v1215 = vmul.f32 %v406, %v1209
    %v1216 = vadd.f32 %v1111, %v1212
    %v1217 = vadd.f32 %v1112, %v1213
    %v1218 = vadd.f32 %v1113, %v1214
    %v1219 = vadd.f32 %v1114, %v1215
    %v1220 = vsel %vm989, %v1216, -1e+30
    %v1221 = vsel %vm990, %v1217, -1e+30
    %v1222 = vsel %vm991, %v1218, -1e+30
    %v1223 = vsel %vm992, %v1219, -1e+30
    %v1224 = vsel %vm415, %v1220, -inf
    %1225 = vmax.xlane.f32.xlu0 %v1224
    %v1226 = vpop.xlane.xlu0 %1225
    %v1227 = vsel %vm415, %v1221, -inf
    %1228 = vmax.xlane.f32.xlu0 %v1227
    %v1229 = vpop.xlane.xlu0 %1228
    %v1230 = vsel %vm415, %v1222, -inf
    %1231 = vmax.xlane.f32.xlu0 %v1230
    %v1232 = vpop.xlane.xlu0 %1231
    %v1233 = vsel %vm415, %v1223, -inf
    %1234 = vmax.xlane.f32.xlu0 %v1233
    %v1235 = vpop.xlane.xlu0 %1234
    %v1236 = vsub.f32 %v1220, %v1226
    %v1237 = vsub.f32 %v1221, %v1229
    %v1238 = vsub.f32 %v1222, %v1232
    %v1239 = vsub.f32 %v1223, %v1235
    %v1240 = vmul.f32 %v1236, 1.442695
    %v1241 = vpow.pop %v1240
    %v1242 = vmul.f32 %v1237, 1.442695
    %v1243 = vpow.pop %v1242
    %v1244 = vmul.f32 %v1238, 1.442695
    %v1245 = vpow.pop %v1244
    %v1246 = vmul.f32 %v1239, 1.442695
    %v1247 = vpow.pop %v1246
    %v1248 = vsel %vm989, %v1241, 0.0
    %v1249 = vsel %vm990, %v1243, 0.0
    %v1250 = vsel %vm991, %v1245, 0.0
    %v1251 = vsel %vm992, %v1247, 0.0
    %v1252 = vsel %vm415, %v1248, 0.0
    %1253 = vadd.xlane.f32.xlu0 %v1252
    %v1254 = vpop.xlane.xlu0 %1253
    %v1255 = vsel %vm415, %v1249, 0.0
    %1256 = vadd.xlane.f32.xlu0 %v1255
    %v1257 = vpop.xlane.xlu0 %1256
    %v1258 = vsel %vm415, %v1250, 0.0
    %1259 = vadd.xlane.f32.xlu0 %v1258
    %v1260 = vpop.xlane.xlu0 %1259
    %v1261 = vsel %vm415, %v1251, 0.0
    %1262 = vadd.xlane.f32.xlu0 %v1261
    %v1263 = vpop.xlane.xlu0 %1262
    %vm1264 = vcmp.eq.f32.partialorder %v1254, 0.0
    %vm1265 = vcmp.eq.f32.partialorder %v1257, 0.0
    %vm1266 = vcmp.eq.f32.partialorder %v1260, 0.0
    %vm1267 = vcmp.eq.f32.partialorder %v1263, 0.0
    %v1268 = vsel %vm1264, 1.0, %v1254
    %v1269 = vsel %vm1265, 1.0, %v1257
    %v1270 = vsel %vm1266, 1.0, %v1260
    %v1271 = vsel %vm1267, 1.0, %v1263
    %v1272 = vrcp.pop %v1268
    %v1273 = vrcp.pop %v1269
    %v1274 = vrcp.pop %v1270
    %v1275 = vrcp.pop %v1271
    %v1276 = vmul.f32 %v1248, %v1272
    %v1277 = vmul.f32 %v1249, %v1273
    %v1278 = vmul.f32 %v1250, %v1274
    %v1279 = vmul.f32 %v1251, %v1275
    %v1280 = vmul.f32 %v1276, %v399
    %v1281 = vmul.f32 %v1277, %v400
    %v1282 = vmul.f32 %v1278, %v401
    %v1283 = vmul.f32 %v1279, %v402
    %v1284 = vmul.f32 %v1276, %v403
    %v1285 = vmul.f32 %v1277, %v404
    %v1286 = vmul.f32 %v1278, %v405
    %v1287 = vmul.f32 %v1279, %v406
    %v1289 = vsel %vm415, %v1284, 0
    %v1292 = vsel %vm415, %v1285, 0
    %v1295 = vsel %vm415, %v1286, 0
    %v1298 = vsel %vm415, %v1287, 0
    %1300 = vmatprep.subr.mxu0 0.0
    %1301 = vmatpush1.msra.mxu0 0.0
    %1302 = vmatprep.subr.mxu0 0.0
    %1303 = vmatpush1.msra.mxu0 0.0
    %1304 = vmatprep.subr.mxu0 0.0
    %1305 = vmatpush1.msra.mxu0 0.0
    %1306 = vmatprep.subr.mxu0 0.0
    %1307 = vmatpush1.msra.mxu0 0.0
    %1308 = vmatprep.subr.mxu0 0.0
    %1309 = vmatpush1.msra.mxu0 0.0
    %1310 = vmatprep.subr.mxu0 0.0
    %1311 = vmatpush1.msra.mxu0 0.0
    %1312 = vmatprep.subr.mxu0 0.0
    %1313 = vmatpush1.msra.mxu0 0.0
    %1314 = vmatprep.subr.mxu0 0.0
    %1315 = vmatpush1.msra.mxu0 0.0
    %1316 = vmatprep.subr.mxu0 0.0
    %1317 = vmatpush1.msra.mxu0 0.0
    %1318 = vmatprep.subr.mxu0 0.0
    %1319 = vmatpush1.msra.mxu0 0.0
    %1320 = vmatprep.subr.mxu0 0.0
    %1321 = vmatpush1.msra.mxu0 0.0
    %1322 = vmatprep.subr.mxu0 0.0
    %1323 = vmatpush1.msra.mxu0 0.0
    %1324 = vmatprep.subr.mxu0 0.0
    %1325 = vmatpush1.msra.mxu0 %v982
    %1326 = vmatprep.subr.mxu0 0.0
    %1327 = vmatpush1.msra.mxu0 %v977
    %1328 = vmatprep.subr.mxu0 0.0
    %1329 = vmatpush1.msra.mxu0 %v972
    %1330 = vmatprep.subr.mxu0 0.0
    %1331 = vmatpush1.msra.mxu0 %v967
    %1332 = vmatprep.subr.mxu0 0.0
    %1333 = vmatpush2.msra.mxu0 0.0
    %1334 = vmatprep.subr.mxu0 0.0
    %1335 = vmatpush2.msra.mxu0 0.0
    %1336 = vmatprep.subr.mxu0 0.0
    %1337 = vmatpush2.msra.mxu0 0.0
    %1338 = vmatprep.subr.mxu0 0.0
    %1339 = vmatpush2.msra.mxu0 0.0
    %1340 = vmatprep.subr.mxu0 0.0
    %1341 = vmatpush2.msra.mxu0 0.0
    %1342 = vmatprep.subr.mxu0 0.0
    %1343 = vmatpush2.msra.mxu0 0.0
    %1344 = vmatprep.subr.mxu0 0.0
    %1345 = vmatpush2.msra.mxu0 0.0
    %1346 = vmatprep.subr.mxu0 0.0
    %1347 = vmatpush2.msra.mxu0 0.0
    %1348 = vmatprep.subr.mxu0 0.0
    %1349 = vmatpush2.msra.mxu0 0.0
    %1350 = vmatprep.subr.mxu0 0.0
    %1351 = vmatpush2.msra.mxu0 0.0
    %1352 = vmatprep.subr.mxu0 0.0
    %1353 = vmatpush2.msra.mxu0 0.0
    %1354 = vmatprep.subr.mxu0 0.0
    %1355 = vmatpush2.msra.mxu0 0.0
    %1356 = vmatprep.subr.mxu0 0.0
    %1357 = vmatpush2.msra.mxu0 0.0
    %1358 = vmatprep.subr.mxu0 0.0
    %1359 = vmatpush2.msra.mxu0 0.0
    %1360 = vmatprep.subr.mxu0 0.0
    %1361 = vmatpush2.msra.mxu0 0.0
    %1362 = vmatprep.subr.mxu0 0.0
    %1363 = vmatpush2.msra.mxu0 0.0
    %1364 = vmatprep.mubr.f32.mxu0 0.0
    %1365 = vmatmul.mubr.f32.gmra.mxu0 %v1289
    %v1366 = vpop.f32.mrf.mxu0
    %v1367 = vadd.f32 0.0, %v1366
    %v1368 = vpop.f32.mrf.mxu0
    %1369 = vmatprep.mubr.f32.mxu0 0.0
    %1370 = vmatmul.mubr.f32.gmra.mxu0 %v1292
    %v1371 = vpop.f32.mrf.mxu0
    %v1372 = vadd.f32 0.0, %v1371
    %v1373 = vpop.f32.mrf.mxu0
    %1374 = vmatprep.mubr.f32.mxu0 0.0
    %1375 = vmatmul.mubr.f32.gmra.mxu0 %v1295
    %v1376 = vpop.f32.mrf.mxu0
    %v1377 = vadd.f32 0.0, %v1376
    %v1378 = vpop.f32.mrf.mxu0
    %1379 = vmatprep.mubr.f32.mxu0 0.0
    %1380 = vmatmul.mubr.f32.gmra.mxu0 %v1298
    %v1381 = vpop.f32.mrf.mxu0
    %v1382 = vadd.f32 0.0, %v1381
    %v1383 = vpop.f32.mrf.mxu0
    %1384 = vdwg.mxu0
    %v1386 = vsel %vm415, %v1280, 0
    %v1389 = vsel %vm415, %v1281, 0
    %v1392 = vsel %vm415, %v1282, 0
    %v1395 = vsel %vm415, %v1283, 0
    %1397 = vmatprep.subr.mxu0 0.0
    %1398 = vmatpush1.msra.mxu0 0.0
    %1399 = vmatprep.subr.mxu0 0.0
    %1400 = vmatpush1.msra.mxu0 0.0
    %1401 = vmatprep.subr.mxu0 0.0
    %1402 = vmatpush1.msra.mxu0 0.0
    %1403 = vmatprep.subr.mxu0 0.0
    %1404 = vmatpush1.msra.mxu0 0.0
    %1405 = vmatprep.subr.mxu0 0.0
    %1406 = vmatpush1.msra.mxu0 0.0
    %1407 = vmatprep.subr.mxu0 0.0
    %1408 = vmatpush1.msra.mxu0 0.0
    %1409 = vmatprep.subr.mxu0 0.0
    %1410 = vmatpush1.msra.mxu0 0.0
    %1411 = vmatprep.subr.mxu0 0.0
    %1412 = vmatpush1.msra.mxu0 0.0
    %1413 = vmatprep.subr.mxu0 0.0
    %1414 = vmatpush1.msra.mxu0 0.0
    %1415 = vmatprep.subr.mxu0 0.0
    %1416 = vmatpush1.msra.mxu0 0.0
    %1417 = vmatprep.subr.mxu0 0.0
    %1418 = vmatpush1.msra.mxu0 0.0
    %1419 = vmatprep.subr.mxu0 0.0
    %1420 = vmatpush1.msra.mxu0 0.0
    %1421 = vmatprep.subr.mxu0 0.0
    %1422 = vmatpush1.msra.mxu0 %v812
    %1423 = vmatprep.subr.mxu0 0.0
    %1424 = vmatpush1.msra.mxu0 %v807
    %1425 = vmatprep.subr.mxu0 0.0
    %1426 = vmatpush1.msra.mxu0 %v802
    %1427 = vmatprep.subr.mxu0 0.0
    %1428 = vmatpush1.msra.mxu0 %v797
    %1429 = vmatprep.subr.mxu0 0.0
    %1430 = vmatpush2.msra.mxu0 0.0
    %1431 = vmatprep.subr.mxu0 0.0
    %1432 = vmatpush2.msra.mxu0 0.0
    %1433 = vmatprep.subr.mxu0 0.0
    %1434 = vmatpush2.msra.mxu0 0.0
    %1435 = vmatprep.subr.mxu0 0.0
    %1436 = vmatpush2.msra.mxu0 0.0
    %1437 = vmatprep.subr.mxu0 0.0
    %1438 = vmatpush2.msra.mxu0 0.0
    %1439 = vmatprep.subr.mxu0 0.0
    %1440 = vmatpush2.msra.mxu0 0.0
    %1441 = vmatprep.subr.mxu0 0.0
    %1442 = vmatpush2.msra.mxu0 0.0
    %1443 = vmatprep.subr.mxu0 0.0
    %1444 = vmatpush2.msra.mxu0 0.0
    %1445 = vmatprep.subr.mxu0 0.0
    %1446 = vmatpush2.msra.mxu0 0.0
    %1447 = vmatprep.subr.mxu0 0.0
    %1448 = vmatpush2.msra.mxu0 0.0
    %1449 = vmatprep.subr.mxu0 0.0
    %1450 = vmatpush2.msra.mxu0 0.0
    %1451 = vmatprep.subr.mxu0 0.0
    %1452 = vmatpush2.msra.mxu0 0.0
    %1453 = vmatprep.subr.mxu0 0.0
    %1454 = vmatpush2.msra.mxu0 0.0
    %1455 = vmatprep.subr.mxu0 0.0
    %1456 = vmatpush2.msra.mxu0 0.0
    %1457 = vmatprep.subr.mxu0 0.0
    %1458 = vmatpush2.msra.mxu0 0.0
    %1459 = vmatprep.subr.mxu0 0.0
    %1460 = vmatpush2.msra.mxu0 0.0
    %1461 = vmatprep.mubr.f32.mxu0 0.0
    %1462 = vmatmul.mubr.f32.gmra.mxu0 %v1386
    %v1463 = vpop.f32.mrf.mxu0
    %v1464 = vadd.f32 %v1367, %v1463
    %v1465 = vpop.f32.mrf.mxu0
    %1466 = vmatprep.mubr.f32.mxu0 0.0
    %1467 = vmatmul.mubr.f32.gmra.mxu0 %v1389
    %v1468 = vpop.f32.mrf.mxu0
    %v1469 = vadd.f32 %v1372, %v1468
    %v1470 = vpop.f32.mrf.mxu0
    %1471 = vmatprep.mubr.f32.mxu0 0.0
    %1472 = vmatmul.mubr.f32.gmra.mxu0 %v1392
    %v1473 = vpop.f32.mrf.mxu0
    %v1474 = vadd.f32 %v1377, %v1473
    %v1475 = vpop.f32.mrf.mxu0
    %1476 = vmatprep.mubr.f32.mxu0 0.0
    %1477 = vmatmul.mubr.f32.gmra.mxu0 %v1395
    %v1478 = vpop.f32.mrf.mxu0
    %v1479 = vadd.f32 %v1382, %v1478
    %v1480 = vpop.f32.mrf.mxu0
    %1481 = vdwg.mxu0
    %1482 = vrot.lane.b32.xlu0 %v597, 88
    %v1483 = vpop.permute.xlu0 %1482
    %1484 = vrot.lane.b32.xlu0 %v598, 88
    %v1485 = vpop.permute.xlu0 %1484
    %1486 = vrot.lane.b32.xlu0 %v599, 88
    %v1487 = vpop.permute.xlu0 %1486
    %1488 = vrot.lane.b32.xlu0 %v600, 88
    %v1489 = vpop.permute.xlu0 %1488
    %1490 = vrot.lane.b32.xlu0 %v696, 120
    %v1491 = vpop.permute.xlu0 %1490
    %1492 = vrot.lane.b32.xlu0 %v701, 120
    %v1493 = vpop.permute.xlu0 %1492
    %1494 = vrot.lane.b32.xlu0 %v706, 120
    %v1495 = vpop.permute.xlu0 %1494
    %1496 = vrot.lane.b32.xlu0 %v711, 120
    %v1497 = vpop.permute.xlu0 %1496
    %v1498 = vsel %vm1005, %v1483, 0
    %v1500 = vsel %vm1005, %v1485, 0
    %v1502 = vsel %vm1005, %v1487, 0
    %v1504 = vsel %vm1005, %v1489, 0
    %v1506 = vsel %vm1005, %v1491, 0
    %v1508 = vsel %vm1005, %v1493, 0
    %v1510 = vsel %vm1005, %v1495, 0
    %v1512 = vsel %vm1005, %v1497, 0
    %1514 = vmatprep.subr.mxu0 0.0
    %1515 = vmatpush1.xpose.msra.mxu0 0.0
    %1516 = vmatprep.subr.mxu0 0.0
    %1517 = vmatpush1.xpose.msra.mxu0 0.0
    %1518 = vmatprep.subr.mxu0 0.0
    %1519 = vmatpush1.xpose.msra.mxu0 0.0
    %1520 = vmatprep.subr.mxu0 0.0
    %1521 = vmatpush1.xpose.msra.mxu0 0.0
    %1522 = vmatprep.subr.mxu0 0.0
    %1523 = vmatpush1.xpose.msra.mxu0 0.0
    %1524 = vmatprep.subr.mxu0 0.0
    %1525 = vmatpush1.xpose.msra.mxu0 0.0
    %1526 = vmatprep.subr.mxu0 0.0
    %1527 = vmatpush1.xpose.msra.mxu0 0.0
    %1528 = vmatprep.subr.mxu0 0.0
    %1529 = vmatpush1.xpose.msra.mxu0 0.0
    %1530 = vmatprep.subr.mxu0 0.0
    %1531 = vmatpush1.xpose.msra.mxu0 0.0
    %1532 = vmatprep.subr.mxu0 0.0
    %1533 = vmatpush1.xpose.msra.mxu0 0.0
    %1534 = vmatprep.subr.mxu0 0.0
    %1535 = vmatpush1.xpose.msra.mxu0 0.0
    %1536 = vmatprep.subr.mxu0 0.0
    %1537 = vmatpush1.xpose.msra.mxu0 0.0
    %1538 = vmatprep.subr.mxu0 0.0
    %1539 = vmatpush1.xpose.msra.mxu0 %v1512
    %1540 = vmatprep.subr.mxu0 0.0
    %1541 = vmatpush1.xpose.msra.mxu0 %v1510
    %1542 = vmatprep.subr.mxu0 0.0
    %1543 = vmatpush1.xpose.msra.mxu0 %v1508
    %1544 = vmatprep.subr.mxu0 0.0
    %1545 = vmatpush1.xpose.msra.mxu0 %v1506
    %1546 = vmatprep.subr.mxu0 0.0
    %1547 = vmatpush2.xpose.msra.mxu0 0.0
    %1548 = vmatprep.subr.mxu0 0.0
    %1549 = vmatpush2.xpose.msra.mxu0 0.0
    %1550 = vmatprep.subr.mxu0 0.0
    %1551 = vmatpush2.xpose.msra.mxu0 0.0
    %1552 = vmatprep.subr.mxu0 0.0
    %1553 = vmatpush2.xpose.msra.mxu0 0.0
    %1554 = vmatprep.subr.mxu0 0.0
    %1555 = vmatpush2.xpose.msra.mxu0 0.0
    %1556 = vmatprep.subr.mxu0 0.0
    %1557 = vmatpush2.xpose.msra.mxu0 0.0
    %1558 = vmatprep.subr.mxu0 0.0
    %1559 = vmatpush2.xpose.msra.mxu0 0.0
    %1560 = vmatprep.subr.mxu0 0.0
    %1561 = vmatpush2.xpose.msra.mxu0 0.0
    %1562 = vmatprep.subr.mxu0 0.0
    %1563 = vmatpush2.xpose.msra.mxu0 0.0
    %1564 = vmatprep.subr.mxu0 0.0
    %1565 = vmatpush2.xpose.msra.mxu0 0.0
    %1566 = vmatprep.subr.mxu0 0.0
    %1567 = vmatpush2.xpose.msra.mxu0 0.0
    %1568 = vmatprep.subr.mxu0 0.0
    %1569 = vmatpush2.xpose.msra.mxu0 0.0
    %1570 = vmatprep.subr.mxu0 0.0
    %1571 = vmatpush2.xpose.msra.mxu0 0.0
    %1572 = vmatprep.subr.mxu0 0.0
    %1573 = vmatpush2.xpose.msra.mxu0 0.0
    %1574 = vmatprep.subr.mxu0 0.0
    %1575 = vmatpush2.xpose.msra.mxu0 0.0
    %1576 = vmatprep.subr.mxu0 0.0
    %1577 = vmatpush2.xpose.msra.mxu0 0.0
    %1578 = vmatprep.mubr.f32.mxu0 0.0
    %1579 = vmatmul.mubr.f32.gmra.mxu0 %v1498
    %v1580 = vpop.f32.mrf.mxu0
    %v1581 = vadd.f32 0.0, %v1580
    %v1582 = vpop.f32.mrf.mxu0
    %1583 = vmatprep.mubr.f32.mxu0 0.0
    %1584 = vmatmul.mubr.f32.gmra.mxu0 %v1500
    %v1585 = vpop.f32.mrf.mxu0
    %v1586 = vadd.f32 0.0, %v1585
    %v1587 = vpop.f32.mrf.mxu0
    %1588 = vmatprep.mubr.f32.mxu0 0.0
    %1589 = vmatmul.mubr.f32.gmra.mxu0 %v1502
    %v1590 = vpop.f32.mrf.mxu0
    %v1591 = vadd.f32 0.0, %v1590
    %v1592 = vpop.f32.mrf.mxu0
    %1593 = vmatprep.mubr.f32.mxu0 0.0
    %1594 = vmatmul.mubr.f32.gmra.mxu0 %v1504
    %v1595 = vpop.f32.mrf.mxu0
    %v1596 = vadd.f32 0.0, %v1595
    %v1597 = vpop.f32.mrf.mxu0
    %1598 = vdwg.mxu0
    %v1599 = vmul.f32 %v399, %v1581
    %v1600 = vmul.f32 %v400, %v1586
    %v1601 = vmul.f32 %v401, %v1591
    %v1602 = vmul.f32 %v402, %v1596
    %1603 = vrot.lane.b32.xlu0 %v882, 120
    %v1604 = vpop.permute.xlu0 %1603
    %1605 = vrot.lane.b32.xlu0 %v887, 120
    %v1606 = vpop.permute.xlu0 %1605
    %1607 = vrot.lane.b32.xlu0 %v892, 120
    %v1608 = vpop.permute.xlu0 %1607
    %1609 = vrot.lane.b32.xlu0 %v897, 120
    %v1610 = vpop.permute.xlu0 %1609
    %v1611 = vsel %vm1005, %v1604, 0
    %v1613 = vsel %vm1005, %v1606, 0
    %v1615 = vsel %vm1005, %v1608, 0
    %v1617 = vsel %vm1005, %v1610, 0
    %1619 = vmatprep.subr.mxu0 0.0
    %1620 = vmatpush1.xpose.msra.mxu0 0.0
    %1621 = vmatprep.subr.mxu0 0.0
    %1622 = vmatpush1.xpose.msra.mxu0 0.0
    %1623 = vmatprep.subr.mxu0 0.0
    %1624 = vmatpush1.xpose.msra.mxu0 0.0
    %1625 = vmatprep.subr.mxu0 0.0
    %1626 = vmatpush1.xpose.msra.mxu0 0.0
    %1627 = vmatprep.subr.mxu0 0.0
    %1628 = vmatpush1.xpose.msra.mxu0 0.0
    %1629 = vmatprep.subr.mxu0 0.0
    %1630 = vmatpush1.xpose.msra.mxu0 0.0
    %1631 = vmatprep.subr.mxu0 0.0
    %1632 = vmatpush1.xpose.msra.mxu0 0.0
    %1633 = vmatprep.subr.mxu0 0.0
    %1634 = vmatpush1.xpose.msra.mxu0 0.0
    %1635 = vmatprep.subr.mxu0 0.0
    %1636 = vmatpush1.xpose.msra.mxu0 0.0
    %1637 = vmatprep.subr.mxu0 0.0
    %1638 = vmatpush1.xpose.msra.mxu0 0.0
    %1639 = vmatprep.subr.mxu0 0.0
    %1640 = vmatpush1.xpose.msra.mxu0 0.0
    %1641 = vmatprep.subr.mxu0 0.0
    %1642 = vmatpush1.xpose.msra.mxu0 0.0
    %1643 = vmatprep.subr.mxu0 0.0
    %1644 = vmatpush1.xpose.msra.mxu0 %v1617
    %1645 = vmatprep.subr.mxu0 0.0
    %1646 = vmatpush1.xpose.msra.mxu0 %v1615
    %1647 = vmatprep.subr.mxu0 0.0
    %1648 = vmatpush1.xpose.msra.mxu0 %v1613
    %1649 = vmatprep.subr.mxu0 0.0
    %1650 = vmatpush1.xpose.msra.mxu0 %v1611
    %1651 = vmatprep.subr.mxu0 0.0
    %1652 = vmatpush2.xpose.msra.mxu0 0.0
    %1653 = vmatprep.subr.mxu0 0.0
    %1654 = vmatpush2.xpose.msra.mxu0 0.0
    %1655 = vmatprep.subr.mxu0 0.0
    %1656 = vmatpush2.xpose.msra.mxu0 0.0
    %1657 = vmatprep.subr.mxu0 0.0
    %1658 = vmatpush2.xpose.msra.mxu0 0.0
    %1659 = vmatprep.subr.mxu0 0.0
    %1660 = vmatpush2.xpose.msra.mxu0 0.0
    %1661 = vmatprep.subr.mxu0 0.0
    %1662 = vmatpush2.xpose.msra.mxu0 0.0
    %1663 = vmatprep.subr.mxu0 0.0
    %1664 = vmatpush2.xpose.msra.mxu0 0.0
    %1665 = vmatprep.subr.mxu0 0.0
    %1666 = vmatpush2.xpose.msra.mxu0 0.0
    %1667 = vmatprep.subr.mxu0 0.0
    %1668 = vmatpush2.xpose.msra.mxu0 0.0
    %1669 = vmatprep.subr.mxu0 0.0
    %1670 = vmatpush2.xpose.msra.mxu0 0.0
    %1671 = vmatprep.subr.mxu0 0.0
    %1672 = vmatpush2.xpose.msra.mxu0 0.0
    %1673 = vmatprep.subr.mxu0 0.0
    %1674 = vmatpush2.xpose.msra.mxu0 0.0
    %1675 = vmatprep.subr.mxu0 0.0
    %1676 = vmatpush2.xpose.msra.mxu0 0.0
    %1677 = vmatprep.subr.mxu0 0.0
    %1678 = vmatpush2.xpose.msra.mxu0 0.0
    %1679 = vmatprep.subr.mxu0 0.0
    %1680 = vmatpush2.xpose.msra.mxu0 0.0
    %1681 = vmatprep.subr.mxu0 0.0
    %1682 = vmatpush2.xpose.msra.mxu0 0.0
    %1683 = vmatprep.mubr.f32.mxu0 0.0
    %1684 = vmatmul.mubr.f32.gmra.mxu0 %v1498
    %v1685 = vpop.f32.mrf.mxu0
    %v1686 = vadd.f32 0.0, %v1685
    %v1687 = vpop.f32.mrf.mxu0
    %1688 = vmatprep.mubr.f32.mxu0 0.0
    %1689 = vmatmul.mubr.f32.gmra.mxu0 %v1500
    %v1690 = vpop.f32.mrf.mxu0
    %v1691 = vadd.f32 0.0, %v1690
    %v1692 = vpop.f32.mrf.mxu0
    %1693 = vmatprep.mubr.f32.mxu0 0.0
    %1694 = vmatmul.mubr.f32.gmra.mxu0 %v1502
    %v1695 = vpop.f32.mrf.mxu0
    %v1696 = vadd.f32 0.0, %v1695
    %v1697 = vpop.f32.mrf.mxu0
    %1698 = vmatprep.mubr.f32.mxu0 0.0
    %1699 = vmatmul.mubr.f32.gmra.mxu0 %v1504
    %v1700 = vpop.f32.mrf.mxu0
    %v1701 = vadd.f32 0.0, %v1700
    %v1702 = vpop.f32.mrf.mxu0
    %1703 = vdwg.mxu0
    %v1704 = vmul.f32 %v403, %v1686
    %v1705 = vmul.f32 %v404, %v1691
    %v1706 = vmul.f32 %v405, %v1696
    %v1707 = vmul.f32 %v406, %v1701
    %v1708 = vadd.f32 %v1599, %v1704
    %v1709 = vadd.f32 %v1600, %v1705
    %v1710 = vadd.f32 %v1601, %v1706
    %v1711 = vadd.f32 %v1602, %v1707
    %v1712 = vsel %vm989, %v1708, -1e+30
    %v1713 = vsel %vm990, %v1709, -1e+30
    %v1714 = vsel %vm991, %v1710, -1e+30
    %v1715 = vsel %vm992, %v1711, -1e+30
    %v1716 = vsel %vm415, %v1712, -inf
    %1717 = vmax.xlane.f32.xlu0 %v1716
    %v1718 = vpop.xlane.xlu0 %1717
    %v1719 = vsel %vm415, %v1713, -inf
    %1720 = vmax.xlane.f32.xlu0 %v1719
    %v1721 = vpop.xlane.xlu0 %1720
    %v1722 = vsel %vm415, %v1714, -inf
    %1723 = vmax.xlane.f32.xlu0 %v1722
    %v1724 = vpop.xlane.xlu0 %1723
    %v1725 = vsel %vm415, %v1715, -inf
    %1726 = vmax.xlane.f32.xlu0 %v1725
    %v1727 = vpop.xlane.xlu0 %1726
    %v1728 = vsub.f32 %v1712, %v1718
    %v1729 = vsub.f32 %v1713, %v1721
    %v1730 = vsub.f32 %v1714, %v1724
    %v1731 = vsub.f32 %v1715, %v1727
    %v1732 = vmul.f32 %v1728, 1.442695
    %v1733 = vpow.pop %v1732
    %v1734 = vmul.f32 %v1729, 1.442695
    %v1735 = vpow.pop %v1734
    %v1736 = vmul.f32 %v1730, 1.442695
    %v1737 = vpow.pop %v1736
    %v1738 = vmul.f32 %v1731, 1.442695
    %v1739 = vpow.pop %v1738
    %v1740 = vsel %vm989, %v1733, 0.0
    %v1741 = vsel %vm990, %v1735, 0.0
    %v1742 = vsel %vm991, %v1737, 0.0
    %v1743 = vsel %vm992, %v1739, 0.0
    %v1744 = vsel %vm415, %v1740, 0.0
    %1745 = vadd.xlane.f32.xlu0 %v1744
    %v1746 = vpop.xlane.xlu0 %1745
    %v1747 = vsel %vm415, %v1741, 0.0
    %1748 = vadd.xlane.f32.xlu0 %v1747
    %v1749 = vpop.xlane.xlu0 %1748
    %v1750 = vsel %vm415, %v1742, 0.0
    %1751 = vadd.xlane.f32.xlu0 %v1750
    %v1752 = vpop.xlane.xlu0 %1751
    %v1753 = vsel %vm415, %v1743, 0.0
    %1754 = vadd.xlane.f32.xlu0 %v1753
    %v1755 = vpop.xlane.xlu0 %1754
    %vm1756 = vcmp.eq.f32.partialorder %v1746, 0.0
    %vm1757 = vcmp.eq.f32.partialorder %v1749, 0.0
    %vm1758 = vcmp.eq.f32.partialorder %v1752, 0.0
    %vm1759 = vcmp.eq.f32.partialorder %v1755, 0.0
    %v1760 = vsel %vm1756, 1.0, %v1746
    %v1761 = vsel %vm1757, 1.0, %v1749
    %v1762 = vsel %vm1758, 1.0, %v1752
    %v1763 = vsel %vm1759, 1.0, %v1755
    %v1764 = vrcp.pop %v1760
    %v1765 = vrcp.pop %v1761
    %v1766 = vrcp.pop %v1762
    %v1767 = vrcp.pop %v1763
    %v1768 = vmul.f32 %v1740, %v1764
    %v1769 = vmul.f32 %v1741, %v1765
    %v1770 = vmul.f32 %v1742, %v1766
    %v1771 = vmul.f32 %v1743, %v1767
    %v1772 = vmul.f32 %v1768, %v399
    %v1773 = vmul.f32 %v1769, %v400
    %v1774 = vmul.f32 %v1770, %v401
    %v1775 = vmul.f32 %v1771, %v402
    %v1776 = vmul.f32 %v1768, %v403
    %v1777 = vmul.f32 %v1769, %v404
    %v1778 = vmul.f32 %v1770, %v405
    %v1779 = vmul.f32 %v1771, %v406
    %1784 = vrot.lane.b32.xlu0 %v967, 120
    %v1785 = vpop.permute.xlu0 %1784
    %1786 = vrot.lane.b32.xlu0 %v972, 120
    %v1787 = vpop.permute.xlu0 %1786
    %1788 = vrot.lane.b32.xlu0 %v977, 120
    %v1789 = vpop.permute.xlu0 %1788
    %1790 = vrot.lane.b32.xlu0 %v982, 120
    %v1791 = vpop.permute.xlu0 %1790
    %v1797 = vsel %vm415, %v1776, 0
    %v1800 = vsel %vm415, %v1777, 0
    %v1803 = vsel %vm415, %v1778, 0
    %v1806 = vsel %vm415, %v1779, 0
    %1808 = vmatprep.subr.mxu0 0.0
    %1809 = vmatpush1.msra.mxu0 0.0
    %1810 = vmatprep.subr.mxu0 0.0
    %1811 = vmatpush1.msra.mxu0 0.0
    %1812 = vmatprep.subr.mxu0 0.0
    %1813 = vmatpush1.msra.mxu0 0.0
    %1814 = vmatprep.subr.mxu0 0.0
    %1815 = vmatpush1.msra.mxu0 0.0
    %1816 = vmatprep.subr.mxu0 0.0
    %1817 = vmatpush1.msra.mxu0 0.0
    %1818 = vmatprep.subr.mxu0 0.0
    %1819 = vmatpush1.msra.mxu0 0.0
    %1820 = vmatprep.subr.mxu0 0.0
    %1821 = vmatpush1.msra.mxu0 0.0
    %1822 = vmatprep.subr.mxu0 0.0
    %1823 = vmatpush1.msra.mxu0 0.0
    %1824 = vmatprep.subr.mxu0 0.0
    %1825 = vmatpush1.msra.mxu0 0.0
    %1826 = vmatprep.subr.mxu0 0.0
    %1827 = vmatpush1.msra.mxu0 0.0
    %1828 = vmatprep.subr.mxu0 0.0
    %1829 = vmatpush1.msra.mxu0 0.0
    %1830 = vmatprep.subr.mxu0 0.0
    %1831 = vmatpush1.msra.mxu0 0.0
    %1832 = vmatprep.subr.mxu0 0.0
    %1833 = vmatpush1.msra.mxu0 %v1791
    %1834 = vmatprep.subr.mxu0 0.0
    %1835 = vmatpush1.msra.mxu0 %v1789
    %1836 = vmatprep.subr.mxu0 0.0
    %1837 = vmatpush1.msra.mxu0 %v1787
    %1838 = vmatprep.subr.mxu0 0.0
    %1839 = vmatpush1.msra.mxu0 %v1785
    %1840 = vmatprep.subr.mxu0 0.0
    %1841 = vmatpush2.msra.mxu0 0.0
    %1842 = vmatprep.subr.mxu0 0.0
    %1843 = vmatpush2.msra.mxu0 0.0
    %1844 = vmatprep.subr.mxu0 0.0
    %1845 = vmatpush2.msra.mxu0 0.0
    %1846 = vmatprep.subr.mxu0 0.0
    %1847 = vmatpush2.msra.mxu0 0.0
    %1848 = vmatprep.subr.mxu0 0.0
    %1849 = vmatpush2.msra.mxu0 0.0
    %1850 = vmatprep.subr.mxu0 0.0
    %1851 = vmatpush2.msra.mxu0 0.0
    %1852 = vmatprep.subr.mxu0 0.0
    %1853 = vmatpush2.msra.mxu0 0.0
    %1854 = vmatprep.subr.mxu0 0.0
    %1855 = vmatpush2.msra.mxu0 0.0
    %1856 = vmatprep.subr.mxu0 0.0
    %1857 = vmatpush2.msra.mxu0 0.0
    %1858 = vmatprep.subr.mxu0 0.0
    %1859 = vmatpush2.msra.mxu0 0.0
    %1860 = vmatprep.subr.mxu0 0.0
    %1861 = vmatpush2.msra.mxu0 0.0
    %1862 = vmatprep.subr.mxu0 0.0
    %1863 = vmatpush2.msra.mxu0 0.0
    %1864 = vmatprep.subr.mxu0 0.0
    %1865 = vmatpush2.msra.mxu0 0.0
    %1866 = vmatprep.subr.mxu0 0.0
    %1867 = vmatpush2.msra.mxu0 0.0
    %1868 = vmatprep.subr.mxu0 0.0
    %1869 = vmatpush2.msra.mxu0 0.0
    %1870 = vmatprep.subr.mxu0 0.0
    %1871 = vmatpush2.msra.mxu0 0.0
    %1872 = vmatprep.mubr.f32.mxu0 0.0
    %1873 = vmatmul.mubr.f32.gmra.mxu0 %v1797
    %v1874 = vpop.f32.mrf.mxu0
    %v1875 = vadd.f32 0.0, %v1874
    %v1876 = vpop.f32.mrf.mxu0
    %1877 = vmatprep.mubr.f32.mxu0 0.0
    %1878 = vmatmul.mubr.f32.gmra.mxu0 %v1800
    %v1879 = vpop.f32.mrf.mxu0
    %v1880 = vadd.f32 0.0, %v1879
    %v1881 = vpop.f32.mrf.mxu0
    %1882 = vmatprep.mubr.f32.mxu0 0.0
    %1883 = vmatmul.mubr.f32.gmra.mxu0 %v1803
    %v1884 = vpop.f32.mrf.mxu0
    %v1885 = vadd.f32 0.0, %v1884
    %v1886 = vpop.f32.mrf.mxu0
    %1887 = vmatprep.mubr.f32.mxu0 0.0
    %1888 = vmatmul.mubr.f32.gmra.mxu0 %v1806
    %v1889 = vpop.f32.mrf.mxu0
    %v1890 = vadd.f32 0.0, %v1889
    %v1891 = vpop.f32.mrf.mxu0
    %1892 = vdwg.mxu0
    %1897 = vrot.lane.b32.xlu0 %v797, 120
    %v1898 = vpop.permute.xlu0 %1897
    %1899 = vrot.lane.b32.xlu0 %v802, 120
    %v1900 = vpop.permute.xlu0 %1899
    %1901 = vrot.lane.b32.xlu0 %v807, 120
    %v1902 = vpop.permute.xlu0 %1901
    %1903 = vrot.lane.b32.xlu0 %v812, 120
    %v1904 = vpop.permute.xlu0 %1903
    %v1910 = vsel %vm415, %v1772, 0
    %v1913 = vsel %vm415, %v1773, 0
    %v1916 = vsel %vm415, %v1774, 0
    %v1919 = vsel %vm415, %v1775, 0
    %1921 = vmatprep.subr.mxu0 0.0
    %1922 = vmatpush1.msra.mxu0 0.0
    %1923 = vmatprep.subr.mxu0 0.0
    %1924 = vmatpush1.msra.mxu0 0.0
    %1925 = vmatprep.subr.mxu0 0.0
    %1926 = vmatpush1.msra.mxu0 0.0
    %1927 = vmatprep.subr.mxu0 0.0
    %1928 = vmatpush1.msra.mxu0 0.0
    %1929 = vmatprep.subr.mxu0 0.0
    %1930 = vmatpush1.msra.mxu0 0.0
    %1931 = vmatprep.subr.mxu0 0.0
    %1932 = vmatpush1.msra.mxu0 0.0
    %1933 = vmatprep.subr.mxu0 0.0
    %1934 = vmatpush1.msra.mxu0 0.0
    %1935 = vmatprep.subr.mxu0 0.0
    %1936 = vmatpush1.msra.mxu0 0.0
    %1937 = vmatprep.subr.mxu0 0.0
    %1938 = vmatpush1.msra.mxu0 0.0
    %1939 = vmatprep.subr.mxu0 0.0
    %1940 = vmatpush1.msra.mxu0 0.0
    %1941 = vmatprep.subr.mxu0 0.0
    %1942 = vmatpush1.msra.mxu0 0.0
    %1943 = vmatprep.subr.mxu0 0.0
    %1944 = vmatpush1.msra.mxu0 0.0
    %1945 = vmatprep.subr.mxu0 0.0
    %1946 = vmatpush1.msra.mxu0 %v1904
    %1947 = vmatprep.subr.mxu0 0.0
    %1948 = vmatpush1.msra.mxu0 %v1902
    %1949 = vmatprep.subr.mxu0 0.0
    %1950 = vmatpush1.msra.mxu0 %v1900
    %1951 = vmatprep.subr.mxu0 0.0
    %1952 = vmatpush1.msra.mxu0 %v1898
    %1953 = vmatprep.subr.mxu0 0.0
    %1954 = vmatpush2.msra.mxu0 0.0
    %1955 = vmatprep.subr.mxu0 0.0
    %1956 = vmatpush2.msra.mxu0 0.0
    %1957 = vmatprep.subr.mxu0 0.0
    %1958 = vmatpush2.msra.mxu0 0.0
    %1959 = vmatprep.subr.mxu0 0.0
    %1960 = vmatpush2.msra.mxu0 0.0
    %1961 = vmatprep.subr.mxu0 0.0
    %1962 = vmatpush2.msra.mxu0 0.0
    %1963 = vmatprep.subr.mxu0 0.0
    %1964 = vmatpush2.msra.mxu0 0.0
    %1965 = vmatprep.subr.mxu0 0.0
    %1966 = vmatpush2.msra.mxu0 0.0
    %1967 = vmatprep.subr.mxu0 0.0
    %1968 = vmatpush2.msra.mxu0 0.0
    %1969 = vmatprep.subr.mxu0 0.0
    %1970 = vmatpush2.msra.mxu0 0.0
    %1971 = vmatprep.subr.mxu0 0.0
    %1972 = vmatpush2.msra.mxu0 0.0
    %1973 = vmatprep.subr.mxu0 0.0
    %1974 = vmatpush2.msra.mxu0 0.0
    %1975 = vmatprep.subr.mxu0 0.0
    %1976 = vmatpush2.msra.mxu0 0.0
    %1977 = vmatprep.subr.mxu0 0.0
    %1978 = vmatpush2.msra.mxu0 0.0
    %1979 = vmatprep.subr.mxu0 0.0
    %1980 = vmatpush2.msra.mxu0 0.0
    %1981 = vmatprep.subr.mxu0 0.0
    %1982 = vmatpush2.msra.mxu0 0.0
    %1983 = vmatprep.subr.mxu0 0.0
    %1984 = vmatpush2.msra.mxu0 0.0
    %1985 = vmatprep.mubr.f32.mxu0 0.0
    %1986 = vmatmul.mubr.f32.gmra.mxu0 %v1910
    %v1987 = vpop.f32.mrf.mxu0
    %v1988 = vadd.f32 %v1875, %v1987
    %v1989 = vpop.f32.mrf.mxu0
    %1990 = vmatprep.mubr.f32.mxu0 0.0
    %1991 = vmatmul.mubr.f32.gmra.mxu0 %v1913
    %v1992 = vpop.f32.mrf.mxu0
    %v1993 = vadd.f32 %v1880, %v1992
    %v1994 = vpop.f32.mrf.mxu0
    %1995 = vmatprep.mubr.f32.mxu0 0.0
    %1996 = vmatmul.mubr.f32.gmra.mxu0 %v1916
    %v1997 = vpop.f32.mrf.mxu0
    %v1998 = vadd.f32 %v1885, %v1997
    %v1999 = vpop.f32.mrf.mxu0
    %2000 = vmatprep.mubr.f32.mxu0 0.0
    %2001 = vmatmul.mubr.f32.gmra.mxu0 %v1919
    %v2002 = vpop.f32.mrf.mxu0
    %v2003 = vadd.f32 %v1890, %v2002
    %v2004 = vpop.f32.mrf.mxu0
    %2005 = vdwg.mxu0
    %v2007 = vsel %vm1005, %v1988, 0
    %v2010 = vsel %vm1005, %v1993, 0
    %v2013 = vsel %vm1005, %v1998, 0
    %v2016 = vsel %vm1005, %v2003, 0
    %2018 = vmatprep.subr.mxu0 0.0
    %2019 = vmatpush1.msra.mxu0 0.0
    %2020 = vmatprep.subr.mxu0 0.0
    %2021 = vmatpush1.msra.mxu0 0.0
    %2022 = vmatprep.subr.mxu0 0.0
    %2023 = vmatpush1.msra.mxu0 0.0
    %2024 = vmatprep.subr.mxu0 0.0
    %2025 = vmatpush1.msra.mxu0 0.0
    %2026 = vmatprep.subr.mxu0 0.0
    %2027 = vmatpush1.msra.mxu0 0.0
    %2028 = vmatprep.subr.mxu0 0.0
    %2029 = vmatpush1.msra.mxu0 0.0
    %2030 = vmatprep.subr.mxu0 0.0
    %2031 = vmatpush1.msra.mxu0 0.0
    %2032 = vmatprep.subr.mxu0 0.0
    %2033 = vmatpush1.msra.mxu0 0.0
    %2034 = vmatprep.subr.mxu0 0.0
    %2035 = vmatpush1.msra.mxu0 0.0
    %2036 = vmatprep.subr.mxu0 0.0
    %2037 = vmatpush1.msra.mxu0 0.0
    %2038 = vmatprep.subr.mxu0 0.0
    %2039 = vmatpush1.msra.mxu0 0.0
    %2040 = vmatprep.subr.mxu0 0.0
    %2041 = vmatpush1.msra.mxu0 0.0
    %2042 = vmatprep.subr.mxu0 0.0
    %2043 = vmatpush1.msra.mxu0 0.0
    %2044 = vmatprep.subr.mxu0 0.0
    %2045 = vmatpush1.msra.mxu0 0.0
    %2046 = vmatprep.subr.mxu0 0.0
    %2047 = vmatpush1.msra.mxu0 0.0
    %2048 = vmatprep.subr.mxu0 0.0
    %2049 = vmatpush1.msra.mxu0 %v994
    %2050 = vmatprep.subr.mxu0 0.0
    %2051 = vmatpush2.msra.mxu0 0.0
    %2052 = vmatprep.subr.mxu0 0.0
    %2053 = vmatpush2.msra.mxu0 0.0
    %2054 = vmatprep.subr.mxu0 0.0
    %2055 = vmatpush2.msra.mxu0 0.0
    %2056 = vmatprep.subr.mxu0 0.0
    %2057 = vmatpush2.msra.mxu0 0.0
    %2058 = vmatprep.subr.mxu0 0.0
    %2059 = vmatpush2.msra.mxu0 0.0
    %2060 = vmatprep.subr.mxu0 0.0
    %2061 = vmatpush2.msra.mxu0 0.0
    %2062 = vmatprep.subr.mxu0 0.0
    %2063 = vmatpush2.msra.mxu0 0.0
    %2064 = vmatprep.subr.mxu0 0.0
    %2065 = vmatpush2.msra.mxu0 0.0
    %2066 = vmatprep.subr.mxu0 0.0
    %2067 = vmatpush2.msra.mxu0 0.0
    %2068 = vmatprep.subr.mxu0 0.0
    %2069 = vmatpush2.msra.mxu0 0.0
    %2070 = vmatprep.subr.mxu0 0.0
    %2071 = vmatpush2.msra.mxu0 0.0
    %2072 = vmatprep.subr.mxu0 0.0
    %2073 = vmatpush2.msra.mxu0 0.0
    %2074 = vmatprep.subr.mxu0 0.0
    %2075 = vmatpush2.msra.mxu0 0.0
    %2076 = vmatprep.subr.mxu0 0.0
    %2077 = vmatpush2.msra.mxu0 0.0
    %2078 = vmatprep.subr.mxu0 0.0
    %2079 = vmatpush2.msra.mxu0 0.0
    %2080 = vmatprep.subr.mxu0 0.0
    %2081 = vmatpush2.msra.mxu0 0.0
    %2082 = vmatprep.mubr.f32.mxu0 0.0
    %2083 = vmatmul.mubr.f32.gmra.mxu0 %v2007
    %v2084 = vpop.f32.mrf.mxu0
    %v2085 = vadd.f32 0.0, %v2084
    %v2086 = vpop.f32.mrf.mxu0
    %2087 = vmatprep.mubr.f32.mxu0 0.0
    %2088 = vmatmul.mubr.f32.gmra.mxu0 %v2010
    %v2089 = vpop.f32.mrf.mxu0
    %v2090 = vadd.f32 0.0, %v2089
    %v2091 = vpop.f32.mrf.mxu0
    %2092 = vmatprep.mubr.f32.mxu0 0.0
    %2093 = vmatmul.mubr.f32.gmra.mxu0 %v2013
    %v2094 = vpop.f32.mrf.mxu0
    %v2095 = vadd.f32 0.0, %v2094
    %v2096 = vpop.f32.mrf.mxu0
    %2097 = vmatprep.mubr.f32.mxu0 0.0
    %2098 = vmatmul.mubr.f32.gmra.mxu0 %v2016
    %v2099 = vpop.f32.mrf.mxu0
    %v2100 = vadd.f32 0.0, %v2099
    %v2101 = vpop.f32.mrf.mxu0
    %2102 = vdwg.mxu0
    %v2104 = vsel %vm1005, %v1464, 0
    %v2107 = vsel %vm1005, %v1469, 0
    %v2110 = vsel %vm1005, %v1474, 0
    %v2113 = vsel %vm1005, %v1479, 0
    %2115 = vmatprep.subr.mxu0 0.0
    %2116 = vmatpush1.msra.mxu0 0.0
    %2117 = vmatprep.subr.mxu0 0.0
    %2118 = vmatpush1.msra.mxu0 0.0
    %2119 = vmatprep.subr.mxu0 0.0
    %2120 = vmatpush1.msra.mxu0 0.0
    %2121 = vmatprep.subr.mxu0 0.0
    %2122 = vmatpush1.msra.mxu0 0.0
    %2123 = vmatprep.subr.mxu0 0.0
    %2124 = vmatpush1.msra.mxu0 0.0
    %2125 = vmatprep.subr.mxu0 0.0
    %2126 = vmatpush1.msra.mxu0 0.0
    %2127 = vmatprep.subr.mxu0 0.0
    %2128 = vmatpush1.msra.mxu0 0.0
    %2129 = vmatprep.subr.mxu0 0.0
    %2130 = vmatpush1.msra.mxu0 0.0
    %2131 = vmatprep.subr.mxu0 0.0
    %2132 = vmatpush1.msra.mxu0 0.0
    %2133 = vmatprep.subr.mxu0 0.0
    %2134 = vmatpush1.msra.mxu0 0.0
    %2135 = vmatprep.subr.mxu0 0.0
    %2136 = vmatpush1.msra.mxu0 0.0
    %2137 = vmatprep.subr.mxu0 0.0
    %2138 = vmatpush1.msra.mxu0 0.0
    %2139 = vmatprep.subr.mxu0 0.0
    %2140 = vmatpush1.msra.mxu0 0.0
    %2141 = vmatprep.subr.mxu0 0.0
    %2142 = vmatpush1.msra.mxu0 0.0
    %2143 = vmatprep.subr.mxu0 0.0
    %2144 = vmatpush1.msra.mxu0 0.0
    %2145 = vmatprep.subr.mxu0 0.0
    %2146 = vmatpush1.msra.mxu0 %v993
    %2147 = vmatprep.subr.mxu0 0.0
    %2148 = vmatpush2.msra.mxu0 0.0
    %2149 = vmatprep.subr.mxu0 0.0
    %2150 = vmatpush2.msra.mxu0 0.0
    %2151 = vmatprep.subr.mxu0 0.0
    %2152 = vmatpush2.msra.mxu0 0.0
    %2153 = vmatprep.subr.mxu0 0.0
    %2154 = vmatpush2.msra.mxu0 0.0
    %2155 = vmatprep.subr.mxu0 0.0
    %2156 = vmatpush2.msra.mxu0 0.0
    %2157 = vmatprep.subr.mxu0 0.0
    %2158 = vmatpush2.msra.mxu0 0.0
    %2159 = vmatprep.subr.mxu0 0.0
    %2160 = vmatpush2.msra.mxu0 0.0
    %2161 = vmatprep.subr.mxu0 0.0
    %2162 = vmatpush2.msra.mxu0 0.0
    %2163 = vmatprep.subr.mxu0 0.0
    %2164 = vmatpush2.msra.mxu0 0.0
    %2165 = vmatprep.subr.mxu0 0.0
    %2166 = vmatpush2.msra.mxu0 0.0
    %2167 = vmatprep.subr.mxu0 0.0
    %2168 = vmatpush2.msra.mxu0 0.0
    %2169 = vmatprep.subr.mxu0 0.0
    %2170 = vmatpush2.msra.mxu0 0.0
    %2171 = vmatprep.subr.mxu0 0.0
    %2172 = vmatpush2.msra.mxu0 0.0
    %2173 = vmatprep.subr.mxu0 0.0
    %2174 = vmatpush2.msra.mxu0 0.0
    %2175 = vmatprep.subr.mxu0 0.0
    %2176 = vmatpush2.msra.mxu0 0.0
    %2177 = vmatprep.subr.mxu0 0.0
    %2178 = vmatpush2.msra.mxu0 0.0
    %2179 = vmatprep.mubr.f32.mxu0 0.0
    %2180 = vmatmul.mubr.f32.gmra.mxu0 %v2104
    %v2181 = vpop.f32.mrf.mxu0
    %v2182 = vadd.f32 %v2085, %v2181
    %v2183 = vpop.f32.mrf.mxu0
    %2184 = vmatprep.mubr.f32.mxu0 0.0
    %2185 = vmatmul.mubr.f32.gmra.mxu0 %v2107
    %v2186 = vpop.f32.mrf.mxu0
    %v2187 = vadd.f32 %v2090, %v2186
    %v2188 = vpop.f32.mrf.mxu0
    %2189 = vmatprep.mubr.f32.mxu0 0.0
    %2190 = vmatmul.mubr.f32.gmra.mxu0 %v2110
    %v2191 = vpop.f32.mrf.mxu0
    %v2192 = vadd.f32 %v2095, %v2191
    %v2193 = vpop.f32.mrf.mxu0
    %2194 = vmatprep.mubr.f32.mxu0 0.0
    %2195 = vmatmul.mubr.f32.gmra.mxu0 %v2113
    %v2196 = vpop.f32.mrf.mxu0
    %v2197 = vadd.f32 %v2100, %v2196
    %v2198 = vpop.f32.mrf.mxu0
    %2199 = vdwg.mxu0
    %2200 = vrot.lane.b32.xlu0 %v597, 80
    %v2201 = vpop.permute.xlu0 %2200
    %2202 = vrot.lane.b32.xlu0 %v598, 80
    %v2203 = vpop.permute.xlu0 %2202
    %2204 = vrot.lane.b32.xlu0 %v599, 80
    %v2205 = vpop.permute.xlu0 %2204
    %2206 = vrot.lane.b32.xlu0 %v600, 80
    %v2207 = vpop.permute.xlu0 %2206
    %2208 = vrot.lane.b32.xlu0 %v696, 112
    %v2209 = vpop.permute.xlu0 %2208
    %2210 = vrot.lane.b32.xlu0 %v701, 112
    %v2211 = vpop.permute.xlu0 %2210
    %2212 = vrot.lane.b32.xlu0 %v706, 112
    %v2213 = vpop.permute.xlu0 %2212
    %2214 = vrot.lane.b32.xlu0 %v711, 112
    %v2215 = vpop.permute.xlu0 %2214
    %v2216 = vsel %vm1005, %v2201, 0
    %v2218 = vsel %vm1005, %v2203, 0
    %v2220 = vsel %vm1005, %v2205, 0
    %v2222 = vsel %vm1005, %v2207, 0
    %v2224 = vsel %vm1005, %v2209, 0
    %v2226 = vsel %vm1005, %v2211, 0
    %v2228 = vsel %vm1005, %v2213, 0
    %v2230 = vsel %vm1005, %v2215, 0
    %2232 = vmatprep.subr.mxu0 0.0
    %2233 = vmatpush1.xpose.msra.mxu0 0.0
    %2234 = vmatprep.subr.mxu0 0.0
    %2235 = vmatpush1.xpose.msra.mxu0 0.0
    %2236 = vmatprep.subr.mxu0 0.0
    %2237 = vmatpush1.xpose.msra.mxu0 0.0
    %2238 = vmatprep.subr.mxu0 0.0
    %2239 = vmatpush1.xpose.msra.mxu0 0.0
    %2240 = vmatprep.subr.mxu0 0.0
    %2241 = vmatpush1.xpose.msra.mxu0 0.0
    %2242 = vmatprep.subr.mxu0 0.0
    %2243 = vmatpush1.xpose.msra.mxu0 0.0
    %2244 = vmatprep.subr.mxu0 0.0
    %2245 = vmatpush1.xpose.msra.mxu0 0.0
    %2246 = vmatprep.subr.mxu0 0.0
    %2247 = vmatpush1.xpose.msra.mxu0 0.0
    %2248 = vmatprep.subr.mxu0 0.0
    %2249 = vmatpush1.xpose.msra.mxu0 0.0
    %2250 = vmatprep.subr.mxu0 0.0
    %2251 = vmatpush1.xpose.msra.mxu0 0.0
    %2252 = vmatprep.subr.mxu0 0.0
    %2253 = vmatpush1.xpose.msra.mxu0 0.0
    %2254 = vmatprep.subr.mxu0 0.0
    %2255 = vmatpush1.xpose.msra.mxu0 0.0
    %2256 = vmatprep.subr.mxu0 0.0
    %2257 = vmatpush1.xpose.msra.mxu0 %v2230
    %2258 = vmatprep.subr.mxu0 0.0
    %2259 = vmatpush1.xpose.msra.mxu0 %v2228
    %2260 = vmatprep.subr.mxu0 0.0
    %2261 = vmatpush1.xpose.msra.mxu0 %v2226
    %2262 = vmatprep.subr.mxu0 0.0
    %2263 = vmatpush1.xpose.msra.mxu0 %v2224
    %2264 = vmatprep.subr.mxu0 0.0
    %2265 = vmatpush2.xpose.msra.mxu0 0.0
    %2266 = vmatprep.subr.mxu0 0.0
    %2267 = vmatpush2.xpose.msra.mxu0 0.0
    %2268 = vmatprep.subr.mxu0 0.0
    %2269 = vmatpush2.xpose.msra.mxu0 0.0
    %2270 = vmatprep.subr.mxu0 0.0
    %2271 = vmatpush2.xpose.msra.mxu0 0.0
    %2272 = vmatprep.subr.mxu0 0.0
    %2273 = vmatpush2.xpose.msra.mxu0 0.0
    %2274 = vmatprep.subr.mxu0 0.0
    %2275 = vmatpush2.xpose.msra.mxu0 0.0
    %2276 = vmatprep.subr.mxu0 0.0
    %2277 = vmatpush2.xpose.msra.mxu0 0.0
    %2278 = vmatprep.subr.mxu0 0.0
    %2279 = vmatpush2.xpose.msra.mxu0 0.0
    %2280 = vmatprep.subr.mxu0 0.0
    %2281 = vmatpush2.xpose.msra.mxu0 0.0
    %2282 = vmatprep.subr.mxu0 0.0
    %2283 = vmatpush2.xpose.msra.mxu0 0.0
    %2284 = vmatprep.subr.mxu0 0.0
    %2285 = vmatpush2.xpose.msra.mxu0 0.0
    %2286 = vmatprep.subr.mxu0 0.0
    %2287 = vmatpush2.xpose.msra.mxu0 0.0
    %2288 = vmatprep.subr.mxu0 0.0
    %2289 = vmatpush2.xpose.msra.mxu0 0.0
    %2290 = vmatprep.subr.mxu0 0.0
    %2291 = vmatpush2.xpose.msra.mxu0 0.0
    %2292 = vmatprep.subr.mxu0 0.0
    %2293 = vmatpush2.xpose.msra.mxu0 0.0
    %2294 = vmatprep.subr.mxu0 0.0
    %2295 = vmatpush2.xpose.msra.mxu0 0.0
    %2296 = vmatprep.mubr.f32.mxu0 0.0
    %2297 = vmatmul.mubr.f32.gmra.mxu0 %v2216
    %v2298 = vpop.f32.mrf.mxu0
    %v2299 = vadd.f32 0.0, %v2298
    %v2300 = vpop.f32.mrf.mxu0
    %2301 = vmatprep.mubr.f32.mxu0 0.0
    %2302 = vmatmul.mubr.f32.gmra.mxu0 %v2218
    %v2303 = vpop.f32.mrf.mxu0
    %v2304 = vadd.f32 0.0, %v2303
    %v2305 = vpop.f32.mrf.mxu0
    %2306 = vmatprep.mubr.f32.mxu0 0.0
    %2307 = vmatmul.mubr.f32.gmra.mxu0 %v2220
    %v2308 = vpop.f32.mrf.mxu0
    %v2309 = vadd.f32 0.0, %v2308
    %v2310 = vpop.f32.mrf.mxu0
    %2311 = vmatprep.mubr.f32.mxu0 0.0
    %2312 = vmatmul.mubr.f32.gmra.mxu0 %v2222
    %v2313 = vpop.f32.mrf.mxu0
    %v2314 = vadd.f32 0.0, %v2313
    %v2315 = vpop.f32.mrf.mxu0
    %2316 = vdwg.mxu0
    %v2317 = vmul.f32 %v399, %v2299
    %v2318 = vmul.f32 %v400, %v2304
    %v2319 = vmul.f32 %v401, %v2309
    %v2320 = vmul.f32 %v402, %v2314
    %2321 = vrot.lane.b32.xlu0 %v882, 112
    %v2322 = vpop.permute.xlu0 %2321
    %2323 = vrot.lane.b32.xlu0 %v887, 112
    %v2324 = vpop.permute.xlu0 %2323
    %2325 = vrot.lane.b32.xlu0 %v892, 112
    %v2326 = vpop.permute.xlu0 %2325
    %2327 = vrot.lane.b32.xlu0 %v897, 112
    %v2328 = vpop.permute.xlu0 %2327
    %v2329 = vsel %vm1005, %v2322, 0
    %v2331 = vsel %vm1005, %v2324, 0
    %v2333 = vsel %vm1005, %v2326, 0
    %v2335 = vsel %vm1005, %v2328, 0
    %2337 = vmatprep.subr.mxu0 0.0
    %2338 = vmatpush1.xpose.msra.mxu0 0.0
    %2339 = vmatprep.subr.mxu0 0.0
    %2340 = vmatpush1.xpose.msra.mxu0 0.0
    %2341 = vmatprep.subr.mxu0 0.0
    %2342 = vmatpush1.xpose.msra.mxu0 0.0
    %2343 = vmatprep.subr.mxu0 0.0
    %2344 = vmatpush1.xpose.msra.mxu0 0.0
    %2345 = vmatprep.subr.mxu0 0.0
    %2346 = vmatpush1.xpose.msra.mxu0 0.0
    %2347 = vmatprep.subr.mxu0 0.0
    %2348 = vmatpush1.xpose.msra.mxu0 0.0
    %2349 = vmatprep.subr.mxu0 0.0
    %2350 = vmatpush1.xpose.msra.mxu0 0.0
    %2351 = vmatprep.subr.mxu0 0.0
    %2352 = vmatpush1.xpose.msra.mxu0 0.0
    %2353 = vmatprep.subr.mxu0 0.0
    %2354 = vmatpush1.xpose.msra.mxu0 0.0
    %2355 = vmatprep.subr.mxu0 0.0
    %2356 = vmatpush1.xpose.msra.mxu0 0.0
    %2357 = vmatprep.subr.mxu0 0.0
    %2358 = vmatpush1.xpose.msra.mxu0 0.0
    %2359 = vmatprep.subr.mxu0 0.0
    %2360 = vmatpush1.xpose.msra.mxu0 0.0
    %2361 = vmatprep.subr.mxu0 0.0
    %2362 = vmatpush1.xpose.msra.mxu0 %v2335
    %2363 = vmatprep.subr.mxu0 0.0
    %2364 = vmatpush1.xpose.msra.mxu0 %v2333
    %2365 = vmatprep.subr.mxu0 0.0
    %2366 = vmatpush1.xpose.msra.mxu0 %v2331
    %2367 = vmatprep.subr.mxu0 0.0
    %2368 = vmatpush1.xpose.msra.mxu0 %v2329
    %2369 = vmatprep.subr.mxu0 0.0
    %2370 = vmatpush2.xpose.msra.mxu0 0.0
    %2371 = vmatprep.subr.mxu0 0.0
    %2372 = vmatpush2.xpose.msra.mxu0 0.0
    %2373 = vmatprep.subr.mxu0 0.0
    %2374 = vmatpush2.xpose.msra.mxu0 0.0
    %2375 = vmatprep.subr.mxu0 0.0
    %2376 = vmatpush2.xpose.msra.mxu0 0.0
    %2377 = vmatprep.subr.mxu0 0.0
    %2378 = vmatpush2.xpose.msra.mxu0 0.0
    %2379 = vmatprep.subr.mxu0 0.0
    %2380 = vmatpush2.xpose.msra.mxu0 0.0
    %2381 = vmatprep.subr.mxu0 0.0
    %2382 = vmatpush2.xpose.msra.mxu0 0.0
    %2383 = vmatprep.subr.mxu0 0.0
    %2384 = vmatpush2.xpose.msra.mxu0 0.0
    %2385 = vmatprep.subr.mxu0 0.0
    %2386 = vmatpush2.xpose.msra.mxu0 0.0
    %2387 = vmatprep.subr.mxu0 0.0
    %2388 = vmatpush2.xpose.msra.mxu0 0.0
    %2389 = vmatprep.subr.mxu0 0.0
    %2390 = vmatpush2.xpose.msra.mxu0 0.0
    %2391 = vmatprep.subr.mxu0 0.0
    %2392 = vmatpush2.xpose.msra.mxu0 0.0
    %2393 = vmatprep.subr.mxu0 0.0
    %2394 = vmatpush2.xpose.msra.mxu0 0.0
    %2395 = vmatprep.subr.mxu0 0.0
    %2396 = vmatpush2.xpose.msra.mxu0 0.0
    %2397 = vmatprep.subr.mxu0 0.0
    %2398 = vmatpush2.xpose.msra.mxu0 0.0
    %2399 = vmatprep.subr.mxu0 0.0
    %2400 = vmatpush2.xpose.msra.mxu0 0.0
    %2401 = vmatprep.mubr.f32.mxu0 0.0
    %2402 = vmatmul.mubr.f32.gmra.mxu0 %v2216
    %v2403 = vpop.f32.mrf.mxu0
    %v2404 = vadd.f32 0.0, %v2403
    %v2405 = vpop.f32.mrf.mxu0
    %2406 = vmatprep.mubr.f32.mxu0 0.0
    %2407 = vmatmul.mubr.f32.gmra.mxu0 %v2218
    %v2408 = vpop.f32.mrf.mxu0
    %v2409 = vadd.f32 0.0, %v2408
    %v2410 = vpop.f32.mrf.mxu0
    %2411 = vmatprep.mubr.f32.mxu0 0.0
    %2412 = vmatmul.mubr.f32.gmra.mxu0 %v2220
    %v2413 = vpop.f32.mrf.mxu0
    %v2414 = vadd.f32 0.0, %v2413
    %v2415 = vpop.f32.mrf.mxu0
    %2416 = vmatprep.mubr.f32.mxu0 0.0
    %2417 = vmatmul.mubr.f32.gmra.mxu0 %v2222
    %v2418 = vpop.f32.mrf.mxu0
    %v2419 = vadd.f32 0.0, %v2418
    %v2420 = vpop.f32.mrf.mxu0
    %2421 = vdwg.mxu0
    %v2422 = vmul.f32 %v403, %v2404
    %v2423 = vmul.f32 %v404, %v2409
    %v2424 = vmul.f32 %v405, %v2414
    %v2425 = vmul.f32 %v406, %v2419
    %v2426 = vadd.f32 %v2317, %v2422
    %v2427 = vadd.f32 %v2318, %v2423
    %v2428 = vadd.f32 %v2319, %v2424
    %v2429 = vadd.f32 %v2320, %v2425
    %v2430 = vsel %vm989, %v2426, -1e+30
    %v2431 = vsel %vm990, %v2427, -1e+30
    %v2432 = vsel %vm991, %v2428, -1e+30
    %v2433 = vsel %vm992, %v2429, -1e+30
    %v2434 = vsel %vm415, %v2430, -inf
    %2435 = vmax.xlane.f32.xlu0 %v2434
    %v2436 = vpop.xlane.xlu0 %2435
    %v2437 = vsel %vm415, %v2431, -inf
    %2438 = vmax.xlane.f32.xlu0 %v2437
    %v2439 = vpop.xlane.xlu0 %2438
    %v2440 = vsel %vm415, %v2432, -inf
    %2441 = vmax.xlane.f32.xlu0 %v2440
    %v2442 = vpop.xlane.xlu0 %2441
    %v2443 = vsel %vm415, %v2433, -inf
    %2444 = vmax.xlane.f32.xlu0 %v2443
    %v2445 = vpop.xlane.xlu0 %2444
    %v2446 = vsub.f32 %v2430, %v2436
    %v2447 = vsub.f32 %v2431, %v2439
    %v2448 = vsub.f32 %v2432, %v2442
    %v2449 = vsub.f32 %v2433, %v2445
    %v2450 = vmul.f32 %v2446, 1.442695
    %v2451 = vpow.pop %v2450
    %v2452 = vmul.f32 %v2447, 1.442695
    %v2453 = vpow.pop %v2452
    %v2454 = vmul.f32 %v2448, 1.442695
    %v2455 = vpow.pop %v2454
    %v2456 = vmul.f32 %v2449, 1.442695
    %v2457 = vpow.pop %v2456
    %v2458 = vsel %vm989, %v2451, 0.0
    %v2459 = vsel %vm990, %v2453, 0.0
    %v2460 = vsel %vm991, %v2455, 0.0
    %v2461 = vsel %vm992, %v2457, 0.0
    %v2462 = vsel %vm415, %v2458, 0.0
    %2463 = vadd.xlane.f32.xlu0 %v2462
    %v2464 = vpop.xlane.xlu0 %2463
    %v2465 = vsel %vm415, %v2459, 0.0
    %2466 = vadd.xlane.f32.xlu0 %v2465
    %v2467 = vpop.xlane.xlu0 %2466
    %v2468 = vsel %vm415, %v2460, 0.0
    %2469 = vadd.xlane.f32.xlu0 %v2468
    %v2470 = vpop.xlane.xlu0 %2469
    %v2471 = vsel %vm415, %v2461, 0.0
    %2472 = vadd.xlane.f32.xlu0 %v2471
    %v2473 = vpop.xlane.xlu0 %2472
    %vm2474 = vcmp.eq.f32.partialorder %v2464, 0.0
    %vm2475 = vcmp.eq.f32.partialorder %v2467, 0.0
    %vm2476 = vcmp.eq.f32.partialorder %v2470, 0.0
    %vm2477 = vcmp.eq.f32.partialorder %v2473, 0.0
    %v2478 = vsel %vm2474, 1.0, %v2464
    %v2479 = vsel %vm2475, 1.0, %v2467
    %v2480 = vsel %vm2476, 1.0, %v2470
    %v2481 = vsel %vm2477, 1.0, %v2473
    %v2482 = vrcp.pop %v2478
    %v2483 = vrcp.pop %v2479
    %v2484 = vrcp.pop %v2480
    %v2485 = vrcp.pop %v2481
    %v2486 = vmul.f32 %v2458, %v2482
    %v2487 = vmul.f32 %v2459, %v2483
    %v2488 = vmul.f32 %v2460, %v2484
    %v2489 = vmul.f32 %v2461, %v2485
    %v2490 = vmul.f32 %v2486, %v399
    %v2491 = vmul.f32 %v2487, %v400
    %v2492 = vmul.f32 %v2488, %v401
    %v2493 = vmul.f32 %v2489, %v402
    %v2494 = vmul.f32 %v2486, %v403
    %v2495 = vmul.f32 %v2487, %v404
    %v2496 = vmul.f32 %v2488, %v405
    %v2497 = vmul.f32 %v2489, %v406
    %2498 = vrot.lane.b32.xlu0 %v967, 112
    %v2499 = vpop.permute.xlu0 %2498
    %2500 = vrot.lane.b32.xlu0 %v972, 112
    %v2501 = vpop.permute.xlu0 %2500
    %2502 = vrot.lane.b32.xlu0 %v977, 112
    %v2503 = vpop.permute.xlu0 %2502
    %2504 = vrot.lane.b32.xlu0 %v982, 112
    %v2505 = vpop.permute.xlu0 %2504
    %v2511 = vsel %vm415, %v2494, 0
    %v2514 = vsel %vm415, %v2495, 0
    %v2517 = vsel %vm415, %v2496, 0
    %v2520 = vsel %vm415, %v2497, 0
    %2522 = vmatprep.subr.mxu0 0.0
    %2523 = vmatpush1.msra.mxu0 0.0
    %2524 = vmatprep.subr.mxu0 0.0
    %2525 = vmatpush1.msra.mxu0 0.0
    %2526 = vmatprep.subr.mxu0 0.0
    %2527 = vmatpush1.msra.mxu0 0.0
    %2528 = vmatprep.subr.mxu0 0.0
    %2529 = vmatpush1.msra.mxu0 0.0
    %2530 = vmatprep.subr.mxu0 0.0
    %2531 = vmatpush1.msra.mxu0 0.0
    %2532 = vmatprep.subr.mxu0 0.0
    %2533 = vmatpush1.msra.mxu0 0.0
    %2534 = vmatprep.subr.mxu0 0.0
    %2535 = vmatpush1.msra.mxu0 0.0
    %2536 = vmatprep.subr.mxu0 0.0
    %2537 = vmatpush1.msra.mxu0 0.0
    %2538 = vmatprep.subr.mxu0 0.0
    %2539 = vmatpush1.msra.mxu0 0.0
    %2540 = vmatprep.subr.mxu0 0.0
    %2541 = vmatpush1.msra.mxu0 0.0
    %2542 = vmatprep.subr.mxu0 0.0
    %2543 = vmatpush1.msra.mxu0 0.0
    %2544 = vmatprep.subr.mxu0 0.0
    %2545 = vmatpush1.msra.mxu0 0.0
    %2546 = vmatprep.subr.mxu0 0.0
    %2547 = vmatpush1.msra.mxu0 %v2505
    %2548 = vmatprep.subr.mxu0 0.0
    %2549 = vmatpush1.msra.mxu0 %v2503
    %2550 = vmatprep.subr.mxu0 0.0
    %2551 = vmatpush1.msra.mxu0 %v2501
    %2552 = vmatprep.subr.mxu0 0.0
    %2553 = vmatpush1.msra.mxu0 %v2499
    %2554 = vmatprep.subr.mxu0 0.0
    %2555 = vmatpush2.msra.mxu0 0.0
    %2556 = vmatprep.subr.mxu0 0.0
    %2557 = vmatpush2.msra.mxu0 0.0
    %2558 = vmatprep.subr.mxu0 0.0
    %2559 = vmatpush2.msra.mxu0 0.0
    %2560 = vmatprep.subr.mxu0 0.0
    %2561 = vmatpush2.msra.mxu0 0.0
    %2562 = vmatprep.subr.mxu0 0.0
    %2563 = vmatpush2.msra.mxu0 0.0
    %2564 = vmatprep.subr.mxu0 0.0
    %2565 = vmatpush2.msra.mxu0 0.0
    %2566 = vmatprep.subr.mxu0 0.0
    %2567 = vmatpush2.msra.mxu0 0.0
    %2568 = vmatprep.subr.mxu0 0.0
    %2569 = vmatpush2.msra.mxu0 0.0
    %2570 = vmatprep.subr.mxu0 0.0
    %2571 = vmatpush2.msra.mxu0 0.0
    %2572 = vmatprep.subr.mxu0 0.0
    %2573 = vmatpush2.msra.mxu0 0.0
    %2574 = vmatprep.subr.mxu0 0.0
    %2575 = vmatpush2.msra.mxu0 0.0
    %2576 = vmatprep.subr.mxu0 0.0
    %2577 = vmatpush2.msra.mxu0 0.0
    %2578 = vmatprep.subr.mxu0 0.0
    %2579 = vmatpush2.msra.mxu0 0.0
    %2580 = vmatprep.subr.mxu0 0.0
    %2581 = vmatpush2.msra.mxu0 0.0
    %2582 = vmatprep.subr.mxu0 0.0
    %2583 = vmatpush2.msra.mxu0 0.0
    %2584 = vmatprep.subr.mxu0 0.0
    %2585 = vmatpush2.msra.mxu0 0.0
    %2586 = vmatprep.mubr.f32.mxu0 0.0
    %2587 = vmatmul.mubr.f32.gmra.mxu0 %v2511
    %v2588 = vpop.f32.mrf.mxu0
    %v2589 = vadd.f32 0.0, %v2588
    %v2590 = vpop.f32.mrf.mxu0
    %2591 = vmatprep.mubr.f32.mxu0 0.0
    %2592 = vmatmul.mubr.f32.gmra.mxu0 %v2514
    %v2593 = vpop.f32.mrf.mxu0
    %v2594 = vadd.f32 0.0, %v2593
    %v2595 = vpop.f32.mrf.mxu0
    %2596 = vmatprep.mubr.f32.mxu0 0.0
    %2597 = vmatmul.mubr.f32.gmra.mxu0 %v2517
    %v2598 = vpop.f32.mrf.mxu0
    %v2599 = vadd.f32 0.0, %v2598
    %v2600 = vpop.f32.mrf.mxu0
    %2601 = vmatprep.mubr.f32.mxu0 0.0
    %2602 = vmatmul.mubr.f32.gmra.mxu0 %v2520
    %v2603 = vpop.f32.mrf.mxu0
    %v2604 = vadd.f32 0.0, %v2603
    %v2605 = vpop.f32.mrf.mxu0
    %2606 = vdwg.mxu0
    %2607 = vrot.lane.b32.xlu0 %v797, 112
    %v2608 = vpop.permute.xlu0 %2607
    %2609 = vrot.lane.b32.xlu0 %v802, 112
    %v2610 = vpop.permute.xlu0 %2609
    %2611 = vrot.lane.b32.xlu0 %v807, 112
    %v2612 = vpop.permute.xlu0 %2611
    %2613 = vrot.lane.b32.xlu0 %v812, 112
    %v2614 = vpop.permute.xlu0 %2613
    %v2620 = vsel %vm415, %v2490, 0
    %v2623 = vsel %vm415, %v2491, 0
    %v2626 = vsel %vm415, %v2492, 0
    %v2629 = vsel %vm415, %v2493, 0
    %2631 = vmatprep.subr.mxu0 0.0
    %2632 = vmatpush1.msra.mxu0 0.0
    %2633 = vmatprep.subr.mxu0 0.0
    %2634 = vmatpush1.msra.mxu0 0.0
    %2635 = vmatprep.subr.mxu0 0.0
    %2636 = vmatpush1.msra.mxu0 0.0
    %2637 = vmatprep.subr.mxu0 0.0
    %2638 = vmatpush1.msra.mxu0 0.0
    %2639 = vmatprep.subr.mxu0 0.0
    %2640 = vmatpush1.msra.mxu0 0.0
    %2641 = vmatprep.subr.mxu0 0.0
    %2642 = vmatpush1.msra.mxu0 0.0
    %2643 = vmatprep.subr.mxu0 0.0
    %2644 = vmatpush1.msra.mxu0 0.0
    %2645 = vmatprep.subr.mxu0 0.0
    %2646 = vmatpush1.msra.mxu0 0.0
    %2647 = vmatprep.subr.mxu0 0.0
    %2648 = vmatpush1.msra.mxu0 0.0
    %2649 = vmatprep.subr.mxu0 0.0
    %2650 = vmatpush1.msra.mxu0 0.0
    %2651 = vmatprep.subr.mxu0 0.0
    %2652 = vmatpush1.msra.mxu0 0.0
    %2653 = vmatprep.subr.mxu0 0.0
    %2654 = vmatpush1.msra.mxu0 0.0
    %2655 = vmatprep.subr.mxu0 0.0
    %2656 = vmatpush1.msra.mxu0 %v2614
    %2657 = vmatprep.subr.mxu0 0.0
    %2658 = vmatpush1.msra.mxu0 %v2612
    %2659 = vmatprep.subr.mxu0 0.0
    %2660 = vmatpush1.msra.mxu0 %v2610
    %2661 = vmatprep.subr.mxu0 0.0
    %2662 = vmatpush1.msra.mxu0 %v2608
    %2663 = vmatprep.subr.mxu0 0.0
    %2664 = vmatpush2.msra.mxu0 0.0
    %2665 = vmatprep.subr.mxu0 0.0
    %2666 = vmatpush2.msra.mxu0 0.0
    %2667 = vmatprep.subr.mxu0 0.0
    %2668 = vmatpush2.msra.mxu0 0.0
    %2669 = vmatprep.subr.mxu0 0.0
    %2670 = vmatpush2.msra.mxu0 0.0
    %2671 = vmatprep.subr.mxu0 0.0
    %2672 = vmatpush2.msra.mxu0 0.0
    %2673 = vmatprep.subr.mxu0 0.0
    %2674 = vmatpush2.msra.mxu0 0.0
    %2675 = vmatprep.subr.mxu0 0.0
    %2676 = vmatpush2.msra.mxu0 0.0
    %2677 = vmatprep.subr.mxu0 0.0
    %2678 = vmatpush2.msra.mxu0 0.0
    %2679 = vmatprep.subr.mxu0 0.0
    %2680 = vmatpush2.msra.mxu0 0.0
    %2681 = vmatprep.subr.mxu0 0.0
    %2682 = vmatpush2.msra.mxu0 0.0
    %2683 = vmatprep.subr.mxu0 0.0
    %2684 = vmatpush2.msra.mxu0 0.0
    %2685 = vmatprep.subr.mxu0 0.0
    %2686 = vmatpush2.msra.mxu0 0.0
    %2687 = vmatprep.subr.mxu0 0.0
    %2688 = vmatpush2.msra.mxu0 0.0
    %2689 = vmatprep.subr.mxu0 0.0
    %2690 = vmatpush2.msra.mxu0 0.0
    %2691 = vmatprep.subr.mxu0 0.0
    %2692 = vmatpush2.msra.mxu0 0.0
    %2693 = vmatprep.subr.mxu0 0.0
    %2694 = vmatpush2.msra.mxu0 0.0
    %2695 = vmatprep.mubr.f32.mxu0 0.0
    %2696 = vmatmul.mubr.f32.gmra.mxu0 %v2620
    %v2697 = vpop.f32.mrf.mxu0
    %v2698 = vadd.f32 %v2589, %v2697
    %v2699 = vpop.f32.mrf.mxu0
    %2700 = vmatprep.mubr.f32.mxu0 0.0
    %2701 = vmatmul.mubr.f32.gmra.mxu0 %v2623
    %v2702 = vpop.f32.mrf.mxu0
    %v2703 = vadd.f32 %v2594, %v2702
    %v2704 = vpop.f32.mrf.mxu0
    %2705 = vmatprep.mubr.f32.mxu0 0.0
    %2706 = vmatmul.mubr.f32.gmra.mxu0 %v2626
    %v2707 = vpop.f32.mrf.mxu0
    %v2708 = vadd.f32 %v2599, %v2707
    %v2709 = vpop.f32.mrf.mxu0
    %2710 = vmatprep.mubr.f32.mxu0 0.0
    %2711 = vmatmul.mubr.f32.gmra.mxu0 %v2629
    %v2712 = vpop.f32.mrf.mxu0
    %v2713 = vadd.f32 %v2604, %v2712
    %v2714 = vpop.f32.mrf.mxu0
    %2715 = vdwg.mxu0
    %v2717 = vsel %vm1005, %v2698, 0
    %v2720 = vsel %vm1005, %v2703, 0
    %v2723 = vsel %vm1005, %v2708, 0
    %v2726 = vsel %vm1005, %v2713, 0
    %2728 = vmatprep.subr.mxu0 0.0
    %2729 = vmatpush1.msra.mxu0 0.0
    %2730 = vmatprep.subr.mxu0 0.0
    %2731 = vmatpush1.msra.mxu0 0.0
    %2732 = vmatprep.subr.mxu0 0.0
    %2733 = vmatpush1.msra.mxu0 0.0
    %2734 = vmatprep.subr.mxu0 0.0
    %2735 = vmatpush1.msra.mxu0 0.0
    %2736 = vmatprep.subr.mxu0 0.0
    %2737 = vmatpush1.msra.mxu0 0.0
    %2738 = vmatprep.subr.mxu0 0.0
    %2739 = vmatpush1.msra.mxu0 0.0
    %2740 = vmatprep.subr.mxu0 0.0
    %2741 = vmatpush1.msra.mxu0 0.0
    %2742 = vmatprep.subr.mxu0 0.0
    %2743 = vmatpush1.msra.mxu0 0.0
    %2744 = vmatprep.subr.mxu0 0.0
    %2745 = vmatpush1.msra.mxu0 0.0
    %2746 = vmatprep.subr.mxu0 0.0
    %2747 = vmatpush1.msra.mxu0 0.0
    %2748 = vmatprep.subr.mxu0 0.0
    %2749 = vmatpush1.msra.mxu0 0.0
    %2750 = vmatprep.subr.mxu0 0.0
    %2751 = vmatpush1.msra.mxu0 0.0
    %2752 = vmatprep.subr.mxu0 0.0
    %2753 = vmatpush1.msra.mxu0 0.0
    %2754 = vmatprep.subr.mxu0 0.0
    %2755 = vmatpush1.msra.mxu0 0.0
    %2756 = vmatprep.subr.mxu0 0.0
    %2757 = vmatpush1.msra.mxu0 0.0
    %2758 = vmatprep.subr.mxu0 0.0
    %2759 = vmatpush1.msra.mxu0 %v995
    %2760 = vmatprep.subr.mxu0 0.0
    %2761 = vmatpush2.msra.mxu0 0.0
    %2762 = vmatprep.subr.mxu0 0.0
    %2763 = vmatpush2.msra.mxu0 0.0
    %2764 = vmatprep.subr.mxu0 0.0
    %2765 = vmatpush2.msra.mxu0 0.0
    %2766 = vmatprep.subr.mxu0 0.0
    %2767 = vmatpush2.msra.mxu0 0.0
    %2768 = vmatprep.subr.mxu0 0.0
    %2769 = vmatpush2.msra.mxu0 0.0
    %2770 = vmatprep.subr.mxu0 0.0
    %2771 = vmatpush2.msra.mxu0 0.0
    %2772 = vmatprep.subr.mxu0 0.0
    %2773 = vmatpush2.msra.mxu0 0.0
    %2774 = vmatprep.subr.mxu0 0.0
    %2775 = vmatpush2.msra.mxu0 0.0
    %2776 = vmatprep.subr.mxu0 0.0
    %2777 = vmatpush2.msra.mxu0 0.0
    %2778 = vmatprep.subr.mxu0 0.0
    %2779 = vmatpush2.msra.mxu0 0.0
    %2780 = vmatprep.subr.mxu0 0.0
    %2781 = vmatpush2.msra.mxu0 0.0
    %2782 = vmatprep.subr.mxu0 0.0
    %2783 = vmatpush2.msra.mxu0 0.0
    %2784 = vmatprep.subr.mxu0 0.0
    %2785 = vmatpush2.msra.mxu0 0.0
    %2786 = vmatprep.subr.mxu0 0.0
    %2787 = vmatpush2.msra.mxu0 0.0
    %2788 = vmatprep.subr.mxu0 0.0
    %2789 = vmatpush2.msra.mxu0 0.0
    %2790 = vmatprep.subr.mxu0 0.0
    %2791 = vmatpush2.msra.mxu0 0.0
    %2792 = vmatprep.mubr.f32.mxu0 0.0
    %2793 = vmatmul.mubr.f32.gmra.mxu0 %v2717
    %v2794 = vpop.f32.mrf.mxu0
    %v2795 = vadd.f32 0.0, %v2794
    %v2796 = vpop.f32.mrf.mxu0
    %2797 = vmatprep.mubr.f32.mxu0 0.0
    %2798 = vmatmul.mubr.f32.gmra.mxu0 %v2720
    %v2799 = vpop.f32.mrf.mxu0
    %v2800 = vadd.f32 0.0, %v2799
    %v2801 = vpop.f32.mrf.mxu0
    %2802 = vmatprep.mubr.f32.mxu0 0.0
    %2803 = vmatmul.mubr.f32.gmra.mxu0 %v2723
    %v2804 = vpop.f32.mrf.mxu0
    %v2805 = vadd.f32 0.0, %v2804
    %v2806 = vpop.f32.mrf.mxu0
    %2807 = vmatprep.mubr.f32.mxu0 0.0
    %2808 = vmatmul.mubr.f32.gmra.mxu0 %v2726
    %v2809 = vpop.f32.mrf.mxu0
    %v2810 = vadd.f32 0.0, %v2809
    %v2811 = vpop.f32.mrf.mxu0
    %2812 = vdwg.mxu0
    %v2813 = vadd.f32 %v2182, %v2795
    %v2814 = vadd.f32 %v2187, %v2800
    %v2815 = vadd.f32 %v2192, %v2805
    %v2816 = vadd.f32 %v2197, %v2810
    %2817 = vrot.lane.b32.xlu0 %v597, 72
    %v2818 = vpop.permute.xlu0 %2817
    %2819 = vrot.lane.b32.xlu0 %v598, 72
    %v2820 = vpop.permute.xlu0 %2819
    %2821 = vrot.lane.b32.xlu0 %v599, 72
    %v2822 = vpop.permute.xlu0 %2821
    %2823 = vrot.lane.b32.xlu0 %v600, 72
    %v2824 = vpop.permute.xlu0 %2823
    %2825 = vrot.lane.b32.xlu0 %v696, 104
    %v2826 = vpop.permute.xlu0 %2825
    %2827 = vrot.lane.b32.xlu0 %v701, 104
    %v2828 = vpop.permute.xlu0 %2827
    %2829 = vrot.lane.b32.xlu0 %v706, 104
    %v2830 = vpop.permute.xlu0 %2829
    %2831 = vrot.lane.b32.xlu0 %v711, 104
    %v2832 = vpop.permute.xlu0 %2831
    %v2833 = vsel %vm1005, %v2818, 0
    %v2835 = vsel %vm1005, %v2820, 0
    %v2837 = vsel %vm1005, %v2822, 0
    %v2839 = vsel %vm1005, %v2824, 0
    %v2841 = vsel %vm1005, %v2826, 0
    %v2843 = vsel %vm1005, %v2828, 0
    %v2845 = vsel %vm1005, %v2830, 0
    %v2847 = vsel %vm1005, %v2832, 0
    %2849 = vmatprep.subr.mxu0 0.0
    %2850 = vmatpush1.xpose.msra.mxu0 0.0
    %2851 = vmatprep.subr.mxu0 0.0
    %2852 = vmatpush1.xpose.msra.mxu0 0.0
    %2853 = vmatprep.subr.mxu0 0.0
    %2854 = vmatpush1.xpose.msra.mxu0 0.0
    %2855 = vmatprep.subr.mxu0 0.0
    %2856 = vmatpush1.xpose.msra.mxu0 0.0
    %2857 = vmatprep.subr.mxu0 0.0
    %2858 = vmatpush1.xpose.msra.mxu0 0.0
    %2859 = vmatprep.subr.mxu0 0.0
    %2860 = vmatpush1.xpose.msra.mxu0 0.0
    %2861 = vmatprep.subr.mxu0 0.0
    %2862 = vmatpush1.xpose.msra.mxu0 0.0
    %2863 = vmatprep.subr.mxu0 0.0
    %2864 = vmatpush1.xpose.msra.mxu0 0.0
    %2865 = vmatprep.subr.mxu0 0.0
    %2866 = vmatpush1.xpose.msra.mxu0 0.0
    %2867 = vmatprep.subr.mxu0 0.0
    %2868 = vmatpush1.xpose.msra.mxu0 0.0
    %2869 = vmatprep.subr.mxu0 0.0
    %2870 = vmatpush1.xpose.msra.mxu0 0.0
    %2871 = vmatprep.subr.mxu0 0.0
    %2872 = vmatpush1.xpose.msra.mxu0 0.0
    %2873 = vmatprep.subr.mxu0 0.0
    %2874 = vmatpush1.xpose.msra.mxu0 %v2847
    %2875 = vmatprep.subr.mxu0 0.0
    %2876 = vmatpush1.xpose.msra.mxu0 %v2845
    %2877 = vmatprep.subr.mxu0 0.0
    %2878 = vmatpush1.xpose.msra.mxu0 %v2843
    %2879 = vmatprep.subr.mxu0 0.0
    %2880 = vmatpush1.xpose.msra.mxu0 %v2841
    %2881 = vmatprep.subr.mxu0 0.0
    %2882 = vmatpush2.xpose.msra.mxu0 0.0
    %2883 = vmatprep.subr.mxu0 0.0
    %2884 = vmatpush2.xpose.msra.mxu0 0.0
    %2885 = vmatprep.subr.mxu0 0.0
    %2886 = vmatpush2.xpose.msra.mxu0 0.0
    %2887 = vmatprep.subr.mxu0 0.0
    %2888 = vmatpush2.xpose.msra.mxu0 0.0
    %2889 = vmatprep.subr.mxu0 0.0
    %2890 = vmatpush2.xpose.msra.mxu0 0.0
    %2891 = vmatprep.subr.mxu0 0.0
    %2892 = vmatpush2.xpose.msra.mxu0 0.0
    %2893 = vmatprep.subr.mxu0 0.0
    %2894 = vmatpush2.xpose.msra.mxu0 0.0
    %2895 = vmatprep.subr.mxu0 0.0
    %2896 = vmatpush2.xpose.msra.mxu0 0.0
    %2897 = vmatprep.subr.mxu0 0.0
    %2898 = vmatpush2.xpose.msra.mxu0 0.0
    %2899 = vmatprep.subr.mxu0 0.0
    %2900 = vmatpush2.xpose.msra.mxu0 0.0
    %2901 = vmatprep.subr.mxu0 0.0
    %2902 = vmatpush2.xpose.msra.mxu0 0.0
    %2903 = vmatprep.subr.mxu0 0.0
    %2904 = vmatpush2.xpose.msra.mxu0 0.0
    %2905 = vmatprep.subr.mxu0 0.0
    %2906 = vmatpush2.xpose.msra.mxu0 0.0
    %2907 = vmatprep.subr.mxu0 0.0
    %2908 = vmatpush2.xpose.msra.mxu0 0.0
    %2909 = vmatprep.subr.mxu0 0.0
    %2910 = vmatpush2.xpose.msra.mxu0 0.0
    %2911 = vmatprep.subr.mxu0 0.0
    %2912 = vmatpush2.xpose.msra.mxu0 0.0
    %2913 = vmatprep.mubr.f32.mxu0 0.0
    %2914 = vmatmul.mubr.f32.gmra.mxu0 %v2833
    %v2915 = vpop.f32.mrf.mxu0
    %v2916 = vadd.f32 0.0, %v2915
    %v2917 = vpop.f32.mrf.mxu0
    %2918 = vmatprep.mubr.f32.mxu0 0.0
    %2919 = vmatmul.mubr.f32.gmra.mxu0 %v2835
    %v2920 = vpop.f32.mrf.mxu0
    %v2921 = vadd.f32 0.0, %v2920
    %v2922 = vpop.f32.mrf.mxu0
    %2923 = vmatprep.mubr.f32.mxu0 0.0
    %2924 = vmatmul.mubr.f32.gmra.mxu0 %v2837
    %v2925 = vpop.f32.mrf.mxu0
    %v2926 = vadd.f32 0.0, %v2925
    %v2927 = vpop.f32.mrf.mxu0
    %2928 = vmatprep.mubr.f32.mxu0 0.0
    %2929 = vmatmul.mubr.f32.gmra.mxu0 %v2839
    %v2930 = vpop.f32.mrf.mxu0
    %v2931 = vadd.f32 0.0, %v2930
    %v2932 = vpop.f32.mrf.mxu0
    %2933 = vdwg.mxu0
    %v2934 = vmul.f32 %v399, %v2916
    %v2935 = vmul.f32 %v400, %v2921
    %v2936 = vmul.f32 %v401, %v2926
    %v2937 = vmul.f32 %v402, %v2931
    %2938 = vrot.lane.b32.xlu0 %v882, 104
    %v2939 = vpop.permute.xlu0 %2938
    %2940 = vrot.lane.b32.xlu0 %v887, 104
    %v2941 = vpop.permute.xlu0 %2940
    %2942 = vrot.lane.b32.xlu0 %v892, 104
    %v2943 = vpop.permute.xlu0 %2942
    %2944 = vrot.lane.b32.xlu0 %v897, 104
    %v2945 = vpop.permute.xlu0 %2944
    %v2946 = vsel %vm1005, %v2939, 0
    %v2948 = vsel %vm1005, %v2941, 0
    %v2950 = vsel %vm1005, %v2943, 0
    %v2952 = vsel %vm1005, %v2945, 0
    %2954 = vmatprep.subr.mxu0 0.0
    %2955 = vmatpush1.xpose.msra.mxu0 0.0
    %2956 = vmatprep.subr.mxu0 0.0
    %2957 = vmatpush1.xpose.msra.mxu0 0.0
    %2958 = vmatprep.subr.mxu0 0.0
    %2959 = vmatpush1.xpose.msra.mxu0 0.0
    %2960 = vmatprep.subr.mxu0 0.0
    %2961 = vmatpush1.xpose.msra.mxu0 0.0
    %2962 = vmatprep.subr.mxu0 0.0
    %2963 = vmatpush1.xpose.msra.mxu0 0.0
    %2964 = vmatprep.subr.mxu0 0.0
    %2965 = vmatpush1.xpose.msra.mxu0 0.0
    %2966 = vmatprep.subr.mxu0 0.0
    %2967 = vmatpush1.xpose.msra.mxu0 0.0
    %2968 = vmatprep.subr.mxu0 0.0
    %2969 = vmatpush1.xpose.msra.mxu0 0.0
    %2970 = vmatprep.subr.mxu0 0.0
    %2971 = vmatpush1.xpose.msra.mxu0 0.0
    %2972 = vmatprep.subr.mxu0 0.0
    %2973 = vmatpush1.xpose.msra.mxu0 0.0
    %2974 = vmatprep.subr.mxu0 0.0
    %2975 = vmatpush1.xpose.msra.mxu0 0.0
    %2976 = vmatprep.subr.mxu0 0.0
    %2977 = vmatpush1.xpose.msra.mxu0 0.0
    %2978 = vmatprep.subr.mxu0 0.0
    %2979 = vmatpush1.xpose.msra.mxu0 %v2952
    %2980 = vmatprep.subr.mxu0 0.0
    %2981 = vmatpush1.xpose.msra.mxu0 %v2950
    %2982 = vmatprep.subr.mxu0 0.0
    %2983 = vmatpush1.xpose.msra.mxu0 %v2948
    %2984 = vmatprep.subr.mxu0 0.0
    %2985 = vmatpush1.xpose.msra.mxu0 %v2946
    %2986 = vmatprep.subr.mxu0 0.0
    %2987 = vmatpush2.xpose.msra.mxu0 0.0
    %2988 = vmatprep.subr.mxu0 0.0
    %2989 = vmatpush2.xpose.msra.mxu0 0.0
    %2990 = vmatprep.subr.mxu0 0.0
    %2991 = vmatpush2.xpose.msra.mxu0 0.0
    %2992 = vmatprep.subr.mxu0 0.0
    %2993 = vmatpush2.xpose.msra.mxu0 0.0
    %2994 = vmatprep.subr.mxu0 0.0
    %2995 = vmatpush2.xpose.msra.mxu0 0.0
    %2996 = vmatprep.subr.mxu0 0.0
    %2997 = vmatpush2.xpose.msra.mxu0 0.0
    %2998 = vmatprep.subr.mxu0 0.0
    %2999 = vmatpush2.xpose.msra.mxu0 0.0
    %3000 = vmatprep.subr.mxu0 0.0
    %3001 = vmatpush2.xpose.msra.mxu0 0.0
    %3002 = vmatprep.subr.mxu0 0.0
    %3003 = vmatpush2.xpose.msra.mxu0 0.0
    %3004 = vmatprep.subr.mxu0 0.0
    %3005 = vmatpush2.xpose.msra.mxu0 0.0
    %3006 = vmatprep.subr.mxu0 0.0
    %3007 = vmatpush2.xpose.msra.mxu0 0.0
    %3008 = vmatprep.subr.mxu0 0.0
    %3009 = vmatpush2.xpose.msra.mxu0 0.0
    %3010 = vmatprep.subr.mxu0 0.0
    %3011 = vmatpush2.xpose.msra.mxu0 0.0
    %3012 = vmatprep.subr.mxu0 0.0
    %3013 = vmatpush2.xpose.msra.mxu0 0.0
    %3014 = vmatprep.subr.mxu0 0.0
    %3015 = vmatpush2.xpose.msra.mxu0 0.0
    %3016 = vmatprep.subr.mxu0 0.0
    %3017 = vmatpush2.xpose.msra.mxu0 0.0
    %3018 = vmatprep.mubr.f32.mxu0 0.0
    %3019 = vmatmul.mubr.f32.gmra.mxu0 %v2833
    %v3020 = vpop.f32.mrf.mxu0
    %v3021 = vadd.f32 0.0, %v3020
    %v3022 = vpop.f32.mrf.mxu0
    %3023 = vmatprep.mubr.f32.mxu0 0.0
    %3024 = vmatmul.mubr.f32.gmra.mxu0 %v2835
    %v3025 = vpop.f32.mrf.mxu0
    %v3026 = vadd.f32 0.0, %v3025
    %v3027 = vpop.f32.mrf.mxu0
    %3028 = vmatprep.mubr.f32.mxu0 0.0
    %3029 = vmatmul.mubr.f32.gmra.mxu0 %v2837
    %v3030 = vpop.f32.mrf.mxu0
    %v3031 = vadd.f32 0.0, %v3030
    %v3032 = vpop.f32.mrf.mxu0
    %3033 = vmatprep.mubr.f32.mxu0 0.0
    %3034 = vmatmul.mubr.f32.gmra.mxu0 %v2839
    %v3035 = vpop.f32.mrf.mxu0
    %v3036 = vadd.f32 0.0, %v3035
    %v3037 = vpop.f32.mrf.mxu0
    %3038 = vdwg.mxu0
    %v3039 = vmul.f32 %v403, %v3021
    %v3040 = vmul.f32 %v404, %v3026
    %v3041 = vmul.f32 %v405, %v3031
    %v3042 = vmul.f32 %v406, %v3036
    %v3043 = vadd.f32 %v2934, %v3039
    %v3044 = vadd.f32 %v2935, %v3040
    %v3045 = vadd.f32 %v2936, %v3041
    %v3046 = vadd.f32 %v2937, %v3042
    %v3047 = vsel %vm989, %v3043, -1e+30
    %v3048 = vsel %vm990, %v3044, -1e+30
    %v3049 = vsel %vm991, %v3045, -1e+30
    %v3050 = vsel %vm992, %v3046, -1e+30
    %v3051 = vsel %vm415, %v3047, -inf
    %3052 = vmax.xlane.f32.xlu0 %v3051
    %v3053 = vpop.xlane.xlu0 %3052
    %v3054 = vsel %vm415, %v3048, -inf
    %3055 = vmax.xlane.f32.xlu0 %v3054
    %v3056 = vpop.xlane.xlu0 %3055
    %v3057 = vsel %vm415, %v3049, -inf
    %3058 = vmax.xlane.f32.xlu0 %v3057
    %v3059 = vpop.xlane.xlu0 %3058
    %v3060 = vsel %vm415, %v3050, -inf
    %3061 = vmax.xlane.f32.xlu0 %v3060
    %v3062 = vpop.xlane.xlu0 %3061
    %v3063 = vsub.f32 %v3047, %v3053
    %v3064 = vsub.f32 %v3048, %v3056
    %v3065 = vsub.f32 %v3049, %v3059
    %v3066 = vsub.f32 %v3050, %v3062
    %v3067 = vmul.f32 %v3063, 1.442695
    %v3068 = vpow.pop %v3067
    %v3069 = vmul.f32 %v3064, 1.442695
    %v3070 = vpow.pop %v3069
    %v3071 = vmul.f32 %v3065, 1.442695
    %v3072 = vpow.pop %v3071
    %v3073 = vmul.f32 %v3066, 1.442695
    %v3074 = vpow.pop %v3073
    %v3075 = vsel %vm989, %v3068, 0.0
    %v3076 = vsel %vm990, %v3070, 0.0
    %v3077 = vsel %vm991, %v3072, 0.0
    %v3078 = vsel %vm992, %v3074, 0.0
    %v3079 = vsel %vm415, %v3075, 0.0
    %3080 = vadd.xlane.f32.xlu0 %v3079
    %v3081 = vpop.xlane.xlu0 %3080
    %v3082 = vsel %vm415, %v3076, 0.0
    %3083 = vadd.xlane.f32.xlu0 %v3082
    %v3084 = vpop.xlane.xlu0 %3083
    %v3085 = vsel %vm415, %v3077, 0.0
    %3086 = vadd.xlane.f32.xlu0 %v3085
    %v3087 = vpop.xlane.xlu0 %3086
    %v3088 = vsel %vm415, %v3078, 0.0
    %3089 = vadd.xlane.f32.xlu0 %v3088
    %v3090 = vpop.xlane.xlu0 %3089
    %vm3091 = vcmp.eq.f32.partialorder %v3081, 0.0
    %vm3092 = vcmp.eq.f32.partialorder %v3084, 0.0
    %vm3093 = vcmp.eq.f32.partialorder %v3087, 0.0
    %vm3094 = vcmp.eq.f32.partialorder %v3090, 0.0
    %v3095 = vsel %vm3091, 1.0, %v3081
    %v3096 = vsel %vm3092, 1.0, %v3084
    %v3097 = vsel %vm3093, 1.0, %v3087
    %v3098 = vsel %vm3094, 1.0, %v3090
    %v3099 = vrcp.pop %v3095
    %v3100 = vrcp.pop %v3096
    %v3101 = vrcp.pop %v3097
    %v3102 = vrcp.pop %v3098
    %v3103 = vmul.f32 %v3075, %v3099
    %v3104 = vmul.f32 %v3076, %v3100
    %v3105 = vmul.f32 %v3077, %v3101
    %v3106 = vmul.f32 %v3078, %v3102
    %v3107 = vmul.f32 %v3103, %v399
    %v3108 = vmul.f32 %v3104, %v400
    %v3109 = vmul.f32 %v3105, %v401
    %v3110 = vmul.f32 %v3106, %v402
    %v3111 = vmul.f32 %v3103, %v403
    %v3112 = vmul.f32 %v3104, %v404
    %v3113 = vmul.f32 %v3105, %v405
    %v3114 = vmul.f32 %v3106, %v406
    %3115 = vrot.lane.b32.xlu0 %v967, 104
    %v3116 = vpop.permute.xlu0 %3115
    %3117 = vrot.lane.b32.xlu0 %v972, 104
    %v3118 = vpop.permute.xlu0 %3117
    %3119 = vrot.lane.b32.xlu0 %v977, 104
    %v3120 = vpop.permute.xlu0 %3119
    %3121 = vrot.lane.b32.xlu0 %v982, 104
    %v3122 = vpop.permute.xlu0 %3121
    %v3128 = vsel %vm415, %v3111, 0
    %v3131 = vsel %vm415, %v3112, 0
    %v3134 = vsel %vm415, %v3113, 0
    %v3137 = vsel %vm415, %v3114, 0
    %3139 = vmatprep.subr.mxu0 0.0
    %3140 = vmatpush1.msra.mxu0 0.0
    %3141 = vmatprep.subr.mxu0 0.0
    %3142 = vmatpush1.msra.mxu0 0.0
    %3143 = vmatprep.subr.mxu0 0.0
    %3144 = vmatpush1.msra.mxu0 0.0
    %3145 = vmatprep.subr.mxu0 0.0
    %3146 = vmatpush1.msra.mxu0 0.0
    %3147 = vmatprep.subr.mxu0 0.0
    %3148 = vmatpush1.msra.mxu0 0.0
    %3149 = vmatprep.subr.mxu0 0.0
    %3150 = vmatpush1.msra.mxu0 0.0
    %3151 = vmatprep.subr.mxu0 0.0
    %3152 = vmatpush1.msra.mxu0 0.0
    %3153 = vmatprep.subr.mxu0 0.0
    %3154 = vmatpush1.msra.mxu0 0.0
    %3155 = vmatprep.subr.mxu0 0.0
    %3156 = vmatpush1.msra.mxu0 0.0
    %3157 = vmatprep.subr.mxu0 0.0
    %3158 = vmatpush1.msra.mxu0 0.0
    %3159 = vmatprep.subr.mxu0 0.0
    %3160 = vmatpush1.msra.mxu0 0.0
    %3161 = vmatprep.subr.mxu0 0.0
    %3162 = vmatpush1.msra.mxu0 0.0
    %3163 = vmatprep.subr.mxu0 0.0
    %3164 = vmatpush1.msra.mxu0 %v3122
    %3165 = vmatprep.subr.mxu0 0.0
    %3166 = vmatpush1.msra.mxu0 %v3120
    %3167 = vmatprep.subr.mxu0 0.0
    %3168 = vmatpush1.msra.mxu0 %v3118
    %3169 = vmatprep.subr.mxu0 0.0
    %3170 = vmatpush1.msra.mxu0 %v3116
    %3171 = vmatprep.subr.mxu0 0.0
    %3172 = vmatpush2.msra.mxu0 0.0
    %3173 = vmatprep.subr.mxu0 0.0
    %3174 = vmatpush2.msra.mxu0 0.0
    %3175 = vmatprep.subr.mxu0 0.0
    %3176 = vmatpush2.msra.mxu0 0.0
    %3177 = vmatprep.subr.mxu0 0.0
    %3178 = vmatpush2.msra.mxu0 0.0
    %3179 = vmatprep.subr.mxu0 0.0
    %3180 = vmatpush2.msra.mxu0 0.0
    %3181 = vmatprep.subr.mxu0 0.0
    %3182 = vmatpush2.msra.mxu0 0.0
    %3183 = vmatprep.subr.mxu0 0.0
    %3184 = vmatpush2.msra.mxu0 0.0
    %3185 = vmatprep.subr.mxu0 0.0
    %3186 = vmatpush2.msra.mxu0 0.0
    %3187 = vmatprep.subr.mxu0 0.0
    %3188 = vmatpush2.msra.mxu0 0.0
    %3189 = vmatprep.subr.mxu0 0.0
    %3190 = vmatpush2.msra.mxu0 0.0
    %3191 = vmatprep.subr.mxu0 0.0
    %3192 = vmatpush2.msra.mxu0 0.0
    %3193 = vmatprep.subr.mxu0 0.0
    %3194 = vmatpush2.msra.mxu0 0.0
    %3195 = vmatprep.subr.mxu0 0.0
    %3196 = vmatpush2.msra.mxu0 0.0
    %3197 = vmatprep.subr.mxu0 0.0
    %3198 = vmatpush2.msra.mxu0 0.0
    %3199 = vmatprep.subr.mxu0 0.0
    %3200 = vmatpush2.msra.mxu0 0.0
    %3201 = vmatprep.subr.mxu0 0.0
    %3202 = vmatpush2.msra.mxu0 0.0
    %3203 = vmatprep.mubr.f32.mxu0 0.0
    %3204 = vmatmul.mubr.f32.gmra.mxu0 %v3128
    %v3205 = vpop.f32.mrf.mxu0
    %v3206 = vadd.f32 0.0, %v3205
    %v3207 = vpop.f32.mrf.mxu0
    %3208 = vmatprep.mubr.f32.mxu0 0.0
    %3209 = vmatmul.mubr.f32.gmra.mxu0 %v3131
    %v3210 = vpop.f32.mrf.mxu0
    %v3211 = vadd.f32 0.0, %v3210
    %v3212 = vpop.f32.mrf.mxu0
    %3213 = vmatprep.mubr.f32.mxu0 0.0
    %3214 = vmatmul.mubr.f32.gmra.mxu0 %v3134
    %v3215 = vpop.f32.mrf.mxu0
    %v3216 = vadd.f32 0.0, %v3215
    %v3217 = vpop.f32.mrf.mxu0
    %3218 = vmatprep.mubr.f32.mxu0 0.0
    %3219 = vmatmul.mubr.f32.gmra.mxu0 %v3137
    %v3220 = vpop.f32.mrf.mxu0
    %v3221 = vadd.f32 0.0, %v3220
    %v3222 = vpop.f32.mrf.mxu0
    %3223 = vdwg.mxu0
    %3224 = vrot.lane.b32.xlu0 %v797, 104
    %v3225 = vpop.permute.xlu0 %3224
    %3226 = vrot.lane.b32.xlu0 %v802, 104
    %v3227 = vpop.permute.xlu0 %3226
    %3228 = vrot.lane.b32.xlu0 %v807, 104
    %v3229 = vpop.permute.xlu0 %3228
    %3230 = vrot.lane.b32.xlu0 %v812, 104
    %v3231 = vpop.permute.xlu0 %3230
    %v3237 = vsel %vm415, %v3107, 0
    %v3240 = vsel %vm415, %v3108, 0
    %v3243 = vsel %vm415, %v3109, 0
    %v3246 = vsel %vm415, %v3110, 0
    %3248 = vmatprep.subr.mxu0 0.0
    %3249 = vmatpush1.msra.mxu0 0.0
    %3250 = vmatprep.subr.mxu0 0.0
    %3251 = vmatpush1.msra.mxu0 0.0
    %3252 = vmatprep.subr.mxu0 0.0
    %3253 = vmatpush1.msra.mxu0 0.0
    %3254 = vmatprep.subr.mxu0 0.0
    %3255 = vmatpush1.msra.mxu0 0.0
    %3256 = vmatprep.subr.mxu0 0.0
    %3257 = vmatpush1.msra.mxu0 0.0
    %3258 = vmatprep.subr.mxu0 0.0
    %3259 = vmatpush1.msra.mxu0 0.0
    %3260 = vmatprep.subr.mxu0 0.0
    %3261 = vmatpush1.msra.mxu0 0.0
    %3262 = vmatprep.subr.mxu0 0.0
    %3263 = vmatpush1.msra.mxu0 0.0
    %3264 = vmatprep.subr.mxu0 0.0
    %3265 = vmatpush1.msra.mxu0 0.0
    %3266 = vmatprep.subr.mxu0 0.0
    %3267 = vmatpush1.msra.mxu0 0.0
    %3268 = vmatprep.subr.mxu0 0.0
    %3269 = vmatpush1.msra.mxu0 0.0
    %3270 = vmatprep.subr.mxu0 0.0
    %3271 = vmatpush1.msra.mxu0 0.0
    %3272 = vmatprep.subr.mxu0 0.0
    %3273 = vmatpush1.msra.mxu0 %v3231
    %3274 = vmatprep.subr.mxu0 0.0
    %3275 = vmatpush1.msra.mxu0 %v3229
    %3276 = vmatprep.subr.mxu0 0.0
    %3277 = vmatpush1.msra.mxu0 %v3227
    %3278 = vmatprep.subr.mxu0 0.0
    %3279 = vmatpush1.msra.mxu0 %v3225
    %3280 = vmatprep.subr.mxu0 0.0
    %3281 = vmatpush2.msra.mxu0 0.0
    %3282 = vmatprep.subr.mxu0 0.0
    %3283 = vmatpush2.msra.mxu0 0.0
    %3284 = vmatprep.subr.mxu0 0.0
    %3285 = vmatpush2.msra.mxu0 0.0
    %3286 = vmatprep.subr.mxu0 0.0
    %3287 = vmatpush2.msra.mxu0 0.0
    %3288 = vmatprep.subr.mxu0 0.0
    %3289 = vmatpush2.msra.mxu0 0.0
    %3290 = vmatprep.subr.mxu0 0.0
    %3291 = vmatpush2.msra.mxu0 0.0
    %3292 = vmatprep.subr.mxu0 0.0
    %3293 = vmatpush2.msra.mxu0 0.0
    %3294 = vmatprep.subr.mxu0 0.0
    %3295 = vmatpush2.msra.mxu0 0.0
    %3296 = vmatprep.subr.mxu0 0.0
    %3297 = vmatpush2.msra.mxu0 0.0
    %3298 = vmatprep.subr.mxu0 0.0
    %3299 = vmatpush2.msra.mxu0 0.0
    %3300 = vmatprep.subr.mxu0 0.0
    %3301 = vmatpush2.msra.mxu0 0.0
    %3302 = vmatprep.subr.mxu0 0.0
    %3303 = vmatpush2.msra.mxu0 0.0
    %3304 = vmatprep.subr.mxu0 0.0
    %3305 = vmatpush2.msra.mxu0 0.0
    %3306 = vmatprep.subr.mxu0 0.0
    %3307 = vmatpush2.msra.mxu0 0.0
    %3308 = vmatprep.subr.mxu0 0.0
    %3309 = vmatpush2.msra.mxu0 0.0
    %3310 = vmatprep.subr.mxu0 0.0
    %3311 = vmatpush2.msra.mxu0 0.0
    %3312 = vmatprep.mubr.f32.mxu0 0.0
    %3313 = vmatmul.mubr.f32.gmra.mxu0 %v3237
    %v3314 = vpop.f32.mrf.mxu0
    %v3315 = vadd.f32 %v3206, %v3314
    %v3316 = vpop.f32.mrf.mxu0
    %3317 = vmatprep.mubr.f32.mxu0 0.0
    %3318 = vmatmul.mubr.f32.gmra.mxu0 %v3240
    %v3319 = vpop.f32.mrf.mxu0
    %v3320 = vadd.f32 %v3211, %v3319
    %v3321 = vpop.f32.mrf.mxu0
    %3322 = vmatprep.mubr.f32.mxu0 0.0
    %3323 = vmatmul.mubr.f32.gmra.mxu0 %v3243
    %v3324 = vpop.f32.mrf.mxu0
    %v3325 = vadd.f32 %v3216, %v3324
    %v3326 = vpop.f32.mrf.mxu0
    %3327 = vmatprep.mubr.f32.mxu0 0.0
    %3328 = vmatmul.mubr.f32.gmra.mxu0 %v3246
    %v3329 = vpop.f32.mrf.mxu0
    %v3330 = vadd.f32 %v3221, %v3329
    %v3331 = vpop.f32.mrf.mxu0
    %3332 = vdwg.mxu0
    %v3334 = vsel %vm1005, %v3315, 0
    %v3337 = vsel %vm1005, %v3320, 0
    %v3340 = vsel %vm1005, %v3325, 0
    %v3343 = vsel %vm1005, %v3330, 0
    %3345 = vmatprep.subr.mxu0 0.0
    %3346 = vmatpush1.msra.mxu0 0.0
    %3347 = vmatprep.subr.mxu0 0.0
    %3348 = vmatpush1.msra.mxu0 0.0
    %3349 = vmatprep.subr.mxu0 0.0
    %3350 = vmatpush1.msra.mxu0 0.0
    %3351 = vmatprep.subr.mxu0 0.0
    %3352 = vmatpush1.msra.mxu0 0.0
    %3353 = vmatprep.subr.mxu0 0.0
    %3354 = vmatpush1.msra.mxu0 0.0
    %3355 = vmatprep.subr.mxu0 0.0
    %3356 = vmatpush1.msra.mxu0 0.0
    %3357 = vmatprep.subr.mxu0 0.0
    %3358 = vmatpush1.msra.mxu0 0.0
    %3359 = vmatprep.subr.mxu0 0.0
    %3360 = vmatpush1.msra.mxu0 0.0
    %3361 = vmatprep.subr.mxu0 0.0
    %3362 = vmatpush1.msra.mxu0 0.0
    %3363 = vmatprep.subr.mxu0 0.0
    %3364 = vmatpush1.msra.mxu0 0.0
    %3365 = vmatprep.subr.mxu0 0.0
    %3366 = vmatpush1.msra.mxu0 0.0
    %3367 = vmatprep.subr.mxu0 0.0
    %3368 = vmatpush1.msra.mxu0 0.0
    %3369 = vmatprep.subr.mxu0 0.0
    %3370 = vmatpush1.msra.mxu0 0.0
    %3371 = vmatprep.subr.mxu0 0.0
    %3372 = vmatpush1.msra.mxu0 0.0
    %3373 = vmatprep.subr.mxu0 0.0
    %3374 = vmatpush1.msra.mxu0 0.0
    %3375 = vmatprep.subr.mxu0 0.0
    %3376 = vmatpush1.msra.mxu0 %v996
    %3377 = vmatprep.subr.mxu0 0.0
    %3378 = vmatpush2.msra.mxu0 0.0
    %3379 = vmatprep.subr.mxu0 0.0
    %3380 = vmatpush2.msra.mxu0 0.0
    %3381 = vmatprep.subr.mxu0 0.0
    %3382 = vmatpush2.msra.mxu0 0.0
    %3383 = vmatprep.subr.mxu0 0.0
    %3384 = vmatpush2.msra.mxu0 0.0
    %3385 = vmatprep.subr.mxu0 0.0
    %3386 = vmatpush2.msra.mxu0 0.0
    %3387 = vmatprep.subr.mxu0 0.0
    %3388 = vmatpush2.msra.mxu0 0.0
    %3389 = vmatprep.subr.mxu0 0.0
    %3390 = vmatpush2.msra.mxu0 0.0
    %3391 = vmatprep.subr.mxu0 0.0
    %3392 = vmatpush2.msra.mxu0 0.0
    %3393 = vmatprep.subr.mxu0 0.0
    %3394 = vmatpush2.msra.mxu0 0.0
    %3395 = vmatprep.subr.mxu0 0.0
    %3396 = vmatpush2.msra.mxu0 0.0
    %3397 = vmatprep.subr.mxu0 0.0
    %3398 = vmatpush2.msra.mxu0 0.0
    %3399 = vmatprep.subr.mxu0 0.0
    %3400 = vmatpush2.msra.mxu0 0.0
    %3401 = vmatprep.subr.mxu0 0.0
    %3402 = vmatpush2.msra.mxu0 0.0
    %3403 = vmatprep.subr.mxu0 0.0
    %3404 = vmatpush2.msra.mxu0 0.0
    %3405 = vmatprep.subr.mxu0 0.0
    %3406 = vmatpush2.msra.mxu0 0.0
    %3407 = vmatprep.subr.mxu0 0.0
    %3408 = vmatpush2.msra.mxu0 0.0
    %3409 = vmatprep.mubr.f32.mxu0 0.0
    %3410 = vmatmul.mubr.f32.gmra.mxu0 %v3334
    %v3411 = vpop.f32.mrf.mxu0
    %v3412 = vadd.f32 0.0, %v3411
    %v3413 = vpop.f32.mrf.mxu0
    %3414 = vmatprep.mubr.f32.mxu0 0.0
    %3415 = vmatmul.mubr.f32.gmra.mxu0 %v3337
    %v3416 = vpop.f32.mrf.mxu0
    %v3417 = vadd.f32 0.0, %v3416
    %v3418 = vpop.f32.mrf.mxu0
    %3419 = vmatprep.mubr.f32.mxu0 0.0
    %3420 = vmatmul.mubr.f32.gmra.mxu0 %v3340
    %v3421 = vpop.f32.mrf.mxu0
    %v3422 = vadd.f32 0.0, %v3421
    %v3423 = vpop.f32.mrf.mxu0
    %3424 = vmatprep.mubr.f32.mxu0 0.0
    %3425 = vmatmul.mubr.f32.gmra.mxu0 %v3343
    %v3426 = vpop.f32.mrf.mxu0
    %v3427 = vadd.f32 0.0, %v3426
    %v3428 = vpop.f32.mrf.mxu0
    %3429 = vdwg.mxu0
    %v3430 = vadd.f32 %v2813, %v3412
    %v3431 = vadd.f32 %v2814, %v3417
    %v3432 = vadd.f32 %v2815, %v3422
    %v3433 = vadd.f32 %v2816, %v3427
    %v3434 = vmul.f32 %v520, %v3430
    %v3435 = vmul.f32 %v525, %v3431
    %v3436 = vmul.f32 %v530, %v3432
    %v3437 = vmul.f32 %v535, %v3433
    %v3438 = vmul.f32 %v543, %v3430
    %v3439 = vmul.f32 %v547, %v3431
    %v3440 = vmul.f32 %v551, %v3432
    %v3441 = vmul.f32 %v555, %v3433
    %3446 = vrot.lane.b32.xlu0 %v3438, 96
    %v3447 = vpop.permute.xlu0 %3446
    %3448 = vrot.lane.b32.xlu0 %v3439, 96
    %v3449 = vpop.permute.xlu0 %3448
    %3450 = vrot.lane.b32.xlu0 %v3440, 96
    %v3451 = vpop.permute.xlu0 %3450
    %3452 = vrot.lane.b32.xlu0 %v3441, 96
    %v3453 = vpop.permute.xlu0 %3452
    %v3458 = vadd.f32 %v3434, %v3447
    %v3459 = vadd.f32 %v3435, %v3449
    %v3460 = vadd.f32 %v3436, %v3451
    %v3461 = vadd.f32 %v3437, %v3453
    %v3462 = vld [vmem:[%s27] sm:$0x3]
    %vm3463 = vcmask 15360
    %v3464 = vsel %vm3463, %v395, 0
    %v3466 = vsel %vm3463, %v396, 0
    %v3468 = vsel %vm3463, %v397, 0
    %v3470 = vsel %vm3463, %v398, 0
    %vm3472 = vcmask 1041408
    %v3474 = vsel %vm3472, %v3462, 0
    %3476 = vmatprep.subr.mxu0 0.0
    %3477 = vmatpush1.msra.mxu0 0.0
    %3478 = vmatprep.subr.mxu0 0.0
    %3479 = vmatpush1.msra.mxu0 0.0
    %3480 = vmatprep.subr.mxu0 0.0
    %3481 = vmatpush1.msra.mxu0 0.0
    %3482 = vmatprep.subr.mxu0 0.0
    %3483 = vmatpush1.msra.mxu0 0.0
    %3484 = vmatprep.subr.mxu0 0.0
    %3485 = vmatpush1.msra.mxu0 0.0
    %3486 = vmatprep.subr.mxu0 0.0
    %3487 = vmatpush1.msra.mxu0 0.0
    %3488 = vmatprep.subr.mxu0 0.0
    %3489 = vmatpush1.msra.mxu0 0.0
    %3490 = vmatprep.subr.mxu0 0.0
    %3491 = vmatpush1.msra.mxu0 0.0
    %3492 = vmatprep.subr.mxu0 0.0
    %3493 = vmatpush1.msra.mxu0 0.0
    %3494 = vmatprep.subr.mxu0 0.0
    %3495 = vmatpush1.msra.mxu0 0.0
    %3496 = vmatprep.subr.mxu0 0.0
    %3497 = vmatpush1.msra.mxu0 0.0
    %3498 = vmatprep.subr.mxu0 0.0
    %3499 = vmatpush1.msra.mxu0 0.0
    %3500 = vmatprep.subr.mxu0 0.0
    %3501 = vmatpush1.msra.mxu0 0.0
    %3502 = vmatprep.subr.mxu0 0.0
    %3503 = vmatpush1.msra.mxu0 0.0
    %3504 = vmatprep.subr.mxu0 0.0
    %3505 = vmatpush1.msra.mxu0 0.0
    %3506 = vmatprep.subr.mxu0 0.0
    %3507 = vmatpush1.msra.mxu0 %v3474
    %3508 = vmatprep.subr.mxu0 0.0
    %3509 = vmatpush2.msra.mxu0 0.0
    %3510 = vmatprep.subr.mxu0 0.0
    %3511 = vmatpush2.msra.mxu0 0.0
    %3512 = vmatprep.subr.mxu0 0.0
    %3513 = vmatpush2.msra.mxu0 0.0
    %3514 = vmatprep.subr.mxu0 0.0
    %3515 = vmatpush2.msra.mxu0 0.0
    %3516 = vmatprep.subr.mxu0 0.0
    %3517 = vmatpush2.msra.mxu0 0.0
    %3518 = vmatprep.subr.mxu0 0.0
    %3519 = vmatpush2.msra.mxu0 0.0
    %3520 = vmatprep.subr.mxu0 0.0
    %3521 = vmatpush2.msra.mxu0 0.0
    %3522 = vmatprep.subr.mxu0 0.0
    %3523 = vmatpush2.msra.mxu0 0.0
    %3524 = vmatprep.subr.mxu0 0.0
    %3525 = vmatpush2.msra.mxu0 0.0
    %3526 = vmatprep.subr.mxu0 0.0
    %3527 = vmatpush2.msra.mxu0 0.0
    %3528 = vmatprep.subr.mxu0 0.0
    %3529 = vmatpush2.msra.mxu0 0.0
    %3530 = vmatprep.subr.mxu0 0.0
    %3531 = vmatpush2.msra.mxu0 0.0
    %3532 = vmatprep.subr.mxu0 0.0
    %3533 = vmatpush2.msra.mxu0 0.0
    %3534 = vmatprep.subr.mxu0 0.0
    %3535 = vmatpush2.msra.mxu0 0.0
    %3536 = vmatprep.subr.mxu0 0.0
    %3537 = vmatpush2.msra.mxu0 0.0
    %3538 = vmatprep.subr.mxu0 0.0
    %3539 = vmatpush2.msra.mxu0 0.0
    %3540 = vmatprep.mubr.f32.mxu0 0.0
    %3541 = vmatmul.mubr.f32.gmra.mxu0 %v3464
    %v3542 = vpop.f32.mrf.mxu0
    %v3543 = vadd.f32 0.0, %v3542
    %v3544 = vpop.f32.mrf.mxu0
    %3545 = vmatprep.mubr.f32.mxu0 0.0
    %3546 = vmatmul.mubr.f32.gmra.mxu0 %v3466
    %v3547 = vpop.f32.mrf.mxu0
    %v3548 = vadd.f32 0.0, %v3547
    %v3549 = vpop.f32.mrf.mxu0
    %3550 = vmatprep.mubr.f32.mxu0 0.0
    %3551 = vmatmul.mubr.f32.gmra.mxu0 %v3468
    %v3552 = vpop.f32.mrf.mxu0
    %v3553 = vadd.f32 0.0, %v3552
    %v3554 = vpop.f32.mrf.mxu0
    %3555 = vmatprep.mubr.f32.mxu0 0.0
    %3556 = vmatmul.mubr.f32.gmra.mxu0 %v3470
    %v3557 = vpop.f32.mrf.mxu0
    %v3558 = vadd.f32 0.0, %v3557
    %v3559 = vpop.f32.mrf.mxu0
    %3560 = vdwg.mxu0
    %v3561 = vsub.f32 0.0, %v3543
    %v3562 = vsub.f32 0.0, %v3548
    %v3563 = vsub.f32 0.0, %v3553
    %v3564 = vsub.f32 0.0, %v3558
    %v3565 = vmul.f32 %v3561, 1.442695
    %v3566 = vpow.pop %v3565
    %v3567 = vmul.f32 %v3562, 1.442695
    %v3568 = vpow.pop %v3567
    %v3569 = vmul.f32 %v3563, 1.442695
    %v3570 = vpow.pop %v3569
    %v3571 = vmul.f32 %v3564, 1.442695
    %v3572 = vpow.pop %v3571
    %v3573 = vadd.f32 %v3566, 1.0
    %v3574 = vadd.f32 %v3568, 1.0
    %v3575 = vadd.f32 %v3570, 1.0
    %v3576 = vadd.f32 %v3572, 1.0
    %v3577 = vrcp.pop %v3573
    %v3578 = vmul.f32 1.0, %v3577
    %v3579 = vrcp.pop %v3574
    %v3580 = vmul.f32 1.0, %v3579
    %v3581 = vrcp.pop %v3575
    %v3582 = vmul.f32 1.0, %v3581
    %v3583 = vrcp.pop %v3576
    %v3584 = vmul.f32 1.0, %v3583
    %3586 = vset.pattern.permute.xlu0 0
    %3587 = vperm.xlu0 %3586, %v3578
    %v3588 = vpop.permute.xlu0 %3587
    %3591 = vset.pattern.permute.xlu0 0
    %3592 = vperm.xlu0 %3591, %v3580
    %v3593 = vpop.permute.xlu0 %3592
    %3596 = vset.pattern.permute.xlu0 0
    %3597 = vperm.xlu0 %3596, %v3582
    %v3598 = vpop.permute.xlu0 %3597
    %3601 = vset.pattern.permute.xlu0 0
    %3602 = vperm.xlu0 %3601, %v3584
    %v3603 = vpop.permute.xlu0 %3602
    %v3605 = vmul.f32 %v3458, %v3588
    %v3606 = vmul.f32 %v3459, %v3593
    %v3607 = vmul.f32 %v3460, %v3598
    %v3608 = vmul.f32 %v3461, %v3603
    %v3609 = vsub.f32 1.0, %v3578
    %v3610 = vsub.f32 1.0, %v3580
    %v3611 = vsub.f32 1.0, %v3582
    %v3612 = vsub.f32 1.0, %v3584
    %3614 = vset.pattern.permute.xlu0 0
    %3615 = vperm.xlu0 %3614, %v3609
    %v3616 = vpop.permute.xlu0 %3615
    %3619 = vset.pattern.permute.xlu0 0
    %3620 = vperm.xlu0 %3619, %v3610
    %v3621 = vpop.permute.xlu0 %3620
    %3624 = vset.pattern.permute.xlu0 0
    %3625 = vperm.xlu0 %3624, %v3611
    %v3626 = vpop.permute.xlu0 %3625
    %3629 = vset.pattern.permute.xlu0 0
    %3630 = vperm.xlu0 %3629, %v3612
    %v3631 = vpop.permute.xlu0 %3630
    %v3633 = vmul.f32 %v391, %v3616
    %v3634 = vmul.f32 %v392, %v3621
    %v3635 = vmul.f32 %v393, %v3626
    %v3636 = vmul.f32 %v394, %v3631
    %v3637 = vadd.f32 %v3605, %v3633
    %v3638 = vadd.f32 %v3606, %v3634
    %v3639 = vadd.f32 %v3607, %v3635
    %v3640 = vadd.f32 %v3608, %v3636
    %v3641 = vld [vmem:[#allocation19] sm:$0xff]
    %v3642 = vld [vmem:[#allocation19 + $0x8] sm:$0xff]
    %v3643 = vld [vmem:[#allocation19 + $0x10] sm:$0xff]
    %v3644 = vld [vmem:[#allocation19 + $0x18] sm:$0xff]
    %v3646 = vsel %vm415, %v3637, 0
    %v3649 = vsel %vm415, %v3638, 0
    %v3652 = vsel %vm415, %v3639, 0
    %v3655 = vsel %vm415, %v3640, 0
    %3657 = vmatprep.subr.mxu0 0.0
    %3658 = vmatpush1.msra.mxu0 0.0
    %3659 = vmatprep.subr.mxu0 0.0
    %3660 = vmatpush1.msra.mxu0 0.0
    %3661 = vmatprep.subr.mxu0 0.0
    %3662 = vmatpush1.msra.mxu0 0.0
    %3663 = vmatprep.subr.mxu0 0.0
    %3664 = vmatpush1.msra.mxu0 0.0
    %3665 = vmatprep.subr.mxu0 0.0
    %3666 = vmatpush1.msra.mxu0 0.0
    %3667 = vmatprep.subr.mxu0 0.0
    %3668 = vmatpush1.msra.mxu0 0.0
    %3669 = vmatprep.subr.mxu0 0.0
    %3670 = vmatpush1.msra.mxu0 0.0
    %3671 = vmatprep.subr.mxu0 0.0
    %3672 = vmatpush1.msra.mxu0 0.0
    %3673 = vmatprep.subr.mxu0 0.0
    %3674 = vmatpush1.msra.mxu0 0.0
    %3675 = vmatprep.subr.mxu0 0.0
    %3676 = vmatpush1.msra.mxu0 0.0
    %3677 = vmatprep.subr.mxu0 0.0
    %3678 = vmatpush1.msra.mxu0 0.0
    %3679 = vmatprep.subr.mxu0 0.0
    %3680 = vmatpush1.msra.mxu0 0.0
    %3681 = vmatprep.subr.mxu0 0.0
    %3682 = vmatpush1.msra.mxu0 %v3644
    %3683 = vmatprep.subr.mxu0 0.0
    %3684 = vmatpush1.msra.mxu0 %v3643
    %3685 = vmatprep.subr.mxu0 0.0
    %3686 = vmatpush1.msra.mxu0 %v3642
    %3687 = vmatprep.subr.mxu0 0.0
    %3688 = vmatpush1.msra.mxu0 %v3641
    %3689 = vmatprep.subr.mxu0 0.0
    %3690 = vmatpush2.msra.mxu0 0.0
    %3691 = vmatprep.subr.mxu0 0.0
    %3692 = vmatpush2.msra.mxu0 0.0
    %3693 = vmatprep.subr.mxu0 0.0
    %3694 = vmatpush2.msra.mxu0 0.0
    %3695 = vmatprep.subr.mxu0 0.0
    %3696 = vmatpush2.msra.mxu0 0.0
    %3697 = vmatprep.subr.mxu0 0.0
    %3698 = vmatpush2.msra.mxu0 0.0
    %3699 = vmatprep.subr.mxu0 0.0
    %3700 = vmatpush2.msra.mxu0 0.0
    %3701 = vmatprep.subr.mxu0 0.0
    %3702 = vmatpush2.msra.mxu0 0.0
    %3703 = vmatprep.subr.mxu0 0.0
    %3704 = vmatpush2.msra.mxu0 0.0
    %3705 = vmatprep.subr.mxu0 0.0
    %3706 = vmatpush2.msra.mxu0 0.0
    %3707 = vmatprep.subr.mxu0 0.0
    %3708 = vmatpush2.msra.mxu0 0.0
    %3709 = vmatprep.subr.mxu0 0.0
    %3710 = vmatpush2.msra.mxu0 0.0
    %3711 = vmatprep.subr.mxu0 0.0
    %3712 = vmatpush2.msra.mxu0 0.0
    %3713 = vmatprep.subr.mxu0 0.0
    %3714 = vmatpush2.msra.mxu0 0.0
    %3715 = vmatprep.subr.mxu0 0.0
    %3716 = vmatpush2.msra.mxu0 0.0
    %3717 = vmatprep.subr.mxu0 0.0
    %3718 = vmatpush2.msra.mxu0 0.0
    %3719 = vmatprep.subr.mxu0 0.0
    %3720 = vmatpush2.msra.mxu0 0.0
    %3721 = vmatprep.mubr.f32.mxu0 0.0
    %3722 = vmatmul.mubr.f32.gmra.mxu0 %v3646
    %v3723 = vpop.f32.mrf.mxu0
    %v3724 = vadd.f32 0.0, %v3723
    %v3725 = vpop.f32.mrf.mxu0
    %3726 = vmatprep.mubr.f32.mxu0 0.0
    %3727 = vmatmul.mubr.f32.gmra.mxu0 %v3649
    %v3728 = vpop.f32.mrf.mxu0
    %v3729 = vadd.f32 0.0, %v3728
    %v3730 = vpop.f32.mrf.mxu0
    %3731 = vmatprep.mubr.f32.mxu0 0.0
    %3732 = vmatmul.mubr.f32.gmra.mxu0 %v3652
    %v3733 = vpop.f32.mrf.mxu0
    %v3734 = vadd.f32 0.0, %v3733
    %v3735 = vpop.f32.mrf.mxu0
    %3736 = vmatprep.mubr.f32.mxu0 0.0
    %3737 = vmatmul.mubr.f32.gmra.mxu0 %v3655
    %v3738 = vpop.f32.mrf.mxu0
    %v3739 = vadd.f32 0.0, %v3738
    %v3740 = vpop.f32.mrf.mxu0
    %3741 = vdwg.mxu0
    %v3742 = vmul.f32 %v520, %v3724
    %v3743 = vmul.f32 %v525, %v3729
    %v3744 = vmul.f32 %v530, %v3734
    %v3745 = vmul.f32 %v535, %v3739
    %v3746 = vmul.f32 %v543, %v3724
    %v3747 = vmul.f32 %v547, %v3729
    %v3748 = vmul.f32 %v551, %v3734
    %v3749 = vmul.f32 %v555, %v3739
    %3754 = vrot.lane.b32.xlu0 %v3746, 80
    %v3755 = vpop.permute.xlu0 %3754
    %3756 = vrot.lane.b32.xlu0 %v3747, 80
    %v3757 = vpop.permute.xlu0 %3756
    %3758 = vrot.lane.b32.xlu0 %v3748, 80
    %v3759 = vpop.permute.xlu0 %3758
    %3760 = vrot.lane.b32.xlu0 %v3749, 80
    %v3761 = vpop.permute.xlu0 %3760
    %v3766 = vadd.f32 %v3742, %v3755
    %v3767 = vadd.f32 %v3743, %v3757
    %v3768 = vadd.f32 %v3744, %v3759
    %v3769 = vadd.f32 %v3745, %v3761
    %v3770 = vld [vmem:[#allocation20] sm:$0xff]
    %v3771 = vld [vmem:[#allocation20 + $0x8] sm:$0xff]
    %v3772 = vld [vmem:[#allocation20 + $0x10] sm:$0xff]
    %v3773 = vld [vmem:[#allocation20 + $0x18] sm:$0xff]
    %v3774 = vld [vmem:[#allocation22] sm:$0xff]
    %v3775 = vld [vmem:[#allocation22 + $0x8] sm:$0xff]
    %v3776 = vld [vmem:[#allocation22 + $0x10] sm:$0xff]
    %v3777 = vld [vmem:[#allocation22 + $0x18] sm:$0xff]
    %vm3778 = vcmask 130048
    %v3780 = vsel %vm3778, %v3766, 0
    %v3783 = vsel %vm3778, %v3767, 0
    %v3786 = vsel %vm3778, %v3768, 0
    %v3789 = vsel %vm3778, %v3769, 0
    %3791 = vmatprep.subr.mxu0 0.0
    %3792 = vmatpush1.msra.mxu0 0.0
    %3793 = vmatprep.subr.mxu0 0.0
    %3794 = vmatpush1.msra.mxu0 0.0
    %3795 = vmatprep.subr.mxu0 0.0
    %3796 = vmatpush1.msra.mxu0 0.0
    %3797 = vmatprep.subr.mxu0 0.0
    %3798 = vmatpush1.msra.mxu0 0.0
    %3799 = vmatprep.subr.mxu0 0.0
    %3800 = vmatpush1.msra.mxu0 0.0
    %3801 = vmatprep.subr.mxu0 0.0
    %3802 = vmatpush1.msra.mxu0 0.0
    %3803 = vmatprep.subr.mxu0 0.0
    %3804 = vmatpush1.msra.mxu0 0.0
    %3805 = vmatprep.subr.mxu0 0.0
    %3806 = vmatpush1.msra.mxu0 0.0
    %3807 = vmatprep.subr.mxu0 0.0
    %3808 = vmatpush1.msra.mxu0 0.0
    %3809 = vmatprep.subr.mxu0 0.0
    %3810 = vmatpush1.msra.mxu0 0.0
    %3811 = vmatprep.subr.mxu0 0.0
    %3812 = vmatpush1.msra.mxu0 0.0
    %3813 = vmatprep.subr.mxu0 0.0
    %3814 = vmatpush1.msra.mxu0 0.0
    %3815 = vmatprep.subr.mxu0 0.0
    %3816 = vmatpush1.msra.mxu0 0.0
    %3817 = vmatprep.subr.mxu0 0.0
    %3818 = vmatpush1.msra.mxu0 0.0
    %3819 = vmatprep.subr.mxu0 0.0
    %3820 = vmatpush1.msra.mxu0 %v3771
    %3821 = vmatprep.subr.mxu0 0.0
    %3822 = vmatpush1.msra.mxu0 %v3770
    %3823 = vmatprep.subr.mxu0 0.0
    %3824 = vmatpush2.msra.mxu0 0.0
    %3825 = vmatprep.subr.mxu0 0.0
    %3826 = vmatpush2.msra.mxu0 0.0
    %3827 = vmatprep.subr.mxu0 0.0
    %3828 = vmatpush2.msra.mxu0 0.0
    %3829 = vmatprep.subr.mxu0 0.0
    %3830 = vmatpush2.msra.mxu0 0.0
    %3831 = vmatprep.subr.mxu0 0.0
    %3832 = vmatpush2.msra.mxu0 0.0
    %3833 = vmatprep.subr.mxu0 0.0
    %3834 = vmatpush2.msra.mxu0 0.0
    %3835 = vmatprep.subr.mxu0 0.0
    %3836 = vmatpush2.msra.mxu0 0.0
    %3837 = vmatprep.subr.mxu0 0.0
    %3838 = vmatpush2.msra.mxu0 0.0
    %3839 = vmatprep.subr.mxu0 0.0
    %3840 = vmatpush2.msra.mxu0 0.0
    %3841 = vmatprep.subr.mxu0 0.0
    %3842 = vmatpush2.msra.mxu0 0.0
    %3843 = vmatprep.subr.mxu0 0.0
    %3844 = vmatpush2.msra.mxu0 0.0
    %3845 = vmatprep.subr.mxu0 0.0
    %3846 = vmatpush2.msra.mxu0 0.0
    %3847 = vmatprep.subr.mxu0 0.0
    %3848 = vmatpush2.msra.mxu0 0.0
    %3849 = vmatprep.subr.mxu0 0.0
    %3850 = vmatpush2.msra.mxu0 0.0
    %3851 = vmatprep.subr.mxu0 0.0
    %3852 = vmatpush2.msra.mxu0 0.0
    %3853 = vmatprep.subr.mxu0 0.0
    %3854 = vmatpush2.msra.mxu0 0.0
    %3855 = vmatprep.mubr.f32.mxu0 0.0
    %3856 = vmatmul.mubr.f32.gmra.mxu0 %v3780
    %v3857 = vpop.f32.mrf.mxu0
    %v3858 = vadd.f32 0.0, %v3857
    %v3859 = vpop.f32.mrf.mxu0
    %3860 = vmatprep.mubr.f32.mxu0 0.0
    %3861 = vmatmul.mubr.f32.gmra.mxu0 %v3783
    %v3862 = vpop.f32.mrf.mxu0
    %v3863 = vadd.f32 0.0, %v3862
    %v3864 = vpop.f32.mrf.mxu0
    %3865 = vmatprep.mubr.f32.mxu0 0.0
    %3866 = vmatmul.mubr.f32.gmra.mxu0 %v3786
    %v3867 = vpop.f32.mrf.mxu0
    %v3868 = vadd.f32 0.0, %v3867
    %v3869 = vpop.f32.mrf.mxu0
    %3870 = vmatprep.mubr.f32.mxu0 0.0
    %3871 = vmatmul.mubr.f32.gmra.mxu0 %v3789
    %v3872 = vpop.f32.mrf.mxu0
    %v3873 = vadd.f32 0.0, %v3872
    %v3874 = vpop.f32.mrf.mxu0
    %3875 = vdwg.mxu0
    %3876 = vrot.lane.b32.xlu0 %v3766, 96
    %v3877 = vpop.permute.xlu0 %3876
    %3878 = vrot.lane.b32.xlu0 %v3767, 96
    %v3879 = vpop.permute.xlu0 %3878
    %3880 = vrot.lane.b32.xlu0 %v3768, 96
    %v3881 = vpop.permute.xlu0 %3880
    %3882 = vrot.lane.b32.xlu0 %v3769, 96
    %v3883 = vpop.permute.xlu0 %3882
    %v3884 = vsel %vm3778, %v3877, 0
    %v3886 = vsel %vm3778, %v3879, 0
    %v3888 = vsel %vm3778, %v3881, 0
    %v3890 = vsel %vm3778, %v3883, 0
    %3892 = vmatprep.subr.mxu0 0.0
    %3893 = vmatpush1.msra.mxu0 0.0
    %3894 = vmatprep.subr.mxu0 0.0
    %3895 = vmatpush1.msra.mxu0 0.0
    %3896 = vmatprep.subr.mxu0 0.0
    %3897 = vmatpush1.msra.mxu0 0.0
    %3898 = vmatprep.subr.mxu0 0.0
    %3899 = vmatpush1.msra.mxu0 0.0
    %3900 = vmatprep.subr.mxu0 0.0
    %3901 = vmatpush1.msra.mxu0 0.0
    %3902 = vmatprep.subr.mxu0 0.0
    %3903 = vmatpush1.msra.mxu0 0.0
    %3904 = vmatprep.subr.mxu0 0.0
    %3905 = vmatpush1.msra.mxu0 0.0
    %3906 = vmatprep.subr.mxu0 0.0
    %3907 = vmatpush1.msra.mxu0 0.0
    %3908 = vmatprep.subr.mxu0 0.0
    %3909 = vmatpush1.msra.mxu0 0.0
    %3910 = vmatprep.subr.mxu0 0.0
    %3911 = vmatpush1.msra.mxu0 0.0
    %3912 = vmatprep.subr.mxu0 0.0
    %3913 = vmatpush1.msra.mxu0 0.0
    %3914 = vmatprep.subr.mxu0 0.0
    %3915 = vmatpush1.msra.mxu0 0.0
    %3916 = vmatprep.subr.mxu0 0.0
    %3917 = vmatpush1.msra.mxu0 0.0
    %3918 = vmatprep.subr.mxu0 0.0
    %3919 = vmatpush1.msra.mxu0 0.0
    %3920 = vmatprep.subr.mxu0 0.0
    %3921 = vmatpush1.msra.mxu0 %v3775
    %3922 = vmatprep.subr.mxu0 0.0
    %3923 = vmatpush1.msra.mxu0 %v3774
    %3924 = vmatprep.subr.mxu0 0.0
    %3925 = vmatpush2.msra.mxu0 0.0
    %3926 = vmatprep.subr.mxu0 0.0
    %3927 = vmatpush2.msra.mxu0 0.0
    %3928 = vmatprep.subr.mxu0 0.0
    %3929 = vmatpush2.msra.mxu0 0.0
    %3930 = vmatprep.subr.mxu0 0.0
    %3931 = vmatpush2.msra.mxu0 0.0
    %3932 = vmatprep.subr.mxu0 0.0
    %3933 = vmatpush2.msra.mxu0 0.0
    %3934 = vmatprep.subr.mxu0 0.0
    %3935 = vmatpush2.msra.mxu0 0.0
    %3936 = vmatprep.subr.mxu0 0.0
    %3937 = vmatpush2.msra.mxu0 0.0
    %3938 = vmatprep.subr.mxu0 0.0
    %3939 = vmatpush2.msra.mxu0 0.0
    %3940 = vmatprep.subr.mxu0 0.0
    %3941 = vmatpush2.msra.mxu0 0.0
    %3942 = vmatprep.subr.mxu0 0.0
    %3943 = vmatpush2.msra.mxu0 0.0
    %3944 = vmatprep.subr.mxu0 0.0
    %3945 = vmatpush2.msra.mxu0 0.0
    %3946 = vmatprep.subr.mxu0 0.0
    %3947 = vmatpush2.msra.mxu0 0.0
    %3948 = vmatprep.subr.mxu0 0.0
    %3949 = vmatpush2.msra.mxu0 0.0
    %3950 = vmatprep.subr.mxu0 0.0
    %3951 = vmatpush2.msra.mxu0 0.0
    %3952 = vmatprep.subr.mxu0 0.0
    %3953 = vmatpush2.msra.mxu0 0.0
    %3954 = vmatprep.subr.mxu0 0.0
    %3955 = vmatpush2.msra.mxu0 0.0
    %3956 = vmatprep.mubr.f32.mxu0 0.0
    %3957 = vmatmul.mubr.f32.gmra.mxu0 %v3884
    %v3958 = vpop.f32.mrf.mxu0
    %v3959 = vadd.f32 0.0, %v3958
    %v3960 = vpop.f32.mrf.mxu0
    %3961 = vmatprep.mubr.f32.mxu0 0.0
    %3962 = vmatmul.mubr.f32.gmra.mxu0 %v3886
    %v3963 = vpop.f32.mrf.mxu0
    %v3964 = vadd.f32 0.0, %v3963
    %v3965 = vpop.f32.mrf.mxu0
    %3966 = vmatprep.mubr.f32.mxu0 0.0
    %3967 = vmatmul.mubr.f32.gmra.mxu0 %v3888
    %v3968 = vpop.f32.mrf.mxu0
    %v3969 = vadd.f32 0.0, %v3968
    %v3970 = vpop.f32.mrf.mxu0
    %3971 = vmatprep.mubr.f32.mxu0 0.0
    %3972 = vmatmul.mubr.f32.gmra.mxu0 %v3890
    %v3973 = vpop.f32.mrf.mxu0
    %v3974 = vadd.f32 0.0, %v3973
    %v3975 = vpop.f32.mrf.mxu0
    %3976 = vdwg.mxu0
    %3977 = vmatprep.subr.mxu0 0.0
    %3978 = vmatpush1.msra.mxu0 0.0
    %3979 = vmatprep.subr.mxu0 0.0
    %3980 = vmatpush1.msra.mxu0 0.0
    %3981 = vmatprep.subr.mxu0 0.0
    %3982 = vmatpush1.msra.mxu0 0.0
    %3983 = vmatprep.subr.mxu0 0.0
    %3984 = vmatpush1.msra.mxu0 0.0
    %3985 = vmatprep.subr.mxu0 0.0
    %3986 = vmatpush1.msra.mxu0 0.0
    %3987 = vmatprep.subr.mxu0 0.0
    %3988 = vmatpush1.msra.mxu0 0.0
    %3989 = vmatprep.subr.mxu0 0.0
    %3990 = vmatpush1.msra.mxu0 0.0
    %3991 = vmatprep.subr.mxu0 0.0
    %3992 = vmatpush1.msra.mxu0 0.0
    %3993 = vmatprep.subr.mxu0 0.0
    %3994 = vmatpush1.msra.mxu0 0.0
    %3995 = vmatprep.subr.mxu0 0.0
    %3996 = vmatpush1.msra.mxu0 0.0
    %3997 = vmatprep.subr.mxu0 0.0
    %3998 = vmatpush1.msra.mxu0 0.0
    %3999 = vmatprep.subr.mxu0 0.0
    %4000 = vmatpush1.msra.mxu0 0.0
    %4001 = vmatprep.subr.mxu0 0.0
    %4002 = vmatpush1.msra.mxu0 0.0
    %4003 = vmatprep.subr.mxu0 0.0
    %4004 = vmatpush1.msra.mxu0 0.0
    %4005 = vmatprep.subr.mxu0 0.0
    %4006 = vmatpush1.msra.mxu0 %v3773
    %4007 = vmatprep.subr.mxu0 0.0
    %4008 = vmatpush1.msra.mxu0 %v3772
    %4009 = vmatprep.subr.mxu0 0.0
    %4010 = vmatpush2.msra.mxu0 0.0
    %4011 = vmatprep.subr.mxu0 0.0
    %4012 = vmatpush2.msra.mxu0 0.0
    %4013 = vmatprep.subr.mxu0 0.0
    %4014 = vmatpush2.msra.mxu0 0.0
    %4015 = vmatprep.subr.mxu0 0.0
    %4016 = vmatpush2.msra.mxu0 0.0
    %4017 = vmatprep.subr.mxu0 0.0
    %4018 = vmatpush2.msra.mxu0 0.0
    %4019 = vmatprep.subr.mxu0 0.0
    %4020 = vmatpush2.msra.mxu0 0.0
    %4021 = vmatprep.subr.mxu0 0.0
    %4022 = vmatpush2.msra.mxu0 0.0
    %4023 = vmatprep.subr.mxu0 0.0
    %4024 = vmatpush2.msra.mxu0 0.0
    %4025 = vmatprep.subr.mxu0 0.0
    %4026 = vmatpush2.msra.mxu0 0.0
    %4027 = vmatprep.subr.mxu0 0.0
    %4028 = vmatpush2.msra.mxu0 0.0
    %4029 = vmatprep.subr.mxu0 0.0
    %4030 = vmatpush2.msra.mxu0 0.0
    %4031 = vmatprep.subr.mxu0 0.0
    %4032 = vmatpush2.msra.mxu0 0.0
    %4033 = vmatprep.subr.mxu0 0.0
    %4034 = vmatpush2.msra.mxu0 0.0
    %4035 = vmatprep.subr.mxu0 0.0
    %4036 = vmatpush2.msra.mxu0 0.0
    %4037 = vmatprep.subr.mxu0 0.0
    %4038 = vmatpush2.msra.mxu0 0.0
    %4039 = vmatprep.subr.mxu0 0.0
    %4040 = vmatpush2.msra.mxu0 0.0
    %4041 = vmatprep.mubr.f32.mxu0 0.0
    %4042 = vmatmul.mubr.f32.gmra.mxu0 %v3780
    %v4043 = vpop.f32.mrf.mxu0
    %v4044 = vadd.f32 0.0, %v4043
    %v4045 = vpop.f32.mrf.mxu0
    %4046 = vmatprep.mubr.f32.mxu0 0.0
    %4047 = vmatmul.mubr.f32.gmra.mxu0 %v3783
    %v4048 = vpop.f32.mrf.mxu0
    %v4049 = vadd.f32 0.0, %v4048
    %v4050 = vpop.f32.mrf.mxu0
    %4051 = vmatprep.mubr.f32.mxu0 0.0
    %4052 = vmatmul.mubr.f32.gmra.mxu0 %v3786
    %v4053 = vpop.f32.mrf.mxu0
    %v4054 = vadd.f32 0.0, %v4053
    %v4055 = vpop.f32.mrf.mxu0
    %4056 = vmatprep.mubr.f32.mxu0 0.0
    %4057 = vmatmul.mubr.f32.gmra.mxu0 %v3789
    %v4058 = vpop.f32.mrf.mxu0
    %v4059 = vadd.f32 0.0, %v4058
    %v4060 = vpop.f32.mrf.mxu0
    %4061 = vdwg.mxu0
    %4062 = vmatprep.subr.mxu0 0.0
    %4063 = vmatpush1.msra.mxu0 0.0
    %4064 = vmatprep.subr.mxu0 0.0
    %4065 = vmatpush1.msra.mxu0 0.0
    %4066 = vmatprep.subr.mxu0 0.0
    %4067 = vmatpush1.msra.mxu0 0.0
    %4068 = vmatprep.subr.mxu0 0.0
    %4069 = vmatpush1.msra.mxu0 0.0
    %4070 = vmatprep.subr.mxu0 0.0
    %4071 = vmatpush1.msra.mxu0 0.0
    %4072 = vmatprep.subr.mxu0 0.0
    %4073 = vmatpush1.msra.mxu0 0.0
    %4074 = vmatprep.subr.mxu0 0.0
    %4075 = vmatpush1.msra.mxu0 0.0
    %4076 = vmatprep.subr.mxu0 0.0
    %4077 = vmatpush1.msra.mxu0 0.0
    %4078 = vmatprep.subr.mxu0 0.0
    %4079 = vmatpush1.msra.mxu0 0.0
    %4080 = vmatprep.subr.mxu0 0.0
    %4081 = vmatpush1.msra.mxu0 0.0
    %4082 = vmatprep.subr.mxu0 0.0
    %4083 = vmatpush1.msra.mxu0 0.0
    %4084 = vmatprep.subr.mxu0 0.0
    %4085 = vmatpush1.msra.mxu0 0.0
    %4086 = vmatprep.subr.mxu0 0.0
    %4087 = vmatpush1.msra.mxu0 0.0
    %4088 = vmatprep.subr.mxu0 0.0
    %4089 = vmatpush1.msra.mxu0 0.0
    %4090 = vmatprep.subr.mxu0 0.0
    %4091 = vmatpush1.msra.mxu0 %v3777
    %4092 = vmatprep.subr.mxu0 0.0
    %4093 = vmatpush1.msra.mxu0 %v3776
    %4094 = vmatprep.subr.mxu0 0.0
    %4095 = vmatpush2.msra.mxu0 0.0
    %4096 = vmatprep.subr.mxu0 0.0
    %4097 = vmatpush2.msra.mxu0 0.0
    %4098 = vmatprep.subr.mxu0 0.0
    %4099 = vmatpush2.msra.mxu0 0.0
    %4100 = vmatprep.subr.mxu0 0.0
    %4101 = vmatpush2.msra.mxu0 0.0
    %4102 = vmatprep.subr.mxu0 0.0
    %4103 = vmatpush2.msra.mxu0 0.0
    %4104 = vmatprep.subr.mxu0 0.0
    %4105 = vmatpush2.msra.mxu0 0.0
    %4106 = vmatprep.subr.mxu0 0.0
    %4107 = vmatpush2.msra.mxu0 0.0
    %4108 = vmatprep.subr.mxu0 0.0
    %4109 = vmatpush2.msra.mxu0 0.0
    %4110 = vmatprep.subr.mxu0 0.0
    %4111 = vmatpush2.msra.mxu0 0.0
    %4112 = vmatprep.subr.mxu0 0.0
    %4113 = vmatpush2.msra.mxu0 0.0
    %4114 = vmatprep.subr.mxu0 0.0
    %4115 = vmatpush2.msra.mxu0 0.0
    %4116 = vmatprep.subr.mxu0 0.0
    %4117 = vmatpush2.msra.mxu0 0.0
    %4118 = vmatprep.subr.mxu0 0.0
    %4119 = vmatpush2.msra.mxu0 0.0
    %4120 = vmatprep.subr.mxu0 0.0
    %4121 = vmatpush2.msra.mxu0 0.0
    %4122 = vmatprep.subr.mxu0 0.0
    %4123 = vmatpush2.msra.mxu0 0.0
    %4124 = vmatprep.subr.mxu0 0.0
    %4125 = vmatpush2.msra.mxu0 0.0
    %4126 = vmatprep.mubr.f32.mxu0 0.0
    %4127 = vmatmul.mubr.f32.gmra.mxu0 %v3884
    %v4128 = vpop.f32.mrf.mxu0
    %v4129 = vadd.f32 0.0, %v4128
    %v4130 = vpop.f32.mrf.mxu0
    %4131 = vmatprep.mubr.f32.mxu0 0.0
    %4132 = vmatmul.mubr.f32.gmra.mxu0 %v3886
    %v4133 = vpop.f32.mrf.mxu0
    %v4134 = vadd.f32 0.0, %v4133
    %v4135 = vpop.f32.mrf.mxu0
    %4136 = vmatprep.mubr.f32.mxu0 0.0
    %4137 = vmatmul.mubr.f32.gmra.mxu0 %v3888
    %v4138 = vpop.f32.mrf.mxu0
    %v4139 = vadd.f32 0.0, %v4138
    %v4140 = vpop.f32.mrf.mxu0
    %4141 = vmatprep.mubr.f32.mxu0 0.0
    %4142 = vmatmul.mubr.f32.gmra.mxu0 %v3890
    %v4143 = vpop.f32.mrf.mxu0
    %v4144 = vadd.f32 0.0, %v4143
    %v4145 = vpop.f32.mrf.mxu0
    %4146 = vdwg.mxu0
    %v4147 = vld [vmem:[#allocation23] sm:$0xff]
    %v4148 = vld [vmem:[#allocation23 + $0x8] sm:$0xff]
    %4149 = vrot.lane.b32.xlu0 %v3766, 112
    %v4150 = vpop.permute.xlu0 %4149
    %4151 = vrot.lane.b32.xlu0 %v3767, 112
    %v4152 = vpop.permute.xlu0 %4151
    %4153 = vrot.lane.b32.xlu0 %v3768, 112
    %v4154 = vpop.permute.xlu0 %4153
    %4155 = vrot.lane.b32.xlu0 %v3769, 112
    %v4156 = vpop.permute.xlu0 %4155
    %v4157 = vsel %vm3778, %v4150, 0
    %v4159 = vsel %vm3778, %v4152, 0
    %v4161 = vsel %vm3778, %v4154, 0
    %v4163 = vsel %vm3778, %v4156, 0
    %v4166 = vsel %vm3778, %v3858, 0
    %v4169 = vsel %vm3778, %v3863, 0
    %v4172 = vsel %vm3778, %v3868, 0
    %v4175 = vsel %vm3778, %v3873, 0
    %4177 = vmatprep.subr.mxu0 0.0
    %4178 = vmatpush1.xpose.msra.mxu0 0.0
    %4179 = vmatprep.subr.mxu0 0.0
    %4180 = vmatpush1.xpose.msra.mxu0 0.0
    %4181 = vmatprep.subr.mxu0 0.0
    %4182 = vmatpush1.xpose.msra.mxu0 0.0
    %4183 = vmatprep.subr.mxu0 0.0
    %4184 = vmatpush1.xpose.msra.mxu0 0.0
    %4185 = vmatprep.subr.mxu0 0.0
    %4186 = vmatpush1.xpose.msra.mxu0 0.0
    %4187 = vmatprep.subr.mxu0 0.0
    %4188 = vmatpush1.xpose.msra.mxu0 0.0
    %4189 = vmatprep.subr.mxu0 0.0
    %4190 = vmatpush1.xpose.msra.mxu0 0.0
    %4191 = vmatprep.subr.mxu0 0.0
    %4192 = vmatpush1.xpose.msra.mxu0 0.0
    %4193 = vmatprep.subr.mxu0 0.0
    %4194 = vmatpush1.xpose.msra.mxu0 0.0
    %4195 = vmatprep.subr.mxu0 0.0
    %4196 = vmatpush1.xpose.msra.mxu0 0.0
    %4197 = vmatprep.subr.mxu0 0.0
    %4198 = vmatpush1.xpose.msra.mxu0 0.0
    %4199 = vmatprep.subr.mxu0 0.0
    %4200 = vmatpush1.xpose.msra.mxu0 0.0
    %4201 = vmatprep.subr.mxu0 0.0
    %4202 = vmatpush1.xpose.msra.mxu0 %v4175
    %4203 = vmatprep.subr.mxu0 0.0
    %4204 = vmatpush1.xpose.msra.mxu0 %v4172
    %4205 = vmatprep.subr.mxu0 0.0
    %4206 = vmatpush1.xpose.msra.mxu0 %v4169
    %4207 = vmatprep.subr.mxu0 0.0
    %4208 = vmatpush1.xpose.msra.mxu0 %v4166
    %4209 = vmatprep.subr.mxu0 0.0
    %4210 = vmatpush2.xpose.msra.mxu0 0.0
    %4211 = vmatprep.subr.mxu0 0.0
    %4212 = vmatpush2.xpose.msra.mxu0 0.0
    %4213 = vmatprep.subr.mxu0 0.0
    %4214 = vmatpush2.xpose.msra.mxu0 0.0
    %4215 = vmatprep.subr.mxu0 0.0
    %4216 = vmatpush2.xpose.msra.mxu0 0.0
    %4217 = vmatprep.subr.mxu0 0.0
    %4218 = vmatpush2.xpose.msra.mxu0 0.0
    %4219 = vmatprep.subr.mxu0 0.0
    %4220 = vmatpush2.xpose.msra.mxu0 0.0
    %4221 = vmatprep.subr.mxu0 0.0
    %4222 = vmatpush2.xpose.msra.mxu0 0.0
    %4223 = vmatprep.subr.mxu0 0.0
    %4224 = vmatpush2.xpose.msra.mxu0 0.0
    %4225 = vmatprep.subr.mxu0 0.0
    %4226 = vmatpush2.xpose.msra.mxu0 0.0
    %4227 = vmatprep.subr.mxu0 0.0
    %4228 = vmatpush2.xpose.msra.mxu0 0.0
    %4229 = vmatprep.subr.mxu0 0.0
    %4230 = vmatpush2.xpose.msra.mxu0 0.0
    %4231 = vmatprep.subr.mxu0 0.0
    %4232 = vmatpush2.xpose.msra.mxu0 0.0
    %4233 = vmatprep.subr.mxu0 0.0
    %4234 = vmatpush2.xpose.msra.mxu0 0.0
    %4235 = vmatprep.subr.mxu0 0.0
    %4236 = vmatpush2.xpose.msra.mxu0 0.0
    %4237 = vmatprep.subr.mxu0 0.0
    %4238 = vmatpush2.xpose.msra.mxu0 0.0
    %4239 = vmatprep.subr.mxu0 0.0
    %4240 = vmatpush2.xpose.msra.mxu0 0.0
    %4241 = vmatprep.mubr.f32.mxu0 0.0
    %4242 = vmatmul.mubr.f32.gmra.mxu0 %v4157
    %v4243 = vpop.f32.mrf.mxu0
    %v4244 = vadd.f32 0.0, %v4243
    %v4245 = vpop.f32.mrf.mxu0
    %4246 = vmatprep.mubr.f32.mxu0 0.0
    %4247 = vmatmul.mubr.f32.gmra.mxu0 %v4159
    %v4248 = vpop.f32.mrf.mxu0
    %v4249 = vadd.f32 0.0, %v4248
    %v4250 = vpop.f32.mrf.mxu0
    %4251 = vmatprep.mubr.f32.mxu0 0.0
    %4252 = vmatmul.mubr.f32.gmra.mxu0 %v4161
    %v4253 = vpop.f32.mrf.mxu0
    %v4254 = vadd.f32 0.0, %v4253
    %v4255 = vpop.f32.mrf.mxu0
    %4256 = vmatprep.mubr.f32.mxu0 0.0
    %4257 = vmatmul.mubr.f32.gmra.mxu0 %v4163
    %v4258 = vpop.f32.mrf.mxu0
    %v4259 = vadd.f32 0.0, %v4258
    %v4260 = vpop.f32.mrf.mxu0
    %4261 = vdwg.mxu0
    %v4262 = vmul.f32 %v399, %v4244
    %v4263 = vmul.f32 %v400, %v4249
    %v4264 = vmul.f32 %v401, %v4254
    %v4265 = vmul.f32 %v402, %v4259
    %v4267 = vsel %vm3778, %v4044, 0
    %v4270 = vsel %vm3778, %v4049, 0
    %v4273 = vsel %vm3778, %v4054, 0
    %v4276 = vsel %vm3778, %v4059, 0
    %4278 = vmatprep.subr.mxu0 0.0
    %4279 = vmatpush1.xpose.msra.mxu0 0.0
    %4280 = vmatprep.subr.mxu0 0.0
    %4281 = vmatpush1.xpose.msra.mxu0 0.0
    %4282 = vmatprep.subr.mxu0 0.0
    %4283 = vmatpush1.xpose.msra.mxu0 0.0
    %4284 = vmatprep.subr.mxu0 0.0
    %4285 = vmatpush1.xpose.msra.mxu0 0.0
    %4286 = vmatprep.subr.mxu0 0.0
    %4287 = vmatpush1.xpose.msra.mxu0 0.0
    %4288 = vmatprep.subr.mxu0 0.0
    %4289 = vmatpush1.xpose.msra.mxu0 0.0
    %4290 = vmatprep.subr.mxu0 0.0
    %4291 = vmatpush1.xpose.msra.mxu0 0.0
    %4292 = vmatprep.subr.mxu0 0.0
    %4293 = vmatpush1.xpose.msra.mxu0 0.0
    %4294 = vmatprep.subr.mxu0 0.0
    %4295 = vmatpush1.xpose.msra.mxu0 0.0
    %4296 = vmatprep.subr.mxu0 0.0
    %4297 = vmatpush1.xpose.msra.mxu0 0.0
    %4298 = vmatprep.subr.mxu0 0.0
    %4299 = vmatpush1.xpose.msra.mxu0 0.0
    %4300 = vmatprep.subr.mxu0 0.0
    %4301 = vmatpush1.xpose.msra.mxu0 0.0
    %4302 = vmatprep.subr.mxu0 0.0
    %4303 = vmatpush1.xpose.msra.mxu0 %v4276
    %4304 = vmatprep.subr.mxu0 0.0
    %4305 = vmatpush1.xpose.msra.mxu0 %v4273
    %4306 = vmatprep.subr.mxu0 0.0
    %4307 = vmatpush1.xpose.msra.mxu0 %v4270
    %4308 = vmatprep.subr.mxu0 0.0
    %4309 = vmatpush1.xpose.msra.mxu0 %v4267
    %4310 = vmatprep.subr.mxu0 0.0
    %4311 = vmatpush2.xpose.msra.mxu0 0.0
    %4312 = vmatprep.subr.mxu0 0.0
    %4313 = vmatpush2.xpose.msra.mxu0 0.0
    %4314 = vmatprep.subr.mxu0 0.0
    %4315 = vmatpush2.xpose.msra.mxu0 0.0
    %4316 = vmatprep.subr.mxu0 0.0
    %4317 = vmatpush2.xpose.msra.mxu0 0.0
    %4318 = vmatprep.subr.mxu0 0.0
    %4319 = vmatpush2.xpose.msra.mxu0 0.0
    %4320 = vmatprep.subr.mxu0 0.0
    %4321 = vmatpush2.xpose.msra.mxu0 0.0
    %4322 = vmatprep.subr.mxu0 0.0
    %4323 = vmatpush2.xpose.msra.mxu0 0.0
    %4324 = vmatprep.subr.mxu0 0.0
    %4325 = vmatpush2.xpose.msra.mxu0 0.0
    %4326 = vmatprep.subr.mxu0 0.0
    %4327 = vmatpush2.xpose.msra.mxu0 0.0
    %4328 = vmatprep.subr.mxu0 0.0
    %4329 = vmatpush2.xpose.msra.mxu0 0.0
    %4330 = vmatprep.subr.mxu0 0.0
    %4331 = vmatpush2.xpose.msra.mxu0 0.0
    %4332 = vmatprep.subr.mxu0 0.0
    %4333 = vmatpush2.xpose.msra.mxu0 0.0
    %4334 = vmatprep.subr.mxu0 0.0
    %4335 = vmatpush2.xpose.msra.mxu0 0.0
    %4336 = vmatprep.subr.mxu0 0.0
    %4337 = vmatpush2.xpose.msra.mxu0 0.0
    %4338 = vmatprep.subr.mxu0 0.0
    %4339 = vmatpush2.xpose.msra.mxu0 0.0
    %4340 = vmatprep.subr.mxu0 0.0
    %4341 = vmatpush2.xpose.msra.mxu0 0.0
    %4342 = vmatprep.mubr.f32.mxu0 0.0
    %4343 = vmatmul.mubr.f32.gmra.mxu0 %v4157
    %v4344 = vpop.f32.mrf.mxu0
    %v4345 = vadd.f32 0.0, %v4344
    %v4346 = vpop.f32.mrf.mxu0
    %4347 = vmatprep.mubr.f32.mxu0 0.0
    %4348 = vmatmul.mubr.f32.gmra.mxu0 %v4159
    %v4349 = vpop.f32.mrf.mxu0
    %v4350 = vadd.f32 0.0, %v4349
    %v4351 = vpop.f32.mrf.mxu0
    %4352 = vmatprep.mubr.f32.mxu0 0.0
    %4353 = vmatmul.mubr.f32.gmra.mxu0 %v4161
    %v4354 = vpop.f32.mrf.mxu0
    %v4355 = vadd.f32 0.0, %v4354
    %v4356 = vpop.f32.mrf.mxu0
    %4357 = vmatprep.mubr.f32.mxu0 0.0
    %4358 = vmatmul.mubr.f32.gmra.mxu0 %v4163
    %v4359 = vpop.f32.mrf.mxu0
    %v4360 = vadd.f32 0.0, %v4359
    %v4361 = vpop.f32.mrf.mxu0
    %4362 = vdwg.mxu0
    %v4363 = vmul.f32 %v403, %v4345
    %v4364 = vmul.f32 %v404, %v4350
    %v4365 = vmul.f32 %v405, %v4355
    %v4366 = vmul.f32 %v406, %v4360
    %v4367 = vadd.f32 %v4262, %v4363
    %v4368 = vadd.f32 %v4263, %v4364
    %v4369 = vadd.f32 %v4264, %v4365
    %v4370 = vadd.f32 %v4265, %v4366
    %v4371 = vsel %vm989, %v4367, -1e+30
    %v4372 = vsel %vm990, %v4368, -1e+30
    %v4373 = vsel %vm991, %v4369, -1e+30
    %v4374 = vsel %vm992, %v4370, -1e+30
    %v4375 = vsel %vm415, %v4371, -inf
    %4376 = vmax.xlane.f32.xlu0 %v4375
    %v4377 = vpop.xlane.xlu0 %4376
    %v4378 = vsel %vm415, %v4372, -inf
    %4379 = vmax.xlane.f32.xlu0 %v4378
    %v4380 = vpop.xlane.xlu0 %4379
    %v4381 = vsel %vm415, %v4373, -inf
    %4382 = vmax.xlane.f32.xlu0 %v4381
    %v4383 = vpop.xlane.xlu0 %4382
    %v4384 = vsel %vm415, %v4374, -inf
    %4385 = vmax.xlane.f32.xlu0 %v4384
    %v4386 = vpop.xlane.xlu0 %4385
    %v4387 = vsub.f32 %v4371, %v4377
    %v4388 = vsub.f32 %v4372, %v4380
    %v4389 = vsub.f32 %v4373, %v4383
    %v4390 = vsub.f32 %v4374, %v4386
    %v4391 = vmul.f32 %v4387, 1.442695
    %v4392 = vpow.pop %v4391
    %v4393 = vmul.f32 %v4388, 1.442695
    %v4394 = vpow.pop %v4393
    %v4395 = vmul.f32 %v4389, 1.442695
    %v4396 = vpow.pop %v4395
    %v4397 = vmul.f32 %v4390, 1.442695
    %v4398 = vpow.pop %v4397
    %v4399 = vsel %vm989, %v4392, 0.0
    %v4400 = vsel %vm990, %v4394, 0.0
    %v4401 = vsel %vm991, %v4396, 0.0
    %v4402 = vsel %vm992, %v4398, 0.0
    %v4403 = vsel %vm415, %v4399, 0.0
    %4404 = vadd.xlane.f32.xlu0 %v4403
    %v4405 = vpop.xlane.xlu0 %4404
    %v4406 = vsel %vm415, %v4400, 0.0
    %4407 = vadd.xlane.f32.xlu0 %v4406
    %v4408 = vpop.xlane.xlu0 %4407
    %v4409 = vsel %vm415, %v4401, 0.0
    %4410 = vadd.xlane.f32.xlu0 %v4409
    %v4411 = vpop.xlane.xlu0 %4410
    %v4412 = vsel %vm415, %v4402, 0.0
    %4413 = vadd.xlane.f32.xlu0 %v4412
    %v4414 = vpop.xlane.xlu0 %4413
    %vm4415 = vcmp.eq.f32.partialorder %v4405, 0.0
    %vm4416 = vcmp.eq.f32.partialorder %v4408, 0.0
    %vm4417 = vcmp.eq.f32.partialorder %v4411, 0.0
    %vm4418 = vcmp.eq.f32.partialorder %v4414, 0.0
    %v4419 = vsel %vm4415, 1.0, %v4405
    %v4420 = vsel %vm4416, 1.0, %v4408
    %v4421 = vsel %vm4417, 1.0, %v4411
    %v4422 = vsel %vm4418, 1.0, %v4414
    %v4423 = vrcp.pop %v4419
    %v4424 = vrcp.pop %v4420
    %v4425 = vrcp.pop %v4421
    %v4426 = vrcp.pop %v4422
    %v4427 = vmul.f32 %v4399, %v4423
    %v4428 = vmul.f32 %v4400, %v4424
    %v4429 = vmul.f32 %v4401, %v4425
    %v4430 = vmul.f32 %v4402, %v4426
    %v4431 = vmul.f32 %v4427, %v399
    %v4432 = vmul.f32 %v4428, %v400
    %v4433 = vmul.f32 %v4429, %v401
    %v4434 = vmul.f32 %v4430, %v402
    %v4435 = vmul.f32 %v4427, %v403
    %v4436 = vmul.f32 %v4428, %v404
    %v4437 = vmul.f32 %v4429, %v405
    %v4438 = vmul.f32 %v4430, %v406
    %v4440 = vsel %vm415, %v4435, 0
    %v4443 = vsel %vm415, %v4436, 0
    %v4446 = vsel %vm415, %v4437, 0
    %v4449 = vsel %vm415, %v4438, 0
    %4451 = vmatprep.subr.mxu0 0.0
    %4452 = vmatpush1.msra.mxu0 0.0
    %4453 = vmatprep.subr.mxu0 0.0
    %4454 = vmatpush1.msra.mxu0 0.0
    %4455 = vmatprep.subr.mxu0 0.0
    %4456 = vmatpush1.msra.mxu0 0.0
    %4457 = vmatprep.subr.mxu0 0.0
    %4458 = vmatpush1.msra.mxu0 0.0
    %4459 = vmatprep.subr.mxu0 0.0
    %4460 = vmatpush1.msra.mxu0 0.0
    %4461 = vmatprep.subr.mxu0 0.0
    %4462 = vmatpush1.msra.mxu0 0.0
    %4463 = vmatprep.subr.mxu0 0.0
    %4464 = vmatpush1.msra.mxu0 0.0
    %4465 = vmatprep.subr.mxu0 0.0
    %4466 = vmatpush1.msra.mxu0 0.0
    %4467 = vmatprep.subr.mxu0 0.0
    %4468 = vmatpush1.msra.mxu0 0.0
    %4469 = vmatprep.subr.mxu0 0.0
    %4470 = vmatpush1.msra.mxu0 0.0
    %4471 = vmatprep.subr.mxu0 0.0
    %4472 = vmatpush1.msra.mxu0 0.0
    %4473 = vmatprep.subr.mxu0 0.0
    %4474 = vmatpush1.msra.mxu0 0.0
    %4475 = vmatprep.subr.mxu0 0.0
    %4476 = vmatpush1.msra.mxu0 %v4144
    %4477 = vmatprep.subr.mxu0 0.0
    %4478 = vmatpush1.msra.mxu0 %v4139
    %4479 = vmatprep.subr.mxu0 0.0
    %4480 = vmatpush1.msra.mxu0 %v4134
    %4481 = vmatprep.subr.mxu0 0.0
    %4482 = vmatpush1.msra.mxu0 %v4129
    %4483 = vmatprep.subr.mxu0 0.0
    %4484 = vmatpush2.msra.mxu0 0.0
    %4485 = vmatprep.subr.mxu0 0.0
    %4486 = vmatpush2.msra.mxu0 0.0
    %4487 = vmatprep.subr.mxu0 0.0
    %4488 = vmatpush2.msra.mxu0 0.0
    %4489 = vmatprep.subr.mxu0 0.0
    %4490 = vmatpush2.msra.mxu0 0.0
    %4491 = vmatprep.subr.mxu0 0.0
    %4492 = vmatpush2.msra.mxu0 0.0
    %4493 = vmatprep.subr.mxu0 0.0
    %4494 = vmatpush2.msra.mxu0 0.0
    %4495 = vmatprep.subr.mxu0 0.0
    %4496 = vmatpush2.msra.mxu0 0.0
    %4497 = vmatprep.subr.mxu0 0.0
    %4498 = vmatpush2.msra.mxu0 0.0
    %4499 = vmatprep.subr.mxu0 0.0
    %4500 = vmatpush2.msra.mxu0 0.0
    %4501 = vmatprep.subr.mxu0 0.0
    %4502 = vmatpush2.msra.mxu0 0.0
    %4503 = vmatprep.subr.mxu0 0.0
    %4504 = vmatpush2.msra.mxu0 0.0
    %4505 = vmatprep.subr.mxu0 0.0
    %4506 = vmatpush2.msra.mxu0 0.0
    %4507 = vmatprep.subr.mxu0 0.0
    %4508 = vmatpush2.msra.mxu0 0.0
    %4509 = vmatprep.subr.mxu0 0.0
    %4510 = vmatpush2.msra.mxu0 0.0
    %4511 = vmatprep.subr.mxu0 0.0
    %4512 = vmatpush2.msra.mxu0 0.0
    %4513 = vmatprep.subr.mxu0 0.0
    %4514 = vmatpush2.msra.mxu0 0.0
    %4515 = vmatprep.mubr.f32.mxu0 0.0
    %4516 = vmatmul.mubr.f32.gmra.mxu0 %v4440
    %v4517 = vpop.f32.mrf.mxu0
    %v4518 = vadd.f32 0.0, %v4517
    %v4519 = vpop.f32.mrf.mxu0
    %4520 = vmatprep.mubr.f32.mxu0 0.0
    %4521 = vmatmul.mubr.f32.gmra.mxu0 %v4443
    %v4522 = vpop.f32.mrf.mxu0
    %v4523 = vadd.f32 0.0, %v4522
    %v4524 = vpop.f32.mrf.mxu0
    %4525 = vmatprep.mubr.f32.mxu0 0.0
    %4526 = vmatmul.mubr.f32.gmra.mxu0 %v4446
    %v4527 = vpop.f32.mrf.mxu0
    %v4528 = vadd.f32 0.0, %v4527
    %v4529 = vpop.f32.mrf.mxu0
    %4530 = vmatprep.mubr.f32.mxu0 0.0
    %4531 = vmatmul.mubr.f32.gmra.mxu0 %v4449
    %v4532 = vpop.f32.mrf.mxu0
    %v4533 = vadd.f32 0.0, %v4532
    %v4534 = vpop.f32.mrf.mxu0
    %4535 = vdwg.mxu0
    %v4537 = vsel %vm415, %v4431, 0
    %v4540 = vsel %vm415, %v4432, 0
    %v4543 = vsel %vm415, %v4433, 0
    %v4546 = vsel %vm415, %v4434, 0
    %4548 = vmatprep.subr.mxu0 0.0
    %4549 = vmatpush1.msra.mxu0 0.0
    %4550 = vmatprep.subr.mxu0 0.0
    %4551 = vmatpush1.msra.mxu0 0.0
    %4552 = vmatprep.subr.mxu0 0.0
    %4553 = vmatpush1.msra.mxu0 0.0
    %4554 = vmatprep.subr.mxu0 0.0
    %4555 = vmatpush1.msra.mxu0 0.0
    %4556 = vmatprep.subr.mxu0 0.0
    %4557 = vmatpush1.msra.mxu0 0.0
    %4558 = vmatprep.subr.mxu0 0.0
    %4559 = vmatpush1.msra.mxu0 0.0
    %4560 = vmatprep.subr.mxu0 0.0
    %4561 = vmatpush1.msra.mxu0 0.0
    %4562 = vmatprep.subr.mxu0 0.0
    %4563 = vmatpush1.msra.mxu0 0.0
    %4564 = vmatprep.subr.mxu0 0.0
    %4565 = vmatpush1.msra.mxu0 0.0
    %4566 = vmatprep.subr.mxu0 0.0
    %4567 = vmatpush1.msra.mxu0 0.0
    %4568 = vmatprep.subr.mxu0 0.0
    %4569 = vmatpush1.msra.mxu0 0.0
    %4570 = vmatprep.subr.mxu0 0.0
    %4571 = vmatpush1.msra.mxu0 0.0
    %4572 = vmatprep.subr.mxu0 0.0
    %4573 = vmatpush1.msra.mxu0 %v3974
    %4574 = vmatprep.subr.mxu0 0.0
    %4575 = vmatpush1.msra.mxu0 %v3969
    %4576 = vmatprep.subr.mxu0 0.0
    %4577 = vmatpush1.msra.mxu0 %v3964
    %4578 = vmatprep.subr.mxu0 0.0
    %4579 = vmatpush1.msra.mxu0 %v3959
    %4580 = vmatprep.subr.mxu0 0.0
    %4581 = vmatpush2.msra.mxu0 0.0
    %4582 = vmatprep.subr.mxu0 0.0
    %4583 = vmatpush2.msra.mxu0 0.0
    %4584 = vmatprep.subr.mxu0 0.0
    %4585 = vmatpush2.msra.mxu0 0.0
    %4586 = vmatprep.subr.mxu0 0.0
    %4587 = vmatpush2.msra.mxu0 0.0
    %4588 = vmatprep.subr.mxu0 0.0
    %4589 = vmatpush2.msra.mxu0 0.0
    %4590 = vmatprep.subr.mxu0 0.0
    %4591 = vmatpush2.msra.mxu0 0.0
    %4592 = vmatprep.subr.mxu0 0.0
    %4593 = vmatpush2.msra.mxu0 0.0
    %4594 = vmatprep.subr.mxu0 0.0
    %4595 = vmatpush2.msra.mxu0 0.0
    %4596 = vmatprep.subr.mxu0 0.0
    %4597 = vmatpush2.msra.mxu0 0.0
    %4598 = vmatprep.subr.mxu0 0.0
    %4599 = vmatpush2.msra.mxu0 0.0
    %4600 = vmatprep.subr.mxu0 0.0
    %4601 = vmatpush2.msra.mxu0 0.0
    %4602 = vmatprep.subr.mxu0 0.0
    %4603 = vmatpush2.msra.mxu0 0.0
    %4604 = vmatprep.subr.mxu0 0.0
    %4605 = vmatpush2.msra.mxu0 0.0
    %4606 = vmatprep.subr.mxu0 0.0
    %4607 = vmatpush2.msra.mxu0 0.0
    %4608 = vmatprep.subr.mxu0 0.0
    %4609 = vmatpush2.msra.mxu0 0.0
    %4610 = vmatprep.subr.mxu0 0.0
    %4611 = vmatpush2.msra.mxu0 0.0
    %4612 = vmatprep.mubr.f32.mxu0 0.0
    %4613 = vmatmul.mubr.f32.gmra.mxu0 %v4537
    %v4614 = vpop.f32.mrf.mxu0
    %v4615 = vadd.f32 %v4518, %v4614
    %v4616 = vpop.f32.mrf.mxu0
    %4617 = vmatprep.mubr.f32.mxu0 0.0
    %4618 = vmatmul.mubr.f32.gmra.mxu0 %v4540
    %v4619 = vpop.f32.mrf.mxu0
    %v4620 = vadd.f32 %v4523, %v4619
    %v4621 = vpop.f32.mrf.mxu0
    %4622 = vmatprep.mubr.f32.mxu0 0.0
    %4623 = vmatmul.mubr.f32.gmra.mxu0 %v4543
    %v4624 = vpop.f32.mrf.mxu0
    %v4625 = vadd.f32 %v4528, %v4624
    %v4626 = vpop.f32.mrf.mxu0
    %4627 = vmatprep.mubr.f32.mxu0 0.0
    %4628 = vmatmul.mubr.f32.gmra.mxu0 %v4546
    %v4629 = vpop.f32.mrf.mxu0
    %v4630 = vadd.f32 %v4533, %v4629
    %v4631 = vpop.f32.mrf.mxu0
    %4632 = vdwg.mxu0
    %v4634 = vsel %vm3778, %v4615, 0
    %v4637 = vsel %vm3778, %v4620, 0
    %v4640 = vsel %vm3778, %v4625, 0
    %v4643 = vsel %vm3778, %v4630, 0
    %4645 = vmatprep.subr.mxu0 0.0
    %4646 = vmatpush1.msra.mxu0 0.0
    %4647 = vmatprep.subr.mxu0 0.0
    %4648 = vmatpush1.msra.mxu0 0.0
    %4649 = vmatprep.subr.mxu0 0.0
    %4650 = vmatpush1.msra.mxu0 0.0
    %4651 = vmatprep.subr.mxu0 0.0
    %4652 = vmatpush1.msra.mxu0 0.0
    %4653 = vmatprep.subr.mxu0 0.0
    %4654 = vmatpush1.msra.mxu0 0.0
    %4655 = vmatprep.subr.mxu0 0.0
    %4656 = vmatpush1.msra.mxu0 0.0
    %4657 = vmatprep.subr.mxu0 0.0
    %4658 = vmatpush1.msra.mxu0 0.0
    %4659 = vmatprep.subr.mxu0 0.0
    %4660 = vmatpush1.msra.mxu0 0.0
    %4661 = vmatprep.subr.mxu0 0.0
    %4662 = vmatpush1.msra.mxu0 0.0
    %4663 = vmatprep.subr.mxu0 0.0
    %4664 = vmatpush1.msra.mxu0 0.0
    %4665 = vmatprep.subr.mxu0 0.0
    %4666 = vmatpush1.msra.mxu0 0.0
    %4667 = vmatprep.subr.mxu0 0.0
    %4668 = vmatpush1.msra.mxu0 0.0
    %4669 = vmatprep.subr.mxu0 0.0
    %4670 = vmatpush1.msra.mxu0 0.0
    %4671 = vmatprep.subr.mxu0 0.0
    %4672 = vmatpush1.msra.mxu0 0.0
    %4673 = vmatprep.subr.mxu0 0.0
    %4674 = vmatpush1.msra.mxu0 %v4148
    %4675 = vmatprep.subr.mxu0 0.0
    %4676 = vmatpush1.msra.mxu0 %v4147
    %4677 = vmatprep.subr.mxu0 0.0
    %4678 = vmatpush2.msra.mxu0 0.0
    %4679 = vmatprep.subr.mxu0 0.0
    %4680 = vmatpush2.msra.mxu0 0.0
    %4681 = vmatprep.subr.mxu0 0.0
    %4682 = vmatpush2.msra.mxu0 0.0
    %4683 = vmatprep.subr.mxu0 0.0
    %4684 = vmatpush2.msra.mxu0 0.0
    %4685 = vmatprep.subr.mxu0 0.0
    %4686 = vmatpush2.msra.mxu0 0.0
    %4687 = vmatprep.subr.mxu0 0.0
    %4688 = vmatpush2.msra.mxu0 0.0
    %4689 = vmatprep.subr.mxu0 0.0
    %4690 = vmatpush2.msra.mxu0 0.0
    %4691 = vmatprep.subr.mxu0 0.0
    %4692 = vmatpush2.msra.mxu0 0.0
    %4693 = vmatprep.subr.mxu0 0.0
    %4694 = vmatpush2.msra.mxu0 0.0
    %4695 = vmatprep.subr.mxu0 0.0
    %4696 = vmatpush2.msra.mxu0 0.0
    %4697 = vmatprep.subr.mxu0 0.0
    %4698 = vmatpush2.msra.mxu0 0.0
    %4699 = vmatprep.subr.mxu0 0.0
    %4700 = vmatpush2.msra.mxu0 0.0
    %4701 = vmatprep.subr.mxu0 0.0
    %4702 = vmatpush2.msra.mxu0 0.0
    %4703 = vmatprep.subr.mxu0 0.0
    %4704 = vmatpush2.msra.mxu0 0.0
    %4705 = vmatprep.subr.mxu0 0.0
    %4706 = vmatpush2.msra.mxu0 0.0
    %4707 = vmatprep.subr.mxu0 0.0
    %4708 = vmatpush2.msra.mxu0 0.0
    %4709 = vmatprep.mubr.f32.mxu0 0.0
    %4710 = vmatmul.mubr.f32.gmra.mxu0 %v4634
    %v4711 = vpop.f32.mrf.mxu0
    %v4712 = vadd.f32 0.0, %v4711
    %v4713 = vpop.f32.mrf.mxu0
    %4714 = vmatprep.mubr.f32.mxu0 0.0
    %4715 = vmatmul.mubr.f32.gmra.mxu0 %v4637
    %v4716 = vpop.f32.mrf.mxu0
    %v4717 = vadd.f32 0.0, %v4716
    %v4718 = vpop.f32.mrf.mxu0
    %4719 = vmatprep.mubr.f32.mxu0 0.0
    %4720 = vmatmul.mubr.f32.gmra.mxu0 %v4640
    %v4721 = vpop.f32.mrf.mxu0
    %v4722 = vpop.f32.mrf.mxu0
    %4723 = vmatprep.mubr.f32.mxu0 0.0
    %4724 = vmatmul.mubr.f32.gmra.mxu0 %v4643
    %v4725 = vpop.f32.mrf.mxu0
    %v4726 = vpop.f32.mrf.mxu0
    %4727 = vdwg.mxu0
    %v4728 = vmul.f32 %v520, %v4712
    %v4729 = vmul.f32 %v525, %v4717
    %v4730 = vmul.f32 %v543, %v4712
    %v4731 = vmul.f32 %v547, %v4717
    %4734 = vrot.lane.b32.xlu0 %v4730, 112
    %v4735 = vpop.permute.xlu0 %4734
    %4736 = vrot.lane.b32.xlu0 %v4731, 112
    %v4737 = vpop.permute.xlu0 %4736
    %v4740 = vadd.f32 %v4728, %v4735
    %v4741 = vadd.f32 %v4729, %v4737
    %v4742 = vld [vmem:[%s37] sm:$0x3]
    %v4744 = vsel %vm3472, %v4742, 0
    %4746 = vmatprep.subr.mxu0 0.0
    %4747 = vmatpush1.msra.mxu0 0.0
    %4748 = vmatprep.subr.mxu0 0.0
    %4749 = vmatpush1.msra.mxu0 0.0
    %4750 = vmatprep.subr.mxu0 0.0
    %4751 = vmatpush1.msra.mxu0 0.0
    %4752 = vmatprep.subr.mxu0 0.0
    %4753 = vmatpush1.msra.mxu0 0.0
    %4754 = vmatprep.subr.mxu0 0.0
    %4755 = vmatpush1.msra.mxu0 0.0
    %4756 = vmatprep.subr.mxu0 0.0
    %4757 = vmatpush1.msra.mxu0 0.0
    %4758 = vmatprep.subr.mxu0 0.0
    %4759 = vmatpush1.msra.mxu0 0.0
    %4760 = vmatprep.subr.mxu0 0.0
    %4761 = vmatpush1.msra.mxu0 0.0
    %4762 = vmatprep.subr.mxu0 0.0
    %4763 = vmatpush1.msra.mxu0 0.0
    %4764 = vmatprep.subr.mxu0 0.0
    %4765 = vmatpush1.msra.mxu0 0.0
    %4766 = vmatprep.subr.mxu0 0.0
    %4767 = vmatpush1.msra.mxu0 0.0
    %4768 = vmatprep.subr.mxu0 0.0
    %4769 = vmatpush1.msra.mxu0 0.0
    %4770 = vmatprep.subr.mxu0 0.0
    %4771 = vmatpush1.msra.mxu0 0.0
    %4772 = vmatprep.subr.mxu0 0.0
    %4773 = vmatpush1.msra.mxu0 0.0
    %4774 = vmatprep.subr.mxu0 0.0
    %4775 = vmatpush1.msra.mxu0 0.0
    %4776 = vmatprep.subr.mxu0 0.0
    %4777 = vmatpush1.msra.mxu0 %v4744
    %4778 = vmatprep.subr.mxu0 0.0
    %4779 = vmatpush2.msra.mxu0 0.0
    %4780 = vmatprep.subr.mxu0 0.0
    %4781 = vmatpush2.msra.mxu0 0.0
    %4782 = vmatprep.subr.mxu0 0.0
    %4783 = vmatpush2.msra.mxu0 0.0
    %4784 = vmatprep.subr.mxu0 0.0
    %4785 = vmatpush2.msra.mxu0 0.0
    %4786 = vmatprep.subr.mxu0 0.0
    %4787 = vmatpush2.msra.mxu0 0.0
    %4788 = vmatprep.subr.mxu0 0.0
    %4789 = vmatpush2.msra.mxu0 0.0
    %4790 = vmatprep.subr.mxu0 0.0
    %4791 = vmatpush2.msra.mxu0 0.0
    %4792 = vmatprep.subr.mxu0 0.0
    %4793 = vmatpush2.msra.mxu0 0.0
    %4794 = vmatprep.subr.mxu0 0.0
    %4795 = vmatpush2.msra.mxu0 0.0
    %4796 = vmatprep.subr.mxu0 0.0
    %4797 = vmatpush2.msra.mxu0 0.0
    %4798 = vmatprep.subr.mxu0 0.0
    %4799 = vmatpush2.msra.mxu0 0.0
    %4800 = vmatprep.subr.mxu0 0.0
    %4801 = vmatpush2.msra.mxu0 0.0
    %4802 = vmatprep.subr.mxu0 0.0
    %4803 = vmatpush2.msra.mxu0 0.0
    %4804 = vmatprep.subr.mxu0 0.0
    %4805 = vmatpush2.msra.mxu0 0.0
    %4806 = vmatprep.subr.mxu0 0.0
    %4807 = vmatpush2.msra.mxu0 0.0
    %4808 = vmatprep.subr.mxu0 0.0
    %4809 = vmatpush2.msra.mxu0 0.0
    %4810 = vmatprep.mubr.f32.mxu0 0.0
    %4811 = vmatmul.mubr.f32.gmra.mxu0 %v3464
    %v4812 = vpop.f32.mrf.mxu0
    %v4813 = vadd.f32 0.0, %v4812
    %v4814 = vpop.f32.mrf.mxu0
    %4815 = vmatprep.mubr.f32.mxu0 0.0
    %4816 = vmatmul.mubr.f32.gmra.mxu0 %v3466
    %v4817 = vpop.f32.mrf.mxu0
    %v4818 = vadd.f32 0.0, %v4817
    %v4819 = vpop.f32.mrf.mxu0
    %4820 = vmatprep.mubr.f32.mxu0 0.0
    %4821 = vmatmul.mubr.f32.gmra.mxu0 %v3468
    %v4822 = vpop.f32.mrf.mxu0
    %v4823 = vpop.f32.mrf.mxu0
    %4824 = vmatprep.mubr.f32.mxu0 0.0
    %4825 = vmatmul.mubr.f32.gmra.mxu0 %v3470
    %v4826 = vpop.f32.mrf.mxu0
    %v4827 = vpop.f32.mrf.mxu0
    %4828 = vdwg.mxu0
    %v4829 = vsub.f32 0.0, %v4813
    %v4830 = vsub.f32 0.0, %v4818
    %v4831 = vmul.f32 %v4829, 1.442695
    %v4832 = vpow.pop %v4831
    %v4833 = vmul.f32 %v4830, 1.442695
    %v4834 = vpow.pop %v4833
    %v4835 = vadd.f32 %v4832, 1.0
    %v4836 = vadd.f32 %v4834, 1.0
    %v4837 = vrcp.pop %v4835
    %v4838 = vmul.f32 1.0, %v4837
    %v4839 = vrcp.pop %v4836
    %v4840 = vmul.f32 1.0, %v4839
    %4842 = vset.pattern.permute.xlu0 0
    %4843 = vperm.xlu0 %4842, %v4838
    %v4844 = vpop.permute.xlu0 %4843
    %4847 = vset.pattern.permute.xlu0 0
    %4848 = vperm.xlu0 %4847, %v4840
    %v4849 = vpop.permute.xlu0 %4848
    %v4851 = vmul.f32 %v4740, %v4844
    %v4852 = vmul.f32 %v4741, %v4849
    %v4853 = vld [vmem:[%s7] sm:$0xff]
    %v4854 = vld [vmem:[%s7 + $0x8] sm:$0xff]
    %4855 = vst.msk [vmem:[#allocation2] sm:$0xff] %vm415, %v4853
    %4856 = vst.msk [vmem:[#allocation2 + $0x8] sm:$0xff] %vm415, %v4854
    %4859 = vrot.lane.b32.xlu0 %v4851, 32
    %v4860 = vpop.permute.xlu0 %4859
    %4861 = vrot.lane.b32.xlu0 %v4852, 32
    %v4862 = vpop.permute.xlu0 %4861
    %vm4865 = vcmask 392448
    %4866 = vst.msk [vmem:[#allocation2] sm:$0xff] %vm4865, %v4860
    %4867 = vst.msk [vmem:[#allocation2 + $0x8] sm:$0xff] %vm4865, %v4862
    %v4868 = vld [vmem:[#allocation7] sm:$0xff]
    %v4869 = vld [vmem:[#allocation7 + $0x8] sm:$0xff]
    %v4870 = vld [vmem:[#allocation10] sm:$0xff]
    %v4871 = vld [vmem:[#allocation10 + $0x8] sm:$0xff]
    %v4872 = vld [vmem:[#allocation10 + $0x10] sm:$0xff]
    %v4873 = vld [vmem:[#allocation11] sm:$0x1]
    %v4875 = vlaneseq
    %v4876 = vshrl.u32 %v4875, 7
    %v4877 = vsub.s32 0, %v4876
    %v4878 = vrot.slane %v4873, %v4877
    %vm4880 = vcmask 195584
    %v4882 = vsel %vm4880, %v4868, 0
    %v4885 = vsel %vm4880, %v4869, 0
    %4887 = vmatprep.subr.mxu0 0.0
    %4888 = vmatpush1.msra.mxu0 0.0
    %4889 = vmatprep.subr.mxu0 0.0
    %4890 = vmatpush1.msra.mxu0 0.0
    %4891 = vmatprep.subr.mxu0 0.0
    %4892 = vmatpush1.msra.mxu0 0.0
    %4893 = vmatprep.subr.mxu0 0.0
    %4894 = vmatpush1.msra.mxu0 0.0
    %4895 = vmatprep.subr.mxu0 0.0
    %4896 = vmatpush1.msra.mxu0 0.0
    %4897 = vmatprep.subr.mxu0 0.0
    %4898 = vmatpush1.msra.mxu0 0.0
    %4899 = vmatprep.subr.mxu0 0.0
    %4900 = vmatpush1.msra.mxu0 0.0
    %4901 = vmatprep.subr.mxu0 0.0
    %4902 = vmatpush1.msra.mxu0 0.0
    %4903 = vmatprep.subr.mxu0 0.0
    %4904 = vmatpush1.msra.mxu0 0.0
    %4905 = vmatprep.subr.mxu0 0.0
    %4906 = vmatpush1.msra.mxu0 0.0
    %4907 = vmatprep.subr.mxu0 0.0
    %4908 = vmatpush1.msra.mxu0 0.0
    %4909 = vmatprep.subr.mxu0 0.0
    %4910 = vmatpush1.msra.mxu0 0.0
    %4911 = vmatprep.subr.mxu0 0.0
    %4912 = vmatpush1.msra.mxu0 0.0
    %4913 = vmatprep.subr.mxu0 0.0
    %4914 = vmatpush1.msra.mxu0 %v4872
    %4915 = vmatprep.subr.mxu0 0.0
    %4916 = vmatpush1.msra.mxu0 %v4871
    %4917 = vmatprep.subr.mxu0 0.0
    %4918 = vmatpush1.msra.mxu0 %v4870
    %4919 = vmatprep.subr.mxu0 0.0
    %4920 = vmatpush2.msra.mxu0 0.0
    %4921 = vmatprep.subr.mxu0 0.0
    %4922 = vmatpush2.msra.mxu0 0.0
    %4923 = vmatprep.subr.mxu0 0.0
    %4924 = vmatpush2.msra.mxu0 0.0
    %4925 = vmatprep.subr.mxu0 0.0
    %4926 = vmatpush2.msra.mxu0 0.0
    %4927 = vmatprep.subr.mxu0 0.0
    %4928 = vmatpush2.msra.mxu0 0.0
    %4929 = vmatprep.subr.mxu0 0.0
    %4930 = vmatpush2.msra.mxu0 0.0
    %4931 = vmatprep.subr.mxu0 0.0
    %4932 = vmatpush2.msra.mxu0 0.0
    %4933 = vmatprep.subr.mxu0 0.0
    %4934 = vmatpush2.msra.mxu0 0.0
    %4935 = vmatprep.subr.mxu0 0.0
    %4936 = vmatpush2.msra.mxu0 0.0
    %4937 = vmatprep.subr.mxu0 0.0
    %4938 = vmatpush2.msra.mxu0 0.0
    %4939 = vmatprep.subr.mxu0 0.0
    %4940 = vmatpush2.msra.mxu0 0.0
    %4941 = vmatprep.subr.mxu0 0.0
    %4942 = vmatpush2.msra.mxu0 0.0
    %4943 = vmatprep.subr.mxu0 0.0
    %4944 = vmatpush2.msra.mxu0 0.0
    %4945 = vmatprep.subr.mxu0 0.0
    %4946 = vmatpush2.msra.mxu0 0.0
    %4947 = vmatprep.subr.mxu0 0.0
    %4948 = vmatpush2.msra.mxu0 0.0
    %4949 = vmatprep.subr.mxu0 0.0
    %4950 = vmatpush2.msra.mxu0 0.0
    %4951 = vmatprep.mubr.f32.mxu0 0.0
    %4952 = vmatmul.mubr.f32.gmra.mxu0 %v4882
    %v4953 = vpop.f32.mrf.mxu0
    %v4954 = vadd.f32 %v4878, %v4953
    %v4955 = vpop.f32.mrf.mxu0
    %4956 = vmatprep.mubr.f32.mxu0 0.0
    %4957 = vmatmul.mubr.f32.gmra.mxu0 %v4885
    %v4958 = vpop.f32.mrf.mxu0
    %v4959 = vadd.f32 %v4878, %v4958
    %v4960 = vpop.f32.mrf.mxu0
    %4961 = vdwg.mxu0
    %vm4962 = vcmask 392192
    %4963 = vst.msk [vmem:[#allocation2 + $0x10] sm:$0xff] %vm4962, %v4954
    %4964 = vst.msk [vmem:[#allocation2 + $0x18] sm:$0xff] %vm4962, %v4959
    %v4965 = vld [vmem:[#allocation2] sm:$0xff]
    %v4966 = vld [vmem:[#allocation2 + $0x8] sm:$0xff]
    %v4967 = vld [vmem:[#allocation2 + $0x10] sm:$0xff]
    %v4968 = vld [vmem:[#allocation2 + $0x18] sm:$0xff]
    %v4969 = vld [vmem:[%s11] sm:$0xff]
    %v4970 = vld [vmem:[%s11 + $0x8] sm:$0xff]
    %v4971 = vld [vmem:[%s11 + $0x10] sm:$0xff]
    %v4972 = vld [vmem:[%s11 + $0x18] sm:$0xff]
    %v4973 = vld [vmem:[#allocation8] sm:$0xff]
    %v4974 = vld [vmem:[#allocation8 + $0x8] sm:$0xff]
    %v4975 = vld [vmem:[#allocation8 + $0x10] sm:$0xff]
    %v4976 = vld [vmem:[#allocation8 + $0x18] sm:$0xff]
    %v4977 = vld [vmem:[#allocation8 + $0x20] sm:$0xff]
    %v4978 = vld [vmem:[#allocation8 + $0x28] sm:$0xff]
    %v4979 = vld [vmem:[#allocation8 + $0x30] sm:$0xff]
    %v4980 = vld [vmem:[#allocation8 + $0x38] sm:$0xff]
    %v4981 = vld [vmem:[%s39] sm:$0xff]
    %v4982 = vld [vmem:[%s39 + $0x8] sm:$0xff]
    %v4983 = vld [vmem:[%s39 + $0x10] sm:$0xff]
    %v4984 = vld [vmem:[%s39 + $0x18] sm:$0xff]
    %v4985 = vld [vmem:[%s39 + $0x20] sm:$0xff]
    %v4986 = vld [vmem:[%s39 + $0x28] sm:$0xff]
    %v4987 = vld [vmem:[%s39 + $0x30] sm:$0xff]
    %v4988 = vld [vmem:[%s39 + $0x38] sm:$0xff]
    %v4989 = vld [vmem:[%s39 + $0x40] sm:$0xff]
    %v4990 = vld [vmem:[%s39 + $0x48] sm:$0xff]
    %v4991 = vld [vmem:[%s39 + $0x50] sm:$0xff]
    %v4992 = vld [vmem:[%s39 + $0x58] sm:$0xff]
    %v4994 = vsel %vm4962, %v4965, 0
    %v4997 = vsel %vm4962, %v4966, 0
    %v5000 = vsel %vm4962, %v4967, 0
    %v5003 = vsel %vm4962, %v4968, 0
    %5005 = vmatprep.subr.mxu0 0.0
    %5006 = vmatpush1.msra.mxu0 0.0
    %5007 = vmatprep.subr.mxu0 0.0
    %5008 = vmatpush1.msra.mxu0 0.0
    %5009 = vmatprep.subr.mxu0 0.0
    %5010 = vmatpush1.msra.mxu0 0.0
    %5011 = vmatprep.subr.mxu0 0.0
    %5012 = vmatpush1.msra.mxu0 0.0
    %5013 = vmatprep.subr.mxu0 0.0
    %5014 = vmatpush1.msra.mxu0 0.0
    %5015 = vmatprep.subr.mxu0 0.0
    %5016 = vmatpush1.msra.mxu0 0.0
    %5017 = vmatprep.subr.mxu0 0.0
    %5018 = vmatpush1.msra.mxu0 0.0
    %5019 = vmatprep.subr.mxu0 0.0
    %5020 = vmatpush1.msra.mxu0 0.0
    %5021 = vmatprep.subr.mxu0 0.0
    %5022 = vmatpush1.msra.mxu0 0.0
    %5023 = vmatprep.subr.mxu0 0.0
    %5024 = vmatpush1.msra.mxu0 0.0
    %5025 = vmatprep.subr.mxu0 %v4992
    %5026 = vmatpush1.msra.mxu0 %v4991
    %5027 = vmatprep.subr.mxu0 %v4990
    %5028 = vmatpush1.msra.mxu0 %v4989
    %5029 = vmatprep.subr.mxu0 %v4988
    %5030 = vmatpush1.msra.mxu0 %v4987
    %5031 = vmatprep.subr.mxu0 %v4986
    %5032 = vmatpush1.msra.mxu0 %v4985
    %5033 = vmatprep.subr.mxu0 %v4984
    %5034 = vmatpush1.msra.mxu0 %v4983
    %5035 = vmatprep.subr.mxu0 %v4982
    %5036 = vmatpush1.msra.mxu0 %v4981
    %5037 = vmatprep.subr.mxu0 0.0
    %5038 = vmatpush2.msra.mxu0 0.0
    %5039 = vmatprep.subr.mxu0 0.0
    %5040 = vmatpush2.msra.mxu0 0.0
    %5041 = vmatprep.subr.mxu0 0.0
    %5042 = vmatpush2.msra.mxu0 0.0
    %5043 = vmatprep.subr.mxu0 0.0
    %5044 = vmatpush2.msra.mxu0 0.0
    %5045 = vmatprep.subr.mxu0 0.0
    %5046 = vmatpush2.msra.mxu0 0.0
    %5047 = vmatprep.subr.mxu0 0.0
    %5048 = vmatpush2.msra.mxu0 0.0
    %5049 = vmatprep.subr.mxu0 0.0
    %5050 = vmatpush2.msra.mxu0 0.0
    %5051 = vmatprep.subr.mxu0 0.0
    %5052 = vmatpush2.msra.mxu0 0.0
    %5053 = vmatprep.subr.mxu0 0.0
    %5054 = vmatpush2.msra.mxu0 0.0
    %5055 = vmatprep.subr.mxu0 0.0
    %5056 = vmatpush2.msra.mxu0 0.0
    %5057 = vmatprep.subr.mxu0 0.0
    %5058 = vmatpush2.msra.mxu0 0.0
    %5059 = vmatprep.subr.mxu0 0.0
    %5060 = vmatpush2.msra.mxu0 0.0
    %5061 = vmatprep.subr.mxu0 0.0
    %5062 = vmatpush2.msra.mxu0 0.0
    %5063 = vmatprep.subr.mxu0 0.0
    %5064 = vmatpush2.msra.mxu0 0.0
    %5065 = vmatprep.subr.mxu0 0.0
    %5066 = vmatpush2.msra.mxu0 0.0
    %5067 = vmatprep.subr.mxu0 0.0
    %5068 = vmatpush2.msra.mxu0 0.0
    %5069 = vmatprep.mubr.f32.mxu0 0.0
    %5070 = vmatmul.mubr.f32.gmra.mxu0 %v4994
    %v5071 = vpop.f32.mrf.mxu0
    %v5072 = vadd.f32 0.0, %v5071
    %v5073 = vpop.f32.mrf.mxu0
    %v5074 = vadd.f32 0.0, %v5073
    %5075 = vmatprep.mubr.f32.mxu0 0.0
    %5076 = vmatmul.mubr.f32.gmra.mxu0 %v4997
    %v5077 = vpop.f32.mrf.mxu0
    %v5078 = vadd.f32 0.0, %v5077
    %v5079 = vpop.f32.mrf.mxu0
    %v5080 = vadd.f32 0.0, %v5079
    %5081 = vmatprep.mubr.f32.mxu0 0.0
    %5082 = vmatmul.mubr.f32.gmra.mxu0 %v5000
    %v5083 = vpop.f32.mrf.mxu0
    %v5084 = vadd.f32 0.0, %v5083
    %v5085 = vpop.f32.mrf.mxu0
    %v5086 = vadd.f32 0.0, %v5085
    %5087 = vmatprep.mubr.f32.mxu0 0.0
    %5088 = vmatmul.mubr.f32.gmra.mxu0 %v5003
    %v5089 = vpop.f32.mrf.mxu0
    %v5090 = vadd.f32 0.0, %v5089
    %v5091 = vpop.f32.mrf.mxu0
    %v5092 = vadd.f32 0.0, %v5091
    %5093 = vdwg.mxu0
    %5095 = vset.pattern.permute.xlu0 0
    %5096 = vperm.xlu0 %5095, %v4969
    %v5097 = vpop.permute.xlu0 %5096
    %5100 = vset.pattern.permute.xlu0 0
    %5101 = vperm.xlu0 %5100, %v4970
    %v5102 = vpop.permute.xlu0 %5101
    %5105 = vset.pattern.permute.xlu0 0
    %5106 = vperm.xlu0 %5105, %v4971
    %v5107 = vpop.permute.xlu0 %5106
    %5110 = vset.pattern.permute.xlu0 0
    %5111 = vperm.xlu0 %5110, %v4972
    %v5112 = vpop.permute.xlu0 %5111
    %v5114 = vmul.f32 %v5097, %v5072
    %v5115 = vmul.f32 %v5102, %v5078
    %v5116 = vmul.f32 %v5107, %v5084
    %v5117 = vmul.f32 %v5112, %v5090
    %5118 = vset.pattern.permute.xlu0 1
    %5119 = vperm.xlu0 %5118, %v4969
    %v5120 = vpop.permute.xlu0 %5119
    %5122 = vset.pattern.permute.xlu0 1
    %5123 = vperm.xlu0 %5122, %v4970
    %v5124 = vpop.permute.xlu0 %5123
    %5126 = vset.pattern.permute.xlu0 1
    %5127 = vperm.xlu0 %5126, %v4971
    %v5128 = vpop.permute.xlu0 %5127
    %5130 = vset.pattern.permute.xlu0 1
    %5131 = vperm.xlu0 %5130, %v4972
    %v5132 = vpop.permute.xlu0 %5131
    %v5134 = vmul.f32 %v5120, %v5072
    %v5135 = vmul.f32 %v5120, %v5074
    %v5136 = vmul.f32 %v5124, %v5078
    %v5137 = vmul.f32 %v5124, %v5080
    %v5138 = vmul.f32 %v5128, %v5084
    %v5139 = vmul.f32 %v5128, %v5086
    %v5140 = vmul.f32 %v5132, %v5090
    %v5141 = vmul.f32 %v5132, %v5092
    %5150 = vrot.lane.b32.xlu0 %v5134, 32
    %v5151 = vpop.permute.xlu0 %5150
    %5152 = vrot.lane.b32.xlu0 %v5135, 32
    %v5153 = vpop.permute.xlu0 %5152
    %5154 = vrot.lane.b32.xlu0 %v5136, 32
    %v5155 = vpop.permute.xlu0 %5154
    %5156 = vrot.lane.b32.xlu0 %v5137, 32
    %v5157 = vpop.permute.xlu0 %5156
    %5158 = vrot.lane.b32.xlu0 %v5138, 32
    %v5159 = vpop.permute.xlu0 %5158
    %5160 = vrot.lane.b32.xlu0 %v5139, 32
    %v5161 = vpop.permute.xlu0 %5160
    %5162 = vrot.lane.b32.xlu0 %v5140, 32
    %v5163 = vpop.permute.xlu0 %5162
    %5164 = vrot.lane.b32.xlu0 %v5141, 32
    %v5165 = vpop.permute.xlu0 %5164
    %v5166 = vsel %vm415, %v5151, %v5153
    %v5167 = vsel %vm415, %v5155, %v5157
    %v5168 = vsel %vm415, %v5159, %v5161
    %v5169 = vsel %vm415, %v5163, %v5165
    %v5174 = vadd.f32 %v5114, %v5166
    %v5175 = vadd.f32 %v5115, %v5167
    %v5176 = vadd.f32 %v5116, %v5168
    %v5177 = vadd.f32 %v5117, %v5169
    %v5178 = vld [vmem:[#allocation25] sm:$0xff]
    %v5179 = vld [vmem:[#allocation25 + $0x8] sm:$0xff]
    %v5180 = vld [vmem:[#allocation25 + $0x10] sm:$0xff]
    %v5181 = vld [vmem:[#allocation25 + $0x18] sm:$0xff]
    %v5182 = vld [vmem:[#allocation25 + $0x20] sm:$0xff]
    %v5183 = vld [vmem:[#allocation25 + $0x28] sm:$0xff]
    %v5184 = vld [vmem:[#allocation25 + $0x30] sm:$0xff]
    %v5185 = vld [vmem:[#allocation25 + $0x38] sm:$0xff]
    %v5186 = vld [vmem:[#allocation26] sm:$0xff]
    %v5187 = vld [vmem:[#allocation26 + $0x8] sm:$0xff]
    %v5188 = vld [vmem:[#allocation26 + $0x10] sm:$0xff]
    %v5189 = vld [vmem:[#allocation26 + $0x18] sm:$0xff]
    %v5190 = vld [vmem:[#allocation26 + $0x20] sm:$0xff]
    %v5191 = vld [vmem:[#allocation26 + $0x28] sm:$0xff]
    %v5192 = vld [vmem:[#allocation26 + $0x30] sm:$0xff]
    %v5193 = vld [vmem:[#allocation26 + $0x38] sm:$0xff]
    %v5195 = vsel %vm415, %v5174, 0
    %v5198 = vsel %vm415, %v5175, 0
    %v5201 = vsel %vm415, %v5176, 0
    %v5204 = vsel %vm415, %v5177, 0
    %5206 = vmatprep.subr.mxu0 0.0
    %5207 = vmatpush1.msra.mxu0 0.0
    %5208 = vmatprep.subr.mxu0 0.0
    %5209 = vmatpush1.msra.mxu0 0.0
    %5210 = vmatprep.subr.mxu0 0.0
    %5211 = vmatpush1.msra.mxu0 0.0
    %5212 = vmatprep.subr.mxu0 0.0
    %5213 = vmatpush1.msra.mxu0 0.0
    %5214 = vmatprep.subr.mxu0 0.0
    %5215 = vmatpush1.msra.mxu0 0.0
    %5216 = vmatprep.subr.mxu0 0.0
    %5217 = vmatpush1.msra.mxu0 0.0
    %5218 = vmatprep.subr.mxu0 0.0
    %5219 = vmatpush1.msra.mxu0 0.0
    %5220 = vmatprep.subr.mxu0 0.0
    %5221 = vmatpush1.msra.mxu0 0.0
    %5222 = vmatprep.subr.mxu0 0.0
    %5223 = vmatpush1.msra.mxu0 0.0
    %5224 = vmatprep.subr.mxu0 0.0
    %5225 = vmatpush1.msra.mxu0 0.0
    %5226 = vmatprep.subr.mxu0 0.0
    %5227 = vmatpush1.msra.mxu0 0.0
    %5228 = vmatprep.subr.mxu0 0.0
    %5229 = vmatpush1.msra.mxu0 0.0
    %5230 = vmatprep.subr.mxu0 0.0
    %5231 = vmatpush1.msra.mxu0 %v5181
    %5232 = vmatprep.subr.mxu0 0.0
    %5233 = vmatpush1.msra.mxu0 %v5180
    %5234 = vmatprep.subr.mxu0 0.0
    %5235 = vmatpush1.msra.mxu0 %v5179
    %5236 = vmatprep.subr.mxu0 0.0
    %5237 = vmatpush1.msra.mxu0 %v5178
    %5238 = vmatprep.subr.mxu0 0.0
    %5239 = vmatpush2.msra.mxu0 0.0
    %5240 = vmatprep.subr.mxu0 0.0
    %5241 = vmatpush2.msra.mxu0 0.0
    %5242 = vmatprep.subr.mxu0 0.0
    %5243 = vmatpush2.msra.mxu0 0.0
    %5244 = vmatprep.subr.mxu0 0.0
    %5245 = vmatpush2.msra.mxu0 0.0
    %5246 = vmatprep.subr.mxu0 0.0
    %5247 = vmatpush2.msra.mxu0 0.0
    %5248 = vmatprep.subr.mxu0 0.0
    %5249 = vmatpush2.msra.mxu0 0.0
    %5250 = vmatprep.subr.mxu0 0.0
    %5251 = vmatpush2.msra.mxu0 0.0
    %5252 = vmatprep.subr.mxu0 0.0
    %5253 = vmatpush2.msra.mxu0 0.0
    %5254 = vmatprep.subr.mxu0 0.0
    %5255 = vmatpush2.msra.mxu0 0.0
    %5256 = vmatprep.subr.mxu0 0.0
    %5257 = vmatpush2.msra.mxu0 0.0
    %5258 = vmatprep.subr.mxu0 0.0
    %5259 = vmatpush2.msra.mxu0 0.0
    %5260 = vmatprep.subr.mxu0 0.0
    %5261 = vmatpush2.msra.mxu0 0.0
    %5262 = vmatprep.subr.mxu0 0.0
    %5263 = vmatpush2.msra.mxu0 0.0
    %5264 = vmatprep.subr.mxu0 0.0
    %5265 = vmatpush2.msra.mxu0 0.0
    %5266 = vmatprep.subr.mxu0 0.0
    %5267 = vmatpush2.msra.mxu0 0.0
    %5268 = vmatprep.subr.mxu0 0.0
    %5269 = vmatpush2.msra.mxu0 0.0
    %5270 = vmatprep.mubr.f32.mxu0 0.0
    %5271 = vmatmul.mubr.f32.gmra.mxu0 %v5195
    %v5272 = vpop.f32.mrf.mxu0
    %v5273 = vadd.f32 0.0, %v5272
    %v5274 = vpop.f32.mrf.mxu0
    %5275 = vmatprep.mubr.f32.mxu0 0.0
    %5276 = vmatmul.mubr.f32.gmra.mxu0 %v5198
    %v5277 = vpop.f32.mrf.mxu0
    %v5278 = vadd.f32 0.0, %v5277
    %v5279 = vpop.f32.mrf.mxu0
    %5280 = vmatprep.mubr.f32.mxu0 0.0
    %5281 = vmatmul.mubr.f32.gmra.mxu0 %v5201
    %v5282 = vpop.f32.mrf.mxu0
    %v5283 = vadd.f32 0.0, %v5282
    %v5284 = vpop.f32.mrf.mxu0
    %5285 = vmatprep.mubr.f32.mxu0 0.0
    %5286 = vmatmul.mubr.f32.gmra.mxu0 %v5204
    %v5287 = vpop.f32.mrf.mxu0
    %v5288 = vadd.f32 0.0, %v5287
    %v5289 = vpop.f32.mrf.mxu0
    %5290 = vdwg.mxu0
    %5291 = vrot.lane.b32.xlu0 %v5174, 64
    %v5292 = vpop.permute.xlu0 %5291
    %5293 = vrot.lane.b32.xlu0 %v5175, 64
    %v5294 = vpop.permute.xlu0 %5293
    %5295 = vrot.lane.b32.xlu0 %v5176, 64
    %v5296 = vpop.permute.xlu0 %5295
    %5297 = vrot.lane.b32.xlu0 %v5177, 64
    %v5298 = vpop.permute.xlu0 %5297
    %v5299 = vsel %vm415, %v5292, 0
    %v5301 = vsel %vm415, %v5294, 0
    %v5303 = vsel %vm415, %v5296, 0
    %v5305 = vsel %vm415, %v5298, 0
    %5307 = vmatprep.subr.mxu0 0.0
    %5308 = vmatpush1.msra.mxu0 0.0
    %5309 = vmatprep.subr.mxu0 0.0
    %5310 = vmatpush1.msra.mxu0 0.0
    %5311 = vmatprep.subr.mxu0 0.0
    %5312 = vmatpush1.msra.mxu0 0.0
    %5313 = vmatprep.subr.mxu0 0.0
    %5314 = vmatpush1.msra.mxu0 0.0
    %5315 = vmatprep.subr.mxu0 0.0
    %5316 = vmatpush1.msra.mxu0 0.0
    %5317 = vmatprep.subr.mxu0 0.0
    %5318 = vmatpush1.msra.mxu0 0.0
    %5319 = vmatprep.subr.mxu0 0.0
    %5320 = vmatpush1.msra.mxu0 0.0
    %5321 = vmatprep.subr.mxu0 0.0
    %5322 = vmatpush1.msra.mxu0 0.0
    %5323 = vmatprep.subr.mxu0 0.0
    %5324 = vmatpush1.msra.mxu0 0.0
    %5325 = vmatprep.subr.mxu0 0.0
    %5326 = vmatpush1.msra.mxu0 0.0
    %5327 = vmatprep.subr.mxu0 0.0
    %5328 = vmatpush1.msra.mxu0 0.0
    %5329 = vmatprep.subr.mxu0 0.0
    %5330 = vmatpush1.msra.mxu0 0.0
    %5331 = vmatprep.subr.mxu0 0.0
    %5332 = vmatpush1.msra.mxu0 %v5189
    %5333 = vmatprep.subr.mxu0 0.0
    %5334 = vmatpush1.msra.mxu0 %v5188
    %5335 = vmatprep.subr.mxu0 0.0
    %5336 = vmatpush1.msra.mxu0 %v5187
    %5337 = vmatprep.subr.mxu0 0.0
    %5338 = vmatpush1.msra.mxu0 %v5186
    %5339 = vmatprep.subr.mxu0 0.0
    %5340 = vmatpush2.msra.mxu0 0.0
    %5341 = vmatprep.subr.mxu0 0.0
    %5342 = vmatpush2.msra.mxu0 0.0
    %5343 = vmatprep.subr.mxu0 0.0
    %5344 = vmatpush2.msra.mxu0 0.0
    %5345 = vmatprep.subr.mxu0 0.0
    %5346 = vmatpush2.msra.mxu0 0.0
    %5347 = vmatprep.subr.mxu0 0.0
    %5348 = vmatpush2.msra.mxu0 0.0
    %5349 = vmatprep.subr.mxu0 0.0
    %5350 = vmatpush2.msra.mxu0 0.0
    %5351 = vmatprep.subr.mxu0 0.0
    %5352 = vmatpush2.msra.mxu0 0.0
    %5353 = vmatprep.subr.mxu0 0.0
    %5354 = vmatpush2.msra.mxu0 0.0
    %5355 = vmatprep.subr.mxu0 0.0
    %5356 = vmatpush2.msra.mxu0 0.0
    %5357 = vmatprep.subr.mxu0 0.0
    %5358 = vmatpush2.msra.mxu0 0.0
    %5359 = vmatprep.subr.mxu0 0.0
    %5360 = vmatpush2.msra.mxu0 0.0
    %5361 = vmatprep.subr.mxu0 0.0
    %5362 = vmatpush2.msra.mxu0 0.0
    %5363 = vmatprep.subr.mxu0 0.0
    %5364 = vmatpush2.msra.mxu0 0.0
    %5365 = vmatprep.subr.mxu0 0.0
    %5366 = vmatpush2.msra.mxu0 0.0
    %5367 = vmatprep.subr.mxu0 0.0
    %5368 = vmatpush2.msra.mxu0 0.0
    %5369 = vmatprep.subr.mxu0 0.0
    %5370 = vmatpush2.msra.mxu0 0.0
    %5371 = vmatprep.mubr.f32.mxu0 0.0
    %5372 = vmatmul.mubr.f32.gmra.mxu0 %v5299
    %v5373 = vpop.f32.mrf.mxu0
    %v5374 = vadd.f32 0.0, %v5373
    %v5375 = vpop.f32.mrf.mxu0
    %5376 = vmatprep.mubr.f32.mxu0 0.0
    %5377 = vmatmul.mubr.f32.gmra.mxu0 %v5301
    %v5378 = vpop.f32.mrf.mxu0
    %v5379 = vadd.f32 0.0, %v5378
    %v5380 = vpop.f32.mrf.mxu0
    %5381 = vmatprep.mubr.f32.mxu0 0.0
    %5382 = vmatmul.mubr.f32.gmra.mxu0 %v5303
    %v5383 = vpop.f32.mrf.mxu0
    %v5384 = vadd.f32 0.0, %v5383
    %v5385 = vpop.f32.mrf.mxu0
    %5386 = vmatprep.mubr.f32.mxu0 0.0
    %5387 = vmatmul.mubr.f32.gmra.mxu0 %v5305
    %v5388 = vpop.f32.mrf.mxu0
    %v5389 = vadd.f32 0.0, %v5388
    %v5390 = vpop.f32.mrf.mxu0
    %5391 = vdwg.mxu0
    %5392 = vmatprep.subr.mxu0 0.0
    %5393 = vmatpush1.msra.mxu0 0.0
    %5394 = vmatprep.subr.mxu0 0.0
    %5395 = vmatpush1.msra.mxu0 0.0
    %5396 = vmatprep.subr.mxu0 0.0
    %5397 = vmatpush1.msra.mxu0 0.0
    %5398 = vmatprep.subr.mxu0 0.0
    %5399 = vmatpush1.msra.mxu0 0.0
    %5400 = vmatprep.subr.mxu0 0.0
    %5401 = vmatpush1.msra.mxu0 0.0
    %5402 = vmatprep.subr.mxu0 0.0
    %5403 = vmatpush1.msra.mxu0 0.0
    %5404 = vmatprep.subr.mxu0 0.0
    %5405 = vmatpush1.msra.mxu0 0.0
    %5406 = vmatprep.subr.mxu0 0.0
    %5407 = vmatpush1.msra.mxu0 0.0
    %5408 = vmatprep.subr.mxu0 0.0
    %5409 = vmatpush1.msra.mxu0 0.0
    %5410 = vmatprep.subr.mxu0 0.0
    %5411 = vmatpush1.msra.mxu0 0.0
    %5412 = vmatprep.subr.mxu0 0.0
    %5413 = vmatpush1.msra.mxu0 0.0
    %5414 = vmatprep.subr.mxu0 0.0
    %5415 = vmatpush1.msra.mxu0 0.0
    %5416 = vmatprep.subr.mxu0 0.0
    %5417 = vmatpush1.msra.mxu0 %v5185
    %5418 = vmatprep.subr.mxu0 0.0
    %5419 = vmatpush1.msra.mxu0 %v5184
    %5420 = vmatprep.subr.mxu0 0.0
    %5421 = vmatpush1.msra.mxu0 %v5183
    %5422 = vmatprep.subr.mxu0 0.0
    %5423 = vmatpush1.msra.mxu0 %v5182
    %5424 = vmatprep.subr.mxu0 0.0
    %5425 = vmatpush2.msra.mxu0 0.0
    %5426 = vmatprep.subr.mxu0 0.0
    %5427 = vmatpush2.msra.mxu0 0.0
    %5428 = vmatprep.subr.mxu0 0.0
    %5429 = vmatpush2.msra.mxu0 0.0
    %5430 = vmatprep.subr.mxu0 0.0
    %5431 = vmatpush2.msra.mxu0 0.0
    %5432 = vmatprep.subr.mxu0 0.0
    %5433 = vmatpush2.msra.mxu0 0.0
    %5434 = vmatprep.subr.mxu0 0.0
    %5435 = vmatpush2.msra.mxu0 0.0
    %5436 = vmatprep.subr.mxu0 0.0
    %5437 = vmatpush2.msra.mxu0 0.0
    %5438 = vmatprep.subr.mxu0 0.0
    %5439 = vmatpush2.msra.mxu0 0.0
    %5440 = vmatprep.subr.mxu0 0.0
    %5441 = vmatpush2.msra.mxu0 0.0
    %5442 = vmatprep.subr.mxu0 0.0
    %5443 = vmatpush2.msra.mxu0 0.0
    %5444 = vmatprep.subr.mxu0 0.0
    %5445 = vmatpush2.msra.mxu0 0.0
    %5446 = vmatprep.subr.mxu0 0.0
    %5447 = vmatpush2.msra.mxu0 0.0
    %5448 = vmatprep.subr.mxu0 0.0
    %5449 = vmatpush2.msra.mxu0 0.0
    %5450 = vmatprep.subr.mxu0 0.0
    %5451 = vmatpush2.msra.mxu0 0.0
    %5452 = vmatprep.subr.mxu0 0.0
    %5453 = vmatpush2.msra.mxu0 0.0
    %5454 = vmatprep.subr.mxu0 0.0
    %5455 = vmatpush2.msra.mxu0 0.0
    %5456 = vmatprep.mubr.f32.mxu0 0.0
    %5457 = vmatmul.mubr.f32.gmra.mxu0 %v5195
    %v5458 = vpop.f32.mrf.mxu0
    %v5459 = vadd.f32 0.0, %v5458
    %v5460 = vpop.f32.mrf.mxu0
    %5461 = vmatprep.mubr.f32.mxu0 0.0
    %5462 = vmatmul.mubr.f32.gmra.mxu0 %v5198
    %v5463 = vpop.f32.mrf.mxu0
    %v5464 = vadd.f32 0.0, %v5463
    %v5465 = vpop.f32.mrf.mxu0
    %5466 = vmatprep.mubr.f32.mxu0 0.0
    %5467 = vmatmul.mubr.f32.gmra.mxu0 %v5201
    %v5468 = vpop.f32.mrf.mxu0
    %v5469 = vadd.f32 0.0, %v5468
    %v5470 = vpop.f32.mrf.mxu0
    %5471 = vmatprep.mubr.f32.mxu0 0.0
    %5472 = vmatmul.mubr.f32.gmra.mxu0 %v5204
    %v5473 = vpop.f32.mrf.mxu0
    %v5474 = vadd.f32 0.0, %v5473
    %v5475 = vpop.f32.mrf.mxu0
    %5476 = vdwg.mxu0
    %5477 = vmatprep.subr.mxu0 0.0
    %5478 = vmatpush1.msra.mxu0 0.0
    %5479 = vmatprep.subr.mxu0 0.0
    %5480 = vmatpush1.msra.mxu0 0.0
    %5481 = vmatprep.subr.mxu0 0.0
    %5482 = vmatpush1.msra.mxu0 0.0
    %5483 = vmatprep.subr.mxu0 0.0
    %5484 = vmatpush1.msra.mxu0 0.0
    %5485 = vmatprep.subr.mxu0 0.0
    %5486 = vmatpush1.msra.mxu0 0.0
    %5487 = vmatprep.subr.mxu0 0.0
    %5488 = vmatpush1.msra.mxu0 0.0
    %5489 = vmatprep.subr.mxu0 0.0
    %5490 = vmatpush1.msra.mxu0 0.0
    %5491 = vmatprep.subr.mxu0 0.0
    %5492 = vmatpush1.msra.mxu0 0.0
    %5493 = vmatprep.subr.mxu0 0.0
    %5494 = vmatpush1.msra.mxu0 0.0
    %5495 = vmatprep.subr.mxu0 0.0
    %5496 = vmatpush1.msra.mxu0 0.0
    %5497 = vmatprep.subr.mxu0 0.0
    %5498 = vmatpush1.msra.mxu0 0.0
    %5499 = vmatprep.subr.mxu0 0.0
    %5500 = vmatpush1.msra.mxu0 0.0
    %5501 = vmatprep.subr.mxu0 0.0
    %5502 = vmatpush1.msra.mxu0 %v5193
    %5503 = vmatprep.subr.mxu0 0.0
    %5504 = vmatpush1.msra.mxu0 %v5192
    %5505 = vmatprep.subr.mxu0 0.0
    %5506 = vmatpush1.msra.mxu0 %v5191
    %5507 = vmatprep.subr.mxu0 0.0
    %5508 = vmatpush1.msra.mxu0 %v5190
    %5509 = vmatprep.subr.mxu0 0.0
    %5510 = vmatpush2.msra.mxu0 0.0
    %5511 = vmatprep.subr.mxu0 0.0
    %5512 = vmatpush2.msra.mxu0 0.0
    %5513 = vmatprep.subr.mxu0 0.0
    %5514 = vmatpush2.msra.mxu0 0.0
    %5515 = vmatprep.subr.mxu0 0.0
    %5516 = vmatpush2.msra.mxu0 0.0
    %5517 = vmatprep.subr.mxu0 0.0
    %5518 = vmatpush2.msra.mxu0 0.0
    %5519 = vmatprep.subr.mxu0 0.0
    %5520 = vmatpush2.msra.mxu0 0.0
    %5521 = vmatprep.subr.mxu0 0.0
    %5522 = vmatpush2.msra.mxu0 0.0
    %5523 = vmatprep.subr.mxu0 0.0
    %5524 = vmatpush2.msra.mxu0 0.0
    %5525 = vmatprep.subr.mxu0 0.0
    %5526 = vmatpush2.msra.mxu0 0.0
    %5527 = vmatprep.subr.mxu0 0.0
    %5528 = vmatpush2.msra.mxu0 0.0
    %5529 = vmatprep.subr.mxu0 0.0
    %5530 = vmatpush2.msra.mxu0 0.0
    %5531 = vmatprep.subr.mxu0 0.0
    %5532 = vmatpush2.msra.mxu0 0.0
    %5533 = vmatprep.subr.mxu0 0.0
    %5534 = vmatpush2.msra.mxu0 0.0
    %5535 = vmatprep.subr.mxu0 0.0
    %5536 = vmatpush2.msra.mxu0 0.0
    %5537 = vmatprep.subr.mxu0 0.0
    %5538 = vmatpush2.msra.mxu0 0.0
    %5539 = vmatprep.subr.mxu0 0.0
    %5540 = vmatpush2.msra.mxu0 0.0
    %5541 = vmatprep.mubr.f32.mxu0 0.0
    %5542 = vmatmul.mubr.f32.gmra.mxu0 %v5299
    %v5543 = vpop.f32.mrf.mxu0
    %v5544 = vadd.f32 0.0, %v5543
    %v5545 = vpop.f32.mrf.mxu0
    %5546 = vmatprep.mubr.f32.mxu0 0.0
    %5547 = vmatmul.mubr.f32.gmra.mxu0 %v5301
    %v5548 = vpop.f32.mrf.mxu0
    %v5549 = vadd.f32 0.0, %v5548
    %v5550 = vpop.f32.mrf.mxu0
    %5551 = vmatprep.mubr.f32.mxu0 0.0
    %5552 = vmatmul.mubr.f32.gmra.mxu0 %v5303
    %v5553 = vpop.f32.mrf.mxu0
    %v5554 = vadd.f32 0.0, %v5553
    %v5555 = vpop.f32.mrf.mxu0
    %5556 = vmatprep.mubr.f32.mxu0 0.0
    %5557 = vmatmul.mubr.f32.gmra.mxu0 %v5305
    %v5558 = vpop.f32.mrf.mxu0
    %v5559 = vadd.f32 0.0, %v5558
    %v5560 = vpop.f32.mrf.mxu0
    %5561 = vdwg.mxu0
    %v5562 = vadd.f32 %v4973, %v4977
    %v5563 = vadd.f32 %v4974, %v4978
    %v5564 = vadd.f32 %v4975, %v4979
    %v5565 = vadd.f32 %v4976, %v4980
    %vm5566 = vcmp.gt.f32.partialorder %v5562, 0.0
    %vm5567 = vcmp.gt.f32.partialorder %v5563, 0.0
    %vm5568 = vcmp.gt.f32.partialorder %v5564, 0.0
    %vm5569 = vcmp.gt.f32.partialorder %v5565, 0.0
    %v5570 = vld [vmem:[#allocation28] sm:$0xff]
    %v5571 = vld [vmem:[#allocation28 + $0x8] sm:$0xff]
    %v5572 = vld [vmem:[#allocation28 + $0x10] sm:$0xff]
    %v5573 = vld [vmem:[#allocation28 + $0x18] sm:$0xff]
    %5574 = vrot.lane.b32.xlu0 %v5174, 96
    %v5575 = vpop.permute.xlu0 %5574
    %5576 = vrot.lane.b32.xlu0 %v5175, 96
    %v5577 = vpop.permute.xlu0 %5576
    %5578 = vrot.lane.b32.xlu0 %v5176, 96
    %v5579 = vpop.permute.xlu0 %5578
    %5580 = vrot.lane.b32.xlu0 %v5177, 96
    %v5581 = vpop.permute.xlu0 %5580
    %v5582 = vsel %vm1005, %v5575, 0
    %v5584 = vsel %vm1005, %v5577, 0
    %v5586 = vsel %vm1005, %v5579, 0
    %v5588 = vsel %vm1005, %v5581, 0
    %v5591 = vsel %vm1005, %v5273, 0
    %v5594 = vsel %vm1005, %v5278, 0
    %v5597 = vsel %vm1005, %v5283, 0
    %v5600 = vsel %vm1005, %v5288, 0
    %5602 = vmatprep.subr.mxu0 0.0
    %5603 = vmatpush1.xpose.msra.mxu0 0.0
    %5604 = vmatprep.subr.mxu0 0.0
    %5605 = vmatpush1.xpose.msra.mxu0 0.0
    %5606 = vmatprep.subr.mxu0 0.0
    %5607 = vmatpush1.xpose.msra.mxu0 0.0
    %5608 = vmatprep.subr.mxu0 0.0
    %5609 = vmatpush1.xpose.msra.mxu0 0.0
    %5610 = vmatprep.subr.mxu0 0.0
    %5611 = vmatpush1.xpose.msra.mxu0 0.0
    %5612 = vmatprep.subr.mxu0 0.0
    %5613 = vmatpush1.xpose.msra.mxu0 0.0
    %5614 = vmatprep.subr.mxu0 0.0
    %5615 = vmatpush1.xpose.msra.mxu0 0.0
    %5616 = vmatprep.subr.mxu0 0.0
    %5617 = vmatpush1.xpose.msra.mxu0 0.0
    %5618 = vmatprep.subr.mxu0 0.0
    %5619 = vmatpush1.xpose.msra.mxu0 0.0
    %5620 = vmatprep.subr.mxu0 0.0
    %5621 = vmatpush1.xpose.msra.mxu0 0.0
    %5622 = vmatprep.subr.mxu0 0.0
    %5623 = vmatpush1.xpose.msra.mxu0 0.0
    %5624 = vmatprep.subr.mxu0 0.0
    %5625 = vmatpush1.xpose.msra.mxu0 0.0
    %5626 = vmatprep.subr.mxu0 0.0
    %5627 = vmatpush1.xpose.msra.mxu0 %v5600
    %5628 = vmatprep.subr.mxu0 0.0
    %5629 = vmatpush1.xpose.msra.mxu0 %v5597
    %5630 = vmatprep.subr.mxu0 0.0
    %5631 = vmatpush1.xpose.msra.mxu0 %v5594
    %5632 = vmatprep.subr.mxu0 0.0
    %5633 = vmatpush1.xpose.msra.mxu0 %v5591
    %5634 = vmatprep.subr.mxu0 0.0
    %5635 = vmatpush2.xpose.msra.mxu0 0.0
    %5636 = vmatprep.subr.mxu0 0.0
    %5637 = vmatpush2.xpose.msra.mxu0 0.0
    %5638 = vmatprep.subr.mxu0 0.0
    %5639 = vmatpush2.xpose.msra.mxu0 0.0
    %5640 = vmatprep.subr.mxu0 0.0
    %5641 = vmatpush2.xpose.msra.mxu0 0.0
    %5642 = vmatprep.subr.mxu0 0.0
    %5643 = vmatpush2.xpose.msra.mxu0 0.0
    %5644 = vmatprep.subr.mxu0 0.0
    %5645 = vmatpush2.xpose.msra.mxu0 0.0
    %5646 = vmatprep.subr.mxu0 0.0
    %5647 = vmatpush2.xpose.msra.mxu0 0.0
    %5648 = vmatprep.subr.mxu0 0.0
    %5649 = vmatpush2.xpose.msra.mxu0 0.0
    %5650 = vmatprep.subr.mxu0 0.0
    %5651 = vmatpush2.xpose.msra.mxu0 0.0
    %5652 = vmatprep.subr.mxu0 0.0
    %5653 = vmatpush2.xpose.msra.mxu0 0.0
    %5654 = vmatprep.subr.mxu0 0.0
    %5655 = vmatpush2.xpose.msra.mxu0 0.0
    %5656 = vmatprep.subr.mxu0 0.0
    %5657 = vmatpush2.xpose.msra.mxu0 0.0
    %5658 = vmatprep.subr.mxu0 0.0
    %5659 = vmatpush2.xpose.msra.mxu0 0.0
    %5660 = vmatprep.subr.mxu0 0.0
    %5661 = vmatpush2.xpose.msra.mxu0 0.0
    %5662 = vmatprep.subr.mxu0 0.0
    %5663 = vmatpush2.xpose.msra.mxu0 0.0
    %5664 = vmatprep.subr.mxu0 0.0
    %5665 = vmatpush2.xpose.msra.mxu0 0.0
    %5666 = vmatprep.mubr.f32.mxu0 0.0
    %5667 = vmatmul.mubr.f32.gmra.mxu0 %v5582
    %v5668 = vpop.f32.mrf.mxu0
    %v5669 = vadd.f32 0.0, %v5668
    %v5670 = vpop.f32.mrf.mxu0
    %5671 = vmatprep.mubr.f32.mxu0 0.0
    %5672 = vmatmul.mubr.f32.gmra.mxu0 %v5584
    %v5673 = vpop.f32.mrf.mxu0
    %v5674 = vadd.f32 0.0, %v5673
    %v5675 = vpop.f32.mrf.mxu0
    %5676 = vmatprep.mubr.f32.mxu0 0.0
    %5677 = vmatmul.mubr.f32.gmra.mxu0 %v5586
    %v5678 = vpop.f32.mrf.mxu0
    %v5679 = vadd.f32 0.0, %v5678
    %v5680 = vpop.f32.mrf.mxu0
    %5681 = vmatprep.mubr.f32.mxu0 0.0
    %5682 = vmatmul.mubr.f32.gmra.mxu0 %v5588
    %v5683 = vpop.f32.mrf.mxu0
    %v5684 = vadd.f32 0.0, %v5683
    %v5685 = vpop.f32.mrf.mxu0
    %5686 = vdwg.mxu0
    %v5687 = vmul.f32 %v4973, %v5669
    %v5688 = vmul.f32 %v4974, %v5674
    %v5689 = vmul.f32 %v4975, %v5679
    %v5690 = vmul.f32 %v4976, %v5684
    %v5692 = vsel %vm1005, %v5459, 0
    %v5695 = vsel %vm1005, %v5464, 0
    %v5698 = vsel %vm1005, %v5469, 0
    %v5701 = vsel %vm1005, %v5474, 0
    %5703 = vmatprep.subr.mxu0 0.0
    %5704 = vmatpush1.xpose.msra.mxu0 0.0
    %5705 = vmatprep.subr.mxu0 0.0
    %5706 = vmatpush1.xpose.msra.mxu0 0.0
    %5707 = vmatprep.subr.mxu0 0.0
    %5708 = vmatpush1.xpose.msra.mxu0 0.0
    %5709 = vmatprep.subr.mxu0 0.0
    %5710 = vmatpush1.xpose.msra.mxu0 0.0
    %5711 = vmatprep.subr.mxu0 0.0
    %5712 = vmatpush1.xpose.msra.mxu0 0.0
    %5713 = vmatprep.subr.mxu0 0.0
    %5714 = vmatpush1.xpose.msra.mxu0 0.0
    %5715 = vmatprep.subr.mxu0 0.0
    %5716 = vmatpush1.xpose.msra.mxu0 0.0
    %5717 = vmatprep.subr.mxu0 0.0
    %5718 = vmatpush1.xpose.msra.mxu0 0.0
    %5719 = vmatprep.subr.mxu0 0.0
    %5720 = vmatpush1.xpose.msra.mxu0 0.0
    %5721 = vmatprep.subr.mxu0 0.0
    %5722 = vmatpush1.xpose.msra.mxu0 0.0
    %5723 = vmatprep.subr.mxu0 0.0
    %5724 = vmatpush1.xpose.msra.mxu0 0.0
    %5725 = vmatprep.subr.mxu0 0.0
    %5726 = vmatpush1.xpose.msra.mxu0 0.0
    %5727 = vmatprep.subr.mxu0 0.0
    %5728 = vmatpush1.xpose.msra.mxu0 %v5701
    %5729 = vmatprep.subr.mxu0 0.0
    %5730 = vmatpush1.xpose.msra.mxu0 %v5698
    %5731 = vmatprep.subr.mxu0 0.0
    %5732 = vmatpush1.xpose.msra.mxu0 %v5695
    %5733 = vmatprep.subr.mxu0 0.0
    %5734 = vmatpush1.xpose.msra.mxu0 %v5692
    %5735 = vmatprep.subr.mxu0 0.0
    %5736 = vmatpush2.xpose.msra.mxu0 0.0
    %5737 = vmatprep.subr.mxu0 0.0
    %5738 = vmatpush2.xpose.msra.mxu0 0.0
    %5739 = vmatprep.subr.mxu0 0.0
    %5740 = vmatpush2.xpose.msra.mxu0 0.0
    %5741 = vmatprep.subr.mxu0 0.0
    %5742 = vmatpush2.xpose.msra.mxu0 0.0
    %5743 = vmatprep.subr.mxu0 0.0
    %5744 = vmatpush2.xpose.msra.mxu0 0.0
    %5745 = vmatprep.subr.mxu0 0.0
    %5746 = vmatpush2.xpose.msra.mxu0 0.0
    %5747 = vmatprep.subr.mxu0 0.0
    %5748 = vmatpush2.xpose.msra.mxu0 0.0
    %5749 = vmatprep.subr.mxu0 0.0
    %5750 = vmatpush2.xpose.msra.mxu0 0.0
    %5751 = vmatprep.subr.mxu0 0.0
    %5752 = vmatpush2.xpose.msra.mxu0 0.0
    %5753 = vmatprep.subr.mxu0 0.0
    %5754 = vmatpush2.xpose.msra.mxu0 0.0
    %5755 = vmatprep.subr.mxu0 0.0
    %5756 = vmatpush2.xpose.msra.mxu0 0.0
    %5757 = vmatprep.subr.mxu0 0.0
    %5758 = vmatpush2.xpose.msra.mxu0 0.0
    %5759 = vmatprep.subr.mxu0 0.0
    %5760 = vmatpush2.xpose.msra.mxu0 0.0
    %5761 = vmatprep.subr.mxu0 0.0
    %5762 = vmatpush2.xpose.msra.mxu0 0.0
    %5763 = vmatprep.subr.mxu0 0.0
    %5764 = vmatpush2.xpose.msra.mxu0 0.0
    %5765 = vmatprep.subr.mxu0 0.0
    %5766 = vmatpush2.xpose.msra.mxu0 0.0
    %5767 = vmatprep.mubr.f32.mxu0 0.0
    %5768 = vmatmul.mubr.f32.gmra.mxu0 %v5582
    %v5769 = vpop.f32.mrf.mxu0
    %v5770 = vadd.f32 0.0, %v5769
    %v5771 = vpop.f32.mrf.mxu0
    %5772 = vmatprep.mubr.f32.mxu0 0.0
    %5773 = vmatmul.mubr.f32.gmra.mxu0 %v5584
    %v5774 = vpop.f32.mrf.mxu0
    %v5775 = vadd.f32 0.0, %v5774
    %v5776 = vpop.f32.mrf.mxu0
    %5777 = vmatprep.mubr.f32.mxu0 0.0
    %5778 = vmatmul.mubr.f32.gmra.mxu0 %v5586
    %v5779 = vpop.f32.mrf.mxu0
    %v5780 = vadd.f32 0.0, %v5779
    %v5781 = vpop.f32.mrf.mxu0
    %5782 = vmatprep.mubr.f32.mxu0 0.0
    %5783 = vmatmul.mubr.f32.gmra.mxu0 %v5588
    %v5784 = vpop.f32.mrf.mxu0
    %v5785 = vadd.f32 0.0, %v5784
    %v5786 = vpop.f32.mrf.mxu0
    %5787 = vdwg.mxu0
    %v5788 = vmul.f32 %v4977, %v5770
    %v5789 = vmul.f32 %v4978, %v5775
    %v5790 = vmul.f32 %v4979, %v5780
    %v5791 = vmul.f32 %v4980, %v5785
    %v5792 = vadd.f32 %v5687, %v5788
    %v5793 = vadd.f32 %v5688, %v5789
    %v5794 = vadd.f32 %v5689, %v5790
    %v5795 = vadd.f32 %v5690, %v5791
    %v5796 = vsel %vm5566, %v5792, -1e+30
    %v5797 = vsel %vm5567, %v5793, -1e+30
    %v5798 = vsel %vm5568, %v5794, -1e+30
    %v5799 = vsel %vm5569, %v5795, -1e+30
    %v5800 = vsel %vm415, %v5796, -inf
    %5801 = vmax.xlane.f32.xlu0 %v5800
    %v5802 = vpop.xlane.xlu0 %5801
    %v5803 = vsel %vm415, %v5797, -inf
    %5804 = vmax.xlane.f32.xlu0 %v5803
    %v5805 = vpop.xlane.xlu0 %5804
    %v5806 = vsel %vm415, %v5798, -inf
    %5807 = vmax.xlane.f32.xlu0 %v5806
    %v5808 = vpop.xlane.xlu0 %5807
    %v5809 = vsel %vm415, %v5799, -inf
    %5810 = vmax.xlane.f32.xlu0 %v5809
    %v5811 = vpop.xlane.xlu0 %5810
    %v5812 = vsub.f32 %v5796, %v5802
    %v5813 = vsub.f32 %v5797, %v5805
    %v5814 = vsub.f32 %v5798, %v5808
    %v5815 = vsub.f32 %v5799, %v5811
    %v5816 = vmul.f32 %v5812, 1.442695
    %v5817 = vpow.pop %v5816
    %v5818 = vmul.f32 %v5813, 1.442695
    %v5819 = vpow.pop %v5818
    %v5820 = vmul.f32 %v5814, 1.442695
    %v5821 = vpow.pop %v5820
    %v5822 = vmul.f32 %v5815, 1.442695
    %v5823 = vpow.pop %v5822
    %v5824 = vsel %vm5566, %v5817, 0.0
    %v5825 = vsel %vm5567, %v5819, 0.0
    %v5826 = vsel %vm5568, %v5821, 0.0
    %v5827 = vsel %vm5569, %v5823, 0.0
    %v5828 = vsel %vm415, %v5824, 0.0
    %5829 = vadd.xlane.f32.xlu0 %v5828
    %v5830 = vpop.xlane.xlu0 %5829
    %v5831 = vsel %vm415, %v5825, 0.0
    %5832 = vadd.xlane.f32.xlu0 %v5831
    %v5833 = vpop.xlane.xlu0 %5832
    %v5834 = vsel %vm415, %v5826, 0.0
    %5835 = vadd.xlane.f32.xlu0 %v5834
    %v5836 = vpop.xlane.xlu0 %5835
    %v5837 = vsel %vm415, %v5827, 0.0
    %5838 = vadd.xlane.f32.xlu0 %v5837
    %v5839 = vpop.xlane.xlu0 %5838
    %vm5840 = vcmp.eq.f32.partialorder %v5830, 0.0
    %vm5841 = vcmp.eq.f32.partialorder %v5833, 0.0
    %vm5842 = vcmp.eq.f32.partialorder %v5836, 0.0
    %vm5843 = vcmp.eq.f32.partialorder %v5839, 0.0
    %v5844 = vsel %vm5840, 1.0, %v5830
    %v5845 = vsel %vm5841, 1.0, %v5833
    %v5846 = vsel %vm5842, 1.0, %v5836
    %v5847 = vsel %vm5843, 1.0, %v5839
    %v5848 = vrcp.pop %v5844
    %v5849 = vrcp.pop %v5845
    %v5850 = vrcp.pop %v5846
    %v5851 = vrcp.pop %v5847
    %v5852 = vmul.f32 %v5824, %v5848
    %v5853 = vmul.f32 %v5825, %v5849
    %v5854 = vmul.f32 %v5826, %v5850
    %v5855 = vmul.f32 %v5827, %v5851
    %v5856 = vmul.f32 %v5852, %v4973
    %v5857 = vmul.f32 %v5853, %v4974
    %v5858 = vmul.f32 %v5854, %v4975
    %v5859 = vmul.f32 %v5855, %v4976
    %v5860 = vmul.f32 %v5852, %v4977
    %v5861 = vmul.f32 %v5853, %v4978
    %v5862 = vmul.f32 %v5854, %v4979
    %v5863 = vmul.f32 %v5855, %v4980
    %v5865 = vsel %vm415, %v5860, 0
    %v5868 = vsel %vm415, %v5861, 0
    %v5871 = vsel %vm415, %v5862, 0
    %v5874 = vsel %vm415, %v5863, 0
    %5876 = vmatprep.subr.mxu0 0.0
    %5877 = vmatpush1.msra.mxu0 0.0
    %5878 = vmatprep.subr.mxu0 0.0
    %5879 = vmatpush1.msra.mxu0 0.0
    %5880 = vmatprep.subr.mxu0 0.0
    %5881 = vmatpush1.msra.mxu0 0.0
    %5882 = vmatprep.subr.mxu0 0.0
    %5883 = vmatpush1.msra.mxu0 0.0
    %5884 = vmatprep.subr.mxu0 0.0
    %5885 = vmatpush1.msra.mxu0 0.0
    %5886 = vmatprep.subr.mxu0 0.0
    %5887 = vmatpush1.msra.mxu0 0.0
    %5888 = vmatprep.subr.mxu0 0.0
    %5889 = vmatpush1.msra.mxu0 0.0
    %5890 = vmatprep.subr.mxu0 0.0
    %5891 = vmatpush1.msra.mxu0 0.0
    %5892 = vmatprep.subr.mxu0 0.0
    %5893 = vmatpush1.msra.mxu0 0.0
    %5894 = vmatprep.subr.mxu0 0.0
    %5895 = vmatpush1.msra.mxu0 0.0
    %5896 = vmatprep.subr.mxu0 0.0
    %5897 = vmatpush1.msra.mxu0 0.0
    %5898 = vmatprep.subr.mxu0 0.0
    %5899 = vmatpush1.msra.mxu0 0.0
    %5900 = vmatprep.subr.mxu0 0.0
    %5901 = vmatpush1.msra.mxu0 %v5559
    %5902 = vmatprep.subr.mxu0 0.0
    %5903 = vmatpush1.msra.mxu0 %v5554
    %5904 = vmatprep.subr.mxu0 0.0
    %5905 = vmatpush1.msra.mxu0 %v5549
    %5906 = vmatprep.subr.mxu0 0.0
    %5907 = vmatpush1.msra.mxu0 %v5544
    %5908 = vmatprep.subr.mxu0 0.0
    %5909 = vmatpush2.msra.mxu0 0.0
    %5910 = vmatprep.subr.mxu0 0.0
    %5911 = vmatpush2.msra.mxu0 0.0
    %5912 = vmatprep.subr.mxu0 0.0
    %5913 = vmatpush2.msra.mxu0 0.0
    %5914 = vmatprep.subr.mxu0 0.0
    %5915 = vmatpush2.msra.mxu0 0.0
    %5916 = vmatprep.subr.mxu0 0.0
    %5917 = vmatpush2.msra.mxu0 0.0
    %5918 = vmatprep.subr.mxu0 0.0
    %5919 = vmatpush2.msra.mxu0 0.0
    %5920 = vmatprep.subr.mxu0 0.0
    %5921 = vmatpush2.msra.mxu0 0.0
    %5922 = vmatprep.subr.mxu0 0.0
    %5923 = vmatpush2.msra.mxu0 0.0
    %5924 = vmatprep.subr.mxu0 0.0
    %5925 = vmatpush2.msra.mxu0 0.0
    %5926 = vmatprep.subr.mxu0 0.0
    %5927 = vmatpush2.msra.mxu0 0.0
    %5928 = vmatprep.subr.mxu0 0.0
    %5929 = vmatpush2.msra.mxu0 0.0
    %5930 = vmatprep.subr.mxu0 0.0
    %5931 = vmatpush2.msra.mxu0 0.0
    %5932 = vmatprep.subr.mxu0 0.0
    %5933 = vmatpush2.msra.mxu0 0.0
    %5934 = vmatprep.subr.mxu0 0.0
    %5935 = vmatpush2.msra.mxu0 0.0
    %5936 = vmatprep.subr.mxu0 0.0
    %5937 = vmatpush2.msra.mxu0 0.0
    %5938 = vmatprep.subr.mxu0 0.0
    %5939 = vmatpush2.msra.mxu0 0.0
    %5940 = vmatprep.mubr.f32.mxu0 0.0
    %5941 = vmatmul.mubr.f32.gmra.mxu0 %v5865
    %v5942 = vpop.f32.mrf.mxu0
    %v5943 = vadd.f32 0.0, %v5942
    %v5944 = vpop.f32.mrf.mxu0
    %5945 = vmatprep.mubr.f32.mxu0 0.0
    %5946 = vmatmul.mubr.f32.gmra.mxu0 %v5868
    %v5947 = vpop.f32.mrf.mxu0
    %v5948 = vadd.f32 0.0, %v5947
    %v5949 = vpop.f32.mrf.mxu0
    %5950 = vmatprep.mubr.f32.mxu0 0.0
    %5951 = vmatmul.mubr.f32.gmra.mxu0 %v5871
    %v5952 = vpop.f32.mrf.mxu0
    %v5953 = vadd.f32 0.0, %v5952
    %v5954 = vpop.f32.mrf.mxu0
    %5955 = vmatprep.mubr.f32.mxu0 0.0
    %5956 = vmatmul.mubr.f32.gmra.mxu0 %v5874
    %v5957 = vpop.f32.mrf.mxu0
    %v5958 = vadd.f32 0.0, %v5957
    %v5959 = vpop.f32.mrf.mxu0
    %5960 = vdwg.mxu0
    %v5962 = vsel %vm415, %v5856, 0
    %v5965 = vsel %vm415, %v5857, 0
    %v5968 = vsel %vm415, %v5858, 0
    %v5971 = vsel %vm415, %v5859, 0
    %5973 = vmatprep.subr.mxu0 0.0
    %5974 = vmatpush1.msra.mxu0 0.0
    %5975 = vmatprep.subr.mxu0 0.0
    %5976 = vmatpush1.msra.mxu0 0.0
    %5977 = vmatprep.subr.mxu0 0.0
    %5978 = vmatpush1.msra.mxu0 0.0
    %5979 = vmatprep.subr.mxu0 0.0
    %5980 = vmatpush1.msra.mxu0 0.0
    %5981 = vmatprep.subr.mxu0 0.0
    %5982 = vmatpush1.msra.mxu0 0.0
    %5983 = vmatprep.subr.mxu0 0.0
    %5984 = vmatpush1.msra.mxu0 0.0
    %5985 = vmatprep.subr.mxu0 0.0
    %5986 = vmatpush1.msra.mxu0 0.0
    %5987 = vmatprep.subr.mxu0 0.0
    %5988 = vmatpush1.msra.mxu0 0.0
    %5989 = vmatprep.subr.mxu0 0.0
    %5990 = vmatpush1.msra.mxu0 0.0
    %5991 = vmatprep.subr.mxu0 0.0
    %5992 = vmatpush1.msra.mxu0 0.0
    %5993 = vmatprep.subr.mxu0 0.0
    %5994 = vmatpush1.msra.mxu0 0.0
    %5995 = vmatprep.subr.mxu0 0.0
    %5996 = vmatpush1.msra.mxu0 0.0
    %5997 = vmatprep.subr.mxu0 0.0
    %5998 = vmatpush1.msra.mxu0 %v5389
    %5999 = vmatprep.subr.mxu0 0.0
    %6000 = vmatpush1.msra.mxu0 %v5384
    %6001 = vmatprep.subr.mxu0 0.0
    %6002 = vmatpush1.msra.mxu0 %v5379
    %6003 = vmatprep.subr.mxu0 0.0
    %6004 = vmatpush1.msra.mxu0 %v5374
    %6005 = vmatprep.subr.mxu0 0.0
    %6006 = vmatpush2.msra.mxu0 0.0
    %6007 = vmatprep.subr.mxu0 0.0
    %6008 = vmatpush2.msra.mxu0 0.0
    %6009 = vmatprep.subr.mxu0 0.0
    %6010 = vmatpush2.msra.mxu0 0.0
    %6011 = vmatprep.subr.mxu0 0.0
    %6012 = vmatpush2.msra.mxu0 0.0
    %6013 = vmatprep.subr.mxu0 0.0
    %6014 = vmatpush2.msra.mxu0 0.0
    %6015 = vmatprep.subr.mxu0 0.0
    %6016 = vmatpush2.msra.mxu0 0.0
    %6017 = vmatprep.subr.mxu0 0.0
    %6018 = vmatpush2.msra.mxu0 0.0
    %6019 = vmatprep.subr.mxu0 0.0
    %6020 = vmatpush2.msra.mxu0 0.0
    %6021 = vmatprep.subr.mxu0 0.0
    %6022 = vmatpush2.msra.mxu0 0.0
    %6023 = vmatprep.subr.mxu0 0.0
    %6024 = vmatpush2.msra.mxu0 0.0
    %6025 = vmatprep.subr.mxu0 0.0
    %6026 = vmatpush2.msra.mxu0 0.0
    %6027 = vmatprep.subr.mxu0 0.0
    %6028 = vmatpush2.msra.mxu0 0.0
    %6029 = vmatprep.subr.mxu0 0.0
    %6030 = vmatpush2.msra.mxu0 0.0
    %6031 = vmatprep.subr.mxu0 0.0
    %6032 = vmatpush2.msra.mxu0 0.0
    %6033 = vmatprep.subr.mxu0 0.0
    %6034 = vmatpush2.msra.mxu0 0.0
    %6035 = vmatprep.subr.mxu0 0.0
    %6036 = vmatpush2.msra.mxu0 0.0
    %6037 = vmatprep.mubr.f32.mxu0 0.0
    %6038 = vmatmul.mubr.f32.gmra.mxu0 %v5962
    %v6039 = vpop.f32.mrf.mxu0
    %v6040 = vadd.f32 %v5943, %v6039
    %v6041 = vpop.f32.mrf.mxu0
    %6042 = vmatprep.mubr.f32.mxu0 0.0
    %6043 = vmatmul.mubr.f32.gmra.mxu0 %v5965
    %v6044 = vpop.f32.mrf.mxu0
    %v6045 = vadd.f32 %v5948, %v6044
    %v6046 = vpop.f32.mrf.mxu0
    %6047 = vmatprep.mubr.f32.mxu0 0.0
    %6048 = vmatmul.mubr.f32.gmra.mxu0 %v5968
    %v6049 = vpop.f32.mrf.mxu0
    %v6050 = vadd.f32 %v5953, %v6049
    %v6051 = vpop.f32.mrf.mxu0
    %6052 = vmatprep.mubr.f32.mxu0 0.0
    %6053 = vmatmul.mubr.f32.gmra.mxu0 %v5971
    %v6054 = vpop.f32.mrf.mxu0
    %v6055 = vadd.f32 %v5958, %v6054
    %v6056 = vpop.f32.mrf.mxu0
    %6057 = vdwg.mxu0
    %6058 = vrot.lane.b32.xlu0 %v5174, 88
    %v6059 = vpop.permute.xlu0 %6058
    %6060 = vrot.lane.b32.xlu0 %v5175, 88
    %v6061 = vpop.permute.xlu0 %6060
    %6062 = vrot.lane.b32.xlu0 %v5176, 88
    %v6063 = vpop.permute.xlu0 %6062
    %6064 = vrot.lane.b32.xlu0 %v5177, 88
    %v6065 = vpop.permute.xlu0 %6064
    %6066 = vrot.lane.b32.xlu0 %v5273, 120
    %v6067 = vpop.permute.xlu0 %6066
    %6068 = vrot.lane.b32.xlu0 %v5278, 120
    %v6069 = vpop.permute.xlu0 %6068
    %6070 = vrot.lane.b32.xlu0 %v5283, 120
    %v6071 = vpop.permute.xlu0 %6070
    %6072 = vrot.lane.b32.xlu0 %v5288, 120
    %v6073 = vpop.permute.xlu0 %6072
    %v6074 = vsel %vm1005, %v6059, 0
    %v6076 = vsel %vm1005, %v6061, 0
    %v6078 = vsel %vm1005, %v6063, 0
    %v6080 = vsel %vm1005, %v6065, 0
    %v6082 = vsel %vm1005, %v6067, 0
    %v6084 = vsel %vm1005, %v6069, 0
    %v6086 = vsel %vm1005, %v6071, 0
    %v6088 = vsel %vm1005, %v6073, 0
    %6090 = vmatprep.subr.mxu0 0.0
    %6091 = vmatpush1.xpose.msra.mxu0 0.0
    %6092 = vmatprep.subr.mxu0 0.0
    %6093 = vmatpush1.xpose.msra.mxu0 0.0
    %6094 = vmatprep.subr.mxu0 0.0
    %6095 = vmatpush1.xpose.msra.mxu0 0.0
    %6096 = vmatprep.subr.mxu0 0.0
    %6097 = vmatpush1.xpose.msra.mxu0 0.0
    %6098 = vmatprep.subr.mxu0 0.0
    %6099 = vmatpush1.xpose.msra.mxu0 0.0
    %6100 = vmatprep.subr.mxu0 0.0
    %6101 = vmatpush1.xpose.msra.mxu0 0.0
    %6102 = vmatprep.subr.mxu0 0.0
    %6103 = vmatpush1.xpose.msra.mxu0 0.0
    %6104 = vmatprep.subr.mxu0 0.0
    %6105 = vmatpush1.xpose.msra.mxu0 0.0
    %6106 = vmatprep.subr.mxu0 0.0
    %6107 = vmatpush1.xpose.msra.mxu0 0.0
    %6108 = vmatprep.subr.mxu0 0.0
    %6109 = vmatpush1.xpose.msra.mxu0 0.0
    %6110 = vmatprep.subr.mxu0 0.0
    %6111 = vmatpush1.xpose.msra.mxu0 0.0
    %6112 = vmatprep.subr.mxu0 0.0
    %6113 = vmatpush1.xpose.msra.mxu0 0.0
    %6114 = vmatprep.subr.mxu0 0.0
    %6115 = vmatpush1.xpose.msra.mxu0 %v6088
    %6116 = vmatprep.subr.mxu0 0.0
    %6117 = vmatpush1.xpose.msra.mxu0 %v6086
    %6118 = vmatprep.subr.mxu0 0.0
    %6119 = vmatpush1.xpose.msra.mxu0 %v6084
    %6120 = vmatprep.subr.mxu0 0.0
    %6121 = vmatpush1.xpose.msra.mxu0 %v6082
    %6122 = vmatprep.subr.mxu0 0.0
    %6123 = vmatpush2.xpose.msra.mxu0 0.0
    %6124 = vmatprep.subr.mxu0 0.0
    %6125 = vmatpush2.xpose.msra.mxu0 0.0
    %6126 = vmatprep.subr.mxu0 0.0
    %6127 = vmatpush2.xpose.msra.mxu0 0.0
    %6128 = vmatprep.subr.mxu0 0.0
    %6129 = vmatpush2.xpose.msra.mxu0 0.0
    %6130 = vmatprep.subr.mxu0 0.0
    %6131 = vmatpush2.xpose.msra.mxu0 0.0
    %6132 = vmatprep.subr.mxu0 0.0
    %6133 = vmatpush2.xpose.msra.mxu0 0.0
    %6134 = vmatprep.subr.mxu0 0.0
    %6135 = vmatpush2.xpose.msra.mxu0 0.0
    %6136 = vmatprep.subr.mxu0 0.0
    %6137 = vmatpush2.xpose.msra.mxu0 0.0
    %6138 = vmatprep.subr.mxu0 0.0
    %6139 = vmatpush2.xpose.msra.mxu0 0.0
    %6140 = vmatprep.subr.mxu0 0.0
    %6141 = vmatpush2.xpose.msra.mxu0 0.0
    %6142 = vmatprep.subr.mxu0 0.0
    %6143 = vmatpush2.xpose.msra.mxu0 0.0
    %6144 = vmatprep.subr.mxu0 0.0
    %6145 = vmatpush2.xpose.msra.mxu0 0.0
    %6146 = vmatprep.subr.mxu0 0.0
    %6147 = vmatpush2.xpose.msra.mxu0 0.0
    %6148 = vmatprep.subr.mxu0 0.0
    %6149 = vmatpush2.xpose.msra.mxu0 0.0
    %6150 = vmatprep.subr.mxu0 0.0
    %6151 = vmatpush2.xpose.msra.mxu0 0.0
    %6152 = vmatprep.subr.mxu0 0.0
    %6153 = vmatpush2.xpose.msra.mxu0 0.0
    %6154 = vmatprep.mubr.f32.mxu0 0.0
    %6155 = vmatmul.mubr.f32.gmra.mxu0 %v6074
    %v6156 = vpop.f32.mrf.mxu0
    %v6157 = vadd.f32 0.0, %v6156
    %v6158 = vpop.f32.mrf.mxu0
    %6159 = vmatprep.mubr.f32.mxu0 0.0
    %6160 = vmatmul.mubr.f32.gmra.mxu0 %v6076
    %v6161 = vpop.f32.mrf.mxu0
    %v6162 = vadd.f32 0.0, %v6161
    %v6163 = vpop.f32.mrf.mxu0
    %6164 = vmatprep.mubr.f32.mxu0 0.0
    %6165 = vmatmul.mubr.f32.gmra.mxu0 %v6078
    %v6166 = vpop.f32.mrf.mxu0
    %v6167 = vadd.f32 0.0, %v6166
    %v6168 = vpop.f32.mrf.mxu0
    %6169 = vmatprep.mubr.f32.mxu0 0.0
    %6170 = vmatmul.mubr.f32.gmra.mxu0 %v6080
    %v6171 = vpop.f32.mrf.mxu0
    %v6172 = vadd.f32 0.0, %v6171
    %v6173 = vpop.f32.mrf.mxu0
    %6174 = vdwg.mxu0
    %v6175 = vmul.f32 %v4973, %v6157
    %v6176 = vmul.f32 %v4974, %v6162
    %v6177 = vmul.f32 %v4975, %v6167
    %v6178 = vmul.f32 %v4976, %v6172
    %6179 = vrot.lane.b32.xlu0 %v5459, 120
    %v6180 = vpop.permute.xlu0 %6179
    %6181 = vrot.lane.b32.xlu0 %v5464, 120
    %v6182 = vpop.permute.xlu0 %6181
    %6183 = vrot.lane.b32.xlu0 %v5469, 120
    %v6184 = vpop.permute.xlu0 %6183
    %6185 = vrot.lane.b32.xlu0 %v5474, 120
    %v6186 = vpop.permute.xlu0 %6185
    %v6187 = vsel %vm1005, %v6180, 0
    %v6189 = vsel %vm1005, %v6182, 0
    %v6191 = vsel %vm1005, %v6184, 0
    %v6193 = vsel %vm1005, %v6186, 0
    %6195 = vmatprep.subr.mxu0 0.0
    %6196 = vmatpush1.xpose.msra.mxu0 0.0
    %6197 = vmatprep.subr.mxu0 0.0
    %6198 = vmatpush1.xpose.msra.mxu0 0.0
    %6199 = vmatprep.subr.mxu0 0.0
    %6200 = vmatpush1.xpose.msra.mxu0 0.0
    %6201 = vmatprep.subr.mxu0 0.0
    %6202 = vmatpush1.xpose.msra.mxu0 0.0
    %6203 = vmatprep.subr.mxu0 0.0
    %6204 = vmatpush1.xpose.msra.mxu0 0.0
    %6205 = vmatprep.subr.mxu0 0.0
    %6206 = vmatpush1.xpose.msra.mxu0 0.0
    %6207 = vmatprep.subr.mxu0 0.0
    %6208 = vmatpush1.xpose.msra.mxu0 0.0
    %6209 = vmatprep.subr.mxu0 0.0
    %6210 = vmatpush1.xpose.msra.mxu0 0.0
    %6211 = vmatprep.subr.mxu0 0.0
    %6212 = vmatpush1.xpose.msra.mxu0 0.0
    %6213 = vmatprep.subr.mxu0 0.0
    %6214 = vmatpush1.xpose.msra.mxu0 0.0
    %6215 = vmatprep.subr.mxu0 0.0
    %6216 = vmatpush1.xpose.msra.mxu0 0.0
    %6217 = vmatprep.subr.mxu0 0.0
    %6218 = vmatpush1.xpose.msra.mxu0 0.0
    %6219 = vmatprep.subr.mxu0 0.0
    %6220 = vmatpush1.xpose.msra.mxu0 %v6193
    %6221 = vmatprep.subr.mxu0 0.0
    %6222 = vmatpush1.xpose.msra.mxu0 %v6191
    %6223 = vmatprep.subr.mxu0 0.0
    %6224 = vmatpush1.xpose.msra.mxu0 %v6189
    %6225 = vmatprep.subr.mxu0 0.0
    %6226 = vmatpush1.xpose.msra.mxu0 %v6187
    %6227 = vmatprep.subr.mxu0 0.0
    %6228 = vmatpush2.xpose.msra.mxu0 0.0
    %6229 = vmatprep.subr.mxu0 0.0
    %6230 = vmatpush2.xpose.msra.mxu0 0.0
    %6231 = vmatprep.subr.mxu0 0.0
    %6232 = vmatpush2.xpose.msra.mxu0 0.0
    %6233 = vmatprep.subr.mxu0 0.0
    %6234 = vmatpush2.xpose.msra.mxu0 0.0
    %6235 = vmatprep.subr.mxu0 0.0
    %6236 = vmatpush2.xpose.msra.mxu0 0.0
    %6237 = vmatprep.subr.mxu0 0.0
    %6238 = vmatpush2.xpose.msra.mxu0 0.0
    %6239 = vmatprep.subr.mxu0 0.0
    %6240 = vmatpush2.xpose.msra.mxu0 0.0
    %6241 = vmatprep.subr.mxu0 0.0
    %6242 = vmatpush2.xpose.msra.mxu0 0.0
    %6243 = vmatprep.subr.mxu0 0.0
    %6244 = vmatpush2.xpose.msra.mxu0 0.0
    %6245 = vmatprep.subr.mxu0 0.0
    %6246 = vmatpush2.xpose.msra.mxu0 0.0
    %6247 = vmatprep.subr.mxu0 0.0
    %6248 = vmatpush2.xpose.msra.mxu0 0.0
    %6249 = vmatprep.subr.mxu0 0.0
    %6250 = vmatpush2.xpose.msra.mxu0 0.0
    %6251 = vmatprep.subr.mxu0 0.0
    %6252 = vmatpush2.xpose.msra.mxu0 0.0
    %6253 = vmatprep.subr.mxu0 0.0
    %6254 = vmatpush2.xpose.msra.mxu0 0.0
    %6255 = vmatprep.subr.mxu0 0.0
    %6256 = vmatpush2.xpose.msra.mxu0 0.0
    %6257 = vmatprep.subr.mxu0 0.0
    %6258 = vmatpush2.xpose.msra.mxu0 0.0
    %6259 = vmatprep.mubr.f32.mxu0 0.0
    %6260 = vmatmul.mubr.f32.gmra.mxu0 %v6074
    %v6261 = vpop.f32.mrf.mxu0
    %v6262 = vadd.f32 0.0, %v6261
    %v6263 = vpop.f32.mrf.mxu0
    %6264 = vmatprep.mubr.f32.mxu0 0.0
    %6265 = vmatmul.mubr.f32.gmra.mxu0 %v6076
    %v6266 = vpop.f32.mrf.mxu0
    %v6267 = vadd.f32 0.0, %v6266
    %v6268 = vpop.f32.mrf.mxu0
    %6269 = vmatprep.mubr.f32.mxu0 0.0
    %6270 = vmatmul.mubr.f32.gmra.mxu0 %v6078
    %v6271 = vpop.f32.mrf.mxu0
    %v6272 = vadd.f32 0.0, %v6271
    %v6273 = vpop.f32.mrf.mxu0
    %6274 = vmatprep.mubr.f32.mxu0 0.0
    %6275 = vmatmul.mubr.f32.gmra.mxu0 %v6080
    %v6276 = vpop.f32.mrf.mxu0
    %v6277 = vadd.f32 0.0, %v6276
    %v6278 = vpop.f32.mrf.mxu0
    %6279 = vdwg.mxu0
    %v6280 = vmul.f32 %v4977, %v6262
    %v6281 = vmul.f32 %v4978, %v6267
    %v6282 = vmul.f32 %v4979, %v6272
    %v6283 = vmul.f32 %v4980, %v6277
    %v6284 = vadd.f32 %v6175, %v6280
    %v6285 = vadd.f32 %v6176, %v6281
    %v6286 = vadd.f32 %v6177, %v6282
    %v6287 = vadd.f32 %v6178, %v6283
    %v6288 = vsel %vm5566, %v6284, -1e+30
    %v6289 = vsel %vm5567, %v6285, -1e+30
    %v6290 = vsel %vm5568, %v6286, -1e+30
    %v6291 = vsel %vm5569, %v6287, -1e+30
    %v6292 = vsel %vm415, %v6288, -inf
    %6293 = vmax.xlane.f32.xlu0 %v6292
    %v6294 = vpop.xlane.xlu0 %6293
    %v6295 = vsel %vm415, %v6289, -inf
    %6296 = vmax.xlane.f32.xlu0 %v6295
    %v6297 = vpop.xlane.xlu0 %6296
    %v6298 = vsel %vm415, %v6290, -inf
    %6299 = vmax.xlane.f32.xlu0 %v6298
    %v6300 = vpop.xlane.xlu0 %6299
    %v6301 = vsel %vm415, %v6291, -inf
    %6302 = vmax.xlane.f32.xlu0 %v6301
    %v6303 = vpop.xlane.xlu0 %6302
    %v6304 = vsub.f32 %v6288, %v6294
    %v6305 = vsub.f32 %v6289, %v6297
    %v6306 = vsub.f32 %v6290, %v6300
    %v6307 = vsub.f32 %v6291, %v6303
    %v6308 = vmul.f32 %v6304, 1.442695
    %v6309 = vpow.pop %v6308
    %v6310 = vmul.f32 %v6305, 1.442695
    %v6311 = vpow.pop %v6310
    %v6312 = vmul.f32 %v6306, 1.442695
    %v6313 = vpow.pop %v6312
    %v6314 = vmul.f32 %v6307, 1.442695
    %v6315 = vpow.pop %v6314
    %v6316 = vsel %vm5566, %v6309, 0.0
    %v6317 = vsel %vm5567, %v6311, 0.0
    %v6318 = vsel %vm5568, %v6313, 0.0
    %v6319 = vsel %vm5569, %v6315, 0.0
    %v6320 = vsel %vm415, %v6316, 0.0
    %6321 = vadd.xlane.f32.xlu0 %v6320
    %v6322 = vpop.xlane.xlu0 %6321
    %v6323 = vsel %vm415, %v6317, 0.0
    %6324 = vadd.xlane.f32.xlu0 %v6323
    %v6325 = vpop.xlane.xlu0 %6324
    %v6326 = vsel %vm415, %v6318, 0.0
    %6327 = vadd.xlane.f32.xlu0 %v6326
    %v6328 = vpop.xlane.xlu0 %6327
    %v6329 = vsel %vm415, %v6319, 0.0
    %6330 = vadd.xlane.f32.xlu0 %v6329
    %v6331 = vpop.xlane.xlu0 %6330
    %vm6332 = vcmp.eq.f32.partialorder %v6322, 0.0
    %vm6333 = vcmp.eq.f32.partialorder %v6325, 0.0
    %vm6334 = vcmp.eq.f32.partialorder %v6328, 0.0
    %vm6335 = vcmp.eq.f32.partialorder %v6331, 0.0
    %v6336 = vsel %vm6332, 1.0, %v6322
    %v6337 = vsel %vm6333, 1.0, %v6325
    %v6338 = vsel %vm6334, 1.0, %v6328
    %v6339 = vsel %vm6335, 1.0, %v6331
    %v6340 = vrcp.pop %v6336
    %v6341 = vrcp.pop %v6337
    %v6342 = vrcp.pop %v6338
    %v6343 = vrcp.pop %v6339
    %v6344 = vmul.f32 %v6316, %v6340
    %v6345 = vmul.f32 %v6317, %v6341
    %v6346 = vmul.f32 %v6318, %v6342
    %v6347 = vmul.f32 %v6319, %v6343
    %v6348 = vmul.f32 %v6344, %v4973
    %v6349 = vmul.f32 %v6345, %v4974
    %v6350 = vmul.f32 %v6346, %v4975
    %v6351 = vmul.f32 %v6347, %v4976
    %v6352 = vmul.f32 %v6344, %v4977
    %v6353 = vmul.f32 %v6345, %v4978
    %v6354 = vmul.f32 %v6346, %v4979
    %v6355 = vmul.f32 %v6347, %v4980
    %6360 = vrot.lane.b32.xlu0 %v5544, 120
    %v6361 = vpop.permute.xlu0 %6360
    %6362 = vrot.lane.b32.xlu0 %v5549, 120
    %v6363 = vpop.permute.xlu0 %6362
    %6364 = vrot.lane.b32.xlu0 %v5554, 120
    %v6365 = vpop.permute.xlu0 %6364
    %6366 = vrot.lane.b32.xlu0 %v5559, 120
    %v6367 = vpop.permute.xlu0 %6366
    %v6373 = vsel %vm415, %v6352, 0
    %v6376 = vsel %vm415, %v6353, 0
    %v6379 = vsel %vm415, %v6354, 0
    %v6382 = vsel %vm415, %v6355, 0
    %6384 = vmatprep.subr.mxu0 0.0
    %6385 = vmatpush1.msra.mxu0 0.0
    %6386 = vmatprep.subr.mxu0 0.0
    %6387 = vmatpush1.msra.mxu0 0.0
    %6388 = vmatprep.subr.mxu0 0.0
    %6389 = vmatpush1.msra.mxu0 0.0
    %6390 = vmatprep.subr.mxu0 0.0
    %6391 = vmatpush1.msra.mxu0 0.0
    %6392 = vmatprep.subr.mxu0 0.0
    %6393 = vmatpush1.msra.mxu0 0.0
    %6394 = vmatprep.subr.mxu0 0.0
    %6395 = vmatpush1.msra.mxu0 0.0
    %6396 = vmatprep.subr.mxu0 0.0
    %6397 = vmatpush1.msra.mxu0 0.0
    %6398 = vmatprep.subr.mxu0 0.0
    %6399 = vmatpush1.msra.mxu0 0.0
    %6400 = vmatprep.subr.mxu0 0.0
    %6401 = vmatpush1.msra.mxu0 0.0
    %6402 = vmatprep.subr.mxu0 0.0
    %6403 = vmatpush1.msra.mxu0 0.0
    %6404 = vmatprep.subr.mxu0 0.0
    %6405 = vmatpush1.msra.mxu0 0.0
    %6406 = vmatprep.subr.mxu0 0.0
    %6407 = vmatpush1.msra.mxu0 0.0
    %6408 = vmatprep.subr.mxu0 0.0
    %6409 = vmatpush1.msra.mxu0 %v6367
    %6410 = vmatprep.subr.mxu0 0.0
    %6411 = vmatpush1.msra.mxu0 %v6365
    %6412 = vmatprep.subr.mxu0 0.0
    %6413 = vmatpush1.msra.mxu0 %v6363
    %6414 = vmatprep.subr.mxu0 0.0
    %6415 = vmatpush1.msra.mxu0 %v6361
    %6416 = vmatprep.subr.mxu0 0.0
    %6417 = vmatpush2.msra.mxu0 0.0
    %6418 = vmatprep.subr.mxu0 0.0
    %6419 = vmatpush2.msra.mxu0 0.0
    %6420 = vmatprep.subr.mxu0 0.0
    %6421 = vmatpush2.msra.mxu0 0.0
    %6422 = vmatprep.subr.mxu0 0.0
    %6423 = vmatpush2.msra.mxu0 0.0
    %6424 = vmatprep.subr.mxu0 0.0
    %6425 = vmatpush2.msra.mxu0 0.0
    %6426 = vmatprep.subr.mxu0 0.0
    %6427 = vmatpush2.msra.mxu0 0.0
    %6428 = vmatprep.subr.mxu0 0.0
    %6429 = vmatpush2.msra.mxu0 0.0
    %6430 = vmatprep.subr.mxu0 0.0
    %6431 = vmatpush2.msra.mxu0 0.0
    %6432 = vmatprep.subr.mxu0 0.0
    %6433 = vmatpush2.msra.mxu0 0.0
    %6434 = vmatprep.subr.mxu0 0.0
    %6435 = vmatpush2.msra.mxu0 0.0
    %6436 = vmatprep.subr.mxu0 0.0
    %6437 = vmatpush2.msra.mxu0 0.0
    %6438 = vmatprep.subr.mxu0 0.0
    %6439 = vmatpush2.msra.mxu0 0.0
    %6440 = vmatprep.subr.mxu0 0.0
    %6441 = vmatpush2.msra.mxu0 0.0
    %6442 = vmatprep.subr.mxu0 0.0
    %6443 = vmatpush2.msra.mxu0 0.0
    %6444 = vmatprep.subr.mxu0 0.0
    %6445 = vmatpush2.msra.mxu0 0.0
    %6446 = vmatprep.subr.mxu0 0.0
    %6447 = vmatpush2.msra.mxu0 0.0
    %6448 = vmatprep.mubr.f32.mxu0 0.0
    %6449 = vmatmul.mubr.f32.gmra.mxu0 %v6373
    %v6450 = vpop.f32.mrf.mxu0
    %v6451 = vadd.f32 0.0, %v6450
    %v6452 = vpop.f32.mrf.mxu0
    %6453 = vmatprep.mubr.f32.mxu0 0.0
    %6454 = vmatmul.mubr.f32.gmra.mxu0 %v6376
    %v6455 = vpop.f32.mrf.mxu0
    %v6456 = vadd.f32 0.0, %v6455
    %v6457 = vpop.f32.mrf.mxu0
    %6458 = vmatprep.mubr.f32.mxu0 0.0
    %6459 = vmatmul.mubr.f32.gmra.mxu0 %v6379
    %v6460 = vpop.f32.mrf.mxu0
    %v6461 = vadd.f32 0.0, %v6460
    %v6462 = vpop.f32.mrf.mxu0
    %6463 = vmatprep.mubr.f32.mxu0 0.0
    %6464 = vmatmul.mubr.f32.gmra.mxu0 %v6382
    %v6465 = vpop.f32.mrf.mxu0
    %v6466 = vadd.f32 0.0, %v6465
    %v6467 = vpop.f32.mrf.mxu0
    %6468 = vdwg.mxu0
    %6473 = vrot.lane.b32.xlu0 %v5374, 120
    %v6474 = vpop.permute.xlu0 %6473
    %6475 = vrot.lane.b32.xlu0 %v5379, 120
    %v6476 = vpop.permute.xlu0 %6475
    %6477 = vrot.lane.b32.xlu0 %v5384, 120
    %v6478 = vpop.permute.xlu0 %6477
    %6479 = vrot.lane.b32.xlu0 %v5389, 120
    %v6480 = vpop.permute.xlu0 %6479
    %v6486 = vsel %vm415, %v6348, 0
    %v6489 = vsel %vm415, %v6349, 0
    %v6492 = vsel %vm415, %v6350, 0
    %v6495 = vsel %vm415, %v6351, 0
    %6497 = vmatprep.subr.mxu0 0.0
    %6498 = vmatpush1.msra.mxu0 0.0
    %6499 = vmatprep.subr.mxu0 0.0
    %6500 = vmatpush1.msra.mxu0 0.0
    %6501 = vmatprep.subr.mxu0 0.0
    %6502 = vmatpush1.msra.mxu0 0.0
    %6503 = vmatprep.subr.mxu0 0.0
    %6504 = vmatpush1.msra.mxu0 0.0
    %6505 = vmatprep.subr.mxu0 0.0
    %6506 = vmatpush1.msra.mxu0 0.0
    %6507 = vmatprep.subr.mxu0 0.0
    %6508 = vmatpush1.msra.mxu0 0.0
    %6509 = vmatprep.subr.mxu0 0.0
    %6510 = vmatpush1.msra.mxu0 0.0
    %6511 = vmatprep.subr.mxu0 0.0
    %6512 = vmatpush1.msra.mxu0 0.0
    %6513 = vmatprep.subr.mxu0 0.0
    %6514 = vmatpush1.msra.mxu0 0.0
    %6515 = vmatprep.subr.mxu0 0.0
    %6516 = vmatpush1.msra.mxu0 0.0
    %6517 = vmatprep.subr.mxu0 0.0
    %6518 = vmatpush1.msra.mxu0 0.0
    %6519 = vmatprep.subr.mxu0 0.0
    %6520 = vmatpush1.msra.mxu0 0.0
    %6521 = vmatprep.subr.mxu0 0.0
    %6522 = vmatpush1.msra.mxu0 %v6480
    %6523 = vmatprep.subr.mxu0 0.0
    %6524 = vmatpush1.msra.mxu0 %v6478
    %6525 = vmatprep.subr.mxu0 0.0
    %6526 = vmatpush1.msra.mxu0 %v6476
    %6527 = vmatprep.subr.mxu0 0.0
    %6528 = vmatpush1.msra.mxu0 %v6474
    %6529 = vmatprep.subr.mxu0 0.0
    %6530 = vmatpush2.msra.mxu0 0.0
    %6531 = vmatprep.subr.mxu0 0.0
    %6532 = vmatpush2.msra.mxu0 0.0
    %6533 = vmatprep.subr.mxu0 0.0
    %6534 = vmatpush2.msra.mxu0 0.0
    %6535 = vmatprep.subr.mxu0 0.0
    %6536 = vmatpush2.msra.mxu0 0.0
    %6537 = vmatprep.subr.mxu0 0.0
    %6538 = vmatpush2.msra.mxu0 0.0
    %6539 = vmatprep.subr.mxu0 0.0
    %6540 = vmatpush2.msra.mxu0 0.0
    %6541 = vmatprep.subr.mxu0 0.0
    %6542 = vmatpush2.msra.mxu0 0.0
    %6543 = vmatprep.subr.mxu0 0.0
    %6544 = vmatpush2.msra.mxu0 0.0
    %6545 = vmatprep.subr.mxu0 0.0
    %6546 = vmatpush2.msra.mxu0 0.0
    %6547 = vmatprep.subr.mxu0 0.0
    %6548 = vmatpush2.msra.mxu0 0.0
    %6549 = vmatprep.subr.mxu0 0.0
    %6550 = vmatpush2.msra.mxu0 0.0
    %6551 = vmatprep.subr.mxu0 0.0
    %6552 = vmatpush2.msra.mxu0 0.0
    %6553 = vmatprep.subr.mxu0 0.0
    %6554 = vmatpush2.msra.mxu0 0.0
    %6555 = vmatprep.subr.mxu0 0.0
    %6556 = vmatpush2.msra.mxu0 0.0
    %6557 = vmatprep.subr.mxu0 0.0
    %6558 = vmatpush2.msra.mxu0 0.0
    %6559 = vmatprep.subr.mxu0 0.0
    %6560 = vmatpush2.msra.mxu0 0.0
    %6561 = vmatprep.mubr.f32.mxu0 0.0
    %6562 = vmatmul.mubr.f32.gmra.mxu0 %v6486
    %v6563 = vpop.f32.mrf.mxu0
    %v6564 = vadd.f32 %v6451, %v6563
    %v6565 = vpop.f32.mrf.mxu0
    %6566 = vmatprep.mubr.f32.mxu0 0.0
    %6567 = vmatmul.mubr.f32.gmra.mxu0 %v6489
    %v6568 = vpop.f32.mrf.mxu0
    %v6569 = vadd.f32 %v6456, %v6568
    %v6570 = vpop.f32.mrf.mxu0
    %6571 = vmatprep.mubr.f32.mxu0 0.0
    %6572 = vmatmul.mubr.f32.gmra.mxu0 %v6492
    %v6573 = vpop.f32.mrf.mxu0
    %v6574 = vadd.f32 %v6461, %v6573
    %v6575 = vpop.f32.mrf.mxu0
    %6576 = vmatprep.mubr.f32.mxu0 0.0
    %6577 = vmatmul.mubr.f32.gmra.mxu0 %v6495
    %v6578 = vpop.f32.mrf.mxu0
    %v6579 = vadd.f32 %v6466, %v6578
    %v6580 = vpop.f32.mrf.mxu0
    %6581 = vdwg.mxu0
    %v6583 = vsel %vm1005, %v6564, 0
    %v6586 = vsel %vm1005, %v6569, 0
    %v6589 = vsel %vm1005, %v6574, 0
    %v6592 = vsel %vm1005, %v6579, 0
    %6594 = vmatprep.subr.mxu0 0.0
    %6595 = vmatpush1.msra.mxu0 0.0
    %6596 = vmatprep.subr.mxu0 0.0
    %6597 = vmatpush1.msra.mxu0 0.0
    %6598 = vmatprep.subr.mxu0 0.0
    %6599 = vmatpush1.msra.mxu0 0.0
    %6600 = vmatprep.subr.mxu0 0.0
    %6601 = vmatpush1.msra.mxu0 0.0
    %6602 = vmatprep.subr.mxu0 0.0
    %6603 = vmatpush1.msra.mxu0 0.0
    %6604 = vmatprep.subr.mxu0 0.0
    %6605 = vmatpush1.msra.mxu0 0.0
    %6606 = vmatprep.subr.mxu0 0.0
    %6607 = vmatpush1.msra.mxu0 0.0
    %6608 = vmatprep.subr.mxu0 0.0
    %6609 = vmatpush1.msra.mxu0 0.0
    %6610 = vmatprep.subr.mxu0 0.0
    %6611 = vmatpush1.msra.mxu0 0.0
    %6612 = vmatprep.subr.mxu0 0.0
    %6613 = vmatpush1.msra.mxu0 0.0
    %6614 = vmatprep.subr.mxu0 0.0
    %6615 = vmatpush1.msra.mxu0 0.0
    %6616 = vmatprep.subr.mxu0 0.0
    %6617 = vmatpush1.msra.mxu0 0.0
    %6618 = vmatprep.subr.mxu0 0.0
    %6619 = vmatpush1.msra.mxu0 0.0
    %6620 = vmatprep.subr.mxu0 0.0
    %6621 = vmatpush1.msra.mxu0 0.0
    %6622 = vmatprep.subr.mxu0 0.0
    %6623 = vmatpush1.msra.mxu0 0.0
    %6624 = vmatprep.subr.mxu0 0.0
    %6625 = vmatpush1.msra.mxu0 %v5571
    %6626 = vmatprep.subr.mxu0 0.0
    %6627 = vmatpush2.msra.mxu0 0.0
    %6628 = vmatprep.subr.mxu0 0.0
    %6629 = vmatpush2.msra.mxu0 0.0
    %6630 = vmatprep.subr.mxu0 0.0
    %6631 = vmatpush2.msra.mxu0 0.0
    %6632 = vmatprep.subr.mxu0 0.0
    %6633 = vmatpush2.msra.mxu0 0.0
    %6634 = vmatprep.subr.mxu0 0.0
    %6635 = vmatpush2.msra.mxu0 0.0
    %6636 = vmatprep.subr.mxu0 0.0
    %6637 = vmatpush2.msra.mxu0 0.0
    %6638 = vmatprep.subr.mxu0 0.0
    %6639 = vmatpush2.msra.mxu0 0.0
    %6640 = vmatprep.subr.mxu0 0.0
    %6641 = vmatpush2.msra.mxu0 0.0
    %6642 = vmatprep.subr.mxu0 0.0
    %6643 = vmatpush2.msra.mxu0 0.0
    %6644 = vmatprep.subr.mxu0 0.0
    %6645 = vmatpush2.msra.mxu0 0.0
    %6646 = vmatprep.subr.mxu0 0.0
    %6647 = vmatpush2.msra.mxu0 0.0
    %6648 = vmatprep.subr.mxu0 0.0
    %6649 = vmatpush2.msra.mxu0 0.0
    %6650 = vmatprep.subr.mxu0 0.0
    %6651 = vmatpush2.msra.mxu0 0.0
    %6652 = vmatprep.subr.mxu0 0.0
    %6653 = vmatpush2.msra.mxu0 0.0
    %6654 = vmatprep.subr.mxu0 0.0
    %6655 = vmatpush2.msra.mxu0 0.0
    %6656 = vmatprep.subr.mxu0 0.0
    %6657 = vmatpush2.msra.mxu0 0.0
    %6658 = vmatprep.mubr.f32.mxu0 0.0
    %6659 = vmatmul.mubr.f32.gmra.mxu0 %v6583
    %v6660 = vpop.f32.mrf.mxu0
    %v6661 = vadd.f32 0.0, %v6660
    %v6662 = vpop.f32.mrf.mxu0
    %6663 = vmatprep.mubr.f32.mxu0 0.0
    %6664 = vmatmul.mubr.f32.gmra.mxu0 %v6586
    %v6665 = vpop.f32.mrf.mxu0
    %v6666 = vadd.f32 0.0, %v6665
    %v6667 = vpop.f32.mrf.mxu0
    %6668 = vmatprep.mubr.f32.mxu0 0.0
    %6669 = vmatmul.mubr.f32.gmra.mxu0 %v6589
    %v6670 = vpop.f32.mrf.mxu0
    %v6671 = vadd.f32 0.0, %v6670
    %v6672 = vpop.f32.mrf.mxu0
    %6673 = vmatprep.mubr.f32.mxu0 0.0
    %6674 = vmatmul.mubr.f32.gmra.mxu0 %v6592
    %v6675 = vpop.f32.mrf.mxu0
    %v6676 = vadd.f32 0.0, %v6675
    %v6677 = vpop.f32.mrf.mxu0
    %6678 = vdwg.mxu0
    %v6680 = vsel %vm1005, %v6040, 0
    %v6683 = vsel %vm1005, %v6045, 0
    %v6686 = vsel %vm1005, %v6050, 0
    %v6689 = vsel %vm1005, %v6055, 0
    %6691 = vmatprep.subr.mxu0 0.0
    %6692 = vmatpush1.msra.mxu0 0.0
    %6693 = vmatprep.subr.mxu0 0.0
    %6694 = vmatpush1.msra.mxu0 0.0
    %6695 = vmatprep.subr.mxu0 0.0
    %6696 = vmatpush1.msra.mxu0 0.0
    %6697 = vmatprep.subr.mxu0 0.0
    %6698 = vmatpush1.msra.mxu0 0.0
    %6699 = vmatprep.subr.mxu0 0.0
    %6700 = vmatpush1.msra.mxu0 0.0
    %6701 = vmatprep.subr.mxu0 0.0
    %6702 = vmatpush1.msra.mxu0 0.0
    %6703 = vmatprep.subr.mxu0 0.0
    %6704 = vmatpush1.msra.mxu0 0.0
    %6705 = vmatprep.subr.mxu0 0.0
    %6706 = vmatpush1.msra.mxu0 0.0
    %6707 = vmatprep.subr.mxu0 0.0
    %6708 = vmatpush1.msra.mxu0 0.0
    %6709 = vmatprep.subr.mxu0 0.0
    %6710 = vmatpush1.msra.mxu0 0.0
    %6711 = vmatprep.subr.mxu0 0.0
    %6712 = vmatpush1.msra.mxu0 0.0
    %6713 = vmatprep.subr.mxu0 0.0
    %6714 = vmatpush1.msra.mxu0 0.0
    %6715 = vmatprep.subr.mxu0 0.0
    %6716 = vmatpush1.msra.mxu0 0.0
    %6717 = vmatprep.subr.mxu0 0.0
    %6718 = vmatpush1.msra.mxu0 0.0
    %6719 = vmatprep.subr.mxu0 0.0
    %6720 = vmatpush1.msra.mxu0 0.0
    %6721 = vmatprep.subr.mxu0 0.0
    %6722 = vmatpush1.msra.mxu0 %v5570
    %6723 = vmatprep.subr.mxu0 0.0
    %6724 = vmatpush2.msra.mxu0 0.0
    %6725 = vmatprep.subr.mxu0 0.0
    %6726 = vmatpush2.msra.mxu0 0.0
    %6727 = vmatprep.subr.mxu0 0.0
    %6728 = vmatpush2.msra.mxu0 0.0
    %6729 = vmatprep.subr.mxu0 0.0
    %6730 = vmatpush2.msra.mxu0 0.0
    %6731 = vmatprep.subr.mxu0 0.0
    %6732 = vmatpush2.msra.mxu0 0.0
    %6733 = vmatprep.subr.mxu0 0.0
    %6734 = vmatpush2.msra.mxu0 0.0
    %6735 = vmatprep.subr.mxu0 0.0
    %6736 = vmatpush2.msra.mxu0 0.0
    %6737 = vmatprep.subr.mxu0 0.0
    %6738 = vmatpush2.msra.mxu0 0.0
    %6739 = vmatprep.subr.mxu0 0.0
    %6740 = vmatpush2.msra.mxu0 0.0
    %6741 = vmatprep.subr.mxu0 0.0
    %6742 = vmatpush2.msra.mxu0 0.0
    %6743 = vmatprep.subr.mxu0 0.0
    %6744 = vmatpush2.msra.mxu0 0.0
    %6745 = vmatprep.subr.mxu0 0.0
    %6746 = vmatpush2.msra.mxu0 0.0
    %6747 = vmatprep.subr.mxu0 0.0
    %6748 = vmatpush2.msra.mxu0 0.0
    %6749 = vmatprep.subr.mxu0 0.0
    %6750 = vmatpush2.msra.mxu0 0.0
    %6751 = vmatprep.subr.mxu0 0.0
    %6752 = vmatpush2.msra.mxu0 0.0
    %6753 = vmatprep.subr.mxu0 0.0
    %6754 = vmatpush2.msra.mxu0 0.0
    %6755 = vmatprep.mubr.f32.mxu0 0.0
    %6756 = vmatmul.mubr.f32.gmra.mxu0 %v6680
    %v6757 = vpop.f32.mrf.mxu0
    %v6758 = vadd.f32 %v6661, %v6757
    %v6759 = vpop.f32.mrf.mxu0
    %6760 = vmatprep.mubr.f32.mxu0 0.0
    %6761 = vmatmul.mubr.f32.gmra.mxu0 %v6683
    %v6762 = vpop.f32.mrf.mxu0
    %v6763 = vadd.f32 %v6666, %v6762
    %v6764 = vpop.f32.mrf.mxu0
    %6765 = vmatprep.mubr.f32.mxu0 0.0
    %6766 = vmatmul.mubr.f32.gmra.mxu0 %v6686
    %v6767 = vpop.f32.mrf.mxu0
    %v6768 = vadd.f32 %v6671, %v6767
    %v6769 = vpop.f32.mrf.mxu0
    %6770 = vmatprep.mubr.f32.mxu0 0.0
    %6771 = vmatmul.mubr.f32.gmra.mxu0 %v6689
    %v6772 = vpop.f32.mrf.mxu0
    %v6773 = vadd.f32 %v6676, %v6772
    %v6774 = vpop.f32.mrf.mxu0
    %6775 = vdwg.mxu0
    %6776 = vrot.lane.b32.xlu0 %v5174, 80
    %v6777 = vpop.permute.xlu0 %6776
    %6778 = vrot.lane.b32.xlu0 %v5175, 80
    %v6779 = vpop.permute.xlu0 %6778
    %6780 = vrot.lane.b32.xlu0 %v5176, 80
    %v6781 = vpop.permute.xlu0 %6780
    %6782 = vrot.lane.b32.xlu0 %v5177, 80
    %v6783 = vpop.permute.xlu0 %6782
    %6784 = vrot.lane.b32.xlu0 %v5273, 112
    %v6785 = vpop.permute.xlu0 %6784
    %6786 = vrot.lane.b32.xlu0 %v5278, 112
    %v6787 = vpop.permute.xlu0 %6786
    %6788 = vrot.lane.b32.xlu0 %v5283, 112
    %v6789 = vpop.permute.xlu0 %6788
    %6790 = vrot.lane.b32.xlu0 %v5288, 112
    %v6791 = vpop.permute.xlu0 %6790
    %v6792 = vsel %vm1005, %v6777, 0
    %v6794 = vsel %vm1005, %v6779, 0
    %v6796 = vsel %vm1005, %v6781, 0
    %v6798 = vsel %vm1005, %v6783, 0
    %v6800 = vsel %vm1005, %v6785, 0
    %v6802 = vsel %vm1005, %v6787, 0
    %v6804 = vsel %vm1005, %v6789, 0
    %v6806 = vsel %vm1005, %v6791, 0
    %6808 = vmatprep.subr.mxu0 0.0
    %6809 = vmatpush1.xpose.msra.mxu0 0.0
    %6810 = vmatprep.subr.mxu0 0.0
    %6811 = vmatpush1.xpose.msra.mxu0 0.0
    %6812 = vmatprep.subr.mxu0 0.0
    %6813 = vmatpush1.xpose.msra.mxu0 0.0
    %6814 = vmatprep.subr.mxu0 0.0
    %6815 = vmatpush1.xpose.msra.mxu0 0.0
    %6816 = vmatprep.subr.mxu0 0.0
    %6817 = vmatpush1.xpose.msra.mxu0 0.0
    %6818 = vmatprep.subr.mxu0 0.0
    %6819 = vmatpush1.xpose.msra.mxu0 0.0
    %6820 = vmatprep.subr.mxu0 0.0
    %6821 = vmatpush1.xpose.msra.mxu0 0.0
    %6822 = vmatprep.subr.mxu0 0.0
    %6823 = vmatpush1.xpose.msra.mxu0 0.0
    %6824 = vmatprep.subr.mxu0 0.0
    %6825 = vmatpush1.xpose.msra.mxu0 0.0
    %6826 = vmatprep.subr.mxu0 0.0
    %6827 = vmatpush1.xpose.msra.mxu0 0.0
    %6828 = vmatprep.subr.mxu0 0.0
    %6829 = vmatpush1.xpose.msra.mxu0 0.0
    %6830 = vmatprep.subr.mxu0 0.0
    %6831 = vmatpush1.xpose.msra.mxu0 0.0
    %6832 = vmatprep.subr.mxu0 0.0
    %6833 = vmatpush1.xpose.msra.mxu0 %v6806
    %6834 = vmatprep.subr.mxu0 0.0
    %6835 = vmatpush1.xpose.msra.mxu0 %v6804
    %6836 = vmatprep.subr.mxu0 0.0
    %6837 = vmatpush1.xpose.msra.mxu0 %v6802
    %6838 = vmatprep.subr.mxu0 0.0
    %6839 = vmatpush1.xpose.msra.mxu0 %v6800
    %6840 = vmatprep.subr.mxu0 0.0
    %6841 = vmatpush2.xpose.msra.mxu0 0.0
    %6842 = vmatprep.subr.mxu0 0.0
    %6843 = vmatpush2.xpose.msra.mxu0 0.0
    %6844 = vmatprep.subr.mxu0 0.0
    %6845 = vmatpush2.xpose.msra.mxu0 0.0
    %6846 = vmatprep.subr.mxu0 0.0
    %6847 = vmatpush2.xpose.msra.mxu0 0.0
    %6848 = vmatprep.subr.mxu0 0.0
    %6849 = vmatpush2.xpose.msra.mxu0 0.0
    %6850 = vmatprep.subr.mxu0 0.0
    %6851 = vmatpush2.xpose.msra.mxu0 0.0
    %6852 = vmatprep.subr.mxu0 0.0
    %6853 = vmatpush2.xpose.msra.mxu0 0.0
    %6854 = vmatprep.subr.mxu0 0.0
    %6855 = vmatpush2.xpose.msra.mxu0 0.0
    %6856 = vmatprep.subr.mxu0 0.0
    %6857 = vmatpush2.xpose.msra.mxu0 0.0
    %6858 = vmatprep.subr.mxu0 0.0
    %6859 = vmatpush2.xpose.msra.mxu0 0.0
    %6860 = vmatprep.subr.mxu0 0.0
    %6861 = vmatpush2.xpose.msra.mxu0 0.0
    %6862 = vmatprep.subr.mxu0 0.0
    %6863 = vmatpush2.xpose.msra.mxu0 0.0
    %6864 = vmatprep.subr.mxu0 0.0
    %6865 = vmatpush2.xpose.msra.mxu0 0.0
    %6866 = vmatprep.subr.mxu0 0.0
    %6867 = vmatpush2.xpose.msra.mxu0 0.0
    %6868 = vmatprep.subr.mxu0 0.0
    %6869 = vmatpush2.xpose.msra.mxu0 0.0
    %6870 = vmatprep.subr.mxu0 0.0
    %6871 = vmatpush2.xpose.msra.mxu0 0.0
    %6872 = vmatprep.mubr.f32.mxu0 0.0
    %6873 = vmatmul.mubr.f32.gmra.mxu0 %v6792
    %v6874 = vpop.f32.mrf.mxu0
    %v6875 = vadd.f32 0.0, %v6874
    %v6876 = vpop.f32.mrf.mxu0
    %6877 = vmatprep.mubr.f32.mxu0 0.0
    %6878 = vmatmul.mubr.f32.gmra.mxu0 %v6794
    %v6879 = vpop.f32.mrf.mxu0
    %v6880 = vadd.f32 0.0, %v6879
    %v6881 = vpop.f32.mrf.mxu0
    %6882 = vmatprep.mubr.f32.mxu0 0.0
    %6883 = vmatmul.mubr.f32.gmra.mxu0 %v6796
    %v6884 = vpop.f32.mrf.mxu0
    %v6885 = vadd.f32 0.0, %v6884
    %v6886 = vpop.f32.mrf.mxu0
    %6887 = vmatprep.mubr.f32.mxu0 0.0
    %6888 = vmatmul.mubr.f32.gmra.mxu0 %v6798
    %v6889 = vpop.f32.mrf.mxu0
    %v6890 = vadd.f32 0.0, %v6889
    %v6891 = vpop.f32.mrf.mxu0
    %6892 = vdwg.mxu0
    %v6893 = vmul.f32 %v4973, %v6875
    %v6894 = vmul.f32 %v4974, %v6880
    %v6895 = vmul.f32 %v4975, %v6885
    %v6896 = vmul.f32 %v4976, %v6890
    %6897 = vrot.lane.b32.xlu0 %v5459, 112
    %v6898 = vpop.permute.xlu0 %6897
    %6899 = vrot.lane.b32.xlu0 %v5464, 112
    %v6900 = vpop.permute.xlu0 %6899
    %6901 = vrot.lane.b32.xlu0 %v5469, 112
    %v6902 = vpop.permute.xlu0 %6901
    %6903 = vrot.lane.b32.xlu0 %v5474, 112
    %v6904 = vpop.permute.xlu0 %6903
    %v6905 = vsel %vm1005, %v6898, 0
    %v6907 = vsel %vm1005, %v6900, 0
    %v6909 = vsel %vm1005, %v6902, 0
    %v6911 = vsel %vm1005, %v6904, 0
    %6913 = vmatprep.subr.mxu0 0.0
    %6914 = vmatpush1.xpose.msra.mxu0 0.0
    %6915 = vmatprep.subr.mxu0 0.0
    %6916 = vmatpush1.xpose.msra.mxu0 0.0
    %6917 = vmatprep.subr.mxu0 0.0
    %6918 = vmatpush1.xpose.msra.mxu0 0.0
    %6919 = vmatprep.subr.mxu0 0.0
    %6920 = vmatpush1.xpose.msra.mxu0 0.0
    %6921 = vmatprep.subr.mxu0 0.0
    %6922 = vmatpush1.xpose.msra.mxu0 0.0
    %6923 = vmatprep.subr.mxu0 0.0
    %6924 = vmatpush1.xpose.msra.mxu0 0.0
    %6925 = vmatprep.subr.mxu0 0.0
    %6926 = vmatpush1.xpose.msra.mxu0 0.0
    %6927 = vmatprep.subr.mxu0 0.0
    %6928 = vmatpush1.xpose.msra.mxu0 0.0
    %6929 = vmatprep.subr.mxu0 0.0
    %6930 = vmatpush1.xpose.msra.mxu0 0.0
    %6931 = vmatprep.subr.mxu0 0.0
    %6932 = vmatpush1.xpose.msra.mxu0 0.0
    %6933 = vmatprep.subr.mxu0 0.0
    %6934 = vmatpush1.xpose.msra.mxu0 0.0
    %6935 = vmatprep.subr.mxu0 0.0
    %6936 = vmatpush1.xpose.msra.mxu0 0.0
    %6937 = vmatprep.subr.mxu0 0.0
    %6938 = vmatpush1.xpose.msra.mxu0 %v6911
    %6939 = vmatprep.subr.mxu0 0.0
    %6940 = vmatpush1.xpose.msra.mxu0 %v6909
    %6941 = vmatprep.subr.mxu0 0.0
    %6942 = vmatpush1.xpose.msra.mxu0 %v6907
    %6943 = vmatprep.subr.mxu0 0.0
    %6944 = vmatpush1.xpose.msra.mxu0 %v6905
    %6945 = vmatprep.subr.mxu0 0.0
    %6946 = vmatpush2.xpose.msra.mxu0 0.0
    %6947 = vmatprep.subr.mxu0 0.0
    %6948 = vmatpush2.xpose.msra.mxu0 0.0
    %6949 = vmatprep.subr.mxu0 0.0
    %6950 = vmatpush2.xpose.msra.mxu0 0.0
    %6951 = vmatprep.subr.mxu0 0.0
    %6952 = vmatpush2.xpose.msra.mxu0 0.0
    %6953 = vmatprep.subr.mxu0 0.0
    %6954 = vmatpush2.xpose.msra.mxu0 0.0
    %6955 = vmatprep.subr.mxu0 0.0
    %6956 = vmatpush2.xpose.msra.mxu0 0.0
    %6957 = vmatprep.subr.mxu0 0.0
    %6958 = vmatpush2.xpose.msra.mxu0 0.0
    %6959 = vmatprep.subr.mxu0 0.0
    %6960 = vmatpush2.xpose.msra.mxu0 0.0
    %6961 = vmatprep.subr.mxu0 0.0
    %6962 = vmatpush2.xpose.msra.mxu0 0.0
    %6963 = vmatprep.subr.mxu0 0.0
    %6964 = vmatpush2.xpose.msra.mxu0 0.0
    %6965 = vmatprep.subr.mxu0 0.0
    %6966 = vmatpush2.xpose.msra.mxu0 0.0
    %6967 = vmatprep.subr.mxu0 0.0
    %6968 = vmatpush2.xpose.msra.mxu0 0.0
    %6969 = vmatprep.subr.mxu0 0.0
    %6970 = vmatpush2.xpose.msra.mxu0 0.0
    %6971 = vmatprep.subr.mxu0 0.0
    %6972 = vmatpush2.xpose.msra.mxu0 0.0
    %6973 = vmatprep.subr.mxu0 0.0
    %6974 = vmatpush2.xpose.msra.mxu0 0.0
    %6975 = vmatprep.subr.mxu0 0.0
    %6976 = vmatpush2.xpose.msra.mxu0 0.0
    %6977 = vmatprep.mubr.f32.mxu0 0.0
    %6978 = vmatmul.mubr.f32.gmra.mxu0 %v6792
    %v6979 = vpop.f32.mrf.mxu0
    %v6980 = vadd.f32 0.0, %v6979
    %v6981 = vpop.f32.mrf.mxu0
    %6982 = vmatprep.mubr.f32.mxu0 0.0
    %6983 = vmatmul.mubr.f32.gmra.mxu0 %v6794
    %v6984 = vpop.f32.mrf.mxu0
    %v6985 = vadd.f32 0.0, %v6984
    %v6986 = vpop.f32.mrf.mxu0
    %6987 = vmatprep.mubr.f32.mxu0 0.0
    %6988 = vmatmul.mubr.f32.gmra.mxu0 %v6796
    %v6989 = vpop.f32.mrf.mxu0
    %v6990 = vadd.f32 0.0, %v6989
    %v6991 = vpop.f32.mrf.mxu0
    %6992 = vmatprep.mubr.f32.mxu0 0.0
    %6993 = vmatmul.mubr.f32.gmra.mxu0 %v6798
    %v6994 = vpop.f32.mrf.mxu0
    %v6995 = vadd.f32 0.0, %v6994
    %v6996 = vpop.f32.mrf.mxu0
    %6997 = vdwg.mxu0
    %v6998 = vmul.f32 %v4977, %v6980
    %v6999 = vmul.f32 %v4978, %v6985
    %v7000 = vmul.f32 %v4979, %v6990
    %v7001 = vmul.f32 %v4980, %v6995
    %v7002 = vadd.f32 %v6893, %v6998
    %v7003 = vadd.f32 %v6894, %v6999
    %v7004 = vadd.f32 %v6895, %v7000
    %v7005 = vadd.f32 %v6896, %v7001
    %v7006 = vsel %vm5566, %v7002, -1e+30
    %v7007 = vsel %vm5567, %v7003, -1e+30
    %v7008 = vsel %vm5568, %v7004, -1e+30
    %v7009 = vsel %vm5569, %v7005, -1e+30
    %v7010 = vsel %vm415, %v7006, -inf
    %7011 = vmax.xlane.f32.xlu0 %v7010
    %v7012 = vpop.xlane.xlu0 %7011
    %v7013 = vsel %vm415, %v7007, -inf
    %7014 = vmax.xlane.f32.xlu0 %v7013
    %v7015 = vpop.xlane.xlu0 %7014
    %v7016 = vsel %vm415, %v7008, -inf
    %7017 = vmax.xlane.f32.xlu0 %v7016
    %v7018 = vpop.xlane.xlu0 %7017
    %v7019 = vsel %vm415, %v7009, -inf
    %7020 = vmax.xlane.f32.xlu0 %v7019
    %v7021 = vpop.xlane.xlu0 %7020
    %v7022 = vsub.f32 %v7006, %v7012
    %v7023 = vsub.f32 %v7007, %v7015
    %v7024 = vsub.f32 %v7008, %v7018
    %v7025 = vsub.f32 %v7009, %v7021
    %v7026 = vmul.f32 %v7022, 1.442695
    %v7027 = vpow.pop %v7026
    %v7028 = vmul.f32 %v7023, 1.442695
    %v7029 = vpow.pop %v7028
    %v7030 = vmul.f32 %v7024, 1.442695
    %v7031 = vpow.pop %v7030
    %v7032 = vmul.f32 %v7025, 1.442695
    %v7033 = vpow.pop %v7032
    %v7034 = vsel %vm5566, %v7027, 0.0
    %v7035 = vsel %vm5567, %v7029, 0.0
    %v7036 = vsel %vm5568, %v7031, 0.0
    %v7037 = vsel %vm5569, %v7033, 0.0
    %v7038 = vsel %vm415, %v7034, 0.0
    %7039 = vadd.xlane.f32.xlu0 %v7038
    %v7040 = vpop.xlane.xlu0 %7039
    %v7041 = vsel %vm415, %v7035, 0.0
    %7042 = vadd.xlane.f32.xlu0 %v7041
    %v7043 = vpop.xlane.xlu0 %7042
    %v7044 = vsel %vm415, %v7036, 0.0
    %7045 = vadd.xlane.f32.xlu0 %v7044
    %v7046 = vpop.xlane.xlu0 %7045
    %v7047 = vsel %vm415, %v7037, 0.0
    %7048 = vadd.xlane.f32.xlu0 %v7047
    %v7049 = vpop.xlane.xlu0 %7048
    %vm7050 = vcmp.eq.f32.partialorder %v7040, 0.0
    %vm7051 = vcmp.eq.f32.partialorder %v7043, 0.0
    %vm7052 = vcmp.eq.f32.partialorder %v7046, 0.0
    %vm7053 = vcmp.eq.f32.partialorder %v7049, 0.0
    %v7054 = vsel %vm7050, 1.0, %v7040
    %v7055 = vsel %vm7051, 1.0, %v7043
    %v7056 = vsel %vm7052, 1.0, %v7046
    %v7057 = vsel %vm7053, 1.0, %v7049
    %v7058 = vrcp.pop %v7054
    %v7059 = vrcp.pop %v7055
    %v7060 = vrcp.pop %v7056
    %v7061 = vrcp.pop %v7057
    %v7062 = vmul.f32 %v7034, %v7058
    %v7063 = vmul.f32 %v7035, %v7059
    %v7064 = vmul.f32 %v7036, %v7060
    %v7065 = vmul.f32 %v7037, %v7061
    %v7066 = vmul.f32 %v7062, %v4973
    %v7067 = vmul.f32 %v7063, %v4974
    %v7068 = vmul.f32 %v7064, %v4975
    %v7069 = vmul.f32 %v7065, %v4976
    %v7070 = vmul.f32 %v7062, %v4977
    %v7071 = vmul.f32 %v7063, %v4978
    %v7072 = vmul.f32 %v7064, %v4979
    %v7073 = vmul.f32 %v7065, %v4980
    %7074 = vrot.lane.b32.xlu0 %v5544, 112
    %v7075 = vpop.permute.xlu0 %7074
    %7076 = vrot.lane.b32.xlu0 %v5549, 112
    %v7077 = vpop.permute.xlu0 %7076
    %7078 = vrot.lane.b32.xlu0 %v5554, 112
    %v7079 = vpop.permute.xlu0 %7078
    %7080 = vrot.lane.b32.xlu0 %v5559, 112
    %v7081 = vpop.permute.xlu0 %7080
    %v7087 = vsel %vm415, %v7070, 0
    %v7090 = vsel %vm415, %v7071, 0
    %v7093 = vsel %vm415, %v7072, 0
    %v7096 = vsel %vm415, %v7073, 0
    %7098 = vmatprep.subr.mxu0 0.0
    %7099 = vmatpush1.msra.mxu0 0.0
    %7100 = vmatprep.subr.mxu0 0.0
    %7101 = vmatpush1.msra.mxu0 0.0
    %7102 = vmatprep.subr.mxu0 0.0
    %7103 = vmatpush1.msra.mxu0 0.0
    %7104 = vmatprep.subr.mxu0 0.0
    %7105 = vmatpush1.msra.mxu0 0.0
    %7106 = vmatprep.subr.mxu0 0.0
    %7107 = vmatpush1.msra.mxu0 0.0
    %7108 = vmatprep.subr.mxu0 0.0
    %7109 = vmatpush1.msra.mxu0 0.0
    %7110 = vmatprep.subr.mxu0 0.0
    %7111 = vmatpush1.msra.mxu0 0.0
    %7112 = vmatprep.subr.mxu0 0.0
    %7113 = vmatpush1.msra.mxu0 0.0
    %7114 = vmatprep.subr.mxu0 0.0
    %7115 = vmatpush1.msra.mxu0 0.0
    %7116 = vmatprep.subr.mxu0 0.0
    %7117 = vmatpush1.msra.mxu0 0.0
    %7118 = vmatprep.subr.mxu0 0.0
    %7119 = vmatpush1.msra.mxu0 0.0
    %7120 = vmatprep.subr.mxu0 0.0
    %7121 = vmatpush1.msra.mxu0 0.0
    %7122 = vmatprep.subr.mxu0 0.0
    %7123 = vmatpush1.msra.mxu0 %v7081
    %7124 = vmatprep.subr.mxu0 0.0
    %7125 = vmatpush1.msra.mxu0 %v7079
    %7126 = vmatprep.subr.mxu0 0.0
    %7127 = vmatpush1.msra.mxu0 %v7077
    %7128 = vmatprep.subr.mxu0 0.0
    %7129 = vmatpush1.msra.mxu0 %v7075
    %7130 = vmatprep.subr.mxu0 0.0
    %7131 = vmatpush2.msra.mxu0 0.0
    %7132 = vmatprep.subr.mxu0 0.0
    %7133 = vmatpush2.msra.mxu0 0.0
    %7134 = vmatprep.subr.mxu0 0.0
    %7135 = vmatpush2.msra.mxu0 0.0
    %7136 = vmatprep.subr.mxu0 0.0
    %7137 = vmatpush2.msra.mxu0 0.0
    %7138 = vmatprep.subr.mxu0 0.0
    %7139 = vmatpush2.msra.mxu0 0.0
    %7140 = vmatprep.subr.mxu0 0.0
    %7141 = vmatpush2.msra.mxu0 0.0
    %7142 = vmatprep.subr.mxu0 0.0
    %7143 = vmatpush2.msra.mxu0 0.0
    %7144 = vmatprep.subr.mxu0 0.0
    %7145 = vmatpush2.msra.mxu0 0.0
    %7146 = vmatprep.subr.mxu0 0.0
    %7147 = vmatpush2.msra.mxu0 0.0
    %7148 = vmatprep.subr.mxu0 0.0
    %7149 = vmatpush2.msra.mxu0 0.0
    %7150 = vmatprep.subr.mxu0 0.0
    %7151 = vmatpush2.msra.mxu0 0.0
    %7152 = vmatprep.subr.mxu0 0.0
    %7153 = vmatpush2.msra.mxu0 0.0
    %7154 = vmatprep.subr.mxu0 0.0
    %7155 = vmatpush2.msra.mxu0 0.0
    %7156 = vmatprep.subr.mxu0 0.0
    %7157 = vmatpush2.msra.mxu0 0.0
    %7158 = vmatprep.subr.mxu0 0.0
    %7159 = vmatpush2.msra.mxu0 0.0
    %7160 = vmatprep.subr.mxu0 0.0
    %7161 = vmatpush2.msra.mxu0 0.0
    %7162 = vmatprep.mubr.f32.mxu0 0.0
    %7163 = vmatmul.mubr.f32.gmra.mxu0 %v7087
    %v7164 = vpop.f32.mrf.mxu0
    %v7165 = vadd.f32 0.0, %v7164
    %v7166 = vpop.f32.mrf.mxu0
    %7167 = vmatprep.mubr.f32.mxu0 0.0
    %7168 = vmatmul.mubr.f32.gmra.mxu0 %v7090
    %v7169 = vpop.f32.mrf.mxu0
    %v7170 = vadd.f32 0.0, %v7169
    %v7171 = vpop.f32.mrf.mxu0
    %7172 = vmatprep.mubr.f32.mxu0 0.0
    %7173 = vmatmul.mubr.f32.gmra.mxu0 %v7093
    %v7174 = vpop.f32.mrf.mxu0
    %v7175 = vadd.f32 0.0, %v7174
    %v7176 = vpop.f32.mrf.mxu0
    %7177 = vmatprep.mubr.f32.mxu0 0.0
    %7178 = vmatmul.mubr.f32.gmra.mxu0 %v7096
    %v7179 = vpop.f32.mrf.mxu0
    %v7180 = vadd.f32 0.0, %v7179
    %v7181 = vpop.f32.mrf.mxu0
    %7182 = vdwg.mxu0
    %7183 = vrot.lane.b32.xlu0 %v5374, 112
    %v7184 = vpop.permute.xlu0 %7183
    %7185 = vrot.lane.b32.xlu0 %v5379, 112
    %v7186 = vpop.permute.xlu0 %7185
    %7187 = vrot.lane.b32.xlu0 %v5384, 112
    %v7188 = vpop.permute.xlu0 %7187
    %7189 = vrot.lane.b32.xlu0 %v5389, 112
    %v7190 = vpop.permute.xlu0 %7189
    %v7196 = vsel %vm415, %v7066, 0
    %v7199 = vsel %vm415, %v7067, 0
    %v7202 = vsel %vm415, %v7068, 0
    %v7205 = vsel %vm415, %v7069, 0
    %7207 = vmatprep.subr.mxu0 0.0
    %7208 = vmatpush1.msra.mxu0 0.0
    %7209 = vmatprep.subr.mxu0 0.0
    %7210 = vmatpush1.msra.mxu0 0.0
    %7211 = vmatprep.subr.mxu0 0.0
    %7212 = vmatpush1.msra.mxu0 0.0
    %7213 = vmatprep.subr.mxu0 0.0
    %7214 = vmatpush1.msra.mxu0 0.0
    %7215 = vmatprep.subr.mxu0 0.0
    %7216 = vmatpush1.msra.mxu0 0.0
    %7217 = vmatprep.subr.mxu0 0.0
    %7218 = vmatpush1.msra.mxu0 0.0
    %7219 = vmatprep.subr.mxu0 0.0
    %7220 = vmatpush1.msra.mxu0 0.0
    %7221 = vmatprep.subr.mxu0 0.0
    %7222 = vmatpush1.msra.mxu0 0.0
    %7223 = vmatprep.subr.mxu0 0.0
    %7224 = vmatpush1.msra.mxu0 0.0
    %7225 = vmatprep.subr.mxu0 0.0
    %7226 = vmatpush1.msra.mxu0 0.0
    %7227 = vmatprep.subr.mxu0 0.0
    %7228 = vmatpush1.msra.mxu0 0.0
    %7229 = vmatprep.subr.mxu0 0.0
    %7230 = vmatpush1.msra.mxu0 0.0
    %7231 = vmatprep.subr.mxu0 0.0
    %7232 = vmatpush1.msra.mxu0 %v7190
    %7233 = vmatprep.subr.mxu0 0.0
    %7234 = vmatpush1.msra.mxu0 %v7188
    %7235 = vmatprep.subr.mxu0 0.0
    %7236 = vmatpush1.msra.mxu0 %v7186
    %7237 = vmatprep.subr.mxu0 0.0
    %7238 = vmatpush1.msra.mxu0 %v7184
    %7239 = vmatprep.subr.mxu0 0.0
    %7240 = vmatpush2.msra.mxu0 0.0
    %7241 = vmatprep.subr.mxu0 0.0
    %7242 = vmatpush2.msra.mxu0 0.0
    %7243 = vmatprep.subr.mxu0 0.0
    %7244 = vmatpush2.msra.mxu0 0.0
    %7245 = vmatprep.subr.mxu0 0.0
    %7246 = vmatpush2.msra.mxu0 0.0
    %7247 = vmatprep.subr.mxu0 0.0
    %7248 = vmatpush2.msra.mxu0 0.0
    %7249 = vmatprep.subr.mxu0 0.0
    %7250 = vmatpush2.msra.mxu0 0.0
    %7251 = vmatprep.subr.mxu0 0.0
    %7252 = vmatpush2.msra.mxu0 0.0
    %7253 = vmatprep.subr.mxu0 0.0
    %7254 = vmatpush2.msra.mxu0 0.0
    %7255 = vmatprep.subr.mxu0 0.0
    %7256 = vmatpush2.msra.mxu0 0.0
    %7257 = vmatprep.subr.mxu0 0.0
    %7258 = vmatpush2.msra.mxu0 0.0
    %7259 = vmatprep.subr.mxu0 0.0
    %7260 = vmatpush2.msra.mxu0 0.0
    %7261 = vmatprep.subr.mxu0 0.0
    %7262 = vmatpush2.msra.mxu0 0.0
    %7263 = vmatprep.subr.mxu0 0.0
    %7264 = vmatpush2.msra.mxu0 0.0
    %7265 = vmatprep.subr.mxu0 0.0
    %7266 = vmatpush2.msra.mxu0 0.0
    %7267 = vmatprep.subr.mxu0 0.0
    %7268 = vmatpush2.msra.mxu0 0.0
    %7269 = vmatprep.subr.mxu0 0.0
    %7270 = vmatpush2.msra.mxu0 0.0
    %7271 = vmatprep.mubr.f32.mxu0 0.0
    %7272 = vmatmul.mubr.f32.gmra.mxu0 %v7196
    %v7273 = vpop.f32.mrf.mxu0
    %v7274 = vadd.f32 %v7165, %v7273
    %v7275 = vpop.f32.mrf.mxu0
    %7276 = vmatprep.mubr.f32.mxu0 0.0
    %7277 = vmatmul.mubr.f32.gmra.mxu0 %v7199
    %v7278 = vpop.f32.mrf.mxu0
    %v7279 = vadd.f32 %v7170, %v7278
    %v7280 = vpop.f32.mrf.mxu0
    %7281 = vmatprep.mubr.f32.mxu0 0.0
    %7282 = vmatmul.mubr.f32.gmra.mxu0 %v7202
    %v7283 = vpop.f32.mrf.mxu0
    %v7284 = vadd.f32 %v7175, %v7283
    %v7285 = vpop.f32.mrf.mxu0
    %7286 = vmatprep.mubr.f32.mxu0 0.0
    %7287 = vmatmul.mubr.f32.gmra.mxu0 %v7205
    %v7288 = vpop.f32.mrf.mxu0
    %v7289 = vadd.f32 %v7180, %v7288
    %v7290 = vpop.f32.mrf.mxu0
    %7291 = vdwg.mxu0
    %v7293 = vsel %vm1005, %v7274, 0
    %v7296 = vsel %vm1005, %v7279, 0
    %v7299 = vsel %vm1005, %v7284, 0
    %v7302 = vsel %vm1005, %v7289, 0
    %7304 = vmatprep.subr.mxu0 0.0
    %7305 = vmatpush1.msra.mxu0 0.0
    %7306 = vmatprep.subr.mxu0 0.0
    %7307 = vmatpush1.msra.mxu0 0.0
    %7308 = vmatprep.subr.mxu0 0.0
    %7309 = vmatpush1.msra.mxu0 0.0
    %7310 = vmatprep.subr.mxu0 0.0
    %7311 = vmatpush1.msra.mxu0 0.0
    %7312 = vmatprep.subr.mxu0 0.0
    %7313 = vmatpush1.msra.mxu0 0.0
    %7314 = vmatprep.subr.mxu0 0.0
    %7315 = vmatpush1.msra.mxu0 0.0
    %7316 = vmatprep.subr.mxu0 0.0
    %7317 = vmatpush1.msra.mxu0 0.0
    %7318 = vmatprep.subr.mxu0 0.0
    %7319 = vmatpush1.msra.mxu0 0.0
    %7320 = vmatprep.subr.mxu0 0.0
    %7321 = vmatpush1.msra.mxu0 0.0
    %7322 = vmatprep.subr.mxu0 0.0
    %7323 = vmatpush1.msra.mxu0 0.0
    %7324 = vmatprep.subr.mxu0 0.0
    %7325 = vmatpush1.msra.mxu0 0.0
    %7326 = vmatprep.subr.mxu0 0.0
    %7327 = vmatpush1.msra.mxu0 0.0
    %7328 = vmatprep.subr.mxu0 0.0
    %7329 = vmatpush1.msra.mxu0 0.0
    %7330 = vmatprep.subr.mxu0 0.0
    %7331 = vmatpush1.msra.mxu0 0.0
    %7332 = vmatprep.subr.mxu0 0.0
    %7333 = vmatpush1.msra.mxu0 0.0
    %7334 = vmatprep.subr.mxu0 0.0
    %7335 = vmatpush1.msra.mxu0 %v5572
    %7336 = vmatprep.subr.mxu0 0.0
    %7337 = vmatpush2.msra.mxu0 0.0
    %7338 = vmatprep.subr.mxu0 0.0
    %7339 = vmatpush2.msra.mxu0 0.0
    %7340 = vmatprep.subr.mxu0 0.0
    %7341 = vmatpush2.msra.mxu0 0.0
    %7342 = vmatprep.subr.mxu0 0.0
    %7343 = vmatpush2.msra.mxu0 0.0
    %7344 = vmatprep.subr.mxu0 0.0
    %7345 = vmatpush2.msra.mxu0 0.0
    %7346 = vmatprep.subr.mxu0 0.0
    %7347 = vmatpush2.msra.mxu0 0.0
    %7348 = vmatprep.subr.mxu0 0.0
    %7349 = vmatpush2.msra.mxu0 0.0
    %7350 = vmatprep.subr.mxu0 0.0
    %7351 = vmatpush2.msra.mxu0 0.0
    %7352 = vmatprep.subr.mxu0 0.0
    %7353 = vmatpush2.msra.mxu0 0.0
    %7354 = vmatprep.subr.mxu0 0.0
    %7355 = vmatpush2.msra.mxu0 0.0
    %7356 = vmatprep.subr.mxu0 0.0
    %7357 = vmatpush2.msra.mxu0 0.0
    %7358 = vmatprep.subr.mxu0 0.0
    %7359 = vmatpush2.msra.mxu0 0.0
    %7360 = vmatprep.subr.mxu0 0.0
    %7361 = vmatpush2.msra.mxu0 0.0
    %7362 = vmatprep.subr.mxu0 0.0
    %7363 = vmatpush2.msra.mxu0 0.0
    %7364 = vmatprep.subr.mxu0 0.0
    %7365 = vmatpush2.msra.mxu0 0.0
    %7366 = vmatprep.subr.mxu0 0.0
    %7367 = vmatpush2.msra.mxu0 0.0
    %7368 = vmatprep.mubr.f32.mxu0 0.0
    %7369 = vmatmul.mubr.f32.gmra.mxu0 %v7293
    %v7370 = vpop.f32.mrf.mxu0
    %v7371 = vadd.f32 0.0, %v7370
    %v7372 = vpop.f32.mrf.mxu0
    %7373 = vmatprep.mubr.f32.mxu0 0.0
    %7374 = vmatmul.mubr.f32.gmra.mxu0 %v7296
    %v7375 = vpop.f32.mrf.mxu0
    %v7376 = vadd.f32 0.0, %v7375
    %v7377 = vpop.f32.mrf.mxu0
    %7378 = vmatprep.mubr.f32.mxu0 0.0
    %7379 = vmatmul.mubr.f32.gmra.mxu0 %v7299
    %v7380 = vpop.f32.mrf.mxu0
    %v7381 = vadd.f32 0.0, %v7380
    %v7382 = vpop.f32.mrf.mxu0
    %7383 = vmatprep.mubr.f32.mxu0 0.0
    %7384 = vmatmul.mubr.f32.gmra.mxu0 %v7302
    %v7385 = vpop.f32.mrf.mxu0
    %v7386 = vadd.f32 0.0, %v7385
    %v7387 = vpop.f32.mrf.mxu0
    %7388 = vdwg.mxu0
    %v7389 = vadd.f32 %v6758, %v7371
    %v7390 = vadd.f32 %v6763, %v7376
    %v7391 = vadd.f32 %v6768, %v7381
    %v7392 = vadd.f32 %v6773, %v7386
    %7393 = vrot.lane.b32.xlu0 %v5174, 72
    %v7394 = vpop.permute.xlu0 %7393
    %7395 = vrot.lane.b32.xlu0 %v5175, 72
    %v7396 = vpop.permute.xlu0 %7395
    %7397 = vrot.lane.b32.xlu0 %v5176, 72
    %v7398 = vpop.permute.xlu0 %7397
    %7399 = vrot.lane.b32.xlu0 %v5177, 72
    %v7400 = vpop.permute.xlu0 %7399
    %7401 = vrot.lane.b32.xlu0 %v5273, 104
    %v7402 = vpop.permute.xlu0 %7401
    %7403 = vrot.lane.b32.xlu0 %v5278, 104
    %v7404 = vpop.permute.xlu0 %7403
    %7405 = vrot.lane.b32.xlu0 %v5283, 104
    %v7406 = vpop.permute.xlu0 %7405
    %7407 = vrot.lane.b32.xlu0 %v5288, 104
    %v7408 = vpop.permute.xlu0 %7407
    %v7409 = vsel %vm1005, %v7394, 0
    %v7411 = vsel %vm1005, %v7396, 0
    %v7413 = vsel %vm1005, %v7398, 0
    %v7415 = vsel %vm1005, %v7400, 0
    %v7417 = vsel %vm1005, %v7402, 0
    %v7419 = vsel %vm1005, %v7404, 0
    %v7421 = vsel %vm1005, %v7406, 0
    %v7423 = vsel %vm1005, %v7408, 0
    %7425 = vmatprep.subr.mxu0 0.0
    %7426 = vmatpush1.xpose.msra.mxu0 0.0
    %7427 = vmatprep.subr.mxu0 0.0
    %7428 = vmatpush1.xpose.msra.mxu0 0.0
    %7429 = vmatprep.subr.mxu0 0.0
    %7430 = vmatpush1.xpose.msra.mxu0 0.0
    %7431 = vmatprep.subr.mxu0 0.0
    %7432 = vmatpush1.xpose.msra.mxu0 0.0
    %7433 = vmatprep.subr.mxu0 0.0
    %7434 = vmatpush1.xpose.msra.mxu0 0.0
    %7435 = vmatprep.subr.mxu0 0.0
    %7436 = vmatpush1.xpose.msra.mxu0 0.0
    %7437 = vmatprep.subr.mxu0 0.0
    %7438 = vmatpush1.xpose.msra.mxu0 0.0
    %7439 = vmatprep.subr.mxu0 0.0
    %7440 = vmatpush1.xpose.msra.mxu0 0.0
    %7441 = vmatprep.subr.mxu0 0.0
    %7442 = vmatpush1.xpose.msra.mxu0 0.0
    %7443 = vmatprep.subr.mxu0 0.0
    %7444 = vmatpush1.xpose.msra.mxu0 0.0
    %7445 = vmatprep.subr.mxu0 0.0
    %7446 = vmatpush1.xpose.msra.mxu0 0.0
    %7447 = vmatprep.subr.mxu0 0.0
    %7448 = vmatpush1.xpose.msra.mxu0 0.0
    %7449 = vmatprep.subr.mxu0 0.0
    %7450 = vmatpush1.xpose.msra.mxu0 %v7423
    %7451 = vmatprep.subr.mxu0 0.0
    %7452 = vmatpush1.xpose.msra.mxu0 %v7421
    %7453 = vmatprep.subr.mxu0 0.0
    %7454 = vmatpush1.xpose.msra.mxu0 %v7419
    %7455 = vmatprep.subr.mxu0 0.0
    %7456 = vmatpush1.xpose.msra.mxu0 %v7417
    %7457 = vmatprep.subr.mxu0 0.0
    %7458 = vmatpush2.xpose.msra.mxu0 0.0
    %7459 = vmatprep.subr.mxu0 0.0
    %7460 = vmatpush2.xpose.msra.mxu0 0.0
    %7461 = vmatprep.subr.mxu0 0.0
    %7462 = vmatpush2.xpose.msra.mxu0 0.0
    %7463 = vmatprep.subr.mxu0 0.0
    %7464 = vmatpush2.xpose.msra.mxu0 0.0
    %7465 = vmatprep.subr.mxu0 0.0
    %7466 = vmatpush2.xpose.msra.mxu0 0.0
    %7467 = vmatprep.subr.mxu0 0.0
    %7468 = vmatpush2.xpose.msra.mxu0 0.0
    %7469 = vmatprep.subr.mxu0 0.0
    %7470 = vmatpush2.xpose.msra.mxu0 0.0
    %7471 = vmatprep.subr.mxu0 0.0
    %7472 = vmatpush2.xpose.msra.mxu0 0.0
    %7473 = vmatprep.subr.mxu0 0.0
    %7474 = vmatpush2.xpose.msra.mxu0 0.0
    %7475 = vmatprep.subr.mxu0 0.0
    %7476 = vmatpush2.xpose.msra.mxu0 0.0
    %7477 = vmatprep.subr.mxu0 0.0
    %7478 = vmatpush2.xpose.msra.mxu0 0.0
    %7479 = vmatprep.subr.mxu0 0.0
    %7480 = vmatpush2.xpose.msra.mxu0 0.0
    %7481 = vmatprep.subr.mxu0 0.0
    %7482 = vmatpush2.xpose.msra.mxu0 0.0
    %7483 = vmatprep.subr.mxu0 0.0
    %7484 = vmatpush2.xpose.msra.mxu0 0.0
    %7485 = vmatprep.subr.mxu0 0.0
    %7486 = vmatpush2.xpose.msra.mxu0 0.0
    %7487 = vmatprep.subr.mxu0 0.0
    %7488 = vmatpush2.xpose.msra.mxu0 0.0
    %7489 = vmatprep.mubr.f32.mxu0 0.0
    %7490 = vmatmul.mubr.f32.gmra.mxu0 %v7409
    %v7491 = vpop.f32.mrf.mxu0
    %v7492 = vadd.f32 0.0, %v7491
    %v7493 = vpop.f32.mrf.mxu0
    %7494 = vmatprep.mubr.f32.mxu0 0.0
    %7495 = vmatmul.mubr.f32.gmra.mxu0 %v7411
    %v7496 = vpop.f32.mrf.mxu0
    %v7497 = vadd.f32 0.0, %v7496
    %v7498 = vpop.f32.mrf.mxu0
    %7499 = vmatprep.mubr.f32.mxu0 0.0
    %7500 = vmatmul.mubr.f32.gmra.mxu0 %v7413
    %v7501 = vpop.f32.mrf.mxu0
    %v7502 = vadd.f32 0.0, %v7501
    %v7503 = vpop.f32.mrf.mxu0
    %7504 = vmatprep.mubr.f32.mxu0 0.0
    %7505 = vmatmul.mubr.f32.gmra.mxu0 %v7415
    %v7506 = vpop.f32.mrf.mxu0
    %v7507 = vadd.f32 0.0, %v7506
    %v7508 = vpop.f32.mrf.mxu0
    %7509 = vdwg.mxu0
    %v7510 = vmul.f32 %v4973, %v7492
    %v7511 = vmul.f32 %v4974, %v7497
    %v7512 = vmul.f32 %v4975, %v7502
    %v7513 = vmul.f32 %v4976, %v7507
    %7514 = vrot.lane.b32.xlu0 %v5459, 104
    %v7515 = vpop.permute.xlu0 %7514
    %7516 = vrot.lane.b32.xlu0 %v5464, 104
    %v7517 = vpop.permute.xlu0 %7516
    %7518 = vrot.lane.b32.xlu0 %v5469, 104
    %v7519 = vpop.permute.xlu0 %7518
    %7520 = vrot.lane.b32.xlu0 %v5474, 104
    %v7521 = vpop.permute.xlu0 %7520
    %v7522 = vsel %vm1005, %v7515, 0
    %v7524 = vsel %vm1005, %v7517, 0
    %v7526 = vsel %vm1005, %v7519, 0
    %v7528 = vsel %vm1005, %v7521, 0
    %7530 = vmatprep.subr.mxu0 0.0
    %7531 = vmatpush1.xpose.msra.mxu0 0.0
    %7532 = vmatprep.subr.mxu0 0.0
    %7533 = vmatpush1.xpose.msra.mxu0 0.0
    %7534 = vmatprep.subr.mxu0 0.0
    %7535 = vmatpush1.xpose.msra.mxu0 0.0
    %7536 = vmatprep.subr.mxu0 0.0
    %7537 = vmatpush1.xpose.msra.mxu0 0.0
    %7538 = vmatprep.subr.mxu0 0.0
    %7539 = vmatpush1.xpose.msra.mxu0 0.0
    %7540 = vmatprep.subr.mxu0 0.0
    %7541 = vmatpush1.xpose.msra.mxu0 0.0
    %7542 = vmatprep.subr.mxu0 0.0
    %7543 = vmatpush1.xpose.msra.mxu0 0.0
    %7544 = vmatprep.subr.mxu0 0.0
    %7545 = vmatpush1.xpose.msra.mxu0 0.0
    %7546 = vmatprep.subr.mxu0 0.0
    %7547 = vmatpush1.xpose.msra.mxu0 0.0
    %7548 = vmatprep.subr.mxu0 0.0
    %7549 = vmatpush1.xpose.msra.mxu0 0.0
    %7550 = vmatprep.subr.mxu0 0.0
    %7551 = vmatpush1.xpose.msra.mxu0 0.0
    %7552 = vmatprep.subr.mxu0 0.0
    %7553 = vmatpush1.xpose.msra.mxu0 0.0
    %7554 = vmatprep.subr.mxu0 0.0
    %7555 = vmatpush1.xpose.msra.mxu0 %v7528
    %7556 = vmatprep.subr.mxu0 0.0
    %7557 = vmatpush1.xpose.msra.mxu0 %v7526
    %7558 = vmatprep.subr.mxu0 0.0
    %7559 = vmatpush1.xpose.msra.mxu0 %v7524
    %7560 = vmatprep.subr.mxu0 0.0
    %7561 = vmatpush1.xpose.msra.mxu0 %v7522
    %7562 = vmatprep.subr.mxu0 0.0
    %7563 = vmatpush2.xpose.msra.mxu0 0.0
    %7564 = vmatprep.subr.mxu0 0.0
    %7565 = vmatpush2.xpose.msra.mxu0 0.0
    %7566 = vmatprep.subr.mxu0 0.0
    %7567 = vmatpush2.xpose.msra.mxu0 0.0
    %7568 = vmatprep.subr.mxu0 0.0
    %7569 = vmatpush2.xpose.msra.mxu0 0.0
    %7570 = vmatprep.subr.mxu0 0.0
    %7571 = vmatpush2.xpose.msra.mxu0 0.0
    %7572 = vmatprep.subr.mxu0 0.0
    %7573 = vmatpush2.xpose.msra.mxu0 0.0
    %7574 = vmatprep.subr.mxu0 0.0
    %7575 = vmatpush2.xpose.msra.mxu0 0.0
    %7576 = vmatprep.subr.mxu0 0.0
    %7577 = vmatpush2.xpose.msra.mxu0 0.0
    %7578 = vmatprep.subr.mxu0 0.0
    %7579 = vmatpush2.xpose.msra.mxu0 0.0
    %7580 = vmatprep.subr.mxu0 0.0
    %7581 = vmatpush2.xpose.msra.mxu0 0.0
    %7582 = vmatprep.subr.mxu0 0.0
    %7583 = vmatpush2.xpose.msra.mxu0 0.0
    %7584 = vmatprep.subr.mxu0 0.0
    %7585 = vmatpush2.xpose.msra.mxu0 0.0
    %7586 = vmatprep.subr.mxu0 0.0
    %7587 = vmatpush2.xpose.msra.mxu0 0.0
    %7588 = vmatprep.subr.mxu0 0.0
    %7589 = vmatpush2.xpose.msra.mxu0 0.0
    %7590 = vmatprep.subr.mxu0 0.0
    %7591 = vmatpush2.xpose.msra.mxu0 0.0
    %7592 = vmatprep.subr.mxu0 0.0
    %7593 = vmatpush2.xpose.msra.mxu0 0.0
    %7594 = vmatprep.mubr.f32.mxu0 0.0
    %7595 = vmatmul.mubr.f32.gmra.mxu0 %v7409
    %v7596 = vpop.f32.mrf.mxu0
    %v7597 = vadd.f32 0.0, %v7596
    %v7598 = vpop.f32.mrf.mxu0
    %7599 = vmatprep.mubr.f32.mxu0 0.0
    %7600 = vmatmul.mubr.f32.gmra.mxu0 %v7411
    %v7601 = vpop.f32.mrf.mxu0
    %v7602 = vadd.f32 0.0, %v7601
    %v7603 = vpop.f32.mrf.mxu0
    %7604 = vmatprep.mubr.f32.mxu0 0.0
    %7605 = vmatmul.mubr.f32.gmra.mxu0 %v7413
    %v7606 = vpop.f32.mrf.mxu0
    %v7607 = vadd.f32 0.0, %v7606
    %v7608 = vpop.f32.mrf.mxu0
    %7609 = vmatprep.mubr.f32.mxu0 0.0
    %7610 = vmatmul.mubr.f32.gmra.mxu0 %v7415
    %v7611 = vpop.f32.mrf.mxu0
    %v7612 = vadd.f32 0.0, %v7611
    %v7613 = vpop.f32.mrf.mxu0
    %7614 = vdwg.mxu0
    %v7615 = vmul.f32 %v4977, %v7597
    %v7616 = vmul.f32 %v4978, %v7602
    %v7617 = vmul.f32 %v4979, %v7607
    %v7618 = vmul.f32 %v4980, %v7612
    %v7619 = vadd.f32 %v7510, %v7615
    %v7620 = vadd.f32 %v7511, %v7616
    %v7621 = vadd.f32 %v7512, %v7617
    %v7622 = vadd.f32 %v7513, %v7618
    %v7623 = vsel %vm5566, %v7619, -1e+30
    %v7624 = vsel %vm5567, %v7620, -1e+30
    %v7625 = vsel %vm5568, %v7621, -1e+30
    %v7626 = vsel %vm5569, %v7622, -1e+30
    %v7627 = vsel %vm415, %v7623, -inf
    %7628 = vmax.xlane.f32.xlu0 %v7627
    %v7629 = vpop.xlane.xlu0 %7628
    %v7630 = vsel %vm415, %v7624, -inf
    %7631 = vmax.xlane.f32.xlu0 %v7630
    %v7632 = vpop.xlane.xlu0 %7631
    %v7633 = vsel %vm415, %v7625, -inf
    %7634 = vmax.xlane.f32.xlu0 %v7633
    %v7635 = vpop.xlane.xlu0 %7634
    %v7636 = vsel %vm415, %v7626, -inf
    %7637 = vmax.xlane.f32.xlu0 %v7636
    %v7638 = vpop.xlane.xlu0 %7637
    %v7639 = vsub.f32 %v7623, %v7629
    %v7640 = vsub.f32 %v7624, %v7632
    %v7641 = vsub.f32 %v7625, %v7635
    %v7642 = vsub.f32 %v7626, %v7638
    %v7643 = vmul.f32 %v7639, 1.442695
    %v7644 = vpow.pop %v7643
    %v7645 = vmul.f32 %v7640, 1.442695
    %v7646 = vpow.pop %v7645
    %v7647 = vmul.f32 %v7641, 1.442695
    %v7648 = vpow.pop %v7647
    %v7649 = vmul.f32 %v7642, 1.442695
    %v7650 = vpow.pop %v7649
    %v7651 = vsel %vm5566, %v7644, 0.0
    %v7652 = vsel %vm5567, %v7646, 0.0
    %v7653 = vsel %vm5568, %v7648, 0.0
    %v7654 = vsel %vm5569, %v7650, 0.0
    %v7655 = vsel %vm415, %v7651, 0.0
    %7656 = vadd.xlane.f32.xlu0 %v7655
    %v7657 = vpop.xlane.xlu0 %7656
    %v7658 = vsel %vm415, %v7652, 0.0
    %7659 = vadd.xlane.f32.xlu0 %v7658
    %v7660 = vpop.xlane.xlu0 %7659
    %v7661 = vsel %vm415, %v7653, 0.0
    %7662 = vadd.xlane.f32.xlu0 %v7661
    %v7663 = vpop.xlane.xlu0 %7662
    %v7664 = vsel %vm415, %v7654, 0.0
    %7665 = vadd.xlane.f32.xlu0 %v7664
    %v7666 = vpop.xlane.xlu0 %7665
    %vm7667 = vcmp.eq.f32.partialorder %v7657, 0.0
    %vm7668 = vcmp.eq.f32.partialorder %v7660, 0.0
    %vm7669 = vcmp.eq.f32.partialorder %v7663, 0.0
    %vm7670 = vcmp.eq.f32.partialorder %v7666, 0.0
    %v7671 = vsel %vm7667, 1.0, %v7657
    %v7672 = vsel %vm7668, 1.0, %v7660
    %v7673 = vsel %vm7669, 1.0, %v7663
    %v7674 = vsel %vm7670, 1.0, %v7666
    %v7675 = vrcp.pop %v7671
    %v7676 = vrcp.pop %v7672
    %v7677 = vrcp.pop %v7673
    %v7678 = vrcp.pop %v7674
    %v7679 = vmul.f32 %v7651, %v7675
    %v7680 = vmul.f32 %v7652, %v7676
    %v7681 = vmul.f32 %v7653, %v7677
    %v7682 = vmul.f32 %v7654, %v7678
    %v7683 = vmul.f32 %v7679, %v4973
    %v7684 = vmul.f32 %v7680, %v4974
    %v7685 = vmul.f32 %v7681, %v4975
    %v7686 = vmul.f32 %v7682, %v4976
    %v7687 = vmul.f32 %v7679, %v4977
    %v7688 = vmul.f32 %v7680, %v4978
    %v7689 = vmul.f32 %v7681, %v4979
    %v7690 = vmul.f32 %v7682, %v4980
    %7691 = vrot.lane.b32.xlu0 %v5544, 104
    %v7692 = vpop.permute.xlu0 %7691
    %7693 = vrot.lane.b32.xlu0 %v5549, 104
    %v7694 = vpop.permute.xlu0 %7693
    %7695 = vrot.lane.b32.xlu0 %v5554, 104
    %v7696 = vpop.permute.xlu0 %7695
    %7697 = vrot.lane.b32.xlu0 %v5559, 104
    %v7698 = vpop.permute.xlu0 %7697
    %v7704 = vsel %vm415, %v7687, 0
    %v7707 = vsel %vm415, %v7688, 0
    %v7710 = vsel %vm415, %v7689, 0
    %v7713 = vsel %vm415, %v7690, 0
    %7715 = vmatprep.subr.mxu0 0.0
    %7716 = vmatpush1.msra.mxu0 0.0
    %7717 = vmatprep.subr.mxu0 0.0
    %7718 = vmatpush1.msra.mxu0 0.0
    %7719 = vmatprep.subr.mxu0 0.0
    %7720 = vmatpush1.msra.mxu0 0.0
    %7721 = vmatprep.subr.mxu0 0.0
    %7722 = vmatpush1.msra.mxu0 0.0
    %7723 = vmatprep.subr.mxu0 0.0
    %7724 = vmatpush1.msra.mxu0 0.0
    %7725 = vmatprep.subr.mxu0 0.0
    %7726 = vmatpush1.msra.mxu0 0.0
    %7727 = vmatprep.subr.mxu0 0.0
    %7728 = vmatpush1.msra.mxu0 0.0
    %7729 = vmatprep.subr.mxu0 0.0
    %7730 = vmatpush1.msra.mxu0 0.0
    %7731 = vmatprep.subr.mxu0 0.0
    %7732 = vmatpush1.msra.mxu0 0.0
    %7733 = vmatprep.subr.mxu0 0.0
    %7734 = vmatpush1.msra.mxu0 0.0
    %7735 = vmatprep.subr.mxu0 0.0
    %7736 = vmatpush1.msra.mxu0 0.0
    %7737 = vmatprep.subr.mxu0 0.0
    %7738 = vmatpush1.msra.mxu0 0.0
    %7739 = vmatprep.subr.mxu0 0.0
    %7740 = vmatpush1.msra.mxu0 %v7698
    %7741 = vmatprep.subr.mxu0 0.0
    %7742 = vmatpush1.msra.mxu0 %v7696
    %7743 = vmatprep.subr.mxu0 0.0
    %7744 = vmatpush1.msra.mxu0 %v7694
    %7745 = vmatprep.subr.mxu0 0.0
    %7746 = vmatpush1.msra.mxu0 %v7692
    %7747 = vmatprep.subr.mxu0 0.0
    %7748 = vmatpush2.msra.mxu0 0.0
    %7749 = vmatprep.subr.mxu0 0.0
    %7750 = vmatpush2.msra.mxu0 0.0
    %7751 = vmatprep.subr.mxu0 0.0
    %7752 = vmatpush2.msra.mxu0 0.0
    %7753 = vmatprep.subr.mxu0 0.0
    %7754 = vmatpush2.msra.mxu0 0.0
    %7755 = vmatprep.subr.mxu0 0.0
    %7756 = vmatpush2.msra.mxu0 0.0
    %7757 = vmatprep.subr.mxu0 0.0
    %7758 = vmatpush2.msra.mxu0 0.0
    %7759 = vmatprep.subr.mxu0 0.0
    %7760 = vmatpush2.msra.mxu0 0.0
    %7761 = vmatprep.subr.mxu0 0.0
    %7762 = vmatpush2.msra.mxu0 0.0
    %7763 = vmatprep.subr.mxu0 0.0
    %7764 = vmatpush2.msra.mxu0 0.0
    %7765 = vmatprep.subr.mxu0 0.0
    %7766 = vmatpush2.msra.mxu0 0.0
    %7767 = vmatprep.subr.mxu0 0.0
    %7768 = vmatpush2.msra.mxu0 0.0
    %7769 = vmatprep.subr.mxu0 0.0
    %7770 = vmatpush2.msra.mxu0 0.0
    %7771 = vmatprep.subr.mxu0 0.0
    %7772 = vmatpush2.msra.mxu0 0.0
    %7773 = vmatprep.subr.mxu0 0.0
    %7774 = vmatpush2.msra.mxu0 0.0
    %7775 = vmatprep.subr.mxu0 0.0
    %7776 = vmatpush2.msra.mxu0 0.0
    %7777 = vmatprep.subr.mxu0 0.0
    %7778 = vmatpush2.msra.mxu0 0.0
    %7779 = vmatprep.mubr.f32.mxu0 0.0
    %7780 = vmatmul.mubr.f32.gmra.mxu0 %v7704
    %v7781 = vpop.f32.mrf.mxu0
    %v7782 = vadd.f32 0.0, %v7781
    %v7783 = vpop.f32.mrf.mxu0
    %7784 = vmatprep.mubr.f32.mxu0 0.0
    %7785 = vmatmul.mubr.f32.gmra.mxu0 %v7707
    %v7786 = vpop.f32.mrf.mxu0
    %v7787 = vadd.f32 0.0, %v7786
    %v7788 = vpop.f32.mrf.mxu0
    %7789 = vmatprep.mubr.f32.mxu0 0.0
    %7790 = vmatmul.mubr.f32.gmra.mxu0 %v7710
    %v7791 = vpop.f32.mrf.mxu0
    %v7792 = vadd.f32 0.0, %v7791
    %v7793 = vpop.f32.mrf.mxu0
    %7794 = vmatprep.mubr.f32.mxu0 0.0
    %7795 = vmatmul.mubr.f32.gmra.mxu0 %v7713
    %v7796 = vpop.f32.mrf.mxu0
    %v7797 = vadd.f32 0.0, %v7796
    %v7798 = vpop.f32.mrf.mxu0
    %7799 = vdwg.mxu0
    %7800 = vrot.lane.b32.xlu0 %v5374, 104
    %v7801 = vpop.permute.xlu0 %7800
    %7802 = vrot.lane.b32.xlu0 %v5379, 104
    %v7803 = vpop.permute.xlu0 %7802
    %7804 = vrot.lane.b32.xlu0 %v5384, 104
    %v7805 = vpop.permute.xlu0 %7804
    %7806 = vrot.lane.b32.xlu0 %v5389, 104
    %v7807 = vpop.permute.xlu0 %7806
    %v7813 = vsel %vm415, %v7683, 0
    %v7816 = vsel %vm415, %v7684, 0
    %v7819 = vsel %vm415, %v7685, 0
    %v7822 = vsel %vm415, %v7686, 0
    %7824 = vmatprep.subr.mxu0 0.0
    %7825 = vmatpush1.msra.mxu0 0.0
    %7826 = vmatprep.subr.mxu0 0.0
    %7827 = vmatpush1.msra.mxu0 0.0
    %7828 = vmatprep.subr.mxu0 0.0
    %7829 = vmatpush1.msra.mxu0 0.0
    %7830 = vmatprep.subr.mxu0 0.0
    %7831 = vmatpush1.msra.mxu0 0.0
    %7832 = vmatprep.subr.mxu0 0.0
    %7833 = vmatpush1.msra.mxu0 0.0
    %7834 = vmatprep.subr.mxu0 0.0
    %7835 = vmatpush1.msra.mxu0 0.0
    %7836 = vmatprep.subr.mxu0 0.0
    %7837 = vmatpush1.msra.mxu0 0.0
    %7838 = vmatprep.subr.mxu0 0.0
    %7839 = vmatpush1.msra.mxu0 0.0
    %7840 = vmatprep.subr.mxu0 0.0
    %7841 = vmatpush1.msra.mxu0 0.0
    %7842 = vmatprep.subr.mxu0 0.0
    %7843 = vmatpush1.msra.mxu0 0.0
    %7844 = vmatprep.subr.mxu0 0.0
    %7845 = vmatpush1.msra.mxu0 0.0
    %7846 = vmatprep.subr.mxu0 0.0
    %7847 = vmatpush1.msra.mxu0 0.0
    %7848 = vmatprep.subr.mxu0 0.0
    %7849 = vmatpush1.msra.mxu0 %v7807
    %7850 = vmatprep.subr.mxu0 0.0
    %7851 = vmatpush1.msra.mxu0 %v7805
    %7852 = vmatprep.subr.mxu0 0.0
    %7853 = vmatpush1.msra.mxu0 %v7803
    %7854 = vmatprep.subr.mxu0 0.0
    %7855 = vmatpush1.msra.mxu0 %v7801
    %7856 = vmatprep.subr.mxu0 0.0
    %7857 = vmatpush2.msra.mxu0 0.0
    %7858 = vmatprep.subr.mxu0 0.0
    %7859 = vmatpush2.msra.mxu0 0.0
    %7860 = vmatprep.subr.mxu0 0.0
    %7861 = vmatpush2.msra.mxu0 0.0
    %7862 = vmatprep.subr.mxu0 0.0
    %7863 = vmatpush2.msra.mxu0 0.0
    %7864 = vmatprep.subr.mxu0 0.0
    %7865 = vmatpush2.msra.mxu0 0.0
    %7866 = vmatprep.subr.mxu0 0.0
    %7867 = vmatpush2.msra.mxu0 0.0
    %7868 = vmatprep.subr.mxu0 0.0
    %7869 = vmatpush2.msra.mxu0 0.0
    %7870 = vmatprep.subr.mxu0 0.0
    %7871 = vmatpush2.msra.mxu0 0.0
    %7872 = vmatprep.subr.mxu0 0.0
    %7873 = vmatpush2.msra.mxu0 0.0
    %7874 = vmatprep.subr.mxu0 0.0
    %7875 = vmatpush2.msra.mxu0 0.0
    %7876 = vmatprep.subr.mxu0 0.0
    %7877 = vmatpush2.msra.mxu0 0.0
    %7878 = vmatprep.subr.mxu0 0.0
    %7879 = vmatpush2.msra.mxu0 0.0
    %7880 = vmatprep.subr.mxu0 0.0
    %7881 = vmatpush2.msra.mxu0 0.0
    %7882 = vmatprep.subr.mxu0 0.0
    %7883 = vmatpush2.msra.mxu0 0.0
    %7884 = vmatprep.subr.mxu0 0.0
    %7885 = vmatpush2.msra.mxu0 0.0
    %7886 = vmatprep.subr.mxu0 0.0
    %7887 = vmatpush2.msra.mxu0 0.0
    %7888 = vmatprep.mubr.f32.mxu0 0.0
    %7889 = vmatmul.mubr.f32.gmra.mxu0 %v7813
    %v7890 = vpop.f32.mrf.mxu0
    %v7891 = vadd.f32 %v7782, %v7890
    %v7892 = vpop.f32.mrf.mxu0
    %7893 = vmatprep.mubr.f32.mxu0 0.0
    %7894 = vmatmul.mubr.f32.gmra.mxu0 %v7816
    %v7895 = vpop.f32.mrf.mxu0
    %v7896 = vadd.f32 %v7787, %v7895
    %v7897 = vpop.f32.mrf.mxu0
    %7898 = vmatprep.mubr.f32.mxu0 0.0
    %7899 = vmatmul.mubr.f32.gmra.mxu0 %v7819
    %v7900 = vpop.f32.mrf.mxu0
    %v7901 = vadd.f32 %v7792, %v7900
    %v7902 = vpop.f32.mrf.mxu0
    %7903 = vmatprep.mubr.f32.mxu0 0.0
    %7904 = vmatmul.mubr.f32.gmra.mxu0 %v7822
    %v7905 = vpop.f32.mrf.mxu0
    %v7906 = vadd.f32 %v7797, %v7905
    %v7907 = vpop.f32.mrf.mxu0
    %7908 = vdwg.mxu0
    %v7910 = vsel %vm1005, %v7891, 0
    %v7913 = vsel %vm1005, %v7896, 0
    %v7916 = vsel %vm1005, %v7901, 0
    %v7919 = vsel %vm1005, %v7906, 0
    %7921 = vmatprep.subr.mxu0 0.0
    %7922 = vmatpush1.msra.mxu0 0.0
    %7923 = vmatprep.subr.mxu0 0.0
    %7924 = vmatpush1.msra.mxu0 0.0
    %7925 = vmatprep.subr.mxu0 0.0
    %7926 = vmatpush1.msra.mxu0 0.0
    %7927 = vmatprep.subr.mxu0 0.0
    %7928 = vmatpush1.msra.mxu0 0.0
    %7929 = vmatprep.subr.mxu0 0.0
    %7930 = vmatpush1.msra.mxu0 0.0
    %7931 = vmatprep.subr.mxu0 0.0
    %7932 = vmatpush1.msra.mxu0 0.0
    %7933 = vmatprep.subr.mxu0 0.0
    %7934 = vmatpush1.msra.mxu0 0.0
    %7935 = vmatprep.subr.mxu0 0.0
    %7936 = vmatpush1.msra.mxu0 0.0
    %7937 = vmatprep.subr.mxu0 0.0
    %7938 = vmatpush1.msra.mxu0 0.0
    %7939 = vmatprep.subr.mxu0 0.0
    %7940 = vmatpush1.msra.mxu0 0.0
    %7941 = vmatprep.subr.mxu0 0.0
    %7942 = vmatpush1.msra.mxu0 0.0
    %7943 = vmatprep.subr.mxu0 0.0
    %7944 = vmatpush1.msra.mxu0 0.0
    %7945 = vmatprep.subr.mxu0 0.0
    %7946 = vmatpush1.msra.mxu0 0.0
    %7947 = vmatprep.subr.mxu0 0.0
    %7948 = vmatpush1.msra.mxu0 0.0
    %7949 = vmatprep.subr.mxu0 0.0
    %7950 = vmatpush1.msra.mxu0 0.0
    %7951 = vmatprep.subr.mxu0 0.0
    %7952 = vmatpush1.msra.mxu0 %v5573
    %7953 = vmatprep.subr.mxu0 0.0
    %7954 = vmatpush2.msra.mxu0 0.0
    %7955 = vmatprep.subr.mxu0 0.0
    %7956 = vmatpush2.msra.mxu0 0.0
    %7957 = vmatprep.subr.mxu0 0.0
    %7958 = vmatpush2.msra.mxu0 0.0
    %7959 = vmatprep.subr.mxu0 0.0
    %7960 = vmatpush2.msra.mxu0 0.0
    %7961 = vmatprep.subr.mxu0 0.0
    %7962 = vmatpush2.msra.mxu0 0.0
    %7963 = vmatprep.subr.mxu0 0.0
    %7964 = vmatpush2.msra.mxu0 0.0
    %7965 = vmatprep.subr.mxu0 0.0
    %7966 = vmatpush2.msra.mxu0 0.0
    %7967 = vmatprep.subr.mxu0 0.0
    %7968 = vmatpush2.msra.mxu0 0.0
    %7969 = vmatprep.subr.mxu0 0.0
    %7970 = vmatpush2.msra.mxu0 0.0
    %7971 = vmatprep.subr.mxu0 0.0
    %7972 = vmatpush2.msra.mxu0 0.0
    %7973 = vmatprep.subr.mxu0 0.0
    %7974 = vmatpush2.msra.mxu0 0.0
    %7975 = vmatprep.subr.mxu0 0.0
    %7976 = vmatpush2.msra.mxu0 0.0
    %7977 = vmatprep.subr.mxu0 0.0
    %7978 = vmatpush2.msra.mxu0 0.0
    %7979 = vmatprep.subr.mxu0 0.0
    %7980 = vmatpush2.msra.mxu0 0.0
    %7981 = vmatprep.subr.mxu0 0.0
    %7982 = vmatpush2.msra.mxu0 0.0
    %7983 = vmatprep.subr.mxu0 0.0
    %7984 = vmatpush2.msra.mxu0 0.0
    %7985 = vmatprep.mubr.f32.mxu0 0.0
    %7986 = vmatmul.mubr.f32.gmra.mxu0 %v7910
    %v7987 = vpop.f32.mrf.mxu0
    %v7988 = vadd.f32 0.0, %v7987
    %v7989 = vpop.f32.mrf.mxu0
    %7990 = vmatprep.mubr.f32.mxu0 0.0
    %7991 = vmatmul.mubr.f32.gmra.mxu0 %v7913
    %v7992 = vpop.f32.mrf.mxu0
    %v7993 = vadd.f32 0.0, %v7992
    %v7994 = vpop.f32.mrf.mxu0
    %7995 = vmatprep.mubr.f32.mxu0 0.0
    %7996 = vmatmul.mubr.f32.gmra.mxu0 %v7916
    %v7997 = vpop.f32.mrf.mxu0
    %v7998 = vadd.f32 0.0, %v7997
    %v7999 = vpop.f32.mrf.mxu0
    %8000 = vmatprep.mubr.f32.mxu0 0.0
    %8001 = vmatmul.mubr.f32.gmra.mxu0 %v7919
    %v8002 = vpop.f32.mrf.mxu0
    %v8003 = vadd.f32 0.0, %v8002
    %v8004 = vpop.f32.mrf.mxu0
    %8005 = vdwg.mxu0
    %v8006 = vadd.f32 %v7389, %v7988
    %v8007 = vadd.f32 %v7390, %v7993
    %v8008 = vadd.f32 %v7391, %v7998
    %v8009 = vadd.f32 %v7392, %v8003
    %v8010 = vmul.f32 %v5097, %v8006
    %v8011 = vmul.f32 %v5102, %v8007
    %v8012 = vmul.f32 %v5107, %v8008
    %v8013 = vmul.f32 %v5112, %v8009
    %v8014 = vmul.f32 %v5120, %v8006
    %v8015 = vmul.f32 %v5124, %v8007
    %v8016 = vmul.f32 %v5128, %v8008
    %v8017 = vmul.f32 %v5132, %v8009
    %8022 = vrot.lane.b32.xlu0 %v8014, 96
    %v8023 = vpop.permute.xlu0 %8022
    %8024 = vrot.lane.b32.xlu0 %v8015, 96
    %v8025 = vpop.permute.xlu0 %8024
    %8026 = vrot.lane.b32.xlu0 %v8016, 96
    %v8027 = vpop.permute.xlu0 %8026
    %8028 = vrot.lane.b32.xlu0 %v8017, 96
    %v8029 = vpop.permute.xlu0 %8028
    %v8034 = vadd.f32 %v8010, %v8023
    %v8035 = vadd.f32 %v8011, %v8025
    %v8036 = vadd.f32 %v8012, %v8027
    %v8037 = vadd.f32 %v8013, %v8029
    %v8038 = vld [vmem:[%s47] sm:$0x3]
    %v8039 = vsel %vm3463, %v4969, 0
    %v8041 = vsel %vm3463, %v4970, 0
    %v8043 = vsel %vm3463, %v4971, 0
    %v8045 = vsel %vm3463, %v4972, 0
    %v8048 = vsel %vm3472, %v8038, 0
    %8050 = vmatprep.subr.mxu0 0.0
    %8051 = vmatpush1.msra.mxu0 0.0
    %8052 = vmatprep.subr.mxu0 0.0
    %8053 = vmatpush1.msra.mxu0 0.0
    %8054 = vmatprep.subr.mxu0 0.0
    %8055 = vmatpush1.msra.mxu0 0.0
    %8056 = vmatprep.subr.mxu0 0.0
    %8057 = vmatpush1.msra.mxu0 0.0
    %8058 = vmatprep.subr.mxu0 0.0
    %8059 = vmatpush1.msra.mxu0 0.0
    %8060 = vmatprep.subr.mxu0 0.0
    %8061 = vmatpush1.msra.mxu0 0.0
    %8062 = vmatprep.subr.mxu0 0.0
    %8063 = vmatpush1.msra.mxu0 0.0
    %8064 = vmatprep.subr.mxu0 0.0
    %8065 = vmatpush1.msra.mxu0 0.0
    %8066 = vmatprep.subr.mxu0 0.0
    %8067 = vmatpush1.msra.mxu0 0.0
    %8068 = vmatprep.subr.mxu0 0.0
    %8069 = vmatpush1.msra.mxu0 0.0
    %8070 = vmatprep.subr.mxu0 0.0
    %8071 = vmatpush1.msra.mxu0 0.0
    %8072 = vmatprep.subr.mxu0 0.0
    %8073 = vmatpush1.msra.mxu0 0.0
    %8074 = vmatprep.subr.mxu0 0.0
    %8075 = vmatpush1.msra.mxu0 0.0
    %8076 = vmatprep.subr.mxu0 0.0
    %8077 = vmatpush1.msra.mxu0 0.0
    %8078 = vmatprep.subr.mxu0 0.0
    %8079 = vmatpush1.msra.mxu0 0.0
    %8080 = vmatprep.subr.mxu0 0.0
    %8081 = vmatpush1.msra.mxu0 %v8048
    %8082 = vmatprep.subr.mxu0 0.0
    %8083 = vmatpush2.msra.mxu0 0.0
    %8084 = vmatprep.subr.mxu0 0.0
    %8085 = vmatpush2.msra.mxu0 0.0
    %8086 = vmatprep.subr.mxu0 0.0
    %8087 = vmatpush2.msra.mxu0 0.0
    %8088 = vmatprep.subr.mxu0 0.0
    %8089 = vmatpush2.msra.mxu0 0.0
    %8090 = vmatprep.subr.mxu0 0.0
    %8091 = vmatpush2.msra.mxu0 0.0
    %8092 = vmatprep.subr.mxu0 0.0
    %8093 = vmatpush2.msra.mxu0 0.0
    %8094 = vmatprep.subr.mxu0 0.0
    %8095 = vmatpush2.msra.mxu0 0.0
    %8096 = vmatprep.subr.mxu0 0.0
    %8097 = vmatpush2.msra.mxu0 0.0
    %8098 = vmatprep.subr.mxu0 0.0
    %8099 = vmatpush2.msra.mxu0 0.0
    %8100 = vmatprep.subr.mxu0 0.0
    %8101 = vmatpush2.msra.mxu0 0.0
    %8102 = vmatprep.subr.mxu0 0.0
    %8103 = vmatpush2.msra.mxu0 0.0
    %8104 = vmatprep.subr.mxu0 0.0
    %8105 = vmatpush2.msra.mxu0 0.0
    %8106 = vmatprep.subr.mxu0 0.0
    %8107 = vmatpush2.msra.mxu0 0.0
    %8108 = vmatprep.subr.mxu0 0.0
    %8109 = vmatpush2.msra.mxu0 0.0
    %8110 = vmatprep.subr.mxu0 0.0
    %8111 = vmatpush2.msra.mxu0 0.0
    %8112 = vmatprep.subr.mxu0 0.0
    %8113 = vmatpush2.msra.mxu0 0.0
    %8114 = vmatprep.mubr.f32.mxu0 0.0
    %8115 = vmatmul.mubr.f32.gmra.mxu0 %v8039
    %v8116 = vpop.f32.mrf.mxu0
    %v8117 = vadd.f32 0.0, %v8116
    %v8118 = vpop.f32.mrf.mxu0
    %8119 = vmatprep.mubr.f32.mxu0 0.0
    %8120 = vmatmul.mubr.f32.gmra.mxu0 %v8041
    %v8121 = vpop.f32.mrf.mxu0
    %v8122 = vadd.f32 0.0, %v8121
    %v8123 = vpop.f32.mrf.mxu0
    %8124 = vmatprep.mubr.f32.mxu0 0.0
    %8125 = vmatmul.mubr.f32.gmra.mxu0 %v8043
    %v8126 = vpop.f32.mrf.mxu0
    %v8127 = vadd.f32 0.0, %v8126
    %v8128 = vpop.f32.mrf.mxu0
    %8129 = vmatprep.mubr.f32.mxu0 0.0
    %8130 = vmatmul.mubr.f32.gmra.mxu0 %v8045
    %v8131 = vpop.f32.mrf.mxu0
    %v8132 = vadd.f32 0.0, %v8131
    %v8133 = vpop.f32.mrf.mxu0
    %8134 = vdwg.mxu0
    %v8135 = vsub.f32 0.0, %v8117
    %v8136 = vsub.f32 0.0, %v8122
    %v8137 = vsub.f32 0.0, %v8127
    %v8138 = vsub.f32 0.0, %v8132
    %v8139 = vmul.f32 %v8135, 1.442695
    %v8140 = vpow.pop %v8139
    %v8141 = vmul.f32 %v8136, 1.442695
    %v8142 = vpow.pop %v8141
    %v8143 = vmul.f32 %v8137, 1.442695
    %v8144 = vpow.pop %v8143
    %v8145 = vmul.f32 %v8138, 1.442695
    %v8146 = vpow.pop %v8145
    %v8147 = vadd.f32 %v8140, 1.0
    %v8148 = vadd.f32 %v8142, 1.0
    %v8149 = vadd.f32 %v8144, 1.0
    %v8150 = vadd.f32 %v8146, 1.0
    %v8151 = vrcp.pop %v8147
    %v8152 = vmul.f32 1.0, %v8151
    %v8153 = vrcp.pop %v8148
    %v8154 = vmul.f32 1.0, %v8153
    %v8155 = vrcp.pop %v8149
    %v8156 = vmul.f32 1.0, %v8155
    %v8157 = vrcp.pop %v8150
    %v8158 = vmul.f32 1.0, %v8157
    %8160 = vset.pattern.permute.xlu0 0
    %8161 = vperm.xlu0 %8160, %v8152
    %v8162 = vpop.permute.xlu0 %8161
    %8165 = vset.pattern.permute.xlu0 0
    %8166 = vperm.xlu0 %8165, %v8154
    %v8167 = vpop.permute.xlu0 %8166
    %8170 = vset.pattern.permute.xlu0 0
    %8171 = vperm.xlu0 %8170, %v8156
    %v8172 = vpop.permute.xlu0 %8171
    %8175 = vset.pattern.permute.xlu0 0
    %8176 = vperm.xlu0 %8175, %v8158
    %v8177 = vpop.permute.xlu0 %8176
    %v8179 = vmul.f32 %v8034, %v8162
    %v8180 = vmul.f32 %v8035, %v8167
    %v8181 = vmul.f32 %v8036, %v8172
    %v8182 = vmul.f32 %v8037, %v8177
    %v8183 = vld [vmem:[#allocation29] sm:$0xff]
    %v8184 = vld [vmem:[#allocation29 + $0x8] sm:$0xff]
    %v8185 = vld [vmem:[#allocation29 + $0x10] sm:$0xff]
    %v8186 = vld [vmem:[#allocation29 + $0x18] sm:$0xff]
    %v8188 = vsel %vm415, %v8179, 0
    %v8191 = vsel %vm415, %v8180, 0
    %v8194 = vsel %vm415, %v8181, 0
    %v8197 = vsel %vm415, %v8182, 0
    %8199 = vmatprep.subr.mxu0 0.0
    %8200 = vmatpush1.msra.mxu0 0.0
    %8201 = vmatprep.subr.mxu0 0.0
    %8202 = vmatpush1.msra.mxu0 0.0
    %8203 = vmatprep.subr.mxu0 0.0
    %8204 = vmatpush1.msra.mxu0 0.0
    %8205 = vmatprep.subr.mxu0 0.0
    %8206 = vmatpush1.msra.mxu0 0.0
    %8207 = vmatprep.subr.mxu0 0.0
    %8208 = vmatpush1.msra.mxu0 0.0
    %8209 = vmatprep.subr.mxu0 0.0
    %8210 = vmatpush1.msra.mxu0 0.0
    %8211 = vmatprep.subr.mxu0 0.0
    %8212 = vmatpush1.msra.mxu0 0.0
    %8213 = vmatprep.subr.mxu0 0.0
    %8214 = vmatpush1.msra.mxu0 0.0
    %8215 = vmatprep.subr.mxu0 0.0
    %8216 = vmatpush1.msra.mxu0 0.0
    %8217 = vmatprep.subr.mxu0 0.0
    %8218 = vmatpush1.msra.mxu0 0.0
    %8219 = vmatprep.subr.mxu0 0.0
    %8220 = vmatpush1.msra.mxu0 0.0
    %8221 = vmatprep.subr.mxu0 0.0
    %8222 = vmatpush1.msra.mxu0 0.0
    %8223 = vmatprep.subr.mxu0 0.0
    %8224 = vmatpush1.msra.mxu0 %v8186
    %8225 = vmatprep.subr.mxu0 0.0
    %8226 = vmatpush1.msra.mxu0 %v8185
    %8227 = vmatprep.subr.mxu0 0.0
    %8228 = vmatpush1.msra.mxu0 %v8184
    %8229 = vmatprep.subr.mxu0 0.0
    %8230 = vmatpush1.msra.mxu0 %v8183
    %8231 = vmatprep.subr.mxu0 0.0
    %8232 = vmatpush2.msra.mxu0 0.0
    %8233 = vmatprep.subr.mxu0 0.0
    %8234 = vmatpush2.msra.mxu0 0.0
    %8235 = vmatprep.subr.mxu0 0.0
    %8236 = vmatpush2.msra.mxu0 0.0
    %8237 = vmatprep.subr.mxu0 0.0
    %8238 = vmatpush2.msra.mxu0 0.0
    %8239 = vmatprep.subr.mxu0 0.0
    %8240 = vmatpush2.msra.mxu0 0.0
    %8241 = vmatprep.subr.mxu0 0.0
    %8242 = vmatpush2.msra.mxu0 0.0
    %8243 = vmatprep.subr.mxu0 0.0
    %8244 = vmatpush2.msra.mxu0 0.0
    %8245 = vmatprep.subr.mxu0 0.0
    %8246 = vmatpush2.msra.mxu0 0.0
    %8247 = vmatprep.subr.mxu0 0.0
    %8248 = vmatpush2.msra.mxu0 0.0
    %8249 = vmatprep.subr.mxu0 0.0
    %8250 = vmatpush2.msra.mxu0 0.0
    %8251 = vmatprep.subr.mxu0 0.0
    %8252 = vmatpush2.msra.mxu0 0.0
    %8253 = vmatprep.subr.mxu0 0.0
    %8254 = vmatpush2.msra.mxu0 0.0
    %8255 = vmatprep.subr.mxu0 0.0
    %8256 = vmatpush2.msra.mxu0 0.0
    %8257 = vmatprep.subr.mxu0 0.0
    %8258 = vmatpush2.msra.mxu0 0.0
    %8259 = vmatprep.subr.mxu0 0.0
    %8260 = vmatpush2.msra.mxu0 0.0
    %8261 = vmatprep.subr.mxu0 0.0
    %8262 = vmatpush2.msra.mxu0 0.0
    %8263 = vmatprep.mubr.f32.mxu0 0.0
    %8264 = vmatmul.mubr.f32.gmra.mxu0 %v8188
    %v8265 = vpop.f32.mrf.mxu0
    %v8266 = vadd.f32 0.0, %v8265
    %v8267 = vpop.f32.mrf.mxu0
    %8268 = vmatprep.mubr.f32.mxu0 0.0
    %8269 = vmatmul.mubr.f32.gmra.mxu0 %v8191
    %v8270 = vpop.f32.mrf.mxu0
    %v8271 = vadd.f32 0.0, %v8270
    %v8272 = vpop.f32.mrf.mxu0
    %8273 = vmatprep.mubr.f32.mxu0 0.0
    %8274 = vmatmul.mubr.f32.gmra.mxu0 %v8194
    %v8275 = vpop.f32.mrf.mxu0
    %v8276 = vadd.f32 0.0, %v8275
    %v8277 = vpop.f32.mrf.mxu0
    %8278 = vmatprep.mubr.f32.mxu0 0.0
    %8279 = vmatmul.mubr.f32.gmra.mxu0 %v8197
    %v8280 = vpop.f32.mrf.mxu0
    %v8281 = vadd.f32 0.0, %v8280
    %v8282 = vpop.f32.mrf.mxu0
    %8283 = vdwg.mxu0
    %v8284 = vmul.f32 %v5097, %v8266
    %v8285 = vmul.f32 %v5102, %v8271
    %v8286 = vmul.f32 %v5107, %v8276
    %v8287 = vmul.f32 %v5112, %v8281
    %v8288 = vmul.f32 %v5120, %v8266
    %v8289 = vmul.f32 %v5124, %v8271
    %v8290 = vmul.f32 %v5128, %v8276
    %v8291 = vmul.f32 %v5132, %v8281
    %8296 = vrot.lane.b32.xlu0 %v8288, 104
    %v8297 = vpop.permute.xlu0 %8296
    %8298 = vrot.lane.b32.xlu0 %v8289, 104
    %v8299 = vpop.permute.xlu0 %8298
    %8300 = vrot.lane.b32.xlu0 %v8290, 104
    %v8301 = vpop.permute.xlu0 %8300
    %8302 = vrot.lane.b32.xlu0 %v8291, 104
    %v8303 = vpop.permute.xlu0 %8302
    %v8308 = vadd.f32 %v8284, %v8297
    %v8309 = vadd.f32 %v8285, %v8299
    %v8310 = vadd.f32 %v8286, %v8301
    %v8311 = vadd.f32 %v8287, %v8303
    %v8312 = vld [vmem:[#allocation31] sm:$0xff]
    %v8313 = vld [vmem:[#allocation31 + $0x8] sm:$0xff]
    %v8314 = vld [vmem:[#allocation32] sm:$0xff]
    %v8315 = vld [vmem:[#allocation32 + $0x8] sm:$0xff]
    %v8317 = vsel %vm1005, %v8308, 0
    %v8320 = vsel %vm1005, %v8309, 0
    %v8323 = vsel %vm1005, %v8310, 0
    %v8326 = vsel %vm1005, %v8311, 0
    %8328 = vmatprep.subr.mxu0 0.0
    %8329 = vmatpush1.msra.mxu0 0.0
    %8330 = vmatprep.subr.mxu0 0.0
    %8331 = vmatpush1.msra.mxu0 0.0
    %8332 = vmatprep.subr.mxu0 0.0
    %8333 = vmatpush1.msra.mxu0 0.0
    %8334 = vmatprep.subr.mxu0 0.0
    %8335 = vmatpush1.msra.mxu0 0.0
    %8336 = vmatprep.subr.mxu0 0.0
    %8337 = vmatpush1.msra.mxu0 0.0
    %8338 = vmatprep.subr.mxu0 0.0
    %8339 = vmatpush1.msra.mxu0 0.0
    %8340 = vmatprep.subr.mxu0 0.0
    %8341 = vmatpush1.msra.mxu0 0.0
    %8342 = vmatprep.subr.mxu0 0.0
    %8343 = vmatpush1.msra.mxu0 0.0
    %8344 = vmatprep.subr.mxu0 0.0
    %8345 = vmatpush1.msra.mxu0 0.0
    %8346 = vmatprep.subr.mxu0 0.0
    %8347 = vmatpush1.msra.mxu0 0.0
    %8348 = vmatprep.subr.mxu0 0.0
    %8349 = vmatpush1.msra.mxu0 0.0
    %8350 = vmatprep.subr.mxu0 0.0
    %8351 = vmatpush1.msra.mxu0 0.0
    %8352 = vmatprep.subr.mxu0 0.0
    %8353 = vmatpush1.msra.mxu0 0.0
    %8354 = vmatprep.subr.mxu0 0.0
    %8355 = vmatpush1.msra.mxu0 0.0
    %8356 = vmatprep.subr.mxu0 0.0
    %8357 = vmatpush1.msra.mxu0 0.0
    %8358 = vmatprep.subr.mxu0 0.0
    %8359 = vmatpush1.msra.mxu0 %v8312
    %8360 = vmatprep.subr.mxu0 0.0
    %8361 = vmatpush2.msra.mxu0 0.0
    %8362 = vmatprep.subr.mxu0 0.0
    %8363 = vmatpush2.msra.mxu0 0.0
    %8364 = vmatprep.subr.mxu0 0.0
    %8365 = vmatpush2.msra.mxu0 0.0
    %8366 = vmatprep.subr.mxu0 0.0
    %8367 = vmatpush2.msra.mxu0 0.0
    %8368 = vmatprep.subr.mxu0 0.0
    %8369 = vmatpush2.msra.mxu0 0.0
    %8370 = vmatprep.subr.mxu0 0.0
    %8371 = vmatpush2.msra.mxu0 0.0
    %8372 = vmatprep.subr.mxu0 0.0
    %8373 = vmatpush2.msra.mxu0 0.0
    %8374 = vmatprep.subr.mxu0 0.0
    %8375 = vmatpush2.msra.mxu0 0.0
    %8376 = vmatprep.subr.mxu0 0.0
    %8377 = vmatpush2.msra.mxu0 0.0
    %8378 = vmatprep.subr.mxu0 0.0
    %8379 = vmatpush2.msra.mxu0 0.0
    %8380 = vmatprep.subr.mxu0 0.0
    %8381 = vmatpush2.msra.mxu0 0.0
    %8382 = vmatprep.subr.mxu0 0.0
    %8383 = vmatpush2.msra.mxu0 0.0
    %8384 = vmatprep.subr.mxu0 0.0
    %8385 = vmatpush2.msra.mxu0 0.0
    %8386 = vmatprep.subr.mxu0 0.0
    %8387 = vmatpush2.msra.mxu0 0.0
    %8388 = vmatprep.subr.mxu0 0.0
    %8389 = vmatpush2.msra.mxu0 0.0
    %8390 = vmatprep.subr.mxu0 0.0
    %8391 = vmatpush2.msra.mxu0 0.0
    %8392 = vmatprep.mubr.f32.mxu0 0.0
    %8393 = vmatmul.mubr.f32.gmra.mxu0 %v8317
    %v8394 = vpop.f32.mrf.mxu0
    %v8395 = vadd.f32 0.0, %v8394
    %v8396 = vpop.f32.mrf.mxu0
    %8397 = vmatprep.mubr.f32.mxu0 0.0
    %8398 = vmatmul.mubr.f32.gmra.mxu0 %v8320
    %v8399 = vpop.f32.mrf.mxu0
    %v8400 = vadd.f32 0.0, %v8399
    %v8401 = vpop.f32.mrf.mxu0
    %8402 = vmatprep.mubr.f32.mxu0 0.0
    %8403 = vmatmul.mubr.f32.gmra.mxu0 %v8323
    %v8404 = vpop.f32.mrf.mxu0
    %v8405 = vadd.f32 0.0, %v8404
    %v8406 = vpop.f32.mrf.mxu0
    %8407 = vmatprep.mubr.f32.mxu0 0.0
    %8408 = vmatmul.mubr.f32.gmra.mxu0 %v8326
    %v8409 = vpop.f32.mrf.mxu0
    %v8410 = vadd.f32 0.0, %v8409
    %v8411 = vpop.f32.mrf.mxu0
    %8412 = vdwg.mxu0
    %8413 = vrot.lane.b32.xlu0 %v8308, 112
    %v8414 = vpop.permute.xlu0 %8413
    %8415 = vrot.lane.b32.xlu0 %v8309, 112
    %v8416 = vpop.permute.xlu0 %8415
    %8417 = vrot.lane.b32.xlu0 %v8310, 112
    %v8418 = vpop.permute.xlu0 %8417
    %8419 = vrot.lane.b32.xlu0 %v8311, 112
    %v8420 = vpop.permute.xlu0 %8419
    %v8421 = vsel %vm1005, %v8414, 0
    %v8423 = vsel %vm1005, %v8416, 0
    %v8425 = vsel %vm1005, %v8418, 0
    %v8427 = vsel %vm1005, %v8420, 0
    %8429 = vmatprep.subr.mxu0 0.0
    %8430 = vmatpush1.msra.mxu0 0.0
    %8431 = vmatprep.subr.mxu0 0.0
    %8432 = vmatpush1.msra.mxu0 0.0
    %8433 = vmatprep.subr.mxu0 0.0
    %8434 = vmatpush1.msra.mxu0 0.0
    %8435 = vmatprep.subr.mxu0 0.0
    %8436 = vmatpush1.msra.mxu0 0.0
    %8437 = vmatprep.subr.mxu0 0.0
    %8438 = vmatpush1.msra.mxu0 0.0
    %8439 = vmatprep.subr.mxu0 0.0
    %8440 = vmatpush1.msra.mxu0 0.0
    %8441 = vmatprep.subr.mxu0 0.0
    %8442 = vmatpush1.msra.mxu0 0.0
    %8443 = vmatprep.subr.mxu0 0.0
    %8444 = vmatpush1.msra.mxu0 0.0
    %8445 = vmatprep.subr.mxu0 0.0
    %8446 = vmatpush1.msra.mxu0 0.0
    %8447 = vmatprep.subr.mxu0 0.0
    %8448 = vmatpush1.msra.mxu0 0.0
    %8449 = vmatprep.subr.mxu0 0.0
    %8450 = vmatpush1.msra.mxu0 0.0
    %8451 = vmatprep.subr.mxu0 0.0
    %8452 = vmatpush1.msra.mxu0 0.0
    %8453 = vmatprep.subr.mxu0 0.0
    %8454 = vmatpush1.msra.mxu0 0.0
    %8455 = vmatprep.subr.mxu0 0.0
    %8456 = vmatpush1.msra.mxu0 0.0
    %8457 = vmatprep.subr.mxu0 0.0
    %8458 = vmatpush1.msra.mxu0 0.0
    %8459 = vmatprep.subr.mxu0 0.0
    %8460 = vmatpush1.msra.mxu0 %v8314
    %8461 = vmatprep.subr.mxu0 0.0
    %8462 = vmatpush2.msra.mxu0 0.0
    %8463 = vmatprep.subr.mxu0 0.0
    %8464 = vmatpush2.msra.mxu0 0.0
    %8465 = vmatprep.subr.mxu0 0.0
    %8466 = vmatpush2.msra.mxu0 0.0
    %8467 = vmatprep.subr.mxu0 0.0
    %8468 = vmatpush2.msra.mxu0 0.0
    %8469 = vmatprep.subr.mxu0 0.0
    %8470 = vmatpush2.msra.mxu0 0.0
    %8471 = vmatprep.subr.mxu0 0.0
    %8472 = vmatpush2.msra.mxu0 0.0
    %8473 = vmatprep.subr.mxu0 0.0
    %8474 = vmatpush2.msra.mxu0 0.0
    %8475 = vmatprep.subr.mxu0 0.0
    %8476 = vmatpush2.msra.mxu0 0.0
    %8477 = vmatprep.subr.mxu0 0.0
    %8478 = vmatpush2.msra.mxu0 0.0
    %8479 = vmatprep.subr.mxu0 0.0
    %8480 = vmatpush2.msra.mxu0 0.0
    %8481 = vmatprep.subr.mxu0 0.0
    %8482 = vmatpush2.msra.mxu0 0.0
    %8483 = vmatprep.subr.mxu0 0.0
    %8484 = vmatpush2.msra.mxu0 0.0
    %8485 = vmatprep.subr.mxu0 0.0
    %8486 = vmatpush2.msra.mxu0 0.0
    %8487 = vmatprep.subr.mxu0 0.0
    %8488 = vmatpush2.msra.mxu0 0.0
    %8489 = vmatprep.subr.mxu0 0.0
    %8490 = vmatpush2.msra.mxu0 0.0
    %8491 = vmatprep.subr.mxu0 0.0
    %8492 = vmatpush2.msra.mxu0 0.0
    %8493 = vmatprep.mubr.f32.mxu0 0.0
    %8494 = vmatmul.mubr.f32.gmra.mxu0 %v8421
    %v8495 = vpop.f32.mrf.mxu0
    %v8496 = vadd.f32 0.0, %v8495
    %v8497 = vpop.f32.mrf.mxu0
    %8498 = vmatprep.mubr.f32.mxu0 0.0
    %8499 = vmatmul.mubr.f32.gmra.mxu0 %v8423
    %v8500 = vpop.f32.mrf.mxu0
    %v8501 = vadd.f32 0.0, %v8500
    %v8502 = vpop.f32.mrf.mxu0
    %8503 = vmatprep.mubr.f32.mxu0 0.0
    %8504 = vmatmul.mubr.f32.gmra.mxu0 %v8425
    %v8505 = vpop.f32.mrf.mxu0
    %v8506 = vadd.f32 0.0, %v8505
    %v8507 = vpop.f32.mrf.mxu0
    %8508 = vmatprep.mubr.f32.mxu0 0.0
    %8509 = vmatmul.mubr.f32.gmra.mxu0 %v8427
    %v8510 = vpop.f32.mrf.mxu0
    %v8511 = vadd.f32 0.0, %v8510
    %v8512 = vpop.f32.mrf.mxu0
    %8513 = vdwg.mxu0
    %8514 = vmatprep.subr.mxu0 0.0
    %8515 = vmatpush1.msra.mxu0 0.0
    %8516 = vmatprep.subr.mxu0 0.0
    %8517 = vmatpush1.msra.mxu0 0.0
    %8518 = vmatprep.subr.mxu0 0.0
    %8519 = vmatpush1.msra.mxu0 0.0
    %8520 = vmatprep.subr.mxu0 0.0
    %8521 = vmatpush1.msra.mxu0 0.0
    %8522 = vmatprep.subr.mxu0 0.0
    %8523 = vmatpush1.msra.mxu0 0.0
    %8524 = vmatprep.subr.mxu0 0.0
    %8525 = vmatpush1.msra.mxu0 0.0
    %8526 = vmatprep.subr.mxu0 0.0
    %8527 = vmatpush1.msra.mxu0 0.0
    %8528 = vmatprep.subr.mxu0 0.0
    %8529 = vmatpush1.msra.mxu0 0.0
    %8530 = vmatprep.subr.mxu0 0.0
    %8531 = vmatpush1.msra.mxu0 0.0
    %8532 = vmatprep.subr.mxu0 0.0
    %8533 = vmatpush1.msra.mxu0 0.0
    %8534 = vmatprep.subr.mxu0 0.0
    %8535 = vmatpush1.msra.mxu0 0.0
    %8536 = vmatprep.subr.mxu0 0.0
    %8537 = vmatpush1.msra.mxu0 0.0
    %8538 = vmatprep.subr.mxu0 0.0
    %8539 = vmatpush1.msra.mxu0 0.0
    %8540 = vmatprep.subr.mxu0 0.0
    %8541 = vmatpush1.msra.mxu0 0.0
    %8542 = vmatprep.subr.mxu0 0.0
    %8543 = vmatpush1.msra.mxu0 0.0
    %8544 = vmatprep.subr.mxu0 0.0
    %8545 = vmatpush1.msra.mxu0 %v8313
    %8546 = vmatprep.subr.mxu0 0.0
    %8547 = vmatpush2.msra.mxu0 0.0
    %8548 = vmatprep.subr.mxu0 0.0
    %8549 = vmatpush2.msra.mxu0 0.0
    %8550 = vmatprep.subr.mxu0 0.0
    %8551 = vmatpush2.msra.mxu0 0.0
    %8552 = vmatprep.subr.mxu0 0.0
    %8553 = vmatpush2.msra.mxu0 0.0
    %8554 = vmatprep.subr.mxu0 0.0
    %8555 = vmatpush2.msra.mxu0 0.0
    %8556 = vmatprep.subr.mxu0 0.0
    %8557 = vmatpush2.msra.mxu0 0.0
    %8558 = vmatprep.subr.mxu0 0.0
    %8559 = vmatpush2.msra.mxu0 0.0
    %8560 = vmatprep.subr.mxu0 0.0
    %8561 = vmatpush2.msra.mxu0 0.0
    %8562 = vmatprep.subr.mxu0 0.0
    %8563 = vmatpush2.msra.mxu0 0.0
    %8564 = vmatprep.subr.mxu0 0.0
    %8565 = vmatpush2.msra.mxu0 0.0
    %8566 = vmatprep.subr.mxu0 0.0
    %8567 = vmatpush2.msra.mxu0 0.0
    %8568 = vmatprep.subr.mxu0 0.0
    %8569 = vmatpush2.msra.mxu0 0.0
    %8570 = vmatprep.subr.mxu0 0.0
    %8571 = vmatpush2.msra.mxu0 0.0
    %8572 = vmatprep.subr.mxu0 0.0
    %8573 = vmatpush2.msra.mxu0 0.0
    %8574 = vmatprep.subr.mxu0 0.0
    %8575 = vmatpush2.msra.mxu0 0.0
    %8576 = vmatprep.subr.mxu0 0.0
    %8577 = vmatpush2.msra.mxu0 0.0
    %8578 = vmatprep.mubr.f32.mxu0 0.0
    %8579 = vmatmul.mubr.f32.gmra.mxu0 %v8317
    %v8580 = vpop.f32.mrf.mxu0
    %v8581 = vadd.f32 0.0, %v8580
    %v8582 = vpop.f32.mrf.mxu0
    %8583 = vmatprep.mubr.f32.mxu0 0.0
    %8584 = vmatmul.mubr.f32.gmra.mxu0 %v8320
    %v8585 = vpop.f32.mrf.mxu0
    %v8586 = vadd.f32 0.0, %v8585
    %v8587 = vpop.f32.mrf.mxu0
    %8588 = vmatprep.mubr.f32.mxu0 0.0
    %8589 = vmatmul.mubr.f32.gmra.mxu0 %v8323
    %v8590 = vpop.f32.mrf.mxu0
    %v8591 = vadd.f32 0.0, %v8590
    %v8592 = vpop.f32.mrf.mxu0
    %8593 = vmatprep.mubr.f32.mxu0 0.0
    %8594 = vmatmul.mubr.f32.gmra.mxu0 %v8326
    %v8595 = vpop.f32.mrf.mxu0
    %v8596 = vadd.f32 0.0, %v8595
    %v8597 = vpop.f32.mrf.mxu0
    %8598 = vdwg.mxu0
    %8599 = vmatprep.subr.mxu0 0.0
    %8600 = vmatpush1.msra.mxu0 0.0
    %8601 = vmatprep.subr.mxu0 0.0
    %8602 = vmatpush1.msra.mxu0 0.0
    %8603 = vmatprep.subr.mxu0 0.0
    %8604 = vmatpush1.msra.mxu0 0.0
    %8605 = vmatprep.subr.mxu0 0.0
    %8606 = vmatpush1.msra.mxu0 0.0
    %8607 = vmatprep.subr.mxu0 0.0
    %8608 = vmatpush1.msra.mxu0 0.0
    %8609 = vmatprep.subr.mxu0 0.0
    %8610 = vmatpush1.msra.mxu0 0.0
    %8611 = vmatprep.subr.mxu0 0.0
    %8612 = vmatpush1.msra.mxu0 0.0
    %8613 = vmatprep.subr.mxu0 0.0
    %8614 = vmatpush1.msra.mxu0 0.0
    %8615 = vmatprep.subr.mxu0 0.0
    %8616 = vmatpush1.msra.mxu0 0.0
    %8617 = vmatprep.subr.mxu0 0.0
    %8618 = vmatpush1.msra.mxu0 0.0
    %8619 = vmatprep.subr.mxu0 0.0
    %8620 = vmatpush1.msra.mxu0 0.0
    %8621 = vmatprep.subr.mxu0 0.0
    %8622 = vmatpush1.msra.mxu0 0.0
    %8623 = vmatprep.subr.mxu0 0.0
    %8624 = vmatpush1.msra.mxu0 0.0
    %8625 = vmatprep.subr.mxu0 0.0
    %8626 = vmatpush1.msra.mxu0 0.0
    %8627 = vmatprep.subr.mxu0 0.0
    %8628 = vmatpush1.msra.mxu0 0.0
    %8629 = vmatprep.subr.mxu0 0.0
    %8630 = vmatpush1.msra.mxu0 %v8315
    %8631 = vmatprep.subr.mxu0 0.0
    %8632 = vmatpush2.msra.mxu0 0.0
    %8633 = vmatprep.subr.mxu0 0.0
    %8634 = vmatpush2.msra.mxu0 0.0
    %8635 = vmatprep.subr.mxu0 0.0
    %8636 = vmatpush2.msra.mxu0 0.0
    %8637 = vmatprep.subr.mxu0 0.0
    %8638 = vmatpush2.msra.mxu0 0.0
    %8639 = vmatprep.subr.mxu0 0.0
    %8640 = vmatpush2.msra.mxu0 0.0
    %8641 = vmatprep.subr.mxu0 0.0
    %8642 = vmatpush2.msra.mxu0 0.0
    %8643 = vmatprep.subr.mxu0 0.0
    %8644 = vmatpush2.msra.mxu0 0.0
    %8645 = vmatprep.subr.mxu0 0.0
    %8646 = vmatpush2.msra.mxu0 0.0
    %8647 = vmatprep.subr.mxu0 0.0
    %8648 = vmatpush2.msra.mxu0 0.0
    %8649 = vmatprep.subr.mxu0 0.0
    %8650 = vmatpush2.msra.mxu0 0.0
    %8651 = vmatprep.subr.mxu0 0.0
    %8652 = vmatpush2.msra.mxu0 0.0
    %8653 = vmatprep.subr.mxu0 0.0
    %8654 = vmatpush2.msra.mxu0 0.0
    %8655 = vmatprep.subr.mxu0 0.0
    %8656 = vmatpush2.msra.mxu0 0.0
    %8657 = vmatprep.subr.mxu0 0.0
    %8658 = vmatpush2.msra.mxu0 0.0
    %8659 = vmatprep.subr.mxu0 0.0
    %8660 = vmatpush2.msra.mxu0 0.0
    %8661 = vmatprep.subr.mxu0 0.0
    %8662 = vmatpush2.msra.mxu0 0.0
    %8663 = vmatprep.mubr.f32.mxu0 0.0
    %8664 = vmatmul.mubr.f32.gmra.mxu0 %v8421
    %v8665 = vpop.f32.mrf.mxu0
    %v8666 = vadd.f32 0.0, %v8665
    %v8667 = vpop.f32.mrf.mxu0
    %8668 = vmatprep.mubr.f32.mxu0 0.0
    %8669 = vmatmul.mubr.f32.gmra.mxu0 %v8423
    %v8670 = vpop.f32.mrf.mxu0
    %v8671 = vadd.f32 0.0, %v8670
    %v8672 = vpop.f32.mrf.mxu0
    %8673 = vmatprep.mubr.f32.mxu0 0.0
    %8674 = vmatmul.mubr.f32.gmra.mxu0 %v8425
    %v8675 = vpop.f32.mrf.mxu0
    %v8676 = vadd.f32 0.0, %v8675
    %v8677 = vpop.f32.mrf.mxu0
    %8678 = vmatprep.mubr.f32.mxu0 0.0
    %8679 = vmatmul.mubr.f32.gmra.mxu0 %v8427
    %v8680 = vpop.f32.mrf.mxu0
    %v8681 = vadd.f32 0.0, %v8680
    %v8682 = vpop.f32.mrf.mxu0
    %8683 = vdwg.mxu0
    %v8684 = vld [vmem:[%s55] sm:$0xff]
    %8685 = vrot.lane.b32.xlu0 %v8308, 120
    %v8686 = vpop.permute.xlu0 %8685
    %8687 = vrot.lane.b32.xlu0 %v8309, 120
    %v8688 = vpop.permute.xlu0 %8687
    %8689 = vrot.lane.b32.xlu0 %v8310, 120
    %v8690 = vpop.permute.xlu0 %8689
    %8691 = vrot.lane.b32.xlu0 %v8311, 120
    %v8692 = vpop.permute.xlu0 %8691
    %v8693 = vsel %vm1005, %v8686, 0
    %v8695 = vsel %vm1005, %v8688, 0
    %v8697 = vsel %vm1005, %v8690, 0
    %v8699 = vsel %vm1005, %v8692, 0
    %v8702 = vsel %vm1005, %v8395, 0
    %v8705 = vsel %vm1005, %v8400, 0
    %v8708 = vsel %vm1005, %v8405, 0
    %v8711 = vsel %vm1005, %v8410, 0
    %8713 = vmatprep.subr.mxu0 0.0
    %8714 = vmatpush1.xpose.msra.mxu0 0.0
    %8715 = vmatprep.subr.mxu0 0.0
    %8716 = vmatpush1.xpose.msra.mxu0 0.0
    %8717 = vmatprep.subr.mxu0 0.0
    %8718 = vmatpush1.xpose.msra.mxu0 0.0
    %8719 = vmatprep.subr.mxu0 0.0
    %8720 = vmatpush1.xpose.msra.mxu0 0.0
    %8721 = vmatprep.subr.mxu0 0.0
    %8722 = vmatpush1.xpose.msra.mxu0 0.0
    %8723 = vmatprep.subr.mxu0 0.0
    %8724 = vmatpush1.xpose.msra.mxu0 0.0
    %8725 = vmatprep.subr.mxu0 0.0
    %8726 = vmatpush1.xpose.msra.mxu0 0.0
    %8727 = vmatprep.subr.mxu0 0.0
    %8728 = vmatpush1.xpose.msra.mxu0 0.0
    %8729 = vmatprep.subr.mxu0 0.0
    %8730 = vmatpush1.xpose.msra.mxu0 0.0
    %8731 = vmatprep.subr.mxu0 0.0
    %8732 = vmatpush1.xpose.msra.mxu0 0.0
    %8733 = vmatprep.subr.mxu0 0.0
    %8734 = vmatpush1.xpose.msra.mxu0 0.0
    %8735 = vmatprep.subr.mxu0 0.0
    %8736 = vmatpush1.xpose.msra.mxu0 0.0
    %8737 = vmatprep.subr.mxu0 0.0
    %8738 = vmatpush1.xpose.msra.mxu0 %v8711
    %8739 = vmatprep.subr.mxu0 0.0
    %8740 = vmatpush1.xpose.msra.mxu0 %v8708
    %8741 = vmatprep.subr.mxu0 0.0
    %8742 = vmatpush1.xpose.msra.mxu0 %v8705
    %8743 = vmatprep.subr.mxu0 0.0
    %8744 = vmatpush1.xpose.msra.mxu0 %v8702
    %8745 = vmatprep.subr.mxu0 0.0
    %8746 = vmatpush2.xpose.msra.mxu0 0.0
    %8747 = vmatprep.subr.mxu0 0.0
    %8748 = vmatpush2.xpose.msra.mxu0 0.0
    %8749 = vmatprep.subr.mxu0 0.0
    %8750 = vmatpush2.xpose.msra.mxu0 0.0
    %8751 = vmatprep.subr.mxu0 0.0
    %8752 = vmatpush2.xpose.msra.mxu0 0.0
    %8753 = vmatprep.subr.mxu0 0.0
    %8754 = vmatpush2.xpose.msra.mxu0 0.0
    %8755 = vmatprep.subr.mxu0 0.0
    %8756 = vmatpush2.xpose.msra.mxu0 0.0
    %8757 = vmatprep.subr.mxu0 0.0
    %8758 = vmatpush2.xpose.msra.mxu0 0.0
    %8759 = vmatprep.subr.mxu0 0.0
    %8760 = vmatpush2.xpose.msra.mxu0 0.0
    %8761 = vmatprep.subr.mxu0 0.0
    %8762 = vmatpush2.xpose.msra.mxu0 0.0
    %8763 = vmatprep.subr.mxu0 0.0
    %8764 = vmatpush2.xpose.msra.mxu0 0.0
    %8765 = vmatprep.subr.mxu0 0.0
    %8766 = vmatpush2.xpose.msra.mxu0 0.0
    %8767 = vmatprep.subr.mxu0 0.0
    %8768 = vmatpush2.xpose.msra.mxu0 0.0
    %8769 = vmatprep.subr.mxu0 0.0
    %8770 = vmatpush2.xpose.msra.mxu0 0.0
    %8771 = vmatprep.subr.mxu0 0.0
    %8772 = vmatpush2.xpose.msra.mxu0 0.0
    %8773 = vmatprep.subr.mxu0 0.0
    %8774 = vmatpush2.xpose.msra.mxu0 0.0
    %8775 = vmatprep.subr.mxu0 0.0
    %8776 = vmatpush2.xpose.msra.mxu0 0.0
    %8777 = vmatprep.mubr.f32.mxu0 0.0
    %8778 = vmatmul.mubr.f32.gmra.mxu0 %v8693
    %v8779 = vpop.f32.mrf.mxu0
    %v8780 = vadd.f32 0.0, %v8779
    %v8781 = vpop.f32.mrf.mxu0
    %8782 = vmatprep.mubr.f32.mxu0 0.0
    %8783 = vmatmul.mubr.f32.gmra.mxu0 %v8695
    %v8784 = vpop.f32.mrf.mxu0
    %v8785 = vadd.f32 0.0, %v8784
    %v8786 = vpop.f32.mrf.mxu0
    %8787 = vmatprep.mubr.f32.mxu0 0.0
    %8788 = vmatmul.mubr.f32.gmra.mxu0 %v8697
    %v8789 = vpop.f32.mrf.mxu0
    %v8790 = vadd.f32 0.0, %v8789
    %v8791 = vpop.f32.mrf.mxu0
    %8792 = vmatprep.mubr.f32.mxu0 0.0
    %8793 = vmatmul.mubr.f32.gmra.mxu0 %v8699
    %v8794 = vpop.f32.mrf.mxu0
    %v8795 = vadd.f32 0.0, %v8794
    %v8796 = vpop.f32.mrf.mxu0
    %8797 = vdwg.mxu0
    %v8798 = vmul.f32 %v4973, %v8780
    %v8799 = vmul.f32 %v4974, %v8785
    %v8800 = vmul.f32 %v4975, %v8790
    %v8801 = vmul.f32 %v4976, %v8795
    %v8803 = vsel %vm1005, %v8581, 0
    %v8806 = vsel %vm1005, %v8586, 0
    %v8809 = vsel %vm1005, %v8591, 0
    %v8812 = vsel %vm1005, %v8596, 0
    %8814 = vmatprep.subr.mxu0 0.0
    %8815 = vmatpush1.xpose.msra.mxu0 0.0
    %8816 = vmatprep.subr.mxu0 0.0
    %8817 = vmatpush1.xpose.msra.mxu0 0.0
    %8818 = vmatprep.subr.mxu0 0.0
    %8819 = vmatpush1.xpose.msra.mxu0 0.0
    %8820 = vmatprep.subr.mxu0 0.0
    %8821 = vmatpush1.xpose.msra.mxu0 0.0
    %8822 = vmatprep.subr.mxu0 0.0
    %8823 = vmatpush1.xpose.msra.mxu0 0.0
    %8824 = vmatprep.subr.mxu0 0.0
    %8825 = vmatpush1.xpose.msra.mxu0 0.0
    %8826 = vmatprep.subr.mxu0 0.0
    %8827 = vmatpush1.xpose.msra.mxu0 0.0
    %8828 = vmatprep.subr.mxu0 0.0
    %8829 = vmatpush1.xpose.msra.mxu0 0.0
    %8830 = vmatprep.subr.mxu0 0.0
    %8831 = vmatpush1.xpose.msra.mxu0 0.0
    %8832 = vmatprep.subr.mxu0 0.0
    %8833 = vmatpush1.xpose.msra.mxu0 0.0
    %8834 = vmatprep.subr.mxu0 0.0
    %8835 = vmatpush1.xpose.msra.mxu0 0.0
    %8836 = vmatprep.subr.mxu0 0.0
    %8837 = vmatpush1.xpose.msra.mxu0 0.0
    %8838 = vmatprep.subr.mxu0 0.0
    %8839 = vmatpush1.xpose.msra.mxu0 %v8812
    %8840 = vmatprep.subr.mxu0 0.0
    %8841 = vmatpush1.xpose.msra.mxu0 %v8809
    %8842 = vmatprep.subr.mxu0 0.0
    %8843 = vmatpush1.xpose.msra.mxu0 %v8806
    %8844 = vmatprep.subr.mxu0 0.0
    %8845 = vmatpush1.xpose.msra.mxu0 %v8803
    %8846 = vmatprep.subr.mxu0 0.0
    %8847 = vmatpush2.xpose.msra.mxu0 0.0
    %8848 = vmatprep.subr.mxu0 0.0
    %8849 = vmatpush2.xpose.msra.mxu0 0.0
    %8850 = vmatprep.subr.mxu0 0.0
    %8851 = vmatpush2.xpose.msra.mxu0 0.0
    %8852 = vmatprep.subr.mxu0 0.0
    %8853 = vmatpush2.xpose.msra.mxu0 0.0
    %8854 = vmatprep.subr.mxu0 0.0
    %8855 = vmatpush2.xpose.msra.mxu0 0.0
    %8856 = vmatprep.subr.mxu0 0.0
    %8857 = vmatpush2.xpose.msra.mxu0 0.0
    %8858 = vmatprep.subr.mxu0 0.0
    %8859 = vmatpush2.xpose.msra.mxu0 0.0
    %8860 = vmatprep.subr.mxu0 0.0
    %8861 = vmatpush2.xpose.msra.mxu0 0.0
    %8862 = vmatprep.subr.mxu0 0.0
    %8863 = vmatpush2.xpose.msra.mxu0 0.0
    %8864 = vmatprep.subr.mxu0 0.0
    %8865 = vmatpush2.xpose.msra.mxu0 0.0
    %8866 = vmatprep.subr.mxu0 0.0
    %8867 = vmatpush2.xpose.msra.mxu0 0.0
    %8868 = vmatprep.subr.mxu0 0.0
    %8869 = vmatpush2.xpose.msra.mxu0 0.0
    %8870 = vmatprep.subr.mxu0 0.0
    %8871 = vmatpush2.xpose.msra.mxu0 0.0
    %8872 = vmatprep.subr.mxu0 0.0
    %8873 = vmatpush2.xpose.msra.mxu0 0.0
    %8874 = vmatprep.subr.mxu0 0.0
    %8875 = vmatpush2.xpose.msra.mxu0 0.0
    %8876 = vmatprep.subr.mxu0 0.0
    %8877 = vmatpush2.xpose.msra.mxu0 0.0
    %8878 = vmatprep.mubr.f32.mxu0 0.0
    %8879 = vmatmul.mubr.f32.gmra.mxu0 %v8693
    %v8880 = vpop.f32.mrf.mxu0
    %v8881 = vadd.f32 0.0, %v8880
    %v8882 = vpop.f32.mrf.mxu0
    %8883 = vmatprep.mubr.f32.mxu0 0.0
    %8884 = vmatmul.mubr.f32.gmra.mxu0 %v8695
    %v8885 = vpop.f32.mrf.mxu0
    %v8886 = vadd.f32 0.0, %v8885
    %v8887 = vpop.f32.mrf.mxu0
    %8888 = vmatprep.mubr.f32.mxu0 0.0
    %8889 = vmatmul.mubr.f32.gmra.mxu0 %v8697
    %v8890 = vpop.f32.mrf.mxu0
    %v8891 = vadd.f32 0.0, %v8890
    %v8892 = vpop.f32.mrf.mxu0
    %8893 = vmatprep.mubr.f32.mxu0 0.0
    %8894 = vmatmul.mubr.f32.gmra.mxu0 %v8699
    %v8895 = vpop.f32.mrf.mxu0
    %v8896 = vadd.f32 0.0, %v8895
    %v8897 = vpop.f32.mrf.mxu0
    %8898 = vdwg.mxu0
    %v8899 = vmul.f32 %v4977, %v8881
    %v8900 = vmul.f32 %v4978, %v8886
    %v8901 = vmul.f32 %v4979, %v8891
    %v8902 = vmul.f32 %v4980, %v8896
    %v8903 = vadd.f32 %v8798, %v8899
    %v8904 = vadd.f32 %v8799, %v8900
    %v8905 = vadd.f32 %v8800, %v8901
    %v8906 = vadd.f32 %v8801, %v8902
    %v8907 = vsel %vm5566, %v8903, -1e+30
    %v8908 = vsel %vm5567, %v8904, -1e+30
    %v8909 = vsel %vm5568, %v8905, -1e+30
    %v8910 = vsel %vm5569, %v8906, -1e+30
    %v8911 = vsel %vm415, %v8907, -inf
    %8912 = vmax.xlane.f32.xlu0 %v8911
    %v8913 = vpop.xlane.xlu0 %8912
    %v8914 = vsel %vm415, %v8908, -inf
    %8915 = vmax.xlane.f32.xlu0 %v8914
    %v8916 = vpop.xlane.xlu0 %8915
    %v8917 = vsel %vm415, %v8909, -inf
    %8918 = vmax.xlane.f32.xlu0 %v8917
    %v8919 = vpop.xlane.xlu0 %8918
    %v8920 = vsel %vm415, %v8910, -inf
    %8921 = vmax.xlane.f32.xlu0 %v8920
    %v8922 = vpop.xlane.xlu0 %8921
    %v8923 = vsub.f32 %v8907, %v8913
    %v8924 = vsub.f32 %v8908, %v8916
    %v8925 = vsub.f32 %v8909, %v8919
    %v8926 = vsub.f32 %v8910, %v8922
    %v8927 = vmul.f32 %v8923, 1.442695
    %v8928 = vpow.pop %v8927
    %v8929 = vmul.f32 %v8924, 1.442695
    %v8930 = vpow.pop %v8929
    %v8931 = vmul.f32 %v8925, 1.442695
    %v8932 = vpow.pop %v8931
    %v8933 = vmul.f32 %v8926, 1.442695
    %v8934 = vpow.pop %v8933
    %v8935 = vsel %vm5566, %v8928, 0.0
    %v8936 = vsel %vm5567, %v8930, 0.0
    %v8937 = vsel %vm5568, %v8932, 0.0
    %v8938 = vsel %vm5569, %v8934, 0.0
    %v8939 = vsel %vm415, %v8935, 0.0
    %8940 = vadd.xlane.f32.xlu0 %v8939
    %v8941 = vpop.xlane.xlu0 %8940
    %v8942 = vsel %vm415, %v8936, 0.0
    %8943 = vadd.xlane.f32.xlu0 %v8942
    %v8944 = vpop.xlane.xlu0 %8943
    %v8945 = vsel %vm415, %v8937, 0.0
    %8946 = vadd.xlane.f32.xlu0 %v8945
    %v8947 = vpop.xlane.xlu0 %8946
    %v8948 = vsel %vm415, %v8938, 0.0
    %8949 = vadd.xlane.f32.xlu0 %v8948
    %v8950 = vpop.xlane.xlu0 %8949
    %vm8951 = vcmp.eq.f32.partialorder %v8941, 0.0
    %vm8952 = vcmp.eq.f32.partialorder %v8944, 0.0
    %vm8953 = vcmp.eq.f32.partialorder %v8947, 0.0
    %vm8954 = vcmp.eq.f32.partialorder %v8950, 0.0
    %v8955 = vsel %vm8951, 1.0, %v8941
    %v8956 = vsel %vm8952, 1.0, %v8944
    %v8957 = vsel %vm8953, 1.0, %v8947
    %v8958 = vsel %vm8954, 1.0, %v8950
    %v8959 = vrcp.pop %v8955
    %v8960 = vrcp.pop %v8956
    %v8961 = vrcp.pop %v8957
    %v8962 = vrcp.pop %v8958
    %v8963 = vmul.f32 %v8935, %v8959
    %v8964 = vmul.f32 %v8936, %v8960
    %v8965 = vmul.f32 %v8937, %v8961
    %v8966 = vmul.f32 %v8938, %v8962
    %v8967 = vmul.f32 %v8963, %v4973
    %v8968 = vmul.f32 %v8964, %v4974
    %v8969 = vmul.f32 %v8965, %v4975
    %v8970 = vmul.f32 %v8966, %v4976
    %v8971 = vmul.f32 %v8963, %v4977
    %v8972 = vmul.f32 %v8964, %v4978
    %v8973 = vmul.f32 %v8965, %v4979
    %v8974 = vmul.f32 %v8966, %v4980
    %v8976 = vsel %vm415, %v8971, 0
    %v8979 = vsel %vm415, %v8972, 0
    %v8982 = vsel %vm415, %v8973, 0
    %v8985 = vsel %vm415, %v8974, 0
    %8987 = vmatprep.subr.mxu0 0.0
    %8988 = vmatpush1.msra.mxu0 0.0
    %8989 = vmatprep.subr.mxu0 0.0
    %8990 = vmatpush1.msra.mxu0 0.0
    %8991 = vmatprep.subr.mxu0 0.0
    %8992 = vmatpush1.msra.mxu0 0.0
    %8993 = vmatprep.subr.mxu0 0.0
    %8994 = vmatpush1.msra.mxu0 0.0
    %8995 = vmatprep.subr.mxu0 0.0
    %8996 = vmatpush1.msra.mxu0 0.0
    %8997 = vmatprep.subr.mxu0 0.0
    %8998 = vmatpush1.msra.mxu0 0.0
    %8999 = vmatprep.subr.mxu0 0.0
    %9000 = vmatpush1.msra.mxu0 0.0
    %9001 = vmatprep.subr.mxu0 0.0
    %9002 = vmatpush1.msra.mxu0 0.0
    %9003 = vmatprep.subr.mxu0 0.0
    %9004 = vmatpush1.msra.mxu0 0.0
    %9005 = vmatprep.subr.mxu0 0.0
    %9006 = vmatpush1.msra.mxu0 0.0
    %9007 = vmatprep.subr.mxu0 0.0
    %9008 = vmatpush1.msra.mxu0 0.0
    %9009 = vmatprep.subr.mxu0 0.0
    %9010 = vmatpush1.msra.mxu0 0.0
    %9011 = vmatprep.subr.mxu0 0.0
    %9012 = vmatpush1.msra.mxu0 %v8681
    %9013 = vmatprep.subr.mxu0 0.0
    %9014 = vmatpush1.msra.mxu0 %v8676
    %9015 = vmatprep.subr.mxu0 0.0
    %9016 = vmatpush1.msra.mxu0 %v8671
    %9017 = vmatprep.subr.mxu0 0.0
    %9018 = vmatpush1.msra.mxu0 %v8666
    %9019 = vmatprep.subr.mxu0 0.0
    %9020 = vmatpush2.msra.mxu0 0.0
    %9021 = vmatprep.subr.mxu0 0.0
    %9022 = vmatpush2.msra.mxu0 0.0
    %9023 = vmatprep.subr.mxu0 0.0
    %9024 = vmatpush2.msra.mxu0 0.0
    %9025 = vmatprep.subr.mxu0 0.0
    %9026 = vmatpush2.msra.mxu0 0.0
    %9027 = vmatprep.subr.mxu0 0.0
    %9028 = vmatpush2.msra.mxu0 0.0
    %9029 = vmatprep.subr.mxu0 0.0
    %9030 = vmatpush2.msra.mxu0 0.0
    %9031 = vmatprep.subr.mxu0 0.0
    %9032 = vmatpush2.msra.mxu0 0.0
    %9033 = vmatprep.subr.mxu0 0.0
    %9034 = vmatpush2.msra.mxu0 0.0
    %9035 = vmatprep.subr.mxu0 0.0
    %9036 = vmatpush2.msra.mxu0 0.0
    %9037 = vmatprep.subr.mxu0 0.0
    %9038 = vmatpush2.msra.mxu0 0.0
    %9039 = vmatprep.subr.mxu0 0.0
    %9040 = vmatpush2.msra.mxu0 0.0
    %9041 = vmatprep.subr.mxu0 0.0
    %9042 = vmatpush2.msra.mxu0 0.0
    %9043 = vmatprep.subr.mxu0 0.0
    %9044 = vmatpush2.msra.mxu0 0.0
    %9045 = vmatprep.subr.mxu0 0.0
    %9046 = vmatpush2.msra.mxu0 0.0
    %9047 = vmatprep.subr.mxu0 0.0
    %9048 = vmatpush2.msra.mxu0 0.0
    %9049 = vmatprep.subr.mxu0 0.0
    %9050 = vmatpush2.msra.mxu0 0.0
    %9051 = vmatprep.mubr.f32.mxu0 0.0
    %9052 = vmatmul.mubr.f32.gmra.mxu0 %v8976
    %v9053 = vpop.f32.mrf.mxu0
    %v9054 = vadd.f32 0.0, %v9053
    %v9055 = vpop.f32.mrf.mxu0
    %9056 = vmatprep.mubr.f32.mxu0 0.0
    %9057 = vmatmul.mubr.f32.gmra.mxu0 %v8979
    %v9058 = vpop.f32.mrf.mxu0
    %v9059 = vadd.f32 0.0, %v9058
    %v9060 = vpop.f32.mrf.mxu0
    %9061 = vmatprep.mubr.f32.mxu0 0.0
    %9062 = vmatmul.mubr.f32.gmra.mxu0 %v8982
    %v9063 = vpop.f32.mrf.mxu0
    %v9064 = vadd.f32 0.0, %v9063
    %v9065 = vpop.f32.mrf.mxu0
    %9066 = vmatprep.mubr.f32.mxu0 0.0
    %9067 = vmatmul.mubr.f32.gmra.mxu0 %v8985
    %v9068 = vpop.f32.mrf.mxu0
    %v9069 = vadd.f32 0.0, %v9068
    %v9070 = vpop.f32.mrf.mxu0
    %9071 = vdwg.mxu0
    %v9073 = vsel %vm415, %v8967, 0
    %v9076 = vsel %vm415, %v8968, 0
    %v9079 = vsel %vm415, %v8969, 0
    %v9082 = vsel %vm415, %v8970, 0
    %9084 = vmatprep.subr.mxu0 0.0
    %9085 = vmatpush1.msra.mxu0 0.0
    %9086 = vmatprep.subr.mxu0 0.0
    %9087 = vmatpush1.msra.mxu0 0.0
    %9088 = vmatprep.subr.mxu0 0.0
    %9089 = vmatpush1.msra.mxu0 0.0
    %9090 = vmatprep.subr.mxu0 0.0
    %9091 = vmatpush1.msra.mxu0 0.0
    %9092 = vmatprep.subr.mxu0 0.0
    %9093 = vmatpush1.msra.mxu0 0.0
    %9094 = vmatprep.subr.mxu0 0.0
    %9095 = vmatpush1.msra.mxu0 0.0
    %9096 = vmatprep.subr.mxu0 0.0
    %9097 = vmatpush1.msra.mxu0 0.0
    %9098 = vmatprep.subr.mxu0 0.0
    %9099 = vmatpush1.msra.mxu0 0.0
    %9100 = vmatprep.subr.mxu0 0.0
    %9101 = vmatpush1.msra.mxu0 0.0
    %9102 = vmatprep.subr.mxu0 0.0
    %9103 = vmatpush1.msra.mxu0 0.0
    %9104 = vmatprep.subr.mxu0 0.0
    %9105 = vmatpush1.msra.mxu0 0.0
    %9106 = vmatprep.subr.mxu0 0.0
    %9107 = vmatpush1.msra.mxu0 0.0
    %9108 = vmatprep.subr.mxu0 0.0
    %9109 = vmatpush1.msra.mxu0 %v8511
    %9110 = vmatprep.subr.mxu0 0.0
    %9111 = vmatpush1.msra.mxu0 %v8506
    %9112 = vmatprep.subr.mxu0 0.0
    %9113 = vmatpush1.msra.mxu0 %v8501
    %9114 = vmatprep.subr.mxu0 0.0
    %9115 = vmatpush1.msra.mxu0 %v8496
    %9116 = vmatprep.subr.mxu0 0.0
    %9117 = vmatpush2.msra.mxu0 0.0
    %9118 = vmatprep.subr.mxu0 0.0
    %9119 = vmatpush2.msra.mxu0 0.0
    %9120 = vmatprep.subr.mxu0 0.0
    %9121 = vmatpush2.msra.mxu0 0.0
    %9122 = vmatprep.subr.mxu0 0.0
    %9123 = vmatpush2.msra.mxu0 0.0
    %9124 = vmatprep.subr.mxu0 0.0
    %9125 = vmatpush2.msra.mxu0 0.0
    %9126 = vmatprep.subr.mxu0 0.0
    %9127 = vmatpush2.msra.mxu0 0.0
    %9128 = vmatprep.subr.mxu0 0.0
    %9129 = vmatpush2.msra.mxu0 0.0
    %9130 = vmatprep.subr.mxu0 0.0
    %9131 = vmatpush2.msra.mxu0 0.0
    %9132 = vmatprep.subr.mxu0 0.0
    %9133 = vmatpush2.msra.mxu0 0.0
    %9134 = vmatprep.subr.mxu0 0.0
    %9135 = vmatpush2.msra.mxu0 0.0
    %9136 = vmatprep.subr.mxu0 0.0
    %9137 = vmatpush2.msra.mxu0 0.0
    %9138 = vmatprep.subr.mxu0 0.0
    %9139 = vmatpush2.msra.mxu0 0.0
    %9140 = vmatprep.subr.mxu0 0.0
    %9141 = vmatpush2.msra.mxu0 0.0
    %9142 = vmatprep.subr.mxu0 0.0
    %9143 = vmatpush2.msra.mxu0 0.0
    %9144 = vmatprep.subr.mxu0 0.0
    %9145 = vmatpush2.msra.mxu0 0.0
    %9146 = vmatprep.subr.mxu0 0.0
    %9147 = vmatpush2.msra.mxu0 0.0
    %9148 = vmatprep.mubr.f32.mxu0 0.0
    %9149 = vmatmul.mubr.f32.gmra.mxu0 %v9073
    %v9150 = vpop.f32.mrf.mxu0
    %v9151 = vadd.f32 %v9054, %v9150
    %v9152 = vpop.f32.mrf.mxu0
    %9153 = vmatprep.mubr.f32.mxu0 0.0
    %9154 = vmatmul.mubr.f32.gmra.mxu0 %v9076
    %v9155 = vpop.f32.mrf.mxu0
    %v9156 = vadd.f32 %v9059, %v9155
    %v9157 = vpop.f32.mrf.mxu0
    %9158 = vmatprep.mubr.f32.mxu0 0.0
    %9159 = vmatmul.mubr.f32.gmra.mxu0 %v9079
    %v9160 = vpop.f32.mrf.mxu0
    %v9161 = vadd.f32 %v9064, %v9160
    %v9162 = vpop.f32.mrf.mxu0
    %9163 = vmatprep.mubr.f32.mxu0 0.0
    %9164 = vmatmul.mubr.f32.gmra.mxu0 %v9082
    %v9165 = vpop.f32.mrf.mxu0
    %v9166 = vadd.f32 %v9069, %v9165
    %v9167 = vpop.f32.mrf.mxu0
    %9168 = vdwg.mxu0
    %v9170 = vsel %vm1005, %v9151, 0
    %v9173 = vsel %vm1005, %v9156, 0
    %v9176 = vsel %vm1005, %v9161, 0
    %v9179 = vsel %vm1005, %v9166, 0
    %9181 = vmatprep.subr.mxu0 0.0
    %9182 = vmatpush1.msra.mxu0 0.0
    %9183 = vmatprep.subr.mxu0 0.0
    %9184 = vmatpush1.msra.mxu0 0.0
    %9185 = vmatprep.subr.mxu0 0.0
    %9186 = vmatpush1.msra.mxu0 0.0
    %9187 = vmatprep.subr.mxu0 0.0
    %9188 = vmatpush1.msra.mxu0 0.0
    %9189 = vmatprep.subr.mxu0 0.0
    %9190 = vmatpush1.msra.mxu0 0.0
    %9191 = vmatprep.subr.mxu0 0.0
    %9192 = vmatpush1.msra.mxu0 0.0
    %9193 = vmatprep.subr.mxu0 0.0
    %9194 = vmatpush1.msra.mxu0 0.0
    %9195 = vmatprep.subr.mxu0 0.0
    %9196 = vmatpush1.msra.mxu0 0.0
    %9197 = vmatprep.subr.mxu0 0.0
    %9198 = vmatpush1.msra.mxu0 0.0
    %9199 = vmatprep.subr.mxu0 0.0
    %9200 = vmatpush1.msra.mxu0 0.0
    %9201 = vmatprep.subr.mxu0 0.0
    %9202 = vmatpush1.msra.mxu0 0.0
    %9203 = vmatprep.subr.mxu0 0.0
    %9204 = vmatpush1.msra.mxu0 0.0
    %9205 = vmatprep.subr.mxu0 0.0
    %9206 = vmatpush1.msra.mxu0 0.0
    %9207 = vmatprep.subr.mxu0 0.0
    %9208 = vmatpush1.msra.mxu0 0.0
    %9209 = vmatprep.subr.mxu0 0.0
    %9210 = vmatpush1.msra.mxu0 0.0
    %9211 = vmatprep.subr.mxu0 0.0
    %9212 = vmatpush1.msra.mxu0 %v8684
    %9213 = vmatprep.subr.mxu0 0.0
    %9214 = vmatpush2.msra.mxu0 0.0
    %9215 = vmatprep.subr.mxu0 0.0
    %9216 = vmatpush2.msra.mxu0 0.0
    %9217 = vmatprep.subr.mxu0 0.0
    %9218 = vmatpush2.msra.mxu0 0.0
    %9219 = vmatprep.subr.mxu0 0.0
    %9220 = vmatpush2.msra.mxu0 0.0
    %9221 = vmatprep.subr.mxu0 0.0
    %9222 = vmatpush2.msra.mxu0 0.0
    %9223 = vmatprep.subr.mxu0 0.0
    %9224 = vmatpush2.msra.mxu0 0.0
    %9225 = vmatprep.subr.mxu0 0.0
    %9226 = vmatpush2.msra.mxu0 0.0
    %9227 = vmatprep.subr.mxu0 0.0
    %9228 = vmatpush2.msra.mxu0 0.0
    %9229 = vmatprep.subr.mxu0 0.0
    %9230 = vmatpush2.msra.mxu0 0.0
    %9231 = vmatprep.subr.mxu0 0.0
    %9232 = vmatpush2.msra.mxu0 0.0
    %9233 = vmatprep.subr.mxu0 0.0
    %9234 = vmatpush2.msra.mxu0 0.0
    %9235 = vmatprep.subr.mxu0 0.0
    %9236 = vmatpush2.msra.mxu0 0.0
    %9237 = vmatprep.subr.mxu0 0.0
    %9238 = vmatpush2.msra.mxu0 0.0
    %9239 = vmatprep.subr.mxu0 0.0
    %9240 = vmatpush2.msra.mxu0 0.0
    %9241 = vmatprep.subr.mxu0 0.0
    %9242 = vmatpush2.msra.mxu0 0.0
    %9243 = vmatprep.subr.mxu0 0.0
    %9244 = vmatpush2.msra.mxu0 0.0
    %9245 = vmatprep.mubr.f32.mxu0 0.0
    %9246 = vmatmul.mubr.f32.gmra.mxu0 %v9170
    %v9247 = vpop.f32.mrf.mxu0
    %v9248 = vadd.f32 0.0, %v9247
    %v9249 = vpop.f32.mrf.mxu0
    %9250 = vmatprep.mubr.f32.mxu0 0.0
    %9251 = vmatmul.mubr.f32.gmra.mxu0 %v9173
    %v9252 = vpop.f32.mrf.mxu0
    %v9253 = vadd.f32 0.0, %v9252
    %v9254 = vpop.f32.mrf.mxu0
    %9255 = vmatprep.mubr.f32.mxu0 0.0
    %9256 = vmatmul.mubr.f32.gmra.mxu0 %v9176
    %v9257 = vpop.f32.mrf.mxu0
    %v9258 = vpop.f32.mrf.mxu0
    %9259 = vmatprep.mubr.f32.mxu0 0.0
    %9260 = vmatmul.mubr.f32.gmra.mxu0 %v9179
    %v9261 = vpop.f32.mrf.mxu0
    %v9262 = vpop.f32.mrf.mxu0
    %9263 = vdwg.mxu0
    %v9264 = vmul.f32 %v5097, %v9248
    %v9265 = vmul.f32 %v5102, %v9253
    %v9266 = vmul.f32 %v5120, %v9248
    %v9267 = vmul.f32 %v5124, %v9253
    %9270 = vrot.lane.b32.xlu0 %v9266, 120
    %v9271 = vpop.permute.xlu0 %9270
    %9272 = vrot.lane.b32.xlu0 %v9267, 120
    %v9273 = vpop.permute.xlu0 %9272
    %v9276 = vadd.f32 %v9264, %v9271
    %v9277 = vadd.f32 %v9265, %v9273
    %v9278 = vld [vmem:[%s57] sm:$0x3]
    %v9280 = vsel %vm3472, %v9278, 0
    %9282 = vmatprep.subr.mxu0 0.0
    %9283 = vmatpush1.msra.mxu0 0.0
    %9284 = vmatprep.subr.mxu0 0.0
    %9285 = vmatpush1.msra.mxu0 0.0
    %9286 = vmatprep.subr.mxu0 0.0
    %9287 = vmatpush1.msra.mxu0 0.0
    %9288 = vmatprep.subr.mxu0 0.0
    %9289 = vmatpush1.msra.mxu0 0.0
    %9290 = vmatprep.subr.mxu0 0.0
    %9291 = vmatpush1.msra.mxu0 0.0
    %9292 = vmatprep.subr.mxu0 0.0
    %9293 = vmatpush1.msra.mxu0 0.0
    %9294 = vmatprep.subr.mxu0 0.0
    %9295 = vmatpush1.msra.mxu0 0.0
    %9296 = vmatprep.subr.mxu0 0.0
    %9297 = vmatpush1.msra.mxu0 0.0
    %9298 = vmatprep.subr.mxu0 0.0
    %9299 = vmatpush1.msra.mxu0 0.0
    %9300 = vmatprep.subr.mxu0 0.0
    %9301 = vmatpush1.msra.mxu0 0.0
    %9302 = vmatprep.subr.mxu0 0.0
    %9303 = vmatpush1.msra.mxu0 0.0
    %9304 = vmatprep.subr.mxu0 0.0
    %9305 = vmatpush1.msra.mxu0 0.0
    %9306 = vmatprep.subr.mxu0 0.0
    %9307 = vmatpush1.msra.mxu0 0.0
    %9308 = vmatprep.subr.mxu0 0.0
    %9309 = vmatpush1.msra.mxu0 0.0
    %9310 = vmatprep.subr.mxu0 0.0
    %9311 = vmatpush1.msra.mxu0 0.0
    %9312 = vmatprep.subr.mxu0 0.0
    %9313 = vmatpush1.msra.mxu0 %v9280
    %9314 = vmatprep.subr.mxu0 0.0
    %9315 = vmatpush2.msra.mxu0 0.0
    %9316 = vmatprep.subr.mxu0 0.0
    %9317 = vmatpush2.msra.mxu0 0.0
    %9318 = vmatprep.subr.mxu0 0.0
    %9319 = vmatpush2.msra.mxu0 0.0
    %9320 = vmatprep.subr.mxu0 0.0
    %9321 = vmatpush2.msra.mxu0 0.0
    %9322 = vmatprep.subr.mxu0 0.0
    %9323 = vmatpush2.msra.mxu0 0.0
    %9324 = vmatprep.subr.mxu0 0.0
    %9325 = vmatpush2.msra.mxu0 0.0
    %9326 = vmatprep.subr.mxu0 0.0
    %9327 = vmatpush2.msra.mxu0 0.0
    %9328 = vmatprep.subr.mxu0 0.0
    %9329 = vmatpush2.msra.mxu0 0.0
    %9330 = vmatprep.subr.mxu0 0.0
    %9331 = vmatpush2.msra.mxu0 0.0
    %9332 = vmatprep.subr.mxu0 0.0
    %9333 = vmatpush2.msra.mxu0 0.0
    %9334 = vmatprep.subr.mxu0 0.0
    %9335 = vmatpush2.msra.mxu0 0.0
    %9336 = vmatprep.subr.mxu0 0.0
    %9337 = vmatpush2.msra.mxu0 0.0
    %9338 = vmatprep.subr.mxu0 0.0
    %9339 = vmatpush2.msra.mxu0 0.0
    %9340 = vmatprep.subr.mxu0 0.0
    %9341 = vmatpush2.msra.mxu0 0.0
    %9342 = vmatprep.subr.mxu0 0.0
    %9343 = vmatpush2.msra.mxu0 0.0
    %9344 = vmatprep.subr.mxu0 0.0
    %9345 = vmatpush2.msra.mxu0 0.0
    %9346 = vmatprep.mubr.f32.mxu0 0.0
    %9347 = vmatmul.mubr.f32.gmra.mxu0 %v8039
    %v9348 = vpop.f32.mrf.mxu0
    %v9349 = vadd.f32 0.0, %v9348
    %v9350 = vpop.f32.mrf.mxu0
    %9351 = vmatprep.mubr.f32.mxu0 0.0
    %9352 = vmatmul.mubr.f32.gmra.mxu0 %v8041
    %v9353 = vpop.f32.mrf.mxu0
    %v9354 = vadd.f32 0.0, %v9353
    %v9355 = vpop.f32.mrf.mxu0
    %9356 = vmatprep.mubr.f32.mxu0 0.0
    %9357 = vmatmul.mubr.f32.gmra.mxu0 %v8043
    %v9358 = vpop.f32.mrf.mxu0
    %v9359 = vpop.f32.mrf.mxu0
    %9360 = vmatprep.mubr.f32.mxu0 0.0
    %9361 = vmatmul.mubr.f32.gmra.mxu0 %v8045
    %v9362 = vpop.f32.mrf.mxu0
    %v9363 = vpop.f32.mrf.mxu0
    %9364 = vdwg.mxu0
    %v9365 = vsub.f32 0.0, %v9349
    %v9366 = vsub.f32 0.0, %v9354
    %v9367 = vmul.f32 %v9365, 1.442695
    %v9368 = vpow.pop %v9367
    %v9369 = vmul.f32 %v9366, 1.442695
    %v9370 = vpow.pop %v9369
    %v9371 = vadd.f32 %v9368, 1.0
    %v9372 = vadd.f32 %v9370, 1.0
    %v9373 = vrcp.pop %v9371
    %v9374 = vmul.f32 1.0, %v9373
    %v9375 = vrcp.pop %v9372
    %v9376 = vmul.f32 1.0, %v9375
    %9378 = vset.pattern.permute.xlu0 0
    %9379 = vperm.xlu0 %9378, %v9374
    %v9380 = vpop.permute.xlu0 %9379
    %9383 = vset.pattern.permute.xlu0 0
    %9384 = vperm.xlu0 %9383, %v9376
    %v9385 = vpop.permute.xlu0 %9384
    %v9387 = vmul.f32 %v9276, %v9380
    %v9388 = vmul.f32 %v9277, %v9385
    %9389 = vst.msk [vmem:[%s59] sm:$0xff] %vm1005, %v9387
    %9390 = vst.msk [vmem:[%s59 + $0x8] sm:$0xff] %vm1005, %v9388
    // Predicated region
    $region198: #{tpu_custom_call.1} parent=1 // pred_check
      _
    $region199: #{tpu_custom_call.1} parent=1 // pred_check_branch
      %9392 = sbr.rel (0) target = $region201
    $region200: #{tpu_custom_call.1} parent=1 // pred_region
      _
    $region201: #{tpu_custom_call.1} parent=1 // pred_fallthru
      _
    // Predicated region
    $region202: #{tpu_custom_call.1} parent=1 // pred_check
      _
    $region203: #{tpu_custom_call.1} parent=1 // pred_check_branch
      %9394 = sbr.rel (0) target = $region205
    $region204: #{tpu_custom_call.1} parent=1 // pred_region
      _
    $region205: #{tpu_custom_call.1} parent=1 // pred_fallthru
      _
    %9395 = vsyncpa [#allocation4], 1
    %9396 = vsyncpa [#allocation6], 1
    %9397 = vsyncpa [#allocation9], 1
    %9398 = vsyncpa [#allocation12], 1
    %9399 = vsyncpa [#allocation15], 1
    %9400 = vsyncpa [#allocation18], 1
    %9401 = vsyncpa [#allocation21], 1
    %9402 = vsyncpa [#allocation24], 1
    %9403 = vsyncpa [#allocation27], 1
    %9404 = vsyncpa [#allocation30], 1
    %9405 = vsyncpa [#allocation33], 1

</llo_original>
